<compile_context>
chip_gen: v5e
topology: v5e:2x2
jax: 0.10.0
libtpu: 0.0.40
codegen_flags: <defaults>
</compile_context>

<pallas_src>
import jax
import jax.numpy as jnp
from jax.experimental import pallas as pl
from jax.experimental.pallas import tpu as pltpu


_SUB = 8        # f32 sublanes per vreg
_LANE = 128     # lanes per vreg
_MAX_TBL = 256  # batch lanes per grid step (=> 8*256 = 2048 items / step)


def _round_up(x, m):
    return (x + m - 1) // m * m


def _model_kernel(x2_ref, inp_ref, out_ref):
    # x2_ref : (N, N, 8, TBL)   out_ref : (N, N, 8, TBL)
    # inp_ref: (N, K, 8, TBL)   with N == 3*K
    N = x2_ref.shape[0]
    K = inp_ref.shape[1]
    G = N // K                       # column-repeat factor (3)
    f32 = jnp.float32

    # Coefficient slabs: x2v[i][j] / inpv[j][k] are (8, TBL) batch tiles.
    x2v = [[x2_ref[i, j, :, :].astype(f32) for j in range(N)] for i in range(N)]
    inpv = [[inp_ref[j, k, :, :].astype(f32) for k in range(K)] for j in range(N)]

    def mm(A, B):
        # Tiny matmul over coefficient slabs: unrolled VPU multiply-add chain.
        J, Kc = len(B), len(B[0])
        res = []
        for arow in A:
            row = []
            for k in range(Kc):
                acc = arow[0] * B[0][k]
                for j in range(1, J):
                    acc = acc + arow[j] * B[j][k]
                row.append(acc)
            res.append(row)
        return res

    def fold_rows(M, cols):
        # Sum of the G K-row blocks (leading-axis groups; free slices).
        out = []
        for r in range(K):
            row = []
            for c in range(cols):
                acc = M[r][c]
                for g in range(1, G):
                    acc = acc + M[g * K + r][c]
                row.append(acc)
            out.append(row)
        return out

    t1 = mm(x2v, inpv)               # (N, K)  == x2 @ inp
    s1 = fold_rows(t1, K)            # (K, K)
    s2 = fold_rows(x2v, N)           # (K, N)
    a = mm(t1, s1)                   # (N, K)  == t1 @ S1
    t4 = mm(a, s2)                   # (N, N)  == (t1 @ S1) @ S2 == t3 @ x2

    for i in range(N):
        for m in range(N):
            out_ref[i, m, :, :] = (x2v[i][m] + t4[i][m]).astype(out_ref.dtype)


def _forward_batched_impl(x2, inp):
    B, N, _ = x2.shape
    K = inp.shape[2]

    # Batch blocking: batch goes on (8 sublanes x Bl lanes).
    bl_min = _round_up(pl.cdiv(B, _SUB), _LANE)
    tbl = min(_MAX_TBL, bl_min)
    bl = _round_up(bl_min, tbl)
    bpad = _SUB * bl

    def relayout(a):                 # (B, R, C) -> (R, C, 8, Bl)
        R, C = a.shape[1], a.shape[2]
        a = jnp.transpose(a, (1, 2, 0))
        a = jnp.pad(a, ((0, 0), (0, 0), (0, bpad - B)))
        return a.reshape(R, C, _SUB, bl)

    x2r = relayout(x2)               # (N, N, 8, Bl)
    inpr = relayout(inp)             # (N, K, 8, Bl)

    itemsize = jnp.dtype(x2.dtype).itemsize
    flops = int(B) * (2 * N * N * K + 2 * N * K * K + 2 * N * K * N + N * N)
    bytes_accessed = itemsize * int(B) * (N * N + N * K + N * N)

    out4 = pl.pallas_call(
        _model_kernel,
        out_shape=jax.ShapeDtypeStruct((N, N, _SUB, bl), x2.dtype),
        grid=(bl // tbl,),
        in_specs=[
            pl.BlockSpec((N, N, _SUB, tbl), lambda g: (0, 0, 0, g)),
            pl.BlockSpec((N, K, _SUB, tbl), lambda g: (0, 0, 0, g)),
        ],
        out_specs=pl.BlockSpec((N, N, _SUB, tbl), lambda g: (0, 0, 0, g)),
        input_output_aliases={0: 0},
        compiler_params=pltpu.CompilerParams(
            dimension_semantics=("parallel",),
            vmem_limit_bytes=32 * 1024 * 1024,
        ),
        cost_estimate=pl.CostEstimate(
            flops=flops, transcendentals=0, bytes_accessed=bytes_accessed),
    )(x2r, inpr)

    out = out4.reshape(N, N, bpad)
    out = jnp.transpose(out, (2, 0, 1))[:B]
    return out


_forward_batched_jit = jax.jit(_forward_batched_impl)


def model_forward_batched(x2, inp):
    """x2: (B, N, N), inp: (B, N, K) with 3*K == N. Returns (B, N, N)."""
    B, N, M = x2.shape
    Bi, Mi, K = inp.shape
    assert Bi == B and Mi == M == N and 3 * K == N, (
        "shapes must satisfy x2:(B,N,N), inp:(B,N,K), 3*K == N")
    return _forward_batched_jit(x2, inp)


def model_forward(x1, x2, inp):
    # x1 is unused by the reference module's forward; kept for signature
    # parity only and never handed to the traced computation.
    del x1
    return model_forward_batched(x2[None], inp[None])[0]


def _reference(x2, inp):
    t1 = x2 @ inp
    t2 = jnp.tile(t1, (1, 3))
    t3 = t2 @ t2
    t4 = t3 @ x2
    return x2 + t4


if __name__ == "__main__":
    key = jax.random.PRNGKey(0)
    k1, k2, k3, k4, k5 = jax.random.split(key, 5)
    K, N, B = 4, 12, 200   # N = 3*K so mm(t2, t2) is well-formed

    # Single-instance path (matches the original module's forward signature).
    x1 = jax.random.normal(k1, (N, N), dtype=jnp.float32)   # unused by forward
    x2 = jax.random.normal(k2, (N, N), dtype=jnp.float32)
    inp = jax.random.normal(k3, (N, K), dtype=jnp.float32)

    out = jax.block_until_ready(model_forward(x1, x2, inp))
    ref = _reference(x2, inp)
    assert out.shape == ref.shape
    assert jnp.allclose(out, ref, rtol=1e-4, atol=1e-4), "single-instance mismatch"

    # Batched path: many independent instances per grid step (lane-dense).
    x2b = jax.random.normal(k4, (B, N, N), dtype=jnp.float32)
    inpb = jax.random.normal(k5, (B, N, K), dtype=jnp.float32)

    outb = jax.block_until_ready(model_forward_batched(x2b, inpb))
    refb = jax.vmap(_reference)(x2b, inpb)
    assert outb.shape == refb.shape
    assert jnp.allclose(outb, refb, rtol=1e-4, atol=1e-4), "batched mismatch"

    print("KERNEL_OK")
</pallas_src>

<mosaic_0001>
module attributes {stable_mosaic.version = 11 : i64} {
  func.func @_model_kernel(%arg0: i32, %arg1: memref<12x12x8x128xf32, #tpu.memory_space<vmem>>, %arg2: memref<12x4x8x128xf32, #tpu.memory_space<vmem>>, %arg3: memref<12x12x8x128xf32, #tpu.memory_space<vmem>>) attributes {dimension_semantics = [#tpu.dimension_semantics<parallel>], iteration_bounds = array<i64: 1>, scalar_prefetch = 0 : i64, scratch_operands = 0 : i64, tpu.core_type = #tpu.core_type<tc>, window_params = [{transform_indices = @transform_0, window_bounds = array<i64: 12, 12, 8, 128>}, {transform_indices = @transform_1, window_bounds = array<i64: 12, 4, 8, 128>}, {transform_indices = @transform_2, window_bounds = array<i64: 12, 12, 8, 128>}]} {
    %c0 = arith.constant 0 : index
    %c0_0 = arith.constant 0 : index
    %c0_1 = arith.constant 0 : index
    %c0_2 = arith.constant 0 : index
    %0 = vector.load %arg1[%c0, %c0_0, %c0_1, %c0_2] : memref<12x12x8x128xf32, #tpu.memory_space<vmem>>, vector<1x1x8x128xf32>
    %1 = vector.shape_cast %0 : vector<1x1x8x128xf32> to vector<8x128xf32>
    %c0_3 = arith.constant 0 : index
    %c1 = arith.constant 1 : index
    %c0_4 = arith.constant 0 : index
    %c0_5 = arith.constant 0 : index
    %2 = vector.load %arg1[%c0_3, %c1, %c0_4, %c0_5] : memref<12x12x8x128xf32, #tpu.memory_space<vmem>>, vector<1x1x8x128xf32>
    %3 = vector.shape_cast %2 : vector<1x1x8x128xf32> to vector<8x128xf32>
    %c0_6 = arith.constant 0 : index
    %c2 = arith.constant 2 : index
    %c0_7 = arith.constant 0 : index
    %c0_8 = arith.constant 0 : index
    %4 = vector.load %arg1[%c0_6, %c2, %c0_7, %c0_8] : memref<12x12x8x128xf32, #tpu.memory_space<vmem>>, vector<1x1x8x128xf32>
    %5 = vector.shape_cast %4 : vector<1x1x8x128xf32> to vector<8x128xf32>
    %c0_9 = arith.constant 0 : index
    %c3 = arith.constant 3 : index
    %c0_10 = arith.constant 0 : index
    %c0_11 = arith.constant 0 : index
    %6 = vector.load %arg1[%c0_9, %c3, %c0_10, %c0_11] : memref<12x12x8x128xf32, #tpu.memory_space<vmem>>, vector<1x1x8x128xf32>
    %7 = vector.shape_cast %6 : vector<1x1x8x128xf32> to vector<8x128xf32>
    %c0_12 = arith.constant 0 : index
    %c4 = arith.constant 4 : index
    %c0_13 = arith.constant 0 : index
    %c0_14 = arith.constant 0 : index
    %8 = vector.load %arg1[%c0_12, %c4, %c0_13, %c0_14] : memref<12x12x8x128xf32, #tpu.memory_space<vmem>>, vector<1x1x8x128xf32>
    %9 = vector.shape_cast %8 : vector<1x1x8x128xf32> to vector<8x128xf32>
    %c0_15 = arith.constant 0 : index
    %c5 = arith.constant 5 : index
    %c0_16 = arith.constant 0 : index
    %c0_17 = arith.constant 0 : index
    %10 = vector.load %arg1[%c0_15, %c5, %c0_16, %c0_17] : memref<12x12x8x128xf32, #tpu.memory_space<vmem>>, vector<1x1x8x128xf32>
    %11 = vector.shape_cast %10 : vector<1x1x8x128xf32> to vector<8x128xf32>
    %c0_18 = arith.constant 0 : index
    %c6 = arith.constant 6 : index
    %c0_19 = arith.constant 0 : index
    %c0_20 = arith.constant 0 : index
    %12 = vector.load %arg1[%c0_18, %c6, %c0_19, %c0_20] : memref<12x12x8x128xf32, #tpu.memory_space<vmem>>, vector<1x1x8x128xf32>
    %13 = vector.shape_cast %12 : vector<1x1x8x128xf32> to vector<8x128xf32>
    %c0_21 = arith.constant 0 : index
    %c7 = arith.constant 7 : index
    %c0_22 = arith.constant 0 : index
    %c0_23 = arith.constant 0 : index
    %14 = vector.load %arg1[%c0_21, %c7, %c0_22, %c0_23] : memref<12x12x8x128xf32, #tpu.memory_space<vmem>>, vector<1x1x8x128xf32>
    %15 = vector.shape_cast %14 : vector<1x1x8x128xf32> to vector<8x128xf32>
    %c0_24 = arith.constant 0 : index
    %c8 = arith.constant 8 : index
    %c0_25 = arith.constant 0 : index
    %c0_26 = arith.constant 0 : index
    %16 = vector.load %arg1[%c0_24, %c8, %c0_25, %c0_26] : memref<12x12x8x128xf32, #tpu.memory_space<vmem>>, vector<1x1x8x128xf32>
    %17 = vector.shape_cast %16 : vector<1x1x8x128xf32> to vector<8x128xf32>
    %c0_27 = arith.constant 0 : index
    %c9 = arith.constant 9 : index
    %c0_28 = arith.constant 0 : index
    %c0_29 = arith.constant 0 : index
    %18 = vector.load %arg1[%c0_27, %c9, %c0_28, %c0_29] : memref<12x12x8x128xf32, #tpu.memory_space<vmem>>, vector<1x1x8x128xf32>
    %19 = vector.shape_cast %18 : vector<1x1x8x128xf32> to vector<8x128xf32>
    %c0_30 = arith.constant 0 : index
    %c10 = arith.constant 10 : index
    %c0_31 = arith.constant 0 : index
    %c0_32 = arith.constant 0 : index
    %20 = vector.load %arg1[%c0_30, %c10, %c0_31, %c0_32] : memref<12x12x8x128xf32, #tpu.memory_space<vmem>>, vector<1x1x8x128xf32>
    %21 = vector.shape_cast %20 : vector<1x1x8x128xf32> to vector<8x128xf32>
    %c0_33 = arith.constant 0 : index
    %c11 = arith.constant 11 : index
    %c0_34 = arith.constant 0 : index
    %c0_35 = arith.constant 0 : index
    %22 = vector.load %arg1[%c0_33, %c11, %c0_34, %c0_35] : memref<12x12x8x128xf32, #tpu.memory_space<vmem>>, vector<1x1x8x128xf32>
    %23 = vector.shape_cast %22 : vector<1x1x8x128xf32> to vector<8x128xf32>
    %c1_36 = arith.constant 1 : index
    %c0_37 = arith.constant 0 : index
    %c0_38 = arith.constant 0 : index
    %c0_39 = arith.constant 0 : index
    %24 = vector.load %arg1[%c1_36, %c0_37, %c0_38, %c0_39] : memref<12x12x8x128xf32, #tpu.memory_space<vmem>>, vector<1x1x8x128xf32>
    %25 = vector.shape_cast %24 : vector<1x1x8x128xf32> to vector<8x128xf32>
    %c1_40 = arith.constant 1 : index
    %c1_41 = arith.constant 1 : index
    %c0_42 = arith.constant 0 : index
    %c0_43 = arith.constant 0 : index
    %26 = vector.load %arg1[%c1_40, %c1_41, %c0_42, %c0_43] : memref<12x12x8x128xf32, #tpu.memory_space<vmem>>, vector<1x1x8x128xf32>
    %27 = vector.shape_cast %26 : vector<1x1x8x128xf32> to vector<8x128xf32>
    %c1_44 = arith.constant 1 : index
    %c2_45 = arith.constant 2 : index
    %c0_46 = arith.constant 0 : index
    %c0_47 = arith.constant 0 : index
    %28 = vector.load %arg1[%c1_44, %c2_45, %c0_46, %c0_47] : memref<12x12x8x128xf32, #tpu.memory_space<vmem>>, vector<1x1x8x128xf32>
    %29 = vector.shape_cast %28 : vector<1x1x8x128xf32> to vector<8x128xf32>
    %c1_48 = arith.constant 1 : index
    %c3_49 = arith.constant 3 : index
    %c0_50 = arith.constant 0 : index
    %c0_51 = arith.constant 0 : index
    %30 = vector.load %arg1[%c1_48, %c3_49, %c0_50, %c0_51] : memref<12x12x8x128xf32, #tpu.memory_space<vmem>>, vector<1x1x8x128xf32>
    %31 = vector.shape_cast %30 : vector<1x1x8x128xf32> to vector<8x128xf32>
    %c1_52 = arith.constant 1 : index
    %c4_53 = arith.constant 4 : index
    %c0_54 = arith.constant 0 : index
    %c0_55 = arith.constant 0 : index
    %32 = vector.load %arg1[%c1_52, %c4_53, %c0_54, %c0_55] : memref<12x12x8x128xf32, #tpu.memory_space<vmem>>, vector<1x1x8x128xf32>
    %33 = vector.shape_cast %32 : vector<1x1x8x128xf32> to vector<8x128xf32>
    %c1_56 = arith.constant 1 : index
    %c5_57 = arith.constant 5 : index
    %c0_58 = arith.constant 0 : index
    %c0_59 = arith.constant 0 : index
    %34 = vector.load %arg1[%c1_56, %c5_57, %c0_58, %c0_59] : memref<12x12x8x128xf32, #tpu.memory_space<vmem>>, vector<1x1x8x128xf32>
    %35 = vector.shape_cast %34 : vector<1x1x8x128xf32> to vector<8x128xf32>
    %c1_60 = arith.constant 1 : index
    %c6_61 = arith.constant 6 : index
    %c0_62 = arith.constant 0 : index
    %c0_63 = arith.constant 0 : index
    %36 = vector.load %arg1[%c1_60, %c6_61, %c0_62, %c0_63] : memref<12x12x8x128xf32, #tpu.memory_space<vmem>>, vector<1x1x8x128xf32>
    %37 = vector.shape_cast %36 : vector<1x1x8x128xf32> to vector<8x128xf32>
    %c1_64 = arith.constant 1 : index
    %c7_65 = arith.constant 7 : index
    %c0_66 = arith.constant 0 : index
    %c0_67 = arith.constant 0 : index
    %38 = vector.load %arg1[%c1_64, %c7_65, %c0_66, %c0_67] : memref<12x12x8x128xf32, #tpu.memory_space<vmem>>, vector<1x1x8x128xf32>
    %39 = vector.shape_cast %38 : vector<1x1x8x128xf32> to vector<8x128xf32>
    %c1_68 = arith.constant 1 : index
    %c8_69 = arith.constant 8 : index
    %c0_70 = arith.constant 0 : index
    %c0_71 = arith.constant 0 : index
    %40 = vector.load %arg1[%c1_68, %c8_69, %c0_70, %c0_71] : memref<12x12x8x128xf32, #tpu.memory_space<vmem>>, vector<1x1x8x128xf32>
    %41 = vector.shape_cast %40 : vector<1x1x8x128xf32> to vector<8x128xf32>
    %c1_72 = arith.constant 1 : index
    %c9_73 = arith.constant 9 : index
    %c0_74 = arith.constant 0 : index
    %c0_75 = arith.constant 0 : index
    %42 = vector.load %arg1[%c1_72, %c9_73, %c0_74, %c0_75] : memref<12x12x8x128xf32, #tpu.memory_space<vmem>>, vector<1x1x8x128xf32>
    %43 = vector.shape_cast %42 : vector<1x1x8x128xf32> to vector<8x128xf32>
    %c1_76 = arith.constant 1 : index
    %c10_77 = arith.constant 10 : index
    %c0_78 = arith.constant 0 : index
    %c0_79 = arith.constant 0 : index
    %44 = vector.load %arg1[%c1_76, %c10_77, %c0_78, %c0_79] : memref<12x12x8x128xf32, #tpu.memory_space<vmem>>, vector<1x1x8x128xf32>
    %45 = vector.shape_cast %44 : vector<1x1x8x128xf32> to vector<8x128xf32>
    %c1_80 = arith.constant 1 : index
    %c11_81 = arith.constant 11 : index
    %c0_82 = arith.constant 0 : index
    %c0_83 = arith.constant 0 : index
    %46 = vector.load %arg1[%c1_80, %c11_81, %c0_82, %c0_83] : memref<12x12x8x128xf32, #tpu.memory_space<vmem>>, vector<1x1x8x128xf32>
    %47 = vector.shape_cast %46 : vector<1x1x8x128xf32> to vector<8x128xf32>
    %c2_84 = arith.constant 2 : index
    %c0_85 = arith.constant 0 : index
    %c0_86 = arith.constant 0 : index
    %c0_87 = arith.constant 0 : index
    %48 = vector.load %arg1[%c2_84, %c0_85, %c0_86, %c0_87] : memref<12x12x8x128xf32, #tpu.memory_space<vmem>>, vector<1x1x8x128xf32>
    %49 = vector.shape_cast %48 : vector<1x1x8x128xf32> to vector<8x128xf32>
    %c2_88 = arith.constant 2 : index
    %c1_89 = arith.constant 1 : index
    %c0_90 = arith.constant 0 : index
    %c0_91 = arith.constant 0 : index
    %50 = vector.load %arg1[%c2_88, %c1_89, %c0_90, %c0_91] : memref<12x12x8x128xf32, #tpu.memory_space<vmem>>, vector<1x1x8x128xf32>
    %51 = vector.shape_cast %50 : vector<1x1x8x128xf32> to vector<8x128xf32>
    %c2_92 = arith.constant 2 : index
    %c2_93 = arith.constant 2 : index
    %c0_94 = arith.constant 0 : index
    %c0_95 = arith.constant 0 : index
    %52 = vector.load %arg1[%c2_92, %c2_93, %c0_94, %c0_95] : memref<12x12x8x128xf32, #tpu.memory_space<vmem>>, vector<1x1x8x128xf32>
    %53 = vector.shape_cast %52 : vector<1x1x8x128xf32> to vector<8x128xf32>
    %c2_96 = arith.constant 2 : index
    %c3_97 = arith.constant 3 : index
    %c0_98 = arith.constant 0 : index
    %c0_99 = arith.constant 0 : index
    %54 = vector.load %arg1[%c2_96, %c3_97, %c0_98, %c0_99] : memref<12x12x8x128xf32, #tpu.memory_space<vmem>>, vector<1x1x8x128xf32>
    %55 = vector.shape_cast %54 : vector<1x1x8x128xf32> to vector<8x128xf32>
    %c2_100 = arith.constant 2 : index
    %c4_101 = arith.constant 4 : index
    %c0_102 = arith.constant 0 : index
    %c0_103 = arith.constant 0 : index
    %56 = vector.load %arg1[%c2_100, %c4_101, %c0_102, %c0_103] : memref<12x12x8x128xf32, #tpu.memory_space<vmem>>, vector<1x1x8x128xf32>
    %57 = vector.shape_cast %56 : vector<1x1x8x128xf32> to vector<8x128xf32>
    %c2_104 = arith.constant 2 : index
    %c5_105 = arith.constant 5 : index
    %c0_106 = arith.constant 0 : index
    %c0_107 = arith.constant 0 : index
    %58 = vector.load %arg1[%c2_104, %c5_105, %c0_106, %c0_107] : memref<12x12x8x128xf32, #tpu.memory_space<vmem>>, vector<1x1x8x128xf32>
    %59 = vector.shape_cast %58 : vector<1x1x8x128xf32> to vector<8x128xf32>
    %c2_108 = arith.constant 2 : index
    %c6_109 = arith.constant 6 : index
    %c0_110 = arith.constant 0 : index
    %c0_111 = arith.constant 0 : index
    %60 = vector.load %arg1[%c2_108, %c6_109, %c0_110, %c0_111] : memref<12x12x8x128xf32, #tpu.memory_space<vmem>>, vector<1x1x8x128xf32>
    %61 = vector.shape_cast %60 : vector<1x1x8x128xf32> to vector<8x128xf32>
    %c2_112 = arith.constant 2 : index
    %c7_113 = arith.constant 7 : index
    %c0_114 = arith.constant 0 : index
    %c0_115 = arith.constant 0 : index
    %62 = vector.load %arg1[%c2_112, %c7_113, %c0_114, %c0_115] : memref<12x12x8x128xf32, #tpu.memory_space<vmem>>, vector<1x1x8x128xf32>
    %63 = vector.shape_cast %62 : vector<1x1x8x128xf32> to vector<8x128xf32>
    %c2_116 = arith.constant 2 : index
    %c8_117 = arith.constant 8 : index
    %c0_118 = arith.constant 0 : index
    %c0_119 = arith.constant 0 : index
    %64 = vector.load %arg1[%c2_116, %c8_117, %c0_118, %c0_119] : memref<12x12x8x128xf32, #tpu.memory_space<vmem>>, vector<1x1x8x128xf32>
    %65 = vector.shape_cast %64 : vector<1x1x8x128xf32> to vector<8x128xf32>
    %c2_120 = arith.constant 2 : index
    %c9_121 = arith.constant 9 : index
    %c0_122 = arith.constant 0 : index
    %c0_123 = arith.constant 0 : index
    %66 = vector.load %arg1[%c2_120, %c9_121, %c0_122, %c0_123] : memref<12x12x8x128xf32, #tpu.memory_space<vmem>>, vector<1x1x8x128xf32>
    %67 = vector.shape_cast %66 : vector<1x1x8x128xf32> to vector<8x128xf32>
    %c2_124 = arith.constant 2 : index
    %c10_125 = arith.constant 10 : index
    %c0_126 = arith.constant 0 : index
    %c0_127 = arith.constant 0 : index
    %68 = vector.load %arg1[%c2_124, %c10_125, %c0_126, %c0_127] : memref<12x12x8x128xf32, #tpu.memory_space<vmem>>, vector<1x1x8x128xf32>
    %69 = vector.shape_cast %68 : vector<1x1x8x128xf32> to vector<8x128xf32>
    %c2_128 = arith.constant 2 : index
    %c11_129 = arith.constant 11 : index
    %c0_130 = arith.constant 0 : index
    %c0_131 = arith.constant 0 : index
    %70 = vector.load %arg1[%c2_128, %c11_129, %c0_130, %c0_131] : memref<12x12x8x128xf32, #tpu.memory_space<vmem>>, vector<1x1x8x128xf32>
    %71 = vector.shape_cast %70 : vector<1x1x8x128xf32> to vector<8x128xf32>
    %c3_132 = arith.constant 3 : index
    %c0_133 = arith.constant 0 : index
    %c0_134 = arith.constant 0 : index
    %c0_135 = arith.constant 0 : index
    %72 = vector.load %arg1[%c3_132, %c0_133, %c0_134, %c0_135] : memref<12x12x8x128xf32, #tpu.memory_space<vmem>>, vector<1x1x8x128xf32>
    %73 = vector.shape_cast %72 : vector<1x1x8x128xf32> to vector<8x128xf32>
    %c3_136 = arith.constant 3 : index
    %c1_137 = arith.constant 1 : index
    %c0_138 = arith.constant 0 : index
    %c0_139 = arith.constant 0 : index
    %74 = vector.load %arg1[%c3_136, %c1_137, %c0_138, %c0_139] : memref<12x12x8x128xf32, #tpu.memory_space<vmem>>, vector<1x1x8x128xf32>
    %75 = vector.shape_cast %74 : vector<1x1x8x128xf32> to vector<8x128xf32>
    %c3_140 = arith.constant 3 : index
    %c2_141 = arith.constant 2 : index
    %c0_142 = arith.constant 0 : index
    %c0_143 = arith.constant 0 : index
    %76 = vector.load %arg1[%c3_140, %c2_141, %c0_142, %c0_143] : memref<12x12x8x128xf32, #tpu.memory_space<vmem>>, vector<1x1x8x128xf32>
    %77 = vector.shape_cast %76 : vector<1x1x8x128xf32> to vector<8x128xf32>
    %c3_144 = arith.constant 3 : index
    %c3_145 = arith.constant 3 : index
    %c0_146 = arith.constant 0 : index
    %c0_147 = arith.constant 0 : index
    %78 = vector.load %arg1[%c3_144, %c3_145, %c0_146, %c0_147] : memref<12x12x8x128xf32, #tpu.memory_space<vmem>>, vector<1x1x8x128xf32>
    %79 = vector.shape_cast %78 : vector<1x1x8x128xf32> to vector<8x128xf32>
    %c3_148 = arith.constant 3 : index
    %c4_149 = arith.constant 4 : index
    %c0_150 = arith.constant 0 : index
    %c0_151 = arith.constant 0 : index
    %80 = vector.load %arg1[%c3_148, %c4_149, %c0_150, %c0_151] : memref<12x12x8x128xf32, #tpu.memory_space<vmem>>, vector<1x1x8x128xf32>
    %81 = vector.shape_cast %80 : vector<1x1x8x128xf32> to vector<8x128xf32>
    %c3_152 = arith.constant 3 : index
    %c5_153 = arith.constant 5 : index
    %c0_154 = arith.constant 0 : index
    %c0_155 = arith.constant 0 : index
    %82 = vector.load %arg1[%c3_152, %c5_153, %c0_154, %c0_155] : memref<12x12x8x128xf32, #tpu.memory_space<vmem>>, vector<1x1x8x128xf32>
    %83 = vector.shape_cast %82 : vector<1x1x8x128xf32> to vector<8x128xf32>
    %c3_156 = arith.constant 3 : index
    %c6_157 = arith.constant 6 : index
    %c0_158 = arith.constant 0 : index
    %c0_159 = arith.constant 0 : index
    %84 = vector.load %arg1[%c3_156, %c6_157, %c0_158, %c0_159] : memref<12x12x8x128xf32, #tpu.memory_space<vmem>>, vector<1x1x8x128xf32>
    %85 = vector.shape_cast %84 : vector<1x1x8x128xf32> to vector<8x128xf32>
    %c3_160 = arith.constant 3 : index
    %c7_161 = arith.constant 7 : index
    %c0_162 = arith.constant 0 : index
    %c0_163 = arith.constant 0 : index
    %86 = vector.load %arg1[%c3_160, %c7_161, %c0_162, %c0_163] : memref<12x12x8x128xf32, #tpu.memory_space<vmem>>, vector<1x1x8x128xf32>
    %87 = vector.shape_cast %86 : vector<1x1x8x128xf32> to vector<8x128xf32>
    %c3_164 = arith.constant 3 : index
    %c8_165 = arith.constant 8 : index
    %c0_166 = arith.constant 0 : index
    %c0_167 = arith.constant 0 : index
    %88 = vector.load %arg1[%c3_164, %c8_165, %c0_166, %c0_167] : memref<12x12x8x128xf32, #tpu.memory_space<vmem>>, vector<1x1x8x128xf32>
    %89 = vector.shape_cast %88 : vector<1x1x8x128xf32> to vector<8x128xf32>
    %c3_168 = arith.constant 3 : index
    %c9_169 = arith.constant 9 : index
    %c0_170 = arith.constant 0 : index
    %c0_171 = arith.constant 0 : index
    %90 = vector.load %arg1[%c3_168, %c9_169, %c0_170, %c0_171] : memref<12x12x8x128xf32, #tpu.memory_space<vmem>>, vector<1x1x8x128xf32>
    %91 = vector.shape_cast %90 : vector<1x1x8x128xf32> to vector<8x128xf32>
    %c3_172 = arith.constant 3 : index
    %c10_173 = arith.constant 10 : index
    %c0_174 = arith.constant 0 : index
    %c0_175 = arith.constant 0 : index
    %92 = vector.load %arg1[%c3_172, %c10_173, %c0_174, %c0_175] : memref<12x12x8x128xf32, #tpu.memory_space<vmem>>, vector<1x1x8x128xf32>
    %93 = vector.shape_cast %92 : vector<1x1x8x128xf32> to vector<8x128xf32>
    %c3_176 = arith.constant 3 : index
    %c11_177 = arith.constant 11 : index
    %c0_178 = arith.constant 0 : index
    %c0_179 = arith.constant 0 : index
    %94 = vector.load %arg1[%c3_176, %c11_177, %c0_178, %c0_179] : memref<12x12x8x128xf32, #tpu.memory_space<vmem>>, vector<1x1x8x128xf32>
    %95 = vector.shape_cast %94 : vector<1x1x8x128xf32> to vector<8x128xf32>
    %c4_180 = arith.constant 4 : index
    %c0_181 = arith.constant 0 : index
    %c0_182 = arith.constant 0 : index
    %c0_183 = arith.constant 0 : index
    %96 = vector.load %arg1[%c4_180, %c0_181, %c0_182, %c0_183] : memref<12x12x8x128xf32, #tpu.memory_space<vmem>>, vector<1x1x8x128xf32>
    %97 = vector.shape_cast %96 : vector<1x1x8x128xf32> to vector<8x128xf32>
    %c4_184 = arith.constant 4 : index
    %c1_185 = arith.constant 1 : index
    %c0_186 = arith.constant 0 : index
    %c0_187 = arith.constant 0 : index
    %98 = vector.load %arg1[%c4_184, %c1_185, %c0_186, %c0_187] : memref<12x12x8x128xf32, #tpu.memory_space<vmem>>, vector<1x1x8x128xf32>
    %99 = vector.shape_cast %98 : vector<1x1x8x128xf32> to vector<8x128xf32>
    %c4_188 = arith.constant 4 : index
    %c2_189 = arith.constant 2 : index
    %c0_190 = arith.constant 0 : index
    %c0_191 = arith.constant 0 : index
    %100 = vector.load %arg1[%c4_188, %c2_189, %c0_190, %c0_191] : memref<12x12x8x128xf32, #tpu.memory_space<vmem>>, vector<1x1x8x128xf32>
    %101 = vector.shape_cast %100 : vector<1x1x8x128xf32> to vector<8x128xf32>
    %c4_192 = arith.constant 4 : index
    %c3_193 = arith.constant 3 : index
    %c0_194 = arith.constant 0 : index
    %c0_195 = arith.constant 0 : index
    %102 = vector.load %arg1[%c4_192, %c3_193, %c0_194, %c0_195] : memref<12x12x8x128xf32, #tpu.memory_space<vmem>>, vector<1x1x8x128xf32>
    %103 = vector.shape_cast %102 : vector<1x1x8x128xf32> to vector<8x128xf32>
    %c4_196 = arith.constant 4 : index
    %c4_197 = arith.constant 4 : index
    %c0_198 = arith.constant 0 : index
    %c0_199 = arith.constant 0 : index
    %104 = vector.load %arg1[%c4_196, %c4_197, %c0_198, %c0_199] : memref<12x12x8x128xf32, #tpu.memory_space<vmem>>, vector<1x1x8x128xf32>
    %105 = vector.shape_cast %104 : vector<1x1x8x128xf32> to vector<8x128xf32>
    %c4_200 = arith.constant 4 : index
    %c5_201 = arith.constant 5 : index
    %c0_202 = arith.constant 0 : index
    %c0_203 = arith.constant 0 : index
    %106 = vector.load %arg1[%c4_200, %c5_201, %c0_202, %c0_203] : memref<12x12x8x128xf32, #tpu.memory_space<vmem>>, vector<1x1x8x128xf32>
    %107 = vector.shape_cast %106 : vector<1x1x8x128xf32> to vector<8x128xf32>
    %c4_204 = arith.constant 4 : index
    %c6_205 = arith.constant 6 : index
    %c0_206 = arith.constant 0 : index
    %c0_207 = arith.constant 0 : index
    %108 = vector.load %arg1[%c4_204, %c6_205, %c0_206, %c0_207] : memref<12x12x8x128xf32, #tpu.memory_space<vmem>>, vector<1x1x8x128xf32>
    %109 = vector.shape_cast %108 : vector<1x1x8x128xf32> to vector<8x128xf32>
    %c4_208 = arith.constant 4 : index
    %c7_209 = arith.constant 7 : index
    %c0_210 = arith.constant 0 : index
    %c0_211 = arith.constant 0 : index
    %110 = vector.load %arg1[%c4_208, %c7_209, %c0_210, %c0_211] : memref<12x12x8x128xf32, #tpu.memory_space<vmem>>, vector<1x1x8x128xf32>
    %111 = vector.shape_cast %110 : vector<1x1x8x128xf32> to vector<8x128xf32>
    %c4_212 = arith.constant 4 : index
    %c8_213 = arith.constant 8 : index
    %c0_214 = arith.constant 0 : index
    %c0_215 = arith.constant 0 : index
    %112 = vector.load %arg1[%c4_212, %c8_213, %c0_214, %c0_215] : memref<12x12x8x128xf32, #tpu.memory_space<vmem>>, vector<1x1x8x128xf32>
    %113 = vector.shape_cast %112 : vector<1x1x8x128xf32> to vector<8x128xf32>
    %c4_216 = arith.constant 4 : index
    %c9_217 = arith.constant 9 : index
    %c0_218 = arith.constant 0 : index
    %c0_219 = arith.constant 0 : index
    %114 = vector.load %arg1[%c4_216, %c9_217, %c0_218, %c0_219] : memref<12x12x8x128xf32, #tpu.memory_space<vmem>>, vector<1x1x8x128xf32>
    %115 = vector.shape_cast %114 : vector<1x1x8x128xf32> to vector<8x128xf32>
    %c4_220 = arith.constant 4 : index
    %c10_221 = arith.constant 10 : index
    %c0_222 = arith.constant 0 : index
    %c0_223 = arith.constant 0 : index
    %116 = vector.load %arg1[%c4_220, %c10_221, %c0_222, %c0_223] : memref<12x12x8x128xf32, #tpu.memory_space<vmem>>, vector<1x1x8x128xf32>
    %117 = vector.shape_cast %116 : vector<1x1x8x128xf32> to vector<8x128xf32>
    %c4_224 = arith.constant 4 : index
    %c11_225 = arith.constant 11 : index
    %c0_226 = arith.constant 0 : index
    %c0_227 = arith.constant 0 : index
    %118 = vector.load %arg1[%c4_224, %c11_225, %c0_226, %c0_227] : memref<12x12x8x128xf32, #tpu.memory_space<vmem>>, vector<1x1x8x128xf32>
    %119 = vector.shape_cast %118 : vector<1x1x8x128xf32> to vector<8x128xf32>
    %c5_228 = arith.constant 5 : index
    %c0_229 = arith.constant 0 : index
    %c0_230 = arith.constant 0 : index
    %c0_231 = arith.constant 0 : index
    %120 = vector.load %arg1[%c5_228, %c0_229, %c0_230, %c0_231] : memref<12x12x8x128xf32, #tpu.memory_space<vmem>>, vector<1x1x8x128xf32>
    %121 = vector.shape_cast %120 : vector<1x1x8x128xf32> to vector<8x128xf32>
    %c5_232 = arith.constant 5 : index
    %c1_233 = arith.constant 1 : index
    %c0_234 = arith.constant 0 : index
    %c0_235 = arith.constant 0 : index
    %122 = vector.load %arg1[%c5_232, %c1_233, %c0_234, %c0_235] : memref<12x12x8x128xf32, #tpu.memory_space<vmem>>, vector<1x1x8x128xf32>
    %123 = vector.shape_cast %122 : vector<1x1x8x128xf32> to vector<8x128xf32>
    %c5_236 = arith.constant 5 : index
    %c2_237 = arith.constant 2 : index
    %c0_238 = arith.constant 0 : index
    %c0_239 = arith.constant 0 : index
    %124 = vector.load %arg1[%c5_236, %c2_237, %c0_238, %c0_239] : memref<12x12x8x128xf32, #tpu.memory_space<vmem>>, vector<1x1x8x128xf32>
    %125 = vector.shape_cast %124 : vector<1x1x8x128xf32> to vector<8x128xf32>
    %c5_240 = arith.constant 5 : index
    %c3_241 = arith.constant 3 : index
    %c0_242 = arith.constant 0 : index
    %c0_243 = arith.constant 0 : index
    %126 = vector.load %arg1[%c5_240, %c3_241, %c0_242, %c0_243] : memref<12x12x8x128xf32, #tpu.memory_space<vmem>>, vector<1x1x8x128xf32>
    %127 = vector.shape_cast %126 : vector<1x1x8x128xf32> to vector<8x128xf32>
    %c5_244 = arith.constant 5 : index
    %c4_245 = arith.constant 4 : index
    %c0_246 = arith.constant 0 : index
    %c0_247 = arith.constant 0 : index
    %128 = vector.load %arg1[%c5_244, %c4_245, %c0_246, %c0_247] : memref<12x12x8x128xf32, #tpu.memory_space<vmem>>, vector<1x1x8x128xf32>
    %129 = vector.shape_cast %128 : vector<1x1x8x128xf32> to vector<8x128xf32>
    %c5_248 = arith.constant 5 : index
    %c5_249 = arith.constant 5 : index
    %c0_250 = arith.constant 0 : index
    %c0_251 = arith.constant 0 : index
    %130 = vector.load %arg1[%c5_248, %c5_249, %c0_250, %c0_251] : memref<12x12x8x128xf32, #tpu.memory_space<vmem>>, vector<1x1x8x128xf32>
    %131 = vector.shape_cast %130 : vector<1x1x8x128xf32> to vector<8x128xf32>
    %c5_252 = arith.constant 5 : index
    %c6_253 = arith.constant 6 : index
    %c0_254 = arith.constant 0 : index
    %c0_255 = arith.constant 0 : index
    %132 = vector.load %arg1[%c5_252, %c6_253, %c0_254, %c0_255] : memref<12x12x8x128xf32, #tpu.memory_space<vmem>>, vector<1x1x8x128xf32>
    %133 = vector.shape_cast %132 : vector<1x1x8x128xf32> to vector<8x128xf32>
    %c5_256 = arith.constant 5 : index
    %c7_257 = arith.constant 7 : index
    %c0_258 = arith.constant 0 : index
    %c0_259 = arith.constant 0 : index
    %134 = vector.load %arg1[%c5_256, %c7_257, %c0_258, %c0_259] : memref<12x12x8x128xf32, #tpu.memory_space<vmem>>, vector<1x1x8x128xf32>
    %135 = vector.shape_cast %134 : vector<1x1x8x128xf32> to vector<8x128xf32>
    %c5_260 = arith.constant 5 : index
    %c8_261 = arith.constant 8 : index
    %c0_262 = arith.constant 0 : index
    %c0_263 = arith.constant 0 : index
    %136 = vector.load %arg1[%c5_260, %c8_261, %c0_262, %c0_263] : memref<12x12x8x128xf32, #tpu.memory_space<vmem>>, vector<1x1x8x128xf32>
    %137 = vector.shape_cast %136 : vector<1x1x8x128xf32> to vector<8x128xf32>
    %c5_264 = arith.constant 5 : index
    %c9_265 = arith.constant 9 : index
    %c0_266 = arith.constant 0 : index
    %c0_267 = arith.constant 0 : index
    %138 = vector.load %arg1[%c5_264, %c9_265, %c0_266, %c0_267] : memref<12x12x8x128xf32, #tpu.memory_space<vmem>>, vector<1x1x8x128xf32>
    %139 = vector.shape_cast %138 : vector<1x1x8x128xf32> to vector<8x128xf32>
    %c5_268 = arith.constant 5 : index
    %c10_269 = arith.constant 10 : index
    %c0_270 = arith.constant 0 : index
    %c0_271 = arith.constant 0 : index
    %140 = vector.load %arg1[%c5_268, %c10_269, %c0_270, %c0_271] : memref<12x12x8x128xf32, #tpu.memory_space<vmem>>, vector<1x1x8x128xf32>
    %141 = vector.shape_cast %140 : vector<1x1x8x128xf32> to vector<8x128xf32>
    %c5_272 = arith.constant 5 : index
    %c11_273 = arith.constant 11 : index
    %c0_274 = arith.constant 0 : index
    %c0_275 = arith.constant 0 : index
    %142 = vector.load %arg1[%c5_272, %c11_273, %c0_274, %c0_275] : memref<12x12x8x128xf32, #tpu.memory_space<vmem>>, vector<1x1x8x128xf32>
    %143 = vector.shape_cast %142 : vector<1x1x8x128xf32> to vector<8x128xf32>
    %c6_276 = arith.constant 6 : index
    %c0_277 = arith.constant 0 : index
    %c0_278 = arith.constant 0 : index
    %c0_279 = arith.constant 0 : index
    %144 = vector.load %arg1[%c6_276, %c0_277, %c0_278, %c0_279] : memref<12x12x8x128xf32, #tpu.memory_space<vmem>>, vector<1x1x8x128xf32>
    %145 = vector.shape_cast %144 : vector<1x1x8x128xf32> to vector<8x128xf32>
    %c6_280 = arith.constant 6 : index
    %c1_281 = arith.constant 1 : index
    %c0_282 = arith.constant 0 : index
    %c0_283 = arith.constant 0 : index
    %146 = vector.load %arg1[%c6_280, %c1_281, %c0_282, %c0_283] : memref<12x12x8x128xf32, #tpu.memory_space<vmem>>, vector<1x1x8x128xf32>
    %147 = vector.shape_cast %146 : vector<1x1x8x128xf32> to vector<8x128xf32>
    %c6_284 = arith.constant 6 : index
    %c2_285 = arith.constant 2 : index
    %c0_286 = arith.constant 0 : index
    %c0_287 = arith.constant 0 : index
    %148 = vector.load %arg1[%c6_284, %c2_285, %c0_286, %c0_287] : memref<12x12x8x128xf32, #tpu.memory_space<vmem>>, vector<1x1x8x128xf32>
    %149 = vector.shape_cast %148 : vector<1x1x8x128xf32> to vector<8x128xf32>
    %c6_288 = arith.constant 6 : index
    %c3_289 = arith.constant 3 : index
    %c0_290 = arith.constant 0 : index
    %c0_291 = arith.constant 0 : index
    %150 = vector.load %arg1[%c6_288, %c3_289, %c0_290, %c0_291] : memref<12x12x8x128xf32, #tpu.memory_space<vmem>>, vector<1x1x8x128xf32>
    %151 = vector.shape_cast %150 : vector<1x1x8x128xf32> to vector<8x128xf32>
    %c6_292 = arith.constant 6 : index
    %c4_293 = arith.constant 4 : index
    %c0_294 = arith.constant 0 : index
    %c0_295 = arith.constant 0 : index
    %152 = vector.load %arg1[%c6_292, %c4_293, %c0_294, %c0_295] : memref<12x12x8x128xf32, #tpu.memory_space<vmem>>, vector<1x1x8x128xf32>
    %153 = vector.shape_cast %152 : vector<1x1x8x128xf32> to vector<8x128xf32>
    %c6_296 = arith.constant 6 : index
    %c5_297 = arith.constant 5 : index
    %c0_298 = arith.constant 0 : index
    %c0_299 = arith.constant 0 : index
    %154 = vector.load %arg1[%c6_296, %c5_297, %c0_298, %c0_299] : memref<12x12x8x128xf32, #tpu.memory_space<vmem>>, vector<1x1x8x128xf32>
    %155 = vector.shape_cast %154 : vector<1x1x8x128xf32> to vector<8x128xf32>
    %c6_300 = arith.constant 6 : index
    %c6_301 = arith.constant 6 : index
    %c0_302 = arith.constant 0 : index
    %c0_303 = arith.constant 0 : index
    %156 = vector.load %arg1[%c6_300, %c6_301, %c0_302, %c0_303] : memref<12x12x8x128xf32, #tpu.memory_space<vmem>>, vector<1x1x8x128xf32>
    %157 = vector.shape_cast %156 : vector<1x1x8x128xf32> to vector<8x128xf32>
    %c6_304 = arith.constant 6 : index
    %c7_305 = arith.constant 7 : index
    %c0_306 = arith.constant 0 : index
    %c0_307 = arith.constant 0 : index
    %158 = vector.load %arg1[%c6_304, %c7_305, %c0_306, %c0_307] : memref<12x12x8x128xf32, #tpu.memory_space<vmem>>, vector<1x1x8x128xf32>
    %159 = vector.shape_cast %158 : vector<1x1x8x128xf32> to vector<8x128xf32>
    %c6_308 = arith.constant 6 : index
    %c8_309 = arith.constant 8 : index
    %c0_310 = arith.constant 0 : index
    %c0_311 = arith.constant 0 : index
    %160 = vector.load %arg1[%c6_308, %c8_309, %c0_310, %c0_311] : memref<12x12x8x128xf32, #tpu.memory_space<vmem>>, vector<1x1x8x128xf32>
    %161 = vector.shape_cast %160 : vector<1x1x8x128xf32> to vector<8x128xf32>
    %c6_312 = arith.constant 6 : index
    %c9_313 = arith.constant 9 : index
    %c0_314 = arith.constant 0 : index
    %c0_315 = arith.constant 0 : index
    %162 = vector.load %arg1[%c6_312, %c9_313, %c0_314, %c0_315] : memref<12x12x8x128xf32, #tpu.memory_space<vmem>>, vector<1x1x8x128xf32>
    %163 = vector.shape_cast %162 : vector<1x1x8x128xf32> to vector<8x128xf32>
    %c6_316 = arith.constant 6 : index
    %c10_317 = arith.constant 10 : index
    %c0_318 = arith.constant 0 : index
    %c0_319 = arith.constant 0 : index
    %164 = vector.load %arg1[%c6_316, %c10_317, %c0_318, %c0_319] : memref<12x12x8x128xf32, #tpu.memory_space<vmem>>, vector<1x1x8x128xf32>
    %165 = vector.shape_cast %164 : vector<1x1x8x128xf32> to vector<8x128xf32>
    %c6_320 = arith.constant 6 : index
    %c11_321 = arith.constant 11 : index
    %c0_322 = arith.constant 0 : index
    %c0_323 = arith.constant 0 : index
    %166 = vector.load %arg1[%c6_320, %c11_321, %c0_322, %c0_323] : memref<12x12x8x128xf32, #tpu.memory_space<vmem>>, vector<1x1x8x128xf32>
    %167 = vector.shape_cast %166 : vector<1x1x8x128xf32> to vector<8x128xf32>
    %c7_324 = arith.constant 7 : index
    %c0_325 = arith.constant 0 : index
    %c0_326 = arith.constant 0 : index
    %c0_327 = arith.constant 0 : index
    %168 = vector.load %arg1[%c7_324, %c0_325, %c0_326, %c0_327] : memref<12x12x8x128xf32, #tpu.memory_space<vmem>>, vector<1x1x8x128xf32>
    %169 = vector.shape_cast %168 : vector<1x1x8x128xf32> to vector<8x128xf32>
    %c7_328 = arith.constant 7 : index
    %c1_329 = arith.constant 1 : index
    %c0_330 = arith.constant 0 : index
    %c0_331 = arith.constant 0 : index
    %170 = vector.load %arg1[%c7_328, %c1_329, %c0_330, %c0_331] : memref<12x12x8x128xf32, #tpu.memory_space<vmem>>, vector<1x1x8x128xf32>
    %171 = vector.shape_cast %170 : vector<1x1x8x128xf32> to vector<8x128xf32>
    %c7_332 = arith.constant 7 : index
    %c2_333 = arith.constant 2 : index
    %c0_334 = arith.constant 0 : index
    %c0_335 = arith.constant 0 : index
    %172 = vector.load %arg1[%c7_332, %c2_333, %c0_334, %c0_335] : memref<12x12x8x128xf32, #tpu.memory_space<vmem>>, vector<1x1x8x128xf32>
    %173 = vector.shape_cast %172 : vector<1x1x8x128xf32> to vector<8x128xf32>
    %c7_336 = arith.constant 7 : index
    %c3_337 = arith.constant 3 : index
    %c0_338 = arith.constant 0 : index
    %c0_339 = arith.constant 0 : index
    %174 = vector.load %arg1[%c7_336, %c3_337, %c0_338, %c0_339] : memref<12x12x8x128xf32, #tpu.memory_space<vmem>>, vector<1x1x8x128xf32>
    %175 = vector.shape_cast %174 : vector<1x1x8x128xf32> to vector<8x128xf32>
    %c7_340 = arith.constant 7 : index
    %c4_341 = arith.constant 4 : index
    %c0_342 = arith.constant 0 : index
    %c0_343 = arith.constant 0 : index
    %176 = vector.load %arg1[%c7_340, %c4_341, %c0_342, %c0_343] : memref<12x12x8x128xf32, #tpu.memory_space<vmem>>, vector<1x1x8x128xf32>
    %177 = vector.shape_cast %176 : vector<1x1x8x128xf32> to vector<8x128xf32>
    %c7_344 = arith.constant 7 : index
    %c5_345 = arith.constant 5 : index
    %c0_346 = arith.constant 0 : index
    %c0_347 = arith.constant 0 : index
    %178 = vector.load %arg1[%c7_344, %c5_345, %c0_346, %c0_347] : memref<12x12x8x128xf32, #tpu.memory_space<vmem>>, vector<1x1x8x128xf32>
    %179 = vector.shape_cast %178 : vector<1x1x8x128xf32> to vector<8x128xf32>
    %c7_348 = arith.constant 7 : index
    %c6_349 = arith.constant 6 : index
    %c0_350 = arith.constant 0 : index
    %c0_351 = arith.constant 0 : index
    %180 = vector.load %arg1[%c7_348, %c6_349, %c0_350, %c0_351] : memref<12x12x8x128xf32, #tpu.memory_space<vmem>>, vector<1x1x8x128xf32>
    %181 = vector.shape_cast %180 : vector<1x1x8x128xf32> to vector<8x128xf32>
    %c7_352 = arith.constant 7 : index
    %c7_353 = arith.constant 7 : index
    %c0_354 = arith.constant 0 : index
    %c0_355 = arith.constant 0 : index
    %182 = vector.load %arg1[%c7_352, %c7_353, %c0_354, %c0_355] : memref<12x12x8x128xf32, #tpu.memory_space<vmem>>, vector<1x1x8x128xf32>
    %183 = vector.shape_cast %182 : vector<1x1x8x128xf32> to vector<8x128xf32>
    %c7_356 = arith.constant 7 : index
    %c8_357 = arith.constant 8 : index
    %c0_358 = arith.constant 0 : index
    %c0_359 = arith.constant 0 : index
    %184 = vector.load %arg1[%c7_356, %c8_357, %c0_358, %c0_359] : memref<12x12x8x128xf32, #tpu.memory_space<vmem>>, vector<1x1x8x128xf32>
    %185 = vector.shape_cast %184 : vector<1x1x8x128xf32> to vector<8x128xf32>
    %c7_360 = arith.constant 7 : index
    %c9_361 = arith.constant 9 : index
    %c0_362 = arith.constant 0 : index
    %c0_363 = arith.constant 0 : index
    %186 = vector.load %arg1[%c7_360, %c9_361, %c0_362, %c0_363] : memref<12x12x8x128xf32, #tpu.memory_space<vmem>>, vector<1x1x8x128xf32>
    %187 = vector.shape_cast %186 : vector<1x1x8x128xf32> to vector<8x128xf32>
    %c7_364 = arith.constant 7 : index
    %c10_365 = arith.constant 10 : index
    %c0_366 = arith.constant 0 : index
    %c0_367 = arith.constant 0 : index
    %188 = vector.load %arg1[%c7_364, %c10_365, %c0_366, %c0_367] : memref<12x12x8x128xf32, #tpu.memory_space<vmem>>, vector<1x1x8x128xf32>
    %189 = vector.shape_cast %188 : vector<1x1x8x128xf32> to vector<8x128xf32>
    %c7_368 = arith.constant 7 : index
    %c11_369 = arith.constant 11 : index
    %c0_370 = arith.constant 0 : index
    %c0_371 = arith.constant 0 : index
    %190 = vector.load %arg1[%c7_368, %c11_369, %c0_370, %c0_371] : memref<12x12x8x128xf32, #tpu.memory_space<vmem>>, vector<1x1x8x128xf32>
    %191 = vector.shape_cast %190 : vector<1x1x8x128xf32> to vector<8x128xf32>
    %c8_372 = arith.constant 8 : index
    %c0_373 = arith.constant 0 : index
    %c0_374 = arith.constant 0 : index
    %c0_375 = arith.constant 0 : index
    %192 = vector.load %arg1[%c8_372, %c0_373, %c0_374, %c0_375] : memref<12x12x8x128xf32, #tpu.memory_space<vmem>>, vector<1x1x8x128xf32>
    %193 = vector.shape_cast %192 : vector<1x1x8x128xf32> to vector<8x128xf32>
    %c8_376 = arith.constant 8 : index
    %c1_377 = arith.constant 1 : index
    %c0_378 = arith.constant 0 : index
    %c0_379 = arith.constant 0 : index
    %194 = vector.load %arg1[%c8_376, %c1_377, %c0_378, %c0_379] : memref<12x12x8x128xf32, #tpu.memory_space<vmem>>, vector<1x1x8x128xf32>
    %195 = vector.shape_cast %194 : vector<1x1x8x128xf32> to vector<8x128xf32>
    %c8_380 = arith.constant 8 : index
    %c2_381 = arith.constant 2 : index
    %c0_382 = arith.constant 0 : index
    %c0_383 = arith.constant 0 : index
    %196 = vector.load %arg1[%c8_380, %c2_381, %c0_382, %c0_383] : memref<12x12x8x128xf32, #tpu.memory_space<vmem>>, vector<1x1x8x128xf32>
    %197 = vector.shape_cast %196 : vector<1x1x8x128xf32> to vector<8x128xf32>
    %c8_384 = arith.constant 8 : index
    %c3_385 = arith.constant 3 : index
    %c0_386 = arith.constant 0 : index
    %c0_387 = arith.constant 0 : index
    %198 = vector.load %arg1[%c8_384, %c3_385, %c0_386, %c0_387] : memref<12x12x8x128xf32, #tpu.memory_space<vmem>>, vector<1x1x8x128xf32>
    %199 = vector.shape_cast %198 : vector<1x1x8x128xf32> to vector<8x128xf32>
    %c8_388 = arith.constant 8 : index
    %c4_389 = arith.constant 4 : index
    %c0_390 = arith.constant 0 : index
    %c0_391 = arith.constant 0 : index
    %200 = vector.load %arg1[%c8_388, %c4_389, %c0_390, %c0_391] : memref<12x12x8x128xf32, #tpu.memory_space<vmem>>, vector<1x1x8x128xf32>
    %201 = vector.shape_cast %200 : vector<1x1x8x128xf32> to vector<8x128xf32>
    %c8_392 = arith.constant 8 : index
    %c5_393 = arith.constant 5 : index
    %c0_394 = arith.constant 0 : index
    %c0_395 = arith.constant 0 : index
    %202 = vector.load %arg1[%c8_392, %c5_393, %c0_394, %c0_395] : memref<12x12x8x128xf32, #tpu.memory_space<vmem>>, vector<1x1x8x128xf32>
    %203 = vector.shape_cast %202 : vector<1x1x8x128xf32> to vector<8x128xf32>
    %c8_396 = arith.constant 8 : index
    %c6_397 = arith.constant 6 : index
    %c0_398 = arith.constant 0 : index
    %c0_399 = arith.constant 0 : index
    %204 = vector.load %arg1[%c8_396, %c6_397, %c0_398, %c0_399] : memref<12x12x8x128xf32, #tpu.memory_space<vmem>>, vector<1x1x8x128xf32>
    %205 = vector.shape_cast %204 : vector<1x1x8x128xf32> to vector<8x128xf32>
    %c8_400 = arith.constant 8 : index
    %c7_401 = arith.constant 7 : index
    %c0_402 = arith.constant 0 : index
    %c0_403 = arith.constant 0 : index
    %206 = vector.load %arg1[%c8_400, %c7_401, %c0_402, %c0_403] : memref<12x12x8x128xf32, #tpu.memory_space<vmem>>, vector<1x1x8x128xf32>
    %207 = vector.shape_cast %206 : vector<1x1x8x128xf32> to vector<8x128xf32>
    %c8_404 = arith.constant 8 : index
    %c8_405 = arith.constant 8 : index
    %c0_406 = arith.constant 0 : index
    %c0_407 = arith.constant 0 : index
    %208 = vector.load %arg1[%c8_404, %c8_405, %c0_406, %c0_407] : memref<12x12x8x128xf32, #tpu.memory_space<vmem>>, vector<1x1x8x128xf32>
    %209 = vector.shape_cast %208 : vector<1x1x8x128xf32> to vector<8x128xf32>
    %c8_408 = arith.constant 8 : index
    %c9_409 = arith.constant 9 : index
    %c0_410 = arith.constant 0 : index
    %c0_411 = arith.constant 0 : index
    %210 = vector.load %arg1[%c8_408, %c9_409, %c0_410, %c0_411] : memref<12x12x8x128xf32, #tpu.memory_space<vmem>>, vector<1x1x8x128xf32>
    %211 = vector.shape_cast %210 : vector<1x1x8x128xf32> to vector<8x128xf32>
    %c8_412 = arith.constant 8 : index
    %c10_413 = arith.constant 10 : index
    %c0_414 = arith.constant 0 : index
    %c0_415 = arith.constant 0 : index
    %212 = vector.load %arg1[%c8_412, %c10_413, %c0_414, %c0_415] : memref<12x12x8x128xf32, #tpu.memory_space<vmem>>, vector<1x1x8x128xf32>
    %213 = vector.shape_cast %212 : vector<1x1x8x128xf32> to vector<8x128xf32>
    %c8_416 = arith.constant 8 : index
    %c11_417 = arith.constant 11 : index
    %c0_418 = arith.constant 0 : index
    %c0_419 = arith.constant 0 : index
    %214 = vector.load %arg1[%c8_416, %c11_417, %c0_418, %c0_419] : memref<12x12x8x128xf32, #tpu.memory_space<vmem>>, vector<1x1x8x128xf32>
    %215 = vector.shape_cast %214 : vector<1x1x8x128xf32> to vector<8x128xf32>
    %c9_420 = arith.constant 9 : index
    %c0_421 = arith.constant 0 : index
    %c0_422 = arith.constant 0 : index
    %c0_423 = arith.constant 0 : index
    %216 = vector.load %arg1[%c9_420, %c0_421, %c0_422, %c0_423] : memref<12x12x8x128xf32, #tpu.memory_space<vmem>>, vector<1x1x8x128xf32>
    %217 = vector.shape_cast %216 : vector<1x1x8x128xf32> to vector<8x128xf32>
    %c9_424 = arith.constant 9 : index
    %c1_425 = arith.constant 1 : index
    %c0_426 = arith.constant 0 : index
    %c0_427 = arith.constant 0 : index
    %218 = vector.load %arg1[%c9_424, %c1_425, %c0_426, %c0_427] : memref<12x12x8x128xf32, #tpu.memory_space<vmem>>, vector<1x1x8x128xf32>
    %219 = vector.shape_cast %218 : vector<1x1x8x128xf32> to vector<8x128xf32>
    %c9_428 = arith.constant 9 : index
    %c2_429 = arith.constant 2 : index
    %c0_430 = arith.constant 0 : index
    %c0_431 = arith.constant 0 : index
    %220 = vector.load %arg1[%c9_428, %c2_429, %c0_430, %c0_431] : memref<12x12x8x128xf32, #tpu.memory_space<vmem>>, vector<1x1x8x128xf32>
    %221 = vector.shape_cast %220 : vector<1x1x8x128xf32> to vector<8x128xf32>
    %c9_432 = arith.constant 9 : index
    %c3_433 = arith.constant 3 : index
    %c0_434 = arith.constant 0 : index
    %c0_435 = arith.constant 0 : index
    %222 = vector.load %arg1[%c9_432, %c3_433, %c0_434, %c0_435] : memref<12x12x8x128xf32, #tpu.memory_space<vmem>>, vector<1x1x8x128xf32>
    %223 = vector.shape_cast %222 : vector<1x1x8x128xf32> to vector<8x128xf32>
    %c9_436 = arith.constant 9 : index
    %c4_437 = arith.constant 4 : index
    %c0_438 = arith.constant 0 : index
    %c0_439 = arith.constant 0 : index
    %224 = vector.load %arg1[%c9_436, %c4_437, %c0_438, %c0_439] : memref<12x12x8x128xf32, #tpu.memory_space<vmem>>, vector<1x1x8x128xf32>
    %225 = vector.shape_cast %224 : vector<1x1x8x128xf32> to vector<8x128xf32>
    %c9_440 = arith.constant 9 : index
    %c5_441 = arith.constant 5 : index
    %c0_442 = arith.constant 0 : index
    %c0_443 = arith.constant 0 : index
    %226 = vector.load %arg1[%c9_440, %c5_441, %c0_442, %c0_443] : memref<12x12x8x128xf32, #tpu.memory_space<vmem>>, vector<1x1x8x128xf32>
    %227 = vector.shape_cast %226 : vector<1x1x8x128xf32> to vector<8x128xf32>
    %c9_444 = arith.constant 9 : index
    %c6_445 = arith.constant 6 : index
    %c0_446 = arith.constant 0 : index
    %c0_447 = arith.constant 0 : index
    %228 = vector.load %arg1[%c9_444, %c6_445, %c0_446, %c0_447] : memref<12x12x8x128xf32, #tpu.memory_space<vmem>>, vector<1x1x8x128xf32>
    %229 = vector.shape_cast %228 : vector<1x1x8x128xf32> to vector<8x128xf32>
    %c9_448 = arith.constant 9 : index
    %c7_449 = arith.constant 7 : index
    %c0_450 = arith.constant 0 : index
    %c0_451 = arith.constant 0 : index
    %230 = vector.load %arg1[%c9_448, %c7_449, %c0_450, %c0_451] : memref<12x12x8x128xf32, #tpu.memory_space<vmem>>, vector<1x1x8x128xf32>
    %231 = vector.shape_cast %230 : vector<1x1x8x128xf32> to vector<8x128xf32>
    %c9_452 = arith.constant 9 : index
    %c8_453 = arith.constant 8 : index
    %c0_454 = arith.constant 0 : index
    %c0_455 = arith.constant 0 : index
    %232 = vector.load %arg1[%c9_452, %c8_453, %c0_454, %c0_455] : memref<12x12x8x128xf32, #tpu.memory_space<vmem>>, vector<1x1x8x128xf32>
    %233 = vector.shape_cast %232 : vector<1x1x8x128xf32> to vector<8x128xf32>
    %c9_456 = arith.constant 9 : index
    %c9_457 = arith.constant 9 : index
    %c0_458 = arith.constant 0 : index
    %c0_459 = arith.constant 0 : index
    %234 = vector.load %arg1[%c9_456, %c9_457, %c0_458, %c0_459] : memref<12x12x8x128xf32, #tpu.memory_space<vmem>>, vector<1x1x8x128xf32>
    %235 = vector.shape_cast %234 : vector<1x1x8x128xf32> to vector<8x128xf32>
    %c9_460 = arith.constant 9 : index
    %c10_461 = arith.constant 10 : index
    %c0_462 = arith.constant 0 : index
    %c0_463 = arith.constant 0 : index
    %236 = vector.load %arg1[%c9_460, %c10_461, %c0_462, %c0_463] : memref<12x12x8x128xf32, #tpu.memory_space<vmem>>, vector<1x1x8x128xf32>
    %237 = vector.shape_cast %236 : vector<1x1x8x128xf32> to vector<8x128xf32>
    %c9_464 = arith.constant 9 : index
    %c11_465 = arith.constant 11 : index
    %c0_466 = arith.constant 0 : index
    %c0_467 = arith.constant 0 : index
    %238 = vector.load %arg1[%c9_464, %c11_465, %c0_466, %c0_467] : memref<12x12x8x128xf32, #tpu.memory_space<vmem>>, vector<1x1x8x128xf32>
    %239 = vector.shape_cast %238 : vector<1x1x8x128xf32> to vector<8x128xf32>
    %c10_468 = arith.constant 10 : index
    %c0_469 = arith.constant 0 : index
    %c0_470 = arith.constant 0 : index
    %c0_471 = arith.constant 0 : index
    %240 = vector.load %arg1[%c10_468, %c0_469, %c0_470, %c0_471] : memref<12x12x8x128xf32, #tpu.memory_space<vmem>>, vector<1x1x8x128xf32>
    %241 = vector.shape_cast %240 : vector<1x1x8x128xf32> to vector<8x128xf32>
    %c10_472 = arith.constant 10 : index
    %c1_473 = arith.constant 1 : index
    %c0_474 = arith.constant 0 : index
    %c0_475 = arith.constant 0 : index
    %242 = vector.load %arg1[%c10_472, %c1_473, %c0_474, %c0_475] : memref<12x12x8x128xf32, #tpu.memory_space<vmem>>, vector<1x1x8x128xf32>
    %243 = vector.shape_cast %242 : vector<1x1x8x128xf32> to vector<8x128xf32>
    %c10_476 = arith.constant 10 : index
    %c2_477 = arith.constant 2 : index
    %c0_478 = arith.constant 0 : index
    %c0_479 = arith.constant 0 : index
    %244 = vector.load %arg1[%c10_476, %c2_477, %c0_478, %c0_479] : memref<12x12x8x128xf32, #tpu.memory_space<vmem>>, vector<1x1x8x128xf32>
    %245 = vector.shape_cast %244 : vector<1x1x8x128xf32> to vector<8x128xf32>
    %c10_480 = arith.constant 10 : index
    %c3_481 = arith.constant 3 : index
    %c0_482 = arith.constant 0 : index
    %c0_483 = arith.constant 0 : index
    %246 = vector.load %arg1[%c10_480, %c3_481, %c0_482, %c0_483] : memref<12x12x8x128xf32, #tpu.memory_space<vmem>>, vector<1x1x8x128xf32>
    %247 = vector.shape_cast %246 : vector<1x1x8x128xf32> to vector<8x128xf32>
    %c10_484 = arith.constant 10 : index
    %c4_485 = arith.constant 4 : index
    %c0_486 = arith.constant 0 : index
    %c0_487 = arith.constant 0 : index
    %248 = vector.load %arg1[%c10_484, %c4_485, %c0_486, %c0_487] : memref<12x12x8x128xf32, #tpu.memory_space<vmem>>, vector<1x1x8x128xf32>
    %249 = vector.shape_cast %248 : vector<1x1x8x128xf32> to vector<8x128xf32>
    %c10_488 = arith.constant 10 : index
    %c5_489 = arith.constant 5 : index
    %c0_490 = arith.constant 0 : index
    %c0_491 = arith.constant 0 : index
    %250 = vector.load %arg1[%c10_488, %c5_489, %c0_490, %c0_491] : memref<12x12x8x128xf32, #tpu.memory_space<vmem>>, vector<1x1x8x128xf32>
    %251 = vector.shape_cast %250 : vector<1x1x8x128xf32> to vector<8x128xf32>
    %c10_492 = arith.constant 10 : index
    %c6_493 = arith.constant 6 : index
    %c0_494 = arith.constant 0 : index
    %c0_495 = arith.constant 0 : index
    %252 = vector.load %arg1[%c10_492, %c6_493, %c0_494, %c0_495] : memref<12x12x8x128xf32, #tpu.memory_space<vmem>>, vector<1x1x8x128xf32>
    %253 = vector.shape_cast %252 : vector<1x1x8x128xf32> to vector<8x128xf32>
    %c10_496 = arith.constant 10 : index
    %c7_497 = arith.constant 7 : index
    %c0_498 = arith.constant 0 : index
    %c0_499 = arith.constant 0 : index
    %254 = vector.load %arg1[%c10_496, %c7_497, %c0_498, %c0_499] : memref<12x12x8x128xf32, #tpu.memory_space<vmem>>, vector<1x1x8x128xf32>
    %255 = vector.shape_cast %254 : vector<1x1x8x128xf32> to vector<8x128xf32>
    %c10_500 = arith.constant 10 : index
    %c8_501 = arith.constant 8 : index
    %c0_502 = arith.constant 0 : index
    %c0_503 = arith.constant 0 : index
    %256 = vector.load %arg1[%c10_500, %c8_501, %c0_502, %c0_503] : memref<12x12x8x128xf32, #tpu.memory_space<vmem>>, vector<1x1x8x128xf32>
    %257 = vector.shape_cast %256 : vector<1x1x8x128xf32> to vector<8x128xf32>
    %c10_504 = arith.constant 10 : index
    %c9_505 = arith.constant 9 : index
    %c0_506 = arith.constant 0 : index
    %c0_507 = arith.constant 0 : index
    %258 = vector.load %arg1[%c10_504, %c9_505, %c0_506, %c0_507] : memref<12x12x8x128xf32, #tpu.memory_space<vmem>>, vector<1x1x8x128xf32>
    %259 = vector.shape_cast %258 : vector<1x1x8x128xf32> to vector<8x128xf32>
    %c10_508 = arith.constant 10 : index
    %c10_509 = arith.constant 10 : index
    %c0_510 = arith.constant 0 : index
    %c0_511 = arith.constant 0 : index
    %260 = vector.load %arg1[%c10_508, %c10_509, %c0_510, %c0_511] : memref<12x12x8x128xf32, #tpu.memory_space<vmem>>, vector<1x1x8x128xf32>
    %261 = vector.shape_cast %260 : vector<1x1x8x128xf32> to vector<8x128xf32>
    %c10_512 = arith.constant 10 : index
    %c11_513 = arith.constant 11 : index
    %c0_514 = arith.constant 0 : index
    %c0_515 = arith.constant 0 : index
    %262 = vector.load %arg1[%c10_512, %c11_513, %c0_514, %c0_515] : memref<12x12x8x128xf32, #tpu.memory_space<vmem>>, vector<1x1x8x128xf32>
    %263 = vector.shape_cast %262 : vector<1x1x8x128xf32> to vector<8x128xf32>
    %c11_516 = arith.constant 11 : index
    %c0_517 = arith.constant 0 : index
    %c0_518 = arith.constant 0 : index
    %c0_519 = arith.constant 0 : index
    %264 = vector.load %arg1[%c11_516, %c0_517, %c0_518, %c0_519] : memref<12x12x8x128xf32, #tpu.memory_space<vmem>>, vector<1x1x8x128xf32>
    %265 = vector.shape_cast %264 : vector<1x1x8x128xf32> to vector<8x128xf32>
    %c11_520 = arith.constant 11 : index
    %c1_521 = arith.constant 1 : index
    %c0_522 = arith.constant 0 : index
    %c0_523 = arith.constant 0 : index
    %266 = vector.load %arg1[%c11_520, %c1_521, %c0_522, %c0_523] : memref<12x12x8x128xf32, #tpu.memory_space<vmem>>, vector<1x1x8x128xf32>
    %267 = vector.shape_cast %266 : vector<1x1x8x128xf32> to vector<8x128xf32>
    %c11_524 = arith.constant 11 : index
    %c2_525 = arith.constant 2 : index
    %c0_526 = arith.constant 0 : index
    %c0_527 = arith.constant 0 : index
    %268 = vector.load %arg1[%c11_524, %c2_525, %c0_526, %c0_527] : memref<12x12x8x128xf32, #tpu.memory_space<vmem>>, vector<1x1x8x128xf32>
    %269 = vector.shape_cast %268 : vector<1x1x8x128xf32> to vector<8x128xf32>
    %c11_528 = arith.constant 11 : index
    %c3_529 = arith.constant 3 : index
    %c0_530 = arith.constant 0 : index
    %c0_531 = arith.constant 0 : index
    %270 = vector.load %arg1[%c11_528, %c3_529, %c0_530, %c0_531] : memref<12x12x8x128xf32, #tpu.memory_space<vmem>>, vector<1x1x8x128xf32>
    %271 = vector.shape_cast %270 : vector<1x1x8x128xf32> to vector<8x128xf32>
    %c11_532 = arith.constant 11 : index
    %c4_533 = arith.constant 4 : index
    %c0_534 = arith.constant 0 : index
    %c0_535 = arith.constant 0 : index
    %272 = vector.load %arg1[%c11_532, %c4_533, %c0_534, %c0_535] : memref<12x12x8x128xf32, #tpu.memory_space<vmem>>, vector<1x1x8x128xf32>
    %273 = vector.shape_cast %272 : vector<1x1x8x128xf32> to vector<8x128xf32>
    %c11_536 = arith.constant 11 : index
    %c5_537 = arith.constant 5 : index
    %c0_538 = arith.constant 0 : index
    %c0_539 = arith.constant 0 : index
    %274 = vector.load %arg1[%c11_536, %c5_537, %c0_538, %c0_539] : memref<12x12x8x128xf32, #tpu.memory_space<vmem>>, vector<1x1x8x128xf32>
    %275 = vector.shape_cast %274 : vector<1x1x8x128xf32> to vector<8x128xf32>
    %c11_540 = arith.constant 11 : index
    %c6_541 = arith.constant 6 : index
    %c0_542 = arith.constant 0 : index
    %c0_543 = arith.constant 0 : index
    %276 = vector.load %arg1[%c11_540, %c6_541, %c0_542, %c0_543] : memref<12x12x8x128xf32, #tpu.memory_space<vmem>>, vector<1x1x8x128xf32>
    %277 = vector.shape_cast %276 : vector<1x1x8x128xf32> to vector<8x128xf32>
    %c11_544 = arith.constant 11 : index
    %c7_545 = arith.constant 7 : index
    %c0_546 = arith.constant 0 : index
    %c0_547 = arith.constant 0 : index
    %278 = vector.load %arg1[%c11_544, %c7_545, %c0_546, %c0_547] : memref<12x12x8x128xf32, #tpu.memory_space<vmem>>, vector<1x1x8x128xf32>
    %279 = vector.shape_cast %278 : vector<1x1x8x128xf32> to vector<8x128xf32>
    %c11_548 = arith.constant 11 : index
    %c8_549 = arith.constant 8 : index
    %c0_550 = arith.constant 0 : index
    %c0_551 = arith.constant 0 : index
    %280 = vector.load %arg1[%c11_548, %c8_549, %c0_550, %c0_551] : memref<12x12x8x128xf32, #tpu.memory_space<vmem>>, vector<1x1x8x128xf32>
    %281 = vector.shape_cast %280 : vector<1x1x8x128xf32> to vector<8x128xf32>
    %c11_552 = arith.constant 11 : index
    %c9_553 = arith.constant 9 : index
    %c0_554 = arith.constant 0 : index
    %c0_555 = arith.constant 0 : index
    %282 = vector.load %arg1[%c11_552, %c9_553, %c0_554, %c0_555] : memref<12x12x8x128xf32, #tpu.memory_space<vmem>>, vector<1x1x8x128xf32>
    %283 = vector.shape_cast %282 : vector<1x1x8x128xf32> to vector<8x128xf32>
    %c11_556 = arith.constant 11 : index
    %c10_557 = arith.constant 10 : index
    %c0_558 = arith.constant 0 : index
    %c0_559 = arith.constant 0 : index
    %284 = vector.load %arg1[%c11_556, %c10_557, %c0_558, %c0_559] : memref<12x12x8x128xf32, #tpu.memory_space<vmem>>, vector<1x1x8x128xf32>
    %285 = vector.shape_cast %284 : vector<1x1x8x128xf32> to vector<8x128xf32>
    %c11_560 = arith.constant 11 : index
    %c11_561 = arith.constant 11 : index
    %c0_562 = arith.constant 0 : index
    %c0_563 = arith.constant 0 : index
    %286 = vector.load %arg1[%c11_560, %c11_561, %c0_562, %c0_563] : memref<12x12x8x128xf32, #tpu.memory_space<vmem>>, vector<1x1x8x128xf32>
    %287 = vector.shape_cast %286 : vector<1x1x8x128xf32> to vector<8x128xf32>
    %c0_564 = arith.constant 0 : index
    %c0_565 = arith.constant 0 : index
    %c0_566 = arith.constant 0 : index
    %c0_567 = arith.constant 0 : index
    %288 = vector.load %arg2[%c0_564, %c0_565, %c0_566, %c0_567] : memref<12x4x8x128xf32, #tpu.memory_space<vmem>>, vector<1x1x8x128xf32>
    %289 = vector.shape_cast %288 : vector<1x1x8x128xf32> to vector<8x128xf32>
    %c0_568 = arith.constant 0 : index
    %c1_569 = arith.constant 1 : index
    %c0_570 = arith.constant 0 : index
    %c0_571 = arith.constant 0 : index
    %290 = vector.load %arg2[%c0_568, %c1_569, %c0_570, %c0_571] : memref<12x4x8x128xf32, #tpu.memory_space<vmem>>, vector<1x1x8x128xf32>
    %291 = vector.shape_cast %290 : vector<1x1x8x128xf32> to vector<8x128xf32>
    %c0_572 = arith.constant 0 : index
    %c2_573 = arith.constant 2 : index
    %c0_574 = arith.constant 0 : index
    %c0_575 = arith.constant 0 : index
    %292 = vector.load %arg2[%c0_572, %c2_573, %c0_574, %c0_575] : memref<12x4x8x128xf32, #tpu.memory_space<vmem>>, vector<1x1x8x128xf32>
    %293 = vector.shape_cast %292 : vector<1x1x8x128xf32> to vector<8x128xf32>
    %c0_576 = arith.constant 0 : index
    %c3_577 = arith.constant 3 : index
    %c0_578 = arith.constant 0 : index
    %c0_579 = arith.constant 0 : index
    %294 = vector.load %arg2[%c0_576, %c3_577, %c0_578, %c0_579] : memref<12x4x8x128xf32, #tpu.memory_space<vmem>>, vector<1x1x8x128xf32>
    %295 = vector.shape_cast %294 : vector<1x1x8x128xf32> to vector<8x128xf32>
    %c1_580 = arith.constant 1 : index
    %c0_581 = arith.constant 0 : index
    %c0_582 = arith.constant 0 : index
    %c0_583 = arith.constant 0 : index
    %296 = vector.load %arg2[%c1_580, %c0_581, %c0_582, %c0_583] : memref<12x4x8x128xf32, #tpu.memory_space<vmem>>, vector<1x1x8x128xf32>
    %297 = vector.shape_cast %296 : vector<1x1x8x128xf32> to vector<8x128xf32>
    %c1_584 = arith.constant 1 : index
    %c1_585 = arith.constant 1 : index
    %c0_586 = arith.constant 0 : index
    %c0_587 = arith.constant 0 : index
    %298 = vector.load %arg2[%c1_584, %c1_585, %c0_586, %c0_587] : memref<12x4x8x128xf32, #tpu.memory_space<vmem>>, vector<1x1x8x128xf32>
    %299 = vector.shape_cast %298 : vector<1x1x8x128xf32> to vector<8x128xf32>
    %c1_588 = arith.constant 1 : index
    %c2_589 = arith.constant 2 : index
    %c0_590 = arith.constant 0 : index
    %c0_591 = arith.constant 0 : index
    %300 = vector.load %arg2[%c1_588, %c2_589, %c0_590, %c0_591] : memref<12x4x8x128xf32, #tpu.memory_space<vmem>>, vector<1x1x8x128xf32>
    %301 = vector.shape_cast %300 : vector<1x1x8x128xf32> to vector<8x128xf32>
    %c1_592 = arith.constant 1 : index
    %c3_593 = arith.constant 3 : index
    %c0_594 = arith.constant 0 : index
    %c0_595 = arith.constant 0 : index
    %302 = vector.load %arg2[%c1_592, %c3_593, %c0_594, %c0_595] : memref<12x4x8x128xf32, #tpu.memory_space<vmem>>, vector<1x1x8x128xf32>
    %303 = vector.shape_cast %302 : vector<1x1x8x128xf32> to vector<8x128xf32>
    %c2_596 = arith.constant 2 : index
    %c0_597 = arith.constant 0 : index
    %c0_598 = arith.constant 0 : index
    %c0_599 = arith.constant 0 : index
    %304 = vector.load %arg2[%c2_596, %c0_597, %c0_598, %c0_599] : memref<12x4x8x128xf32, #tpu.memory_space<vmem>>, vector<1x1x8x128xf32>
    %305 = vector.shape_cast %304 : vector<1x1x8x128xf32> to vector<8x128xf32>
    %c2_600 = arith.constant 2 : index
    %c1_601 = arith.constant 1 : index
    %c0_602 = arith.constant 0 : index
    %c0_603 = arith.constant 0 : index
    %306 = vector.load %arg2[%c2_600, %c1_601, %c0_602, %c0_603] : memref<12x4x8x128xf32, #tpu.memory_space<vmem>>, vector<1x1x8x128xf32>
    %307 = vector.shape_cast %306 : vector<1x1x8x128xf32> to vector<8x128xf32>
    %c2_604 = arith.constant 2 : index
    %c2_605 = arith.constant 2 : index
    %c0_606 = arith.constant 0 : index
    %c0_607 = arith.constant 0 : index
    %308 = vector.load %arg2[%c2_604, %c2_605, %c0_606, %c0_607] : memref<12x4x8x128xf32, #tpu.memory_space<vmem>>, vector<1x1x8x128xf32>
    %309 = vector.shape_cast %308 : vector<1x1x8x128xf32> to vector<8x128xf32>
    %c2_608 = arith.constant 2 : index
    %c3_609 = arith.constant 3 : index
    %c0_610 = arith.constant 0 : index
    %c0_611 = arith.constant 0 : index
    %310 = vector.load %arg2[%c2_608, %c3_609, %c0_610, %c0_611] : memref<12x4x8x128xf32, #tpu.memory_space<vmem>>, vector<1x1x8x128xf32>
    %311 = vector.shape_cast %310 : vector<1x1x8x128xf32> to vector<8x128xf32>
    %c3_612 = arith.constant 3 : index
    %c0_613 = arith.constant 0 : index
    %c0_614 = arith.constant 0 : index
    %c0_615 = arith.constant 0 : index
    %312 = vector.load %arg2[%c3_612, %c0_613, %c0_614, %c0_615] : memref<12x4x8x128xf32, #tpu.memory_space<vmem>>, vector<1x1x8x128xf32>
    %313 = vector.shape_cast %312 : vector<1x1x8x128xf32> to vector<8x128xf32>
    %c3_616 = arith.constant 3 : index
    %c1_617 = arith.constant 1 : index
    %c0_618 = arith.constant 0 : index
    %c0_619 = arith.constant 0 : index
    %314 = vector.load %arg2[%c3_616, %c1_617, %c0_618, %c0_619] : memref<12x4x8x128xf32, #tpu.memory_space<vmem>>, vector<1x1x8x128xf32>
    %315 = vector.shape_cast %314 : vector<1x1x8x128xf32> to vector<8x128xf32>
    %c3_620 = arith.constant 3 : index
    %c2_621 = arith.constant 2 : index
    %c0_622 = arith.constant 0 : index
    %c0_623 = arith.constant 0 : index
    %316 = vector.load %arg2[%c3_620, %c2_621, %c0_622, %c0_623] : memref<12x4x8x128xf32, #tpu.memory_space<vmem>>, vector<1x1x8x128xf32>
    %317 = vector.shape_cast %316 : vector<1x1x8x128xf32> to vector<8x128xf32>
    %c3_624 = arith.constant 3 : index
    %c3_625 = arith.constant 3 : index
    %c0_626 = arith.constant 0 : index
    %c0_627 = arith.constant 0 : index
    %318 = vector.load %arg2[%c3_624, %c3_625, %c0_626, %c0_627] : memref<12x4x8x128xf32, #tpu.memory_space<vmem>>, vector<1x1x8x128xf32>
    %319 = vector.shape_cast %318 : vector<1x1x8x128xf32> to vector<8x128xf32>
    %c4_628 = arith.constant 4 : index
    %c0_629 = arith.constant 0 : index
    %c0_630 = arith.constant 0 : index
    %c0_631 = arith.constant 0 : index
    %320 = vector.load %arg2[%c4_628, %c0_629, %c0_630, %c0_631] : memref<12x4x8x128xf32, #tpu.memory_space<vmem>>, vector<1x1x8x128xf32>
    %321 = vector.shape_cast %320 : vector<1x1x8x128xf32> to vector<8x128xf32>
    %c4_632 = arith.constant 4 : index
    %c1_633 = arith.constant 1 : index
    %c0_634 = arith.constant 0 : index
    %c0_635 = arith.constant 0 : index
    %322 = vector.load %arg2[%c4_632, %c1_633, %c0_634, %c0_635] : memref<12x4x8x128xf32, #tpu.memory_space<vmem>>, vector<1x1x8x128xf32>
    %323 = vector.shape_cast %322 : vector<1x1x8x128xf32> to vector<8x128xf32>
    %c4_636 = arith.constant 4 : index
    %c2_637 = arith.constant 2 : index
    %c0_638 = arith.constant 0 : index
    %c0_639 = arith.constant 0 : index
    %324 = vector.load %arg2[%c4_636, %c2_637, %c0_638, %c0_639] : memref<12x4x8x128xf32, #tpu.memory_space<vmem>>, vector<1x1x8x128xf32>
    %325 = vector.shape_cast %324 : vector<1x1x8x128xf32> to vector<8x128xf32>
    %c4_640 = arith.constant 4 : index
    %c3_641 = arith.constant 3 : index
    %c0_642 = arith.constant 0 : index
    %c0_643 = arith.constant 0 : index
    %326 = vector.load %arg2[%c4_640, %c3_641, %c0_642, %c0_643] : memref<12x4x8x128xf32, #tpu.memory_space<vmem>>, vector<1x1x8x128xf32>
    %327 = vector.shape_cast %326 : vector<1x1x8x128xf32> to vector<8x128xf32>
    %c5_644 = arith.constant 5 : index
    %c0_645 = arith.constant 0 : index
    %c0_646 = arith.constant 0 : index
    %c0_647 = arith.constant 0 : index
    %328 = vector.load %arg2[%c5_644, %c0_645, %c0_646, %c0_647] : memref<12x4x8x128xf32, #tpu.memory_space<vmem>>, vector<1x1x8x128xf32>
    %329 = vector.shape_cast %328 : vector<1x1x8x128xf32> to vector<8x128xf32>
    %c5_648 = arith.constant 5 : index
    %c1_649 = arith.constant 1 : index
    %c0_650 = arith.constant 0 : index
    %c0_651 = arith.constant 0 : index
    %330 = vector.load %arg2[%c5_648, %c1_649, %c0_650, %c0_651] : memref<12x4x8x128xf32, #tpu.memory_space<vmem>>, vector<1x1x8x128xf32>
    %331 = vector.shape_cast %330 : vector<1x1x8x128xf32> to vector<8x128xf32>
    %c5_652 = arith.constant 5 : index
    %c2_653 = arith.constant 2 : index
    %c0_654 = arith.constant 0 : index
    %c0_655 = arith.constant 0 : index
    %332 = vector.load %arg2[%c5_652, %c2_653, %c0_654, %c0_655] : memref<12x4x8x128xf32, #tpu.memory_space<vmem>>, vector<1x1x8x128xf32>
    %333 = vector.shape_cast %332 : vector<1x1x8x128xf32> to vector<8x128xf32>
    %c5_656 = arith.constant 5 : index
    %c3_657 = arith.constant 3 : index
    %c0_658 = arith.constant 0 : index
    %c0_659 = arith.constant 0 : index
    %334 = vector.load %arg2[%c5_656, %c3_657, %c0_658, %c0_659] : memref<12x4x8x128xf32, #tpu.memory_space<vmem>>, vector<1x1x8x128xf32>
    %335 = vector.shape_cast %334 : vector<1x1x8x128xf32> to vector<8x128xf32>
    %c6_660 = arith.constant 6 : index
    %c0_661 = arith.constant 0 : index
    %c0_662 = arith.constant 0 : index
    %c0_663 = arith.constant 0 : index
    %336 = vector.load %arg2[%c6_660, %c0_661, %c0_662, %c0_663] : memref<12x4x8x128xf32, #tpu.memory_space<vmem>>, vector<1x1x8x128xf32>
    %337 = vector.shape_cast %336 : vector<1x1x8x128xf32> to vector<8x128xf32>
    %c6_664 = arith.constant 6 : index
    %c1_665 = arith.constant 1 : index
    %c0_666 = arith.constant 0 : index
    %c0_667 = arith.constant 0 : index
    %338 = vector.load %arg2[%c6_664, %c1_665, %c0_666, %c0_667] : memref<12x4x8x128xf32, #tpu.memory_space<vmem>>, vector<1x1x8x128xf32>
    %339 = vector.shape_cast %338 : vector<1x1x8x128xf32> to vector<8x128xf32>
    %c6_668 = arith.constant 6 : index
    %c2_669 = arith.constant 2 : index
    %c0_670 = arith.constant 0 : index
    %c0_671 = arith.constant 0 : index
    %340 = vector.load %arg2[%c6_668, %c2_669, %c0_670, %c0_671] : memref<12x4x8x128xf32, #tpu.memory_space<vmem>>, vector<1x1x8x128xf32>
    %341 = vector.shape_cast %340 : vector<1x1x8x128xf32> to vector<8x128xf32>
    %c6_672 = arith.constant 6 : index
    %c3_673 = arith.constant 3 : index
    %c0_674 = arith.constant 0 : index
    %c0_675 = arith.constant 0 : index
    %342 = vector.load %arg2[%c6_672, %c3_673, %c0_674, %c0_675] : memref<12x4x8x128xf32, #tpu.memory_space<vmem>>, vector<1x1x8x128xf32>
    %343 = vector.shape_cast %342 : vector<1x1x8x128xf32> to vector<8x128xf32>
    %c7_676 = arith.constant 7 : index
    %c0_677 = arith.constant 0 : index
    %c0_678 = arith.constant 0 : index
    %c0_679 = arith.constant 0 : index
    %344 = vector.load %arg2[%c7_676, %c0_677, %c0_678, %c0_679] : memref<12x4x8x128xf32, #tpu.memory_space<vmem>>, vector<1x1x8x128xf32>
    %345 = vector.shape_cast %344 : vector<1x1x8x128xf32> to vector<8x128xf32>
    %c7_680 = arith.constant 7 : index
    %c1_681 = arith.constant 1 : index
    %c0_682 = arith.constant 0 : index
    %c0_683 = arith.constant 0 : index
    %346 = vector.load %arg2[%c7_680, %c1_681, %c0_682, %c0_683] : memref<12x4x8x128xf32, #tpu.memory_space<vmem>>, vector<1x1x8x128xf32>
    %347 = vector.shape_cast %346 : vector<1x1x8x128xf32> to vector<8x128xf32>
    %c7_684 = arith.constant 7 : index
    %c2_685 = arith.constant 2 : index
    %c0_686 = arith.constant 0 : index
    %c0_687 = arith.constant 0 : index
    %348 = vector.load %arg2[%c7_684, %c2_685, %c0_686, %c0_687] : memref<12x4x8x128xf32, #tpu.memory_space<vmem>>, vector<1x1x8x128xf32>
    %349 = vector.shape_cast %348 : vector<1x1x8x128xf32> to vector<8x128xf32>
    %c7_688 = arith.constant 7 : index
    %c3_689 = arith.constant 3 : index
    %c0_690 = arith.constant 0 : index
    %c0_691 = arith.constant 0 : index
    %350 = vector.load %arg2[%c7_688, %c3_689, %c0_690, %c0_691] : memref<12x4x8x128xf32, #tpu.memory_space<vmem>>, vector<1x1x8x128xf32>
    %351 = vector.shape_cast %350 : vector<1x1x8x128xf32> to vector<8x128xf32>
    %c8_692 = arith.constant 8 : index
    %c0_693 = arith.constant 0 : index
    %c0_694 = arith.constant 0 : index
    %c0_695 = arith.constant 0 : index
    %352 = vector.load %arg2[%c8_692, %c0_693, %c0_694, %c0_695] : memref<12x4x8x128xf32, #tpu.memory_space<vmem>>, vector<1x1x8x128xf32>
    %353 = vector.shape_cast %352 : vector<1x1x8x128xf32> to vector<8x128xf32>
    %c8_696 = arith.constant 8 : index
    %c1_697 = arith.constant 1 : index
    %c0_698 = arith.constant 0 : index
    %c0_699 = arith.constant 0 : index
    %354 = vector.load %arg2[%c8_696, %c1_697, %c0_698, %c0_699] : memref<12x4x8x128xf32, #tpu.memory_space<vmem>>, vector<1x1x8x128xf32>
    %355 = vector.shape_cast %354 : vector<1x1x8x128xf32> to vector<8x128xf32>
    %c8_700 = arith.constant 8 : index
    %c2_701 = arith.constant 2 : index
    %c0_702 = arith.constant 0 : index
    %c0_703 = arith.constant 0 : index
    %356 = vector.load %arg2[%c8_700, %c2_701, %c0_702, %c0_703] : memref<12x4x8x128xf32, #tpu.memory_space<vmem>>, vector<1x1x8x128xf32>
    %357 = vector.shape_cast %356 : vector<1x1x8x128xf32> to vector<8x128xf32>
    %c8_704 = arith.constant 8 : index
    %c3_705 = arith.constant 3 : index
    %c0_706 = arith.constant 0 : index
    %c0_707 = arith.constant 0 : index
    %358 = vector.load %arg2[%c8_704, %c3_705, %c0_706, %c0_707] : memref<12x4x8x128xf32, #tpu.memory_space<vmem>>, vector<1x1x8x128xf32>
    %359 = vector.shape_cast %358 : vector<1x1x8x128xf32> to vector<8x128xf32>
    %c9_708 = arith.constant 9 : index
    %c0_709 = arith.constant 0 : index
    %c0_710 = arith.constant 0 : index
    %c0_711 = arith.constant 0 : index
    %360 = vector.load %arg2[%c9_708, %c0_709, %c0_710, %c0_711] : memref<12x4x8x128xf32, #tpu.memory_space<vmem>>, vector<1x1x8x128xf32>
    %361 = vector.shape_cast %360 : vector<1x1x8x128xf32> to vector<8x128xf32>
    %c9_712 = arith.constant 9 : index
    %c1_713 = arith.constant 1 : index
    %c0_714 = arith.constant 0 : index
    %c0_715 = arith.constant 0 : index
    %362 = vector.load %arg2[%c9_712, %c1_713, %c0_714, %c0_715] : memref<12x4x8x128xf32, #tpu.memory_space<vmem>>, vector<1x1x8x128xf32>
    %363 = vector.shape_cast %362 : vector<1x1x8x128xf32> to vector<8x128xf32>
    %c9_716 = arith.constant 9 : index
    %c2_717 = arith.constant 2 : index
    %c0_718 = arith.constant 0 : index
    %c0_719 = arith.constant 0 : index
    %364 = vector.load %arg2[%c9_716, %c2_717, %c0_718, %c0_719] : memref<12x4x8x128xf32, #tpu.memory_space<vmem>>, vector<1x1x8x128xf32>
    %365 = vector.shape_cast %364 : vector<1x1x8x128xf32> to vector<8x128xf32>
    %c9_720 = arith.constant 9 : index
    %c3_721 = arith.constant 3 : index
    %c0_722 = arith.constant 0 : index
    %c0_723 = arith.constant 0 : index
    %366 = vector.load %arg2[%c9_720, %c3_721, %c0_722, %c0_723] : memref<12x4x8x128xf32, #tpu.memory_space<vmem>>, vector<1x1x8x128xf32>
    %367 = vector.shape_cast %366 : vector<1x1x8x128xf32> to vector<8x128xf32>
    %c10_724 = arith.constant 10 : index
    %c0_725 = arith.constant 0 : index
    %c0_726 = arith.constant 0 : index
    %c0_727 = arith.constant 0 : index
    %368 = vector.load %arg2[%c10_724, %c0_725, %c0_726, %c0_727] : memref<12x4x8x128xf32, #tpu.memory_space<vmem>>, vector<1x1x8x128xf32>
    %369 = vector.shape_cast %368 : vector<1x1x8x128xf32> to vector<8x128xf32>
    %c10_728 = arith.constant 10 : index
    %c1_729 = arith.constant 1 : index
    %c0_730 = arith.constant 0 : index
    %c0_731 = arith.constant 0 : index
    %370 = vector.load %arg2[%c10_728, %c1_729, %c0_730, %c0_731] : memref<12x4x8x128xf32, #tpu.memory_space<vmem>>, vector<1x1x8x128xf32>
    %371 = vector.shape_cast %370 : vector<1x1x8x128xf32> to vector<8x128xf32>
    %c10_732 = arith.constant 10 : index
    %c2_733 = arith.constant 2 : index
    %c0_734 = arith.constant 0 : index
    %c0_735 = arith.constant 0 : index
    %372 = vector.load %arg2[%c10_732, %c2_733, %c0_734, %c0_735] : memref<12x4x8x128xf32, #tpu.memory_space<vmem>>, vector<1x1x8x128xf32>
    %373 = vector.shape_cast %372 : vector<1x1x8x128xf32> to vector<8x128xf32>
    %c10_736 = arith.constant 10 : index
    %c3_737 = arith.constant 3 : index
    %c0_738 = arith.constant 0 : index
    %c0_739 = arith.constant 0 : index
    %374 = vector.load %arg2[%c10_736, %c3_737, %c0_738, %c0_739] : memref<12x4x8x128xf32, #tpu.memory_space<vmem>>, vector<1x1x8x128xf32>
    %375 = vector.shape_cast %374 : vector<1x1x8x128xf32> to vector<8x128xf32>
    %c11_740 = arith.constant 11 : index
    %c0_741 = arith.constant 0 : index
    %c0_742 = arith.constant 0 : index
    %c0_743 = arith.constant 0 : index
    %376 = vector.load %arg2[%c11_740, %c0_741, %c0_742, %c0_743] : memref<12x4x8x128xf32, #tpu.memory_space<vmem>>, vector<1x1x8x128xf32>
    %377 = vector.shape_cast %376 : vector<1x1x8x128xf32> to vector<8x128xf32>
    %c11_744 = arith.constant 11 : index
    %c1_745 = arith.constant 1 : index
    %c0_746 = arith.constant 0 : index
    %c0_747 = arith.constant 0 : index
    %378 = vector.load %arg2[%c11_744, %c1_745, %c0_746, %c0_747] : memref<12x4x8x128xf32, #tpu.memory_space<vmem>>, vector<1x1x8x128xf32>
    %379 = vector.shape_cast %378 : vector<1x1x8x128xf32> to vector<8x128xf32>
    %c11_748 = arith.constant 11 : index
    %c2_749 = arith.constant 2 : index
    %c0_750 = arith.constant 0 : index
    %c0_751 = arith.constant 0 : index
    %380 = vector.load %arg2[%c11_748, %c2_749, %c0_750, %c0_751] : memref<12x4x8x128xf32, #tpu.memory_space<vmem>>, vector<1x1x8x128xf32>
    %381 = vector.shape_cast %380 : vector<1x1x8x128xf32> to vector<8x128xf32>
    %c11_752 = arith.constant 11 : index
    %c3_753 = arith.constant 3 : index
    %c0_754 = arith.constant 0 : index
    %c0_755 = arith.constant 0 : index
    %382 = vector.load %arg2[%c11_752, %c3_753, %c0_754, %c0_755] : memref<12x4x8x128xf32, #tpu.memory_space<vmem>>, vector<1x1x8x128xf32>
    %383 = vector.shape_cast %382 : vector<1x1x8x128xf32> to vector<8x128xf32>
    %384 = arith.mulf %1, %289 : vector<8x128xf32>
    %385 = arith.mulf %3, %297 : vector<8x128xf32>
    %386 = arith.addf %384, %385 : vector<8x128xf32>
    %387 = arith.mulf %5, %305 : vector<8x128xf32>
    %388 = arith.addf %386, %387 : vector<8x128xf32>
    %389 = arith.mulf %7, %313 : vector<8x128xf32>
    %390 = arith.addf %388, %389 : vector<8x128xf32>
    %391 = arith.mulf %9, %321 : vector<8x128xf32>
    %392 = arith.addf %390, %391 : vector<8x128xf32>
    %393 = arith.mulf %11, %329 : vector<8x128xf32>
    %394 = arith.addf %392, %393 : vector<8x128xf32>
    %395 = arith.mulf %13, %337 : vector<8x128xf32>
    %396 = arith.addf %394, %395 : vector<8x128xf32>
    %397 = arith.mulf %15, %345 : vector<8x128xf32>
    %398 = arith.addf %396, %397 : vector<8x128xf32>
    %399 = arith.mulf %17, %353 : vector<8x128xf32>
    %400 = arith.addf %398, %399 : vector<8x128xf32>
    %401 = arith.mulf %19, %361 : vector<8x128xf32>
    %402 = arith.addf %400, %401 : vector<8x128xf32>
    %403 = arith.mulf %21, %369 : vector<8x128xf32>
    %404 = arith.addf %402, %403 : vector<8x128xf32>
    %405 = arith.mulf %23, %377 : vector<8x128xf32>
    %406 = arith.addf %404, %405 : vector<8x128xf32>
    %407 = arith.mulf %1, %291 : vector<8x128xf32>
    %408 = arith.mulf %3, %299 : vector<8x128xf32>
    %409 = arith.addf %407, %408 : vector<8x128xf32>
    %410 = arith.mulf %5, %307 : vector<8x128xf32>
    %411 = arith.addf %409, %410 : vector<8x128xf32>
    %412 = arith.mulf %7, %315 : vector<8x128xf32>
    %413 = arith.addf %411, %412 : vector<8x128xf32>
    %414 = arith.mulf %9, %323 : vector<8x128xf32>
    %415 = arith.addf %413, %414 : vector<8x128xf32>
    %416 = arith.mulf %11, %331 : vector<8x128xf32>
    %417 = arith.addf %415, %416 : vector<8x128xf32>
    %418 = arith.mulf %13, %339 : vector<8x128xf32>
    %419 = arith.addf %417, %418 : vector<8x128xf32>
    %420 = arith.mulf %15, %347 : vector<8x128xf32>
    %421 = arith.addf %419, %420 : vector<8x128xf32>
    %422 = arith.mulf %17, %355 : vector<8x128xf32>
    %423 = arith.addf %421, %422 : vector<8x128xf32>
    %424 = arith.mulf %19, %363 : vector<8x128xf32>
    %425 = arith.addf %423, %424 : vector<8x128xf32>
    %426 = arith.mulf %21, %371 : vector<8x128xf32>
    %427 = arith.addf %425, %426 : vector<8x128xf32>
    %428 = arith.mulf %23, %379 : vector<8x128xf32>
    %429 = arith.addf %427, %428 : vector<8x128xf32>
    %430 = arith.mulf %1, %293 : vector<8x128xf32>
    %431 = arith.mulf %3, %301 : vector<8x128xf32>
    %432 = arith.addf %430, %431 : vector<8x128xf32>
    %433 = arith.mulf %5, %309 : vector<8x128xf32>
    %434 = arith.addf %432, %433 : vector<8x128xf32>
    %435 = arith.mulf %7, %317 : vector<8x128xf32>
    %436 = arith.addf %434, %435 : vector<8x128xf32>
    %437 = arith.mulf %9, %325 : vector<8x128xf32>
    %438 = arith.addf %436, %437 : vector<8x128xf32>
    %439 = arith.mulf %11, %333 : vector<8x128xf32>
    %440 = arith.addf %438, %439 : vector<8x128xf32>
    %441 = arith.mulf %13, %341 : vector<8x128xf32>
    %442 = arith.addf %440, %441 : vector<8x128xf32>
    %443 = arith.mulf %15, %349 : vector<8x128xf32>
    %444 = arith.addf %442, %443 : vector<8x128xf32>
    %445 = arith.mulf %17, %357 : vector<8x128xf32>
    %446 = arith.addf %444, %445 : vector<8x128xf32>
    %447 = arith.mulf %19, %365 : vector<8x128xf32>
    %448 = arith.addf %446, %447 : vector<8x128xf32>
    %449 = arith.mulf %21, %373 : vector<8x128xf32>
    %450 = arith.addf %448, %449 : vector<8x128xf32>
    %451 = arith.mulf %23, %381 : vector<8x128xf32>
    %452 = arith.addf %450, %451 : vector<8x128xf32>
    %453 = arith.mulf %1, %295 : vector<8x128xf32>
    %454 = arith.mulf %3, %303 : vector<8x128xf32>
    %455 = arith.addf %453, %454 : vector<8x128xf32>
    %456 = arith.mulf %5, %311 : vector<8x128xf32>
    %457 = arith.addf %455, %456 : vector<8x128xf32>
    %458 = arith.mulf %7, %319 : vector<8x128xf32>
    %459 = arith.addf %457, %458 : vector<8x128xf32>
    %460 = arith.mulf %9, %327 : vector<8x128xf32>
    %461 = arith.addf %459, %460 : vector<8x128xf32>
    %462 = arith.mulf %11, %335 : vector<8x128xf32>
    %463 = arith.addf %461, %462 : vector<8x128xf32>
    %464 = arith.mulf %13, %343 : vector<8x128xf32>
    %465 = arith.addf %463, %464 : vector<8x128xf32>
    %466 = arith.mulf %15, %351 : vector<8x128xf32>
    %467 = arith.addf %465, %466 : vector<8x128xf32>
    %468 = arith.mulf %17, %359 : vector<8x128xf32>
    %469 = arith.addf %467, %468 : vector<8x128xf32>
    %470 = arith.mulf %19, %367 : vector<8x128xf32>
    %471 = arith.addf %469, %470 : vector<8x128xf32>
    %472 = arith.mulf %21, %375 : vector<8x128xf32>
    %473 = arith.addf %471, %472 : vector<8x128xf32>
    %474 = arith.mulf %23, %383 : vector<8x128xf32>
    %475 = arith.addf %473, %474 : vector<8x128xf32>
    %476 = arith.mulf %25, %289 : vector<8x128xf32>
    %477 = arith.mulf %27, %297 : vector<8x128xf32>
    %478 = arith.addf %476, %477 : vector<8x128xf32>
    %479 = arith.mulf %29, %305 : vector<8x128xf32>
    %480 = arith.addf %478, %479 : vector<8x128xf32>
    %481 = arith.mulf %31, %313 : vector<8x128xf32>
    %482 = arith.addf %480, %481 : vector<8x128xf32>
    %483 = arith.mulf %33, %321 : vector<8x128xf32>
    %484 = arith.addf %482, %483 : vector<8x128xf32>
    %485 = arith.mulf %35, %329 : vector<8x128xf32>
    %486 = arith.addf %484, %485 : vector<8x128xf32>
    %487 = arith.mulf %37, %337 : vector<8x128xf32>
    %488 = arith.addf %486, %487 : vector<8x128xf32>
    %489 = arith.mulf %39, %345 : vector<8x128xf32>
    %490 = arith.addf %488, %489 : vector<8x128xf32>
    %491 = arith.mulf %41, %353 : vector<8x128xf32>
    %492 = arith.addf %490, %491 : vector<8x128xf32>
    %493 = arith.mulf %43, %361 : vector<8x128xf32>
    %494 = arith.addf %492, %493 : vector<8x128xf32>
    %495 = arith.mulf %45, %369 : vector<8x128xf32>
    %496 = arith.addf %494, %495 : vector<8x128xf32>
    %497 = arith.mulf %47, %377 : vector<8x128xf32>
    %498 = arith.addf %496, %497 : vector<8x128xf32>
    %499 = arith.mulf %25, %291 : vector<8x128xf32>
    %500 = arith.mulf %27, %299 : vector<8x128xf32>
    %501 = arith.addf %499, %500 : vector<8x128xf32>
    %502 = arith.mulf %29, %307 : vector<8x128xf32>
    %503 = arith.addf %501, %502 : vector<8x128xf32>
    %504 = arith.mulf %31, %315 : vector<8x128xf32>
    %505 = arith.addf %503, %504 : vector<8x128xf32>
    %506 = arith.mulf %33, %323 : vector<8x128xf32>
    %507 = arith.addf %505, %506 : vector<8x128xf32>
    %508 = arith.mulf %35, %331 : vector<8x128xf32>
    %509 = arith.addf %507, %508 : vector<8x128xf32>
    %510 = arith.mulf %37, %339 : vector<8x128xf32>
    %511 = arith.addf %509, %510 : vector<8x128xf32>
    %512 = arith.mulf %39, %347 : vector<8x128xf32>
    %513 = arith.addf %511, %512 : vector<8x128xf32>
    %514 = arith.mulf %41, %355 : vector<8x128xf32>
    %515 = arith.addf %513, %514 : vector<8x128xf32>
    %516 = arith.mulf %43, %363 : vector<8x128xf32>
    %517 = arith.addf %515, %516 : vector<8x128xf32>
    %518 = arith.mulf %45, %371 : vector<8x128xf32>
    %519 = arith.addf %517, %518 : vector<8x128xf32>
    %520 = arith.mulf %47, %379 : vector<8x128xf32>
    %521 = arith.addf %519, %520 : vector<8x128xf32>
    %522 = arith.mulf %25, %293 : vector<8x128xf32>
    %523 = arith.mulf %27, %301 : vector<8x128xf32>
    %524 = arith.addf %522, %523 : vector<8x128xf32>
    %525 = arith.mulf %29, %309 : vector<8x128xf32>
    %526 = arith.addf %524, %525 : vector<8x128xf32>
    %527 = arith.mulf %31, %317 : vector<8x128xf32>
    %528 = arith.addf %526, %527 : vector<8x128xf32>
    %529 = arith.mulf %33, %325 : vector<8x128xf32>
    %530 = arith.addf %528, %529 : vector<8x128xf32>
    %531 = arith.mulf %35, %333 : vector<8x128xf32>
    %532 = arith.addf %530, %531 : vector<8x128xf32>
    %533 = arith.mulf %37, %341 : vector<8x128xf32>
    %534 = arith.addf %532, %533 : vector<8x128xf32>
    %535 = arith.mulf %39, %349 : vector<8x128xf32>
    %536 = arith.addf %534, %535 : vector<8x128xf32>
    %537 = arith.mulf %41, %357 : vector<8x128xf32>
    %538 = arith.addf %536, %537 : vector<8x128xf32>
    %539 = arith.mulf %43, %365 : vector<8x128xf32>
    %540 = arith.addf %538, %539 : vector<8x128xf32>
    %541 = arith.mulf %45, %373 : vector<8x128xf32>
    %542 = arith.addf %540, %541 : vector<8x128xf32>
    %543 = arith.mulf %47, %381 : vector<8x128xf32>
    %544 = arith.addf %542, %543 : vector<8x128xf32>
    %545 = arith.mulf %25, %295 : vector<8x128xf32>
    %546 = arith.mulf %27, %303 : vector<8x128xf32>
    %547 = arith.addf %545, %546 : vector<8x128xf32>
    %548 = arith.mulf %29, %311 : vector<8x128xf32>
    %549 = arith.addf %547, %548 : vector<8x128xf32>
    %550 = arith.mulf %31, %319 : vector<8x128xf32>
    %551 = arith.addf %549, %550 : vector<8x128xf32>
    %552 = arith.mulf %33, %327 : vector<8x128xf32>
    %553 = arith.addf %551, %552 : vector<8x128xf32>
    %554 = arith.mulf %35, %335 : vector<8x128xf32>
    %555 = arith.addf %553, %554 : vector<8x128xf32>
    %556 = arith.mulf %37, %343 : vector<8x128xf32>
    %557 = arith.addf %555, %556 : vector<8x128xf32>
    %558 = arith.mulf %39, %351 : vector<8x128xf32>
    %559 = arith.addf %557, %558 : vector<8x128xf32>
    %560 = arith.mulf %41, %359 : vector<8x128xf32>
    %561 = arith.addf %559, %560 : vector<8x128xf32>
    %562 = arith.mulf %43, %367 : vector<8x128xf32>
    %563 = arith.addf %561, %562 : vector<8x128xf32>
    %564 = arith.mulf %45, %375 : vector<8x128xf32>
    %565 = arith.addf %563, %564 : vector<8x128xf32>
    %566 = arith.mulf %47, %383 : vector<8x128xf32>
    %567 = arith.addf %565, %566 : vector<8x128xf32>
    %568 = arith.mulf %49, %289 : vector<8x128xf32>
    %569 = arith.mulf %51, %297 : vector<8x128xf32>
    %570 = arith.addf %568, %569 : vector<8x128xf32>
    %571 = arith.mulf %53, %305 : vector<8x128xf32>
    %572 = arith.addf %570, %571 : vector<8x128xf32>
    %573 = arith.mulf %55, %313 : vector<8x128xf32>
    %574 = arith.addf %572, %573 : vector<8x128xf32>
    %575 = arith.mulf %57, %321 : vector<8x128xf32>
    %576 = arith.addf %574, %575 : vector<8x128xf32>
    %577 = arith.mulf %59, %329 : vector<8x128xf32>
    %578 = arith.addf %576, %577 : vector<8x128xf32>
    %579 = arith.mulf %61, %337 : vector<8x128xf32>
    %580 = arith.addf %578, %579 : vector<8x128xf32>
    %581 = arith.mulf %63, %345 : vector<8x128xf32>
    %582 = arith.addf %580, %581 : vector<8x128xf32>
    %583 = arith.mulf %65, %353 : vector<8x128xf32>
    %584 = arith.addf %582, %583 : vector<8x128xf32>
    %585 = arith.mulf %67, %361 : vector<8x128xf32>
    %586 = arith.addf %584, %585 : vector<8x128xf32>
    %587 = arith.mulf %69, %369 : vector<8x128xf32>
    %588 = arith.addf %586, %587 : vector<8x128xf32>
    %589 = arith.mulf %71, %377 : vector<8x128xf32>
    %590 = arith.addf %588, %589 : vector<8x128xf32>
    %591 = arith.mulf %49, %291 : vector<8x128xf32>
    %592 = arith.mulf %51, %299 : vector<8x128xf32>
    %593 = arith.addf %591, %592 : vector<8x128xf32>
    %594 = arith.mulf %53, %307 : vector<8x128xf32>
    %595 = arith.addf %593, %594 : vector<8x128xf32>
    %596 = arith.mulf %55, %315 : vector<8x128xf32>
    %597 = arith.addf %595, %596 : vector<8x128xf32>
    %598 = arith.mulf %57, %323 : vector<8x128xf32>
    %599 = arith.addf %597, %598 : vector<8x128xf32>
    %600 = arith.mulf %59, %331 : vector<8x128xf32>
    %601 = arith.addf %599, %600 : vector<8x128xf32>
    %602 = arith.mulf %61, %339 : vector<8x128xf32>
    %603 = arith.addf %601, %602 : vector<8x128xf32>
    %604 = arith.mulf %63, %347 : vector<8x128xf32>
    %605 = arith.addf %603, %604 : vector<8x128xf32>
    %606 = arith.mulf %65, %355 : vector<8x128xf32>
    %607 = arith.addf %605, %606 : vector<8x128xf32>
    %608 = arith.mulf %67, %363 : vector<8x128xf32>
    %609 = arith.addf %607, %608 : vector<8x128xf32>
    %610 = arith.mulf %69, %371 : vector<8x128xf32>
    %611 = arith.addf %609, %610 : vector<8x128xf32>
    %612 = arith.mulf %71, %379 : vector<8x128xf32>
    %613 = arith.addf %611, %612 : vector<8x128xf32>
    %614 = arith.mulf %49, %293 : vector<8x128xf32>
    %615 = arith.mulf %51, %301 : vector<8x128xf32>
    %616 = arith.addf %614, %615 : vector<8x128xf32>
    %617 = arith.mulf %53, %309 : vector<8x128xf32>
    %618 = arith.addf %616, %617 : vector<8x128xf32>
    %619 = arith.mulf %55, %317 : vector<8x128xf32>
    %620 = arith.addf %618, %619 : vector<8x128xf32>
    %621 = arith.mulf %57, %325 : vector<8x128xf32>
    %622 = arith.addf %620, %621 : vector<8x128xf32>
    %623 = arith.mulf %59, %333 : vector<8x128xf32>
    %624 = arith.addf %622, %623 : vector<8x128xf32>
    %625 = arith.mulf %61, %341 : vector<8x128xf32>
    %626 = arith.addf %624, %625 : vector<8x128xf32>
    %627 = arith.mulf %63, %349 : vector<8x128xf32>
    %628 = arith.addf %626, %627 : vector<8x128xf32>
    %629 = arith.mulf %65, %357 : vector<8x128xf32>
    %630 = arith.addf %628, %629 : vector<8x128xf32>
    %631 = arith.mulf %67, %365 : vector<8x128xf32>
    %632 = arith.addf %630, %631 : vector<8x128xf32>
    %633 = arith.mulf %69, %373 : vector<8x128xf32>
    %634 = arith.addf %632, %633 : vector<8x128xf32>
    %635 = arith.mulf %71, %381 : vector<8x128xf32>
    %636 = arith.addf %634, %635 : vector<8x128xf32>
    %637 = arith.mulf %49, %295 : vector<8x128xf32>
    %638 = arith.mulf %51, %303 : vector<8x128xf32>
    %639 = arith.addf %637, %638 : vector<8x128xf32>
    %640 = arith.mulf %53, %311 : vector<8x128xf32>
    %641 = arith.addf %639, %640 : vector<8x128xf32>
    %642 = arith.mulf %55, %319 : vector<8x128xf32>
    %643 = arith.addf %641, %642 : vector<8x128xf32>
    %644 = arith.mulf %57, %327 : vector<8x128xf32>
    %645 = arith.addf %643, %644 : vector<8x128xf32>
    %646 = arith.mulf %59, %335 : vector<8x128xf32>
    %647 = arith.addf %645, %646 : vector<8x128xf32>
    %648 = arith.mulf %61, %343 : vector<8x128xf32>
    %649 = arith.addf %647, %648 : vector<8x128xf32>
    %650 = arith.mulf %63, %351 : vector<8x128xf32>
    %651 = arith.addf %649, %650 : vector<8x128xf32>
    %652 = arith.mulf %65, %359 : vector<8x128xf32>
    %653 = arith.addf %651, %652 : vector<8x128xf32>
    %654 = arith.mulf %67, %367 : vector<8x128xf32>
    %655 = arith.addf %653, %654 : vector<8x128xf32>
    %656 = arith.mulf %69, %375 : vector<8x128xf32>
    %657 = arith.addf %655, %656 : vector<8x128xf32>
    %658 = arith.mulf %71, %383 : vector<8x128xf32>
    %659 = arith.addf %657, %658 : vector<8x128xf32>
    %660 = arith.mulf %73, %289 : vector<8x128xf32>
    %661 = arith.mulf %75, %297 : vector<8x128xf32>
    %662 = arith.addf %660, %661 : vector<8x128xf32>
    %663 = arith.mulf %77, %305 : vector<8x128xf32>
    %664 = arith.addf %662, %663 : vector<8x128xf32>
    %665 = arith.mulf %79, %313 : vector<8x128xf32>
    %666 = arith.addf %664, %665 : vector<8x128xf32>
    %667 = arith.mulf %81, %321 : vector<8x128xf32>
    %668 = arith.addf %666, %667 : vector<8x128xf32>
    %669 = arith.mulf %83, %329 : vector<8x128xf32>
    %670 = arith.addf %668, %669 : vector<8x128xf32>
    %671 = arith.mulf %85, %337 : vector<8x128xf32>
    %672 = arith.addf %670, %671 : vector<8x128xf32>
    %673 = arith.mulf %87, %345 : vector<8x128xf32>
    %674 = arith.addf %672, %673 : vector<8x128xf32>
    %675 = arith.mulf %89, %353 : vector<8x128xf32>
    %676 = arith.addf %674, %675 : vector<8x128xf32>
    %677 = arith.mulf %91, %361 : vector<8x128xf32>
    %678 = arith.addf %676, %677 : vector<8x128xf32>
    %679 = arith.mulf %93, %369 : vector<8x128xf32>
    %680 = arith.addf %678, %679 : vector<8x128xf32>
    %681 = arith.mulf %95, %377 : vector<8x128xf32>
    %682 = arith.addf %680, %681 : vector<8x128xf32>
    %683 = arith.mulf %73, %291 : vector<8x128xf32>
    %684 = arith.mulf %75, %299 : vector<8x128xf32>
    %685 = arith.addf %683, %684 : vector<8x128xf32>
    %686 = arith.mulf %77, %307 : vector<8x128xf32>
    %687 = arith.addf %685, %686 : vector<8x128xf32>
    %688 = arith.mulf %79, %315 : vector<8x128xf32>
    %689 = arith.addf %687, %688 : vector<8x128xf32>
    %690 = arith.mulf %81, %323 : vector<8x128xf32>
    %691 = arith.addf %689, %690 : vector<8x128xf32>
    %692 = arith.mulf %83, %331 : vector<8x128xf32>
    %693 = arith.addf %691, %692 : vector<8x128xf32>
    %694 = arith.mulf %85, %339 : vector<8x128xf32>
    %695 = arith.addf %693, %694 : vector<8x128xf32>
    %696 = arith.mulf %87, %347 : vector<8x128xf32>
    %697 = arith.addf %695, %696 : vector<8x128xf32>
    %698 = arith.mulf %89, %355 : vector<8x128xf32>
    %699 = arith.addf %697, %698 : vector<8x128xf32>
    %700 = arith.mulf %91, %363 : vector<8x128xf32>
    %701 = arith.addf %699, %700 : vector<8x128xf32>
    %702 = arith.mulf %93, %371 : vector<8x128xf32>
    %703 = arith.addf %701, %702 : vector<8x128xf32>
    %704 = arith.mulf %95, %379 : vector<8x128xf32>
    %705 = arith.addf %703, %704 : vector<8x128xf32>
    %706 = arith.mulf %73, %293 : vector<8x128xf32>
    %707 = arith.mulf %75, %301 : vector<8x128xf32>
    %708 = arith.addf %706, %707 : vector<8x128xf32>
    %709 = arith.mulf %77, %309 : vector<8x128xf32>
    %710 = arith.addf %708, %709 : vector<8x128xf32>
    %711 = arith.mulf %79, %317 : vector<8x128xf32>
    %712 = arith.addf %710, %711 : vector<8x128xf32>
    %713 = arith.mulf %81, %325 : vector<8x128xf32>
    %714 = arith.addf %712, %713 : vector<8x128xf32>
    %715 = arith.mulf %83, %333 : vector<8x128xf32>
    %716 = arith.addf %714, %715 : vector<8x128xf32>
    %717 = arith.mulf %85, %341 : vector<8x128xf32>
    %718 = arith.addf %716, %717 : vector<8x128xf32>
    %719 = arith.mulf %87, %349 : vector<8x128xf32>
    %720 = arith.addf %718, %719 : vector<8x128xf32>
    %721 = arith.mulf %89, %357 : vector<8x128xf32>
    %722 = arith.addf %720, %721 : vector<8x128xf32>
    %723 = arith.mulf %91, %365 : vector<8x128xf32>
    %724 = arith.addf %722, %723 : vector<8x128xf32>
    %725 = arith.mulf %93, %373 : vector<8x128xf32>
    %726 = arith.addf %724, %725 : vector<8x128xf32>
    %727 = arith.mulf %95, %381 : vector<8x128xf32>
    %728 = arith.addf %726, %727 : vector<8x128xf32>
    %729 = arith.mulf %73, %295 : vector<8x128xf32>
    %730 = arith.mulf %75, %303 : vector<8x128xf32>
    %731 = arith.addf %729, %730 : vector<8x128xf32>
    %732 = arith.mulf %77, %311 : vector<8x128xf32>
    %733 = arith.addf %731, %732 : vector<8x128xf32>
    %734 = arith.mulf %79, %319 : vector<8x128xf32>
    %735 = arith.addf %733, %734 : vector<8x128xf32>
    %736 = arith.mulf %81, %327 : vector<8x128xf32>
    %737 = arith.addf %735, %736 : vector<8x128xf32>
    %738 = arith.mulf %83, %335 : vector<8x128xf32>
    %739 = arith.addf %737, %738 : vector<8x128xf32>
    %740 = arith.mulf %85, %343 : vector<8x128xf32>
    %741 = arith.addf %739, %740 : vector<8x128xf32>
    %742 = arith.mulf %87, %351 : vector<8x128xf32>
    %743 = arith.addf %741, %742 : vector<8x128xf32>
    %744 = arith.mulf %89, %359 : vector<8x128xf32>
    %745 = arith.addf %743, %744 : vector<8x128xf32>
    %746 = arith.mulf %91, %367 : vector<8x128xf32>
    %747 = arith.addf %745, %746 : vector<8x128xf32>
    %748 = arith.mulf %93, %375 : vector<8x128xf32>
    %749 = arith.addf %747, %748 : vector<8x128xf32>
    %750 = arith.mulf %95, %383 : vector<8x128xf32>
    %751 = arith.addf %749, %750 : vector<8x128xf32>
    %752 = arith.mulf %97, %289 : vector<8x128xf32>
    %753 = arith.mulf %99, %297 : vector<8x128xf32>
    %754 = arith.addf %752, %753 : vector<8x128xf32>
    %755 = arith.mulf %101, %305 : vector<8x128xf32>
    %756 = arith.addf %754, %755 : vector<8x128xf32>
    %757 = arith.mulf %103, %313 : vector<8x128xf32>
    %758 = arith.addf %756, %757 : vector<8x128xf32>
    %759 = arith.mulf %105, %321 : vector<8x128xf32>
    %760 = arith.addf %758, %759 : vector<8x128xf32>
    %761 = arith.mulf %107, %329 : vector<8x128xf32>
    %762 = arith.addf %760, %761 : vector<8x128xf32>
    %763 = arith.mulf %109, %337 : vector<8x128xf32>
    %764 = arith.addf %762, %763 : vector<8x128xf32>
    %765 = arith.mulf %111, %345 : vector<8x128xf32>
    %766 = arith.addf %764, %765 : vector<8x128xf32>
    %767 = arith.mulf %113, %353 : vector<8x128xf32>
    %768 = arith.addf %766, %767 : vector<8x128xf32>
    %769 = arith.mulf %115, %361 : vector<8x128xf32>
    %770 = arith.addf %768, %769 : vector<8x128xf32>
    %771 = arith.mulf %117, %369 : vector<8x128xf32>
    %772 = arith.addf %770, %771 : vector<8x128xf32>
    %773 = arith.mulf %119, %377 : vector<8x128xf32>
    %774 = arith.addf %772, %773 : vector<8x128xf32>
    %775 = arith.mulf %97, %291 : vector<8x128xf32>
    %776 = arith.mulf %99, %299 : vector<8x128xf32>
    %777 = arith.addf %775, %776 : vector<8x128xf32>
    %778 = arith.mulf %101, %307 : vector<8x128xf32>
    %779 = arith.addf %777, %778 : vector<8x128xf32>
    %780 = arith.mulf %103, %315 : vector<8x128xf32>
    %781 = arith.addf %779, %780 : vector<8x128xf32>
    %782 = arith.mulf %105, %323 : vector<8x128xf32>
    %783 = arith.addf %781, %782 : vector<8x128xf32>
    %784 = arith.mulf %107, %331 : vector<8x128xf32>
    %785 = arith.addf %783, %784 : vector<8x128xf32>
    %786 = arith.mulf %109, %339 : vector<8x128xf32>
    %787 = arith.addf %785, %786 : vector<8x128xf32>
    %788 = arith.mulf %111, %347 : vector<8x128xf32>
    %789 = arith.addf %787, %788 : vector<8x128xf32>
    %790 = arith.mulf %113, %355 : vector<8x128xf32>
    %791 = arith.addf %789, %790 : vector<8x128xf32>
    %792 = arith.mulf %115, %363 : vector<8x128xf32>
    %793 = arith.addf %791, %792 : vector<8x128xf32>
    %794 = arith.mulf %117, %371 : vector<8x128xf32>
    %795 = arith.addf %793, %794 : vector<8x128xf32>
    %796 = arith.mulf %119, %379 : vector<8x128xf32>
    %797 = arith.addf %795, %796 : vector<8x128xf32>
    %798 = arith.mulf %97, %293 : vector<8x128xf32>
    %799 = arith.mulf %99, %301 : vector<8x128xf32>
    %800 = arith.addf %798, %799 : vector<8x128xf32>
    %801 = arith.mulf %101, %309 : vector<8x128xf32>
    %802 = arith.addf %800, %801 : vector<8x128xf32>
    %803 = arith.mulf %103, %317 : vector<8x128xf32>
    %804 = arith.addf %802, %803 : vector<8x128xf32>
    %805 = arith.mulf %105, %325 : vector<8x128xf32>
    %806 = arith.addf %804, %805 : vector<8x128xf32>
    %807 = arith.mulf %107, %333 : vector<8x128xf32>
    %808 = arith.addf %806, %807 : vector<8x128xf32>
    %809 = arith.mulf %109, %341 : vector<8x128xf32>
    %810 = arith.addf %808, %809 : vector<8x128xf32>
    %811 = arith.mulf %111, %349 : vector<8x128xf32>
    %812 = arith.addf %810, %811 : vector<8x128xf32>
    %813 = arith.mulf %113, %357 : vector<8x128xf32>
    %814 = arith.addf %812, %813 : vector<8x128xf32>
    %815 = arith.mulf %115, %365 : vector<8x128xf32>
    %816 = arith.addf %814, %815 : vector<8x128xf32>
    %817 = arith.mulf %117, %373 : vector<8x128xf32>
    %818 = arith.addf %816, %817 : vector<8x128xf32>
    %819 = arith.mulf %119, %381 : vector<8x128xf32>
    %820 = arith.addf %818, %819 : vector<8x128xf32>
    %821 = arith.mulf %97, %295 : vector<8x128xf32>
    %822 = arith.mulf %99, %303 : vector<8x128xf32>
    %823 = arith.addf %821, %822 : vector<8x128xf32>
    %824 = arith.mulf %101, %311 : vector<8x128xf32>
    %825 = arith.addf %823, %824 : vector<8x128xf32>
    %826 = arith.mulf %103, %319 : vector<8x128xf32>
    %827 = arith.addf %825, %826 : vector<8x128xf32>
    %828 = arith.mulf %105, %327 : vector<8x128xf32>
    %829 = arith.addf %827, %828 : vector<8x128xf32>
    %830 = arith.mulf %107, %335 : vector<8x128xf32>
    %831 = arith.addf %829, %830 : vector<8x128xf32>
    %832 = arith.mulf %109, %343 : vector<8x128xf32>
    %833 = arith.addf %831, %832 : vector<8x128xf32>
    %834 = arith.mulf %111, %351 : vector<8x128xf32>
    %835 = arith.addf %833, %834 : vector<8x128xf32>
    %836 = arith.mulf %113, %359 : vector<8x128xf32>
    %837 = arith.addf %835, %836 : vector<8x128xf32>
    %838 = arith.mulf %115, %367 : vector<8x128xf32>
    %839 = arith.addf %837, %838 : vector<8x128xf32>
    %840 = arith.mulf %117, %375 : vector<8x128xf32>
    %841 = arith.addf %839, %840 : vector<8x128xf32>
    %842 = arith.mulf %119, %383 : vector<8x128xf32>
    %843 = arith.addf %841, %842 : vector<8x128xf32>
    %844 = arith.mulf %121, %289 : vector<8x128xf32>
    %845 = arith.mulf %123, %297 : vector<8x128xf32>
    %846 = arith.addf %844, %845 : vector<8x128xf32>
    %847 = arith.mulf %125, %305 : vector<8x128xf32>
    %848 = arith.addf %846, %847 : vector<8x128xf32>
    %849 = arith.mulf %127, %313 : vector<8x128xf32>
    %850 = arith.addf %848, %849 : vector<8x128xf32>
    %851 = arith.mulf %129, %321 : vector<8x128xf32>
    %852 = arith.addf %850, %851 : vector<8x128xf32>
    %853 = arith.mulf %131, %329 : vector<8x128xf32>
    %854 = arith.addf %852, %853 : vector<8x128xf32>
    %855 = arith.mulf %133, %337 : vector<8x128xf32>
    %856 = arith.addf %854, %855 : vector<8x128xf32>
    %857 = arith.mulf %135, %345 : vector<8x128xf32>
    %858 = arith.addf %856, %857 : vector<8x128xf32>
    %859 = arith.mulf %137, %353 : vector<8x128xf32>
    %860 = arith.addf %858, %859 : vector<8x128xf32>
    %861 = arith.mulf %139, %361 : vector<8x128xf32>
    %862 = arith.addf %860, %861 : vector<8x128xf32>
    %863 = arith.mulf %141, %369 : vector<8x128xf32>
    %864 = arith.addf %862, %863 : vector<8x128xf32>
    %865 = arith.mulf %143, %377 : vector<8x128xf32>
    %866 = arith.addf %864, %865 : vector<8x128xf32>
    %867 = arith.mulf %121, %291 : vector<8x128xf32>
    %868 = arith.mulf %123, %299 : vector<8x128xf32>
    %869 = arith.addf %867, %868 : vector<8x128xf32>
    %870 = arith.mulf %125, %307 : vector<8x128xf32>
    %871 = arith.addf %869, %870 : vector<8x128xf32>
    %872 = arith.mulf %127, %315 : vector<8x128xf32>
    %873 = arith.addf %871, %872 : vector<8x128xf32>
    %874 = arith.mulf %129, %323 : vector<8x128xf32>
    %875 = arith.addf %873, %874 : vector<8x128xf32>
    %876 = arith.mulf %131, %331 : vector<8x128xf32>
    %877 = arith.addf %875, %876 : vector<8x128xf32>
    %878 = arith.mulf %133, %339 : vector<8x128xf32>
    %879 = arith.addf %877, %878 : vector<8x128xf32>
    %880 = arith.mulf %135, %347 : vector<8x128xf32>
    %881 = arith.addf %879, %880 : vector<8x128xf32>
    %882 = arith.mulf %137, %355 : vector<8x128xf32>
    %883 = arith.addf %881, %882 : vector<8x128xf32>
    %884 = arith.mulf %139, %363 : vector<8x128xf32>
    %885 = arith.addf %883, %884 : vector<8x128xf32>
    %886 = arith.mulf %141, %371 : vector<8x128xf32>
    %887 = arith.addf %885, %886 : vector<8x128xf32>
    %888 = arith.mulf %143, %379 : vector<8x128xf32>
    %889 = arith.addf %887, %888 : vector<8x128xf32>
    %890 = arith.mulf %121, %293 : vector<8x128xf32>
    %891 = arith.mulf %123, %301 : vector<8x128xf32>
    %892 = arith.addf %890, %891 : vector<8x128xf32>
    %893 = arith.mulf %125, %309 : vector<8x128xf32>
    %894 = arith.addf %892, %893 : vector<8x128xf32>
    %895 = arith.mulf %127, %317 : vector<8x128xf32>
    %896 = arith.addf %894, %895 : vector<8x128xf32>
    %897 = arith.mulf %129, %325 : vector<8x128xf32>
    %898 = arith.addf %896, %897 : vector<8x128xf32>
    %899 = arith.mulf %131, %333 : vector<8x128xf32>
    %900 = arith.addf %898, %899 : vector<8x128xf32>
    %901 = arith.mulf %133, %341 : vector<8x128xf32>
    %902 = arith.addf %900, %901 : vector<8x128xf32>
    %903 = arith.mulf %135, %349 : vector<8x128xf32>
    %904 = arith.addf %902, %903 : vector<8x128xf32>
    %905 = arith.mulf %137, %357 : vector<8x128xf32>
    %906 = arith.addf %904, %905 : vector<8x128xf32>
    %907 = arith.mulf %139, %365 : vector<8x128xf32>
    %908 = arith.addf %906, %907 : vector<8x128xf32>
    %909 = arith.mulf %141, %373 : vector<8x128xf32>
    %910 = arith.addf %908, %909 : vector<8x128xf32>
    %911 = arith.mulf %143, %381 : vector<8x128xf32>
    %912 = arith.addf %910, %911 : vector<8x128xf32>
    %913 = arith.mulf %121, %295 : vector<8x128xf32>
    %914 = arith.mulf %123, %303 : vector<8x128xf32>
    %915 = arith.addf %913, %914 : vector<8x128xf32>
    %916 = arith.mulf %125, %311 : vector<8x128xf32>
    %917 = arith.addf %915, %916 : vector<8x128xf32>
    %918 = arith.mulf %127, %319 : vector<8x128xf32>
    %919 = arith.addf %917, %918 : vector<8x128xf32>
    %920 = arith.mulf %129, %327 : vector<8x128xf32>
    %921 = arith.addf %919, %920 : vector<8x128xf32>
    %922 = arith.mulf %131, %335 : vector<8x128xf32>
    %923 = arith.addf %921, %922 : vector<8x128xf32>
    %924 = arith.mulf %133, %343 : vector<8x128xf32>
    %925 = arith.addf %923, %924 : vector<8x128xf32>
    %926 = arith.mulf %135, %351 : vector<8x128xf32>
    %927 = arith.addf %925, %926 : vector<8x128xf32>
    %928 = arith.mulf %137, %359 : vector<8x128xf32>
    %929 = arith.addf %927, %928 : vector<8x128xf32>
    %930 = arith.mulf %139, %367 : vector<8x128xf32>
    %931 = arith.addf %929, %930 : vector<8x128xf32>
    %932 = arith.mulf %141, %375 : vector<8x128xf32>
    %933 = arith.addf %931, %932 : vector<8x128xf32>
    %934 = arith.mulf %143, %383 : vector<8x128xf32>
    %935 = arith.addf %933, %934 : vector<8x128xf32>
    %936 = arith.mulf %145, %289 : vector<8x128xf32>
    %937 = arith.mulf %147, %297 : vector<8x128xf32>
    %938 = arith.addf %936, %937 : vector<8x128xf32>
    %939 = arith.mulf %149, %305 : vector<8x128xf32>
    %940 = arith.addf %938, %939 : vector<8x128xf32>
    %941 = arith.mulf %151, %313 : vector<8x128xf32>
    %942 = arith.addf %940, %941 : vector<8x128xf32>
    %943 = arith.mulf %153, %321 : vector<8x128xf32>
    %944 = arith.addf %942, %943 : vector<8x128xf32>
    %945 = arith.mulf %155, %329 : vector<8x128xf32>
    %946 = arith.addf %944, %945 : vector<8x128xf32>
    %947 = arith.mulf %157, %337 : vector<8x128xf32>
    %948 = arith.addf %946, %947 : vector<8x128xf32>
    %949 = arith.mulf %159, %345 : vector<8x128xf32>
    %950 = arith.addf %948, %949 : vector<8x128xf32>
    %951 = arith.mulf %161, %353 : vector<8x128xf32>
    %952 = arith.addf %950, %951 : vector<8x128xf32>
    %953 = arith.mulf %163, %361 : vector<8x128xf32>
    %954 = arith.addf %952, %953 : vector<8x128xf32>
    %955 = arith.mulf %165, %369 : vector<8x128xf32>
    %956 = arith.addf %954, %955 : vector<8x128xf32>
    %957 = arith.mulf %167, %377 : vector<8x128xf32>
    %958 = arith.addf %956, %957 : vector<8x128xf32>
    %959 = arith.mulf %145, %291 : vector<8x128xf32>
    %960 = arith.mulf %147, %299 : vector<8x128xf32>
    %961 = arith.addf %959, %960 : vector<8x128xf32>
    %962 = arith.mulf %149, %307 : vector<8x128xf32>
    %963 = arith.addf %961, %962 : vector<8x128xf32>
    %964 = arith.mulf %151, %315 : vector<8x128xf32>
    %965 = arith.addf %963, %964 : vector<8x128xf32>
    %966 = arith.mulf %153, %323 : vector<8x128xf32>
    %967 = arith.addf %965, %966 : vector<8x128xf32>
    %968 = arith.mulf %155, %331 : vector<8x128xf32>
    %969 = arith.addf %967, %968 : vector<8x128xf32>
    %970 = arith.mulf %157, %339 : vector<8x128xf32>
    %971 = arith.addf %969, %970 : vector<8x128xf32>
    %972 = arith.mulf %159, %347 : vector<8x128xf32>
    %973 = arith.addf %971, %972 : vector<8x128xf32>
    %974 = arith.mulf %161, %355 : vector<8x128xf32>
    %975 = arith.addf %973, %974 : vector<8x128xf32>
    %976 = arith.mulf %163, %363 : vector<8x128xf32>
    %977 = arith.addf %975, %976 : vector<8x128xf32>
    %978 = arith.mulf %165, %371 : vector<8x128xf32>
    %979 = arith.addf %977, %978 : vector<8x128xf32>
    %980 = arith.mulf %167, %379 : vector<8x128xf32>
    %981 = arith.addf %979, %980 : vector<8x128xf32>
    %982 = arith.mulf %145, %293 : vector<8x128xf32>
    %983 = arith.mulf %147, %301 : vector<8x128xf32>
    %984 = arith.addf %982, %983 : vector<8x128xf32>
    %985 = arith.mulf %149, %309 : vector<8x128xf32>
    %986 = arith.addf %984, %985 : vector<8x128xf32>
    %987 = arith.mulf %151, %317 : vector<8x128xf32>
    %988 = arith.addf %986, %987 : vector<8x128xf32>
    %989 = arith.mulf %153, %325 : vector<8x128xf32>
    %990 = arith.addf %988, %989 : vector<8x128xf32>
    %991 = arith.mulf %155, %333 : vector<8x128xf32>
    %992 = arith.addf %990, %991 : vector<8x128xf32>
    %993 = arith.mulf %157, %341 : vector<8x128xf32>
    %994 = arith.addf %992, %993 : vector<8x128xf32>
    %995 = arith.mulf %159, %349 : vector<8x128xf32>
    %996 = arith.addf %994, %995 : vector<8x128xf32>
    %997 = arith.mulf %161, %357 : vector<8x128xf32>
    %998 = arith.addf %996, %997 : vector<8x128xf32>
    %999 = arith.mulf %163, %365 : vector<8x128xf32>
    %1000 = arith.addf %998, %999 : vector<8x128xf32>
    %1001 = arith.mulf %165, %373 : vector<8x128xf32>
    %1002 = arith.addf %1000, %1001 : vector<8x128xf32>
    %1003 = arith.mulf %167, %381 : vector<8x128xf32>
    %1004 = arith.addf %1002, %1003 : vector<8x128xf32>
    %1005 = arith.mulf %145, %295 : vector<8x128xf32>
    %1006 = arith.mulf %147, %303 : vector<8x128xf32>
    %1007 = arith.addf %1005, %1006 : vector<8x128xf32>
    %1008 = arith.mulf %149, %311 : vector<8x128xf32>
    %1009 = arith.addf %1007, %1008 : vector<8x128xf32>
    %1010 = arith.mulf %151, %319 : vector<8x128xf32>
    %1011 = arith.addf %1009, %1010 : vector<8x128xf32>
    %1012 = arith.mulf %153, %327 : vector<8x128xf32>
    %1013 = arith.addf %1011, %1012 : vector<8x128xf32>
    %1014 = arith.mulf %155, %335 : vector<8x128xf32>
    %1015 = arith.addf %1013, %1014 : vector<8x128xf32>
    %1016 = arith.mulf %157, %343 : vector<8x128xf32>
    %1017 = arith.addf %1015, %1016 : vector<8x128xf32>
    %1018 = arith.mulf %159, %351 : vector<8x128xf32>
    %1019 = arith.addf %1017, %1018 : vector<8x128xf32>
    %1020 = arith.mulf %161, %359 : vector<8x128xf32>
    %1021 = arith.addf %1019, %1020 : vector<8x128xf32>
    %1022 = arith.mulf %163, %367 : vector<8x128xf32>
    %1023 = arith.addf %1021, %1022 : vector<8x128xf32>
    %1024 = arith.mulf %165, %375 : vector<8x128xf32>
    %1025 = arith.addf %1023, %1024 : vector<8x128xf32>
    %1026 = arith.mulf %167, %383 : vector<8x128xf32>
    %1027 = arith.addf %1025, %1026 : vector<8x128xf32>
    %1028 = arith.mulf %169, %289 : vector<8x128xf32>
    %1029 = arith.mulf %171, %297 : vector<8x128xf32>
    %1030 = arith.addf %1028, %1029 : vector<8x128xf32>
    %1031 = arith.mulf %173, %305 : vector<8x128xf32>
    %1032 = arith.addf %1030, %1031 : vector<8x128xf32>
    %1033 = arith.mulf %175, %313 : vector<8x128xf32>
    %1034 = arith.addf %1032, %1033 : vector<8x128xf32>
    %1035 = arith.mulf %177, %321 : vector<8x128xf32>
    %1036 = arith.addf %1034, %1035 : vector<8x128xf32>
    %1037 = arith.mulf %179, %329 : vector<8x128xf32>
    %1038 = arith.addf %1036, %1037 : vector<8x128xf32>
    %1039 = arith.mulf %181, %337 : vector<8x128xf32>
    %1040 = arith.addf %1038, %1039 : vector<8x128xf32>
    %1041 = arith.mulf %183, %345 : vector<8x128xf32>
    %1042 = arith.addf %1040, %1041 : vector<8x128xf32>
    %1043 = arith.mulf %185, %353 : vector<8x128xf32>
    %1044 = arith.addf %1042, %1043 : vector<8x128xf32>
    %1045 = arith.mulf %187, %361 : vector<8x128xf32>
    %1046 = arith.addf %1044, %1045 : vector<8x128xf32>
    %1047 = arith.mulf %189, %369 : vector<8x128xf32>
    %1048 = arith.addf %1046, %1047 : vector<8x128xf32>
    %1049 = arith.mulf %191, %377 : vector<8x128xf32>
    %1050 = arith.addf %1048, %1049 : vector<8x128xf32>
    %1051 = arith.mulf %169, %291 : vector<8x128xf32>
    %1052 = arith.mulf %171, %299 : vector<8x128xf32>
    %1053 = arith.addf %1051, %1052 : vector<8x128xf32>
    %1054 = arith.mulf %173, %307 : vector<8x128xf32>
    %1055 = arith.addf %1053, %1054 : vector<8x128xf32>
    %1056 = arith.mulf %175, %315 : vector<8x128xf32>
    %1057 = arith.addf %1055, %1056 : vector<8x128xf32>
    %1058 = arith.mulf %177, %323 : vector<8x128xf32>
    %1059 = arith.addf %1057, %1058 : vector<8x128xf32>
    %1060 = arith.mulf %179, %331 : vector<8x128xf32>
    %1061 = arith.addf %1059, %1060 : vector<8x128xf32>
    %1062 = arith.mulf %181, %339 : vector<8x128xf32>
    %1063 = arith.addf %1061, %1062 : vector<8x128xf32>
    %1064 = arith.mulf %183, %347 : vector<8x128xf32>
    %1065 = arith.addf %1063, %1064 : vector<8x128xf32>
    %1066 = arith.mulf %185, %355 : vector<8x128xf32>
    %1067 = arith.addf %1065, %1066 : vector<8x128xf32>
    %1068 = arith.mulf %187, %363 : vector<8x128xf32>
    %1069 = arith.addf %1067, %1068 : vector<8x128xf32>
    %1070 = arith.mulf %189, %371 : vector<8x128xf32>
    %1071 = arith.addf %1069, %1070 : vector<8x128xf32>
    %1072 = arith.mulf %191, %379 : vector<8x128xf32>
    %1073 = arith.addf %1071, %1072 : vector<8x128xf32>
    %1074 = arith.mulf %169, %293 : vector<8x128xf32>
    %1075 = arith.mulf %171, %301 : vector<8x128xf32>
    %1076 = arith.addf %1074, %1075 : vector<8x128xf32>
    %1077 = arith.mulf %173, %309 : vector<8x128xf32>
    %1078 = arith.addf %1076, %1077 : vector<8x128xf32>
    %1079 = arith.mulf %175, %317 : vector<8x128xf32>
    %1080 = arith.addf %1078, %1079 : vector<8x128xf32>
    %1081 = arith.mulf %177, %325 : vector<8x128xf32>
    %1082 = arith.addf %1080, %1081 : vector<8x128xf32>
    %1083 = arith.mulf %179, %333 : vector<8x128xf32>
    %1084 = arith.addf %1082, %1083 : vector<8x128xf32>
    %1085 = arith.mulf %181, %341 : vector<8x128xf32>
    %1086 = arith.addf %1084, %1085 : vector<8x128xf32>
    %1087 = arith.mulf %183, %349 : vector<8x128xf32>
    %1088 = arith.addf %1086, %1087 : vector<8x128xf32>
    %1089 = arith.mulf %185, %357 : vector<8x128xf32>
    %1090 = arith.addf %1088, %1089 : vector<8x128xf32>
    %1091 = arith.mulf %187, %365 : vector<8x128xf32>
    %1092 = arith.addf %1090, %1091 : vector<8x128xf32>
    %1093 = arith.mulf %189, %373 : vector<8x128xf32>
    %1094 = arith.addf %1092, %1093 : vector<8x128xf32>
    %1095 = arith.mulf %191, %381 : vector<8x128xf32>
    %1096 = arith.addf %1094, %1095 : vector<8x128xf32>
    %1097 = arith.mulf %169, %295 : vector<8x128xf32>
    %1098 = arith.mulf %171, %303 : vector<8x128xf32>
    %1099 = arith.addf %1097, %1098 : vector<8x128xf32>
    %1100 = arith.mulf %173, %311 : vector<8x128xf32>
    %1101 = arith.addf %1099, %1100 : vector<8x128xf32>
    %1102 = arith.mulf %175, %319 : vector<8x128xf32>
    %1103 = arith.addf %1101, %1102 : vector<8x128xf32>
    %1104 = arith.mulf %177, %327 : vector<8x128xf32>
    %1105 = arith.addf %1103, %1104 : vector<8x128xf32>
    %1106 = arith.mulf %179, %335 : vector<8x128xf32>
    %1107 = arith.addf %1105, %1106 : vector<8x128xf32>
    %1108 = arith.mulf %181, %343 : vector<8x128xf32>
    %1109 = arith.addf %1107, %1108 : vector<8x128xf32>
    %1110 = arith.mulf %183, %351 : vector<8x128xf32>
    %1111 = arith.addf %1109, %1110 : vector<8x128xf32>
    %1112 = arith.mulf %185, %359 : vector<8x128xf32>
    %1113 = arith.addf %1111, %1112 : vector<8x128xf32>
    %1114 = arith.mulf %187, %367 : vector<8x128xf32>
    %1115 = arith.addf %1113, %1114 : vector<8x128xf32>
    %1116 = arith.mulf %189, %375 : vector<8x128xf32>
    %1117 = arith.addf %1115, %1116 : vector<8x128xf32>
    %1118 = arith.mulf %191, %383 : vector<8x128xf32>
    %1119 = arith.addf %1117, %1118 : vector<8x128xf32>
    %1120 = arith.mulf %193, %289 : vector<8x128xf32>
    %1121 = arith.mulf %195, %297 : vector<8x128xf32>
    %1122 = arith.addf %1120, %1121 : vector<8x128xf32>
    %1123 = arith.mulf %197, %305 : vector<8x128xf32>
    %1124 = arith.addf %1122, %1123 : vector<8x128xf32>
    %1125 = arith.mulf %199, %313 : vector<8x128xf32>
    %1126 = arith.addf %1124, %1125 : vector<8x128xf32>
    %1127 = arith.mulf %201, %321 : vector<8x128xf32>
    %1128 = arith.addf %1126, %1127 : vector<8x128xf32>
    %1129 = arith.mulf %203, %329 : vector<8x128xf32>
    %1130 = arith.addf %1128, %1129 : vector<8x128xf32>
    %1131 = arith.mulf %205, %337 : vector<8x128xf32>
    %1132 = arith.addf %1130, %1131 : vector<8x128xf32>
    %1133 = arith.mulf %207, %345 : vector<8x128xf32>
    %1134 = arith.addf %1132, %1133 : vector<8x128xf32>
    %1135 = arith.mulf %209, %353 : vector<8x128xf32>
    %1136 = arith.addf %1134, %1135 : vector<8x128xf32>
    %1137 = arith.mulf %211, %361 : vector<8x128xf32>
    %1138 = arith.addf %1136, %1137 : vector<8x128xf32>
    %1139 = arith.mulf %213, %369 : vector<8x128xf32>
    %1140 = arith.addf %1138, %1139 : vector<8x128xf32>
    %1141 = arith.mulf %215, %377 : vector<8x128xf32>
    %1142 = arith.addf %1140, %1141 : vector<8x128xf32>
    %1143 = arith.mulf %193, %291 : vector<8x128xf32>
    %1144 = arith.mulf %195, %299 : vector<8x128xf32>
    %1145 = arith.addf %1143, %1144 : vector<8x128xf32>
    %1146 = arith.mulf %197, %307 : vector<8x128xf32>
    %1147 = arith.addf %1145, %1146 : vector<8x128xf32>
    %1148 = arith.mulf %199, %315 : vector<8x128xf32>
    %1149 = arith.addf %1147, %1148 : vector<8x128xf32>
    %1150 = arith.mulf %201, %323 : vector<8x128xf32>
    %1151 = arith.addf %1149, %1150 : vector<8x128xf32>
    %1152 = arith.mulf %203, %331 : vector<8x128xf32>
    %1153 = arith.addf %1151, %1152 : vector<8x128xf32>
    %1154 = arith.mulf %205, %339 : vector<8x128xf32>
    %1155 = arith.addf %1153, %1154 : vector<8x128xf32>
    %1156 = arith.mulf %207, %347 : vector<8x128xf32>
    %1157 = arith.addf %1155, %1156 : vector<8x128xf32>
    %1158 = arith.mulf %209, %355 : vector<8x128xf32>
    %1159 = arith.addf %1157, %1158 : vector<8x128xf32>
    %1160 = arith.mulf %211, %363 : vector<8x128xf32>
    %1161 = arith.addf %1159, %1160 : vector<8x128xf32>
    %1162 = arith.mulf %213, %371 : vector<8x128xf32>
    %1163 = arith.addf %1161, %1162 : vector<8x128xf32>
    %1164 = arith.mulf %215, %379 : vector<8x128xf32>
    %1165 = arith.addf %1163, %1164 : vector<8x128xf32>
    %1166 = arith.mulf %193, %293 : vector<8x128xf32>
    %1167 = arith.mulf %195, %301 : vector<8x128xf32>
    %1168 = arith.addf %1166, %1167 : vector<8x128xf32>
    %1169 = arith.mulf %197, %309 : vector<8x128xf32>
    %1170 = arith.addf %1168, %1169 : vector<8x128xf32>
    %1171 = arith.mulf %199, %317 : vector<8x128xf32>
    %1172 = arith.addf %1170, %1171 : vector<8x128xf32>
    %1173 = arith.mulf %201, %325 : vector<8x128xf32>
    %1174 = arith.addf %1172, %1173 : vector<8x128xf32>
    %1175 = arith.mulf %203, %333 : vector<8x128xf32>
    %1176 = arith.addf %1174, %1175 : vector<8x128xf32>
    %1177 = arith.mulf %205, %341 : vector<8x128xf32>
    %1178 = arith.addf %1176, %1177 : vector<8x128xf32>
    %1179 = arith.mulf %207, %349 : vector<8x128xf32>
    %1180 = arith.addf %1178, %1179 : vector<8x128xf32>
    %1181 = arith.mulf %209, %357 : vector<8x128xf32>
    %1182 = arith.addf %1180, %1181 : vector<8x128xf32>
    %1183 = arith.mulf %211, %365 : vector<8x128xf32>
    %1184 = arith.addf %1182, %1183 : vector<8x128xf32>
    %1185 = arith.mulf %213, %373 : vector<8x128xf32>
    %1186 = arith.addf %1184, %1185 : vector<8x128xf32>
    %1187 = arith.mulf %215, %381 : vector<8x128xf32>
    %1188 = arith.addf %1186, %1187 : vector<8x128xf32>
    %1189 = arith.mulf %193, %295 : vector<8x128xf32>
    %1190 = arith.mulf %195, %303 : vector<8x128xf32>
    %1191 = arith.addf %1189, %1190 : vector<8x128xf32>
    %1192 = arith.mulf %197, %311 : vector<8x128xf32>
    %1193 = arith.addf %1191, %1192 : vector<8x128xf32>
    %1194 = arith.mulf %199, %319 : vector<8x128xf32>
    %1195 = arith.addf %1193, %1194 : vector<8x128xf32>
    %1196 = arith.mulf %201, %327 : vector<8x128xf32>
    %1197 = arith.addf %1195, %1196 : vector<8x128xf32>
    %1198 = arith.mulf %203, %335 : vector<8x128xf32>
    %1199 = arith.addf %1197, %1198 : vector<8x128xf32>
    %1200 = arith.mulf %205, %343 : vector<8x128xf32>
    %1201 = arith.addf %1199, %1200 : vector<8x128xf32>
    %1202 = arith.mulf %207, %351 : vector<8x128xf32>
    %1203 = arith.addf %1201, %1202 : vector<8x128xf32>
    %1204 = arith.mulf %209, %359 : vector<8x128xf32>
    %1205 = arith.addf %1203, %1204 : vector<8x128xf32>
    %1206 = arith.mulf %211, %367 : vector<8x128xf32>
    %1207 = arith.addf %1205, %1206 : vector<8x128xf32>
    %1208 = arith.mulf %213, %375 : vector<8x128xf32>
    %1209 = arith.addf %1207, %1208 : vector<8x128xf32>
    %1210 = arith.mulf %215, %383 : vector<8x128xf32>
    %1211 = arith.addf %1209, %1210 : vector<8x128xf32>
    %1212 = arith.mulf %217, %289 : vector<8x128xf32>
    %1213 = arith.mulf %219, %297 : vector<8x128xf32>
    %1214 = arith.addf %1212, %1213 : vector<8x128xf32>
    %1215 = arith.mulf %221, %305 : vector<8x128xf32>
    %1216 = arith.addf %1214, %1215 : vector<8x128xf32>
    %1217 = arith.mulf %223, %313 : vector<8x128xf32>
    %1218 = arith.addf %1216, %1217 : vector<8x128xf32>
    %1219 = arith.mulf %225, %321 : vector<8x128xf32>
    %1220 = arith.addf %1218, %1219 : vector<8x128xf32>
    %1221 = arith.mulf %227, %329 : vector<8x128xf32>
    %1222 = arith.addf %1220, %1221 : vector<8x128xf32>
    %1223 = arith.mulf %229, %337 : vector<8x128xf32>
    %1224 = arith.addf %1222, %1223 : vector<8x128xf32>
    %1225 = arith.mulf %231, %345 : vector<8x128xf32>
    %1226 = arith.addf %1224, %1225 : vector<8x128xf32>
    %1227 = arith.mulf %233, %353 : vector<8x128xf32>
    %1228 = arith.addf %1226, %1227 : vector<8x128xf32>
    %1229 = arith.mulf %235, %361 : vector<8x128xf32>
    %1230 = arith.addf %1228, %1229 : vector<8x128xf32>
    %1231 = arith.mulf %237, %369 : vector<8x128xf32>
    %1232 = arith.addf %1230, %1231 : vector<8x128xf32>
    %1233 = arith.mulf %239, %377 : vector<8x128xf32>
    %1234 = arith.addf %1232, %1233 : vector<8x128xf32>
    %1235 = arith.mulf %217, %291 : vector<8x128xf32>
    %1236 = arith.mulf %219, %299 : vector<8x128xf32>
    %1237 = arith.addf %1235, %1236 : vector<8x128xf32>
    %1238 = arith.mulf %221, %307 : vector<8x128xf32>
    %1239 = arith.addf %1237, %1238 : vector<8x128xf32>
    %1240 = arith.mulf %223, %315 : vector<8x128xf32>
    %1241 = arith.addf %1239, %1240 : vector<8x128xf32>
    %1242 = arith.mulf %225, %323 : vector<8x128xf32>
    %1243 = arith.addf %1241, %1242 : vector<8x128xf32>
    %1244 = arith.mulf %227, %331 : vector<8x128xf32>
    %1245 = arith.addf %1243, %1244 : vector<8x128xf32>
    %1246 = arith.mulf %229, %339 : vector<8x128xf32>
    %1247 = arith.addf %1245, %1246 : vector<8x128xf32>
    %1248 = arith.mulf %231, %347 : vector<8x128xf32>
    %1249 = arith.addf %1247, %1248 : vector<8x128xf32>
    %1250 = arith.mulf %233, %355 : vector<8x128xf32>
    %1251 = arith.addf %1249, %1250 : vector<8x128xf32>
    %1252 = arith.mulf %235, %363 : vector<8x128xf32>
    %1253 = arith.addf %1251, %1252 : vector<8x128xf32>
    %1254 = arith.mulf %237, %371 : vector<8x128xf32>
    %1255 = arith.addf %1253, %1254 : vector<8x128xf32>
    %1256 = arith.mulf %239, %379 : vector<8x128xf32>
    %1257 = arith.addf %1255, %1256 : vector<8x128xf32>
    %1258 = arith.mulf %217, %293 : vector<8x128xf32>
    %1259 = arith.mulf %219, %301 : vector<8x128xf32>
    %1260 = arith.addf %1258, %1259 : vector<8x128xf32>
    %1261 = arith.mulf %221, %309 : vector<8x128xf32>
    %1262 = arith.addf %1260, %1261 : vector<8x128xf32>
    %1263 = arith.mulf %223, %317 : vector<8x128xf32>
    %1264 = arith.addf %1262, %1263 : vector<8x128xf32>
    %1265 = arith.mulf %225, %325 : vector<8x128xf32>
    %1266 = arith.addf %1264, %1265 : vector<8x128xf32>
    %1267 = arith.mulf %227, %333 : vector<8x128xf32>
    %1268 = arith.addf %1266, %1267 : vector<8x128xf32>
    %1269 = arith.mulf %229, %341 : vector<8x128xf32>
    %1270 = arith.addf %1268, %1269 : vector<8x128xf32>
    %1271 = arith.mulf %231, %349 : vector<8x128xf32>
    %1272 = arith.addf %1270, %1271 : vector<8x128xf32>
    %1273 = arith.mulf %233, %357 : vector<8x128xf32>
    %1274 = arith.addf %1272, %1273 : vector<8x128xf32>
    %1275 = arith.mulf %235, %365 : vector<8x128xf32>
    %1276 = arith.addf %1274, %1275 : vector<8x128xf32>
    %1277 = arith.mulf %237, %373 : vector<8x128xf32>
    %1278 = arith.addf %1276, %1277 : vector<8x128xf32>
    %1279 = arith.mulf %239, %381 : vector<8x128xf32>
    %1280 = arith.addf %1278, %1279 : vector<8x128xf32>
    %1281 = arith.mulf %217, %295 : vector<8x128xf32>
    %1282 = arith.mulf %219, %303 : vector<8x128xf32>
    %1283 = arith.addf %1281, %1282 : vector<8x128xf32>
    %1284 = arith.mulf %221, %311 : vector<8x128xf32>
    %1285 = arith.addf %1283, %1284 : vector<8x128xf32>
    %1286 = arith.mulf %223, %319 : vector<8x128xf32>
    %1287 = arith.addf %1285, %1286 : vector<8x128xf32>
    %1288 = arith.mulf %225, %327 : vector<8x128xf32>
    %1289 = arith.addf %1287, %1288 : vector<8x128xf32>
    %1290 = arith.mulf %227, %335 : vector<8x128xf32>
    %1291 = arith.addf %1289, %1290 : vector<8x128xf32>
    %1292 = arith.mulf %229, %343 : vector<8x128xf32>
    %1293 = arith.addf %1291, %1292 : vector<8x128xf32>
    %1294 = arith.mulf %231, %351 : vector<8x128xf32>
    %1295 = arith.addf %1293, %1294 : vector<8x128xf32>
    %1296 = arith.mulf %233, %359 : vector<8x128xf32>
    %1297 = arith.addf %1295, %1296 : vector<8x128xf32>
    %1298 = arith.mulf %235, %367 : vector<8x128xf32>
    %1299 = arith.addf %1297, %1298 : vector<8x128xf32>
    %1300 = arith.mulf %237, %375 : vector<8x128xf32>
    %1301 = arith.addf %1299, %1300 : vector<8x128xf32>
    %1302 = arith.mulf %239, %383 : vector<8x128xf32>
    %1303 = arith.addf %1301, %1302 : vector<8x128xf32>
    %1304 = arith.mulf %241, %289 : vector<8x128xf32>
    %1305 = arith.mulf %243, %297 : vector<8x128xf32>
    %1306 = arith.addf %1304, %1305 : vector<8x128xf32>
    %1307 = arith.mulf %245, %305 : vector<8x128xf32>
    %1308 = arith.addf %1306, %1307 : vector<8x128xf32>
    %1309 = arith.mulf %247, %313 : vector<8x128xf32>
    %1310 = arith.addf %1308, %1309 : vector<8x128xf32>
    %1311 = arith.mulf %249, %321 : vector<8x128xf32>
    %1312 = arith.addf %1310, %1311 : vector<8x128xf32>
    %1313 = arith.mulf %251, %329 : vector<8x128xf32>
    %1314 = arith.addf %1312, %1313 : vector<8x128xf32>
    %1315 = arith.mulf %253, %337 : vector<8x128xf32>
    %1316 = arith.addf %1314, %1315 : vector<8x128xf32>
    %1317 = arith.mulf %255, %345 : vector<8x128xf32>
    %1318 = arith.addf %1316, %1317 : vector<8x128xf32>
    %1319 = arith.mulf %257, %353 : vector<8x128xf32>
    %1320 = arith.addf %1318, %1319 : vector<8x128xf32>
    %1321 = arith.mulf %259, %361 : vector<8x128xf32>
    %1322 = arith.addf %1320, %1321 : vector<8x128xf32>
    %1323 = arith.mulf %261, %369 : vector<8x128xf32>
    %1324 = arith.addf %1322, %1323 : vector<8x128xf32>
    %1325 = arith.mulf %263, %377 : vector<8x128xf32>
    %1326 = arith.addf %1324, %1325 : vector<8x128xf32>
    %1327 = arith.mulf %241, %291 : vector<8x128xf32>
    %1328 = arith.mulf %243, %299 : vector<8x128xf32>
    %1329 = arith.addf %1327, %1328 : vector<8x128xf32>
    %1330 = arith.mulf %245, %307 : vector<8x128xf32>
    %1331 = arith.addf %1329, %1330 : vector<8x128xf32>
    %1332 = arith.mulf %247, %315 : vector<8x128xf32>
    %1333 = arith.addf %1331, %1332 : vector<8x128xf32>
    %1334 = arith.mulf %249, %323 : vector<8x128xf32>
    %1335 = arith.addf %1333, %1334 : vector<8x128xf32>
    %1336 = arith.mulf %251, %331 : vector<8x128xf32>
    %1337 = arith.addf %1335, %1336 : vector<8x128xf32>
    %1338 = arith.mulf %253, %339 : vector<8x128xf32>
    %1339 = arith.addf %1337, %1338 : vector<8x128xf32>
    %1340 = arith.mulf %255, %347 : vector<8x128xf32>
    %1341 = arith.addf %1339, %1340 : vector<8x128xf32>
    %1342 = arith.mulf %257, %355 : vector<8x128xf32>
    %1343 = arith.addf %1341, %1342 : vector<8x128xf32>
    %1344 = arith.mulf %259, %363 : vector<8x128xf32>
    %1345 = arith.addf %1343, %1344 : vector<8x128xf32>
    %1346 = arith.mulf %261, %371 : vector<8x128xf32>
    %1347 = arith.addf %1345, %1346 : vector<8x128xf32>
    %1348 = arith.mulf %263, %379 : vector<8x128xf32>
    %1349 = arith.addf %1347, %1348 : vector<8x128xf32>
    %1350 = arith.mulf %241, %293 : vector<8x128xf32>
    %1351 = arith.mulf %243, %301 : vector<8x128xf32>
    %1352 = arith.addf %1350, %1351 : vector<8x128xf32>
    %1353 = arith.mulf %245, %309 : vector<8x128xf32>
    %1354 = arith.addf %1352, %1353 : vector<8x128xf32>
    %1355 = arith.mulf %247, %317 : vector<8x128xf32>
    %1356 = arith.addf %1354, %1355 : vector<8x128xf32>
    %1357 = arith.mulf %249, %325 : vector<8x128xf32>
    %1358 = arith.addf %1356, %1357 : vector<8x128xf32>
    %1359 = arith.mulf %251, %333 : vector<8x128xf32>
    %1360 = arith.addf %1358, %1359 : vector<8x128xf32>
    %1361 = arith.mulf %253, %341 : vector<8x128xf32>
    %1362 = arith.addf %1360, %1361 : vector<8x128xf32>
    %1363 = arith.mulf %255, %349 : vector<8x128xf32>
    %1364 = arith.addf %1362, %1363 : vector<8x128xf32>
    %1365 = arith.mulf %257, %357 : vector<8x128xf32>
    %1366 = arith.addf %1364, %1365 : vector<8x128xf32>
    %1367 = arith.mulf %259, %365 : vector<8x128xf32>
    %1368 = arith.addf %1366, %1367 : vector<8x128xf32>
    %1369 = arith.mulf %261, %373 : vector<8x128xf32>
    %1370 = arith.addf %1368, %1369 : vector<8x128xf32>
    %1371 = arith.mulf %263, %381 : vector<8x128xf32>
    %1372 = arith.addf %1370, %1371 : vector<8x128xf32>
    %1373 = arith.mulf %241, %295 : vector<8x128xf32>
    %1374 = arith.mulf %243, %303 : vector<8x128xf32>
    %1375 = arith.addf %1373, %1374 : vector<8x128xf32>
    %1376 = arith.mulf %245, %311 : vector<8x128xf32>
    %1377 = arith.addf %1375, %1376 : vector<8x128xf32>
    %1378 = arith.mulf %247, %319 : vector<8x128xf32>
    %1379 = arith.addf %1377, %1378 : vector<8x128xf32>
    %1380 = arith.mulf %249, %327 : vector<8x128xf32>
    %1381 = arith.addf %1379, %1380 : vector<8x128xf32>
    %1382 = arith.mulf %251, %335 : vector<8x128xf32>
    %1383 = arith.addf %1381, %1382 : vector<8x128xf32>
    %1384 = arith.mulf %253, %343 : vector<8x128xf32>
    %1385 = arith.addf %1383, %1384 : vector<8x128xf32>
    %1386 = arith.mulf %255, %351 : vector<8x128xf32>
    %1387 = arith.addf %1385, %1386 : vector<8x128xf32>
    %1388 = arith.mulf %257, %359 : vector<8x128xf32>
    %1389 = arith.addf %1387, %1388 : vector<8x128xf32>
    %1390 = arith.mulf %259, %367 : vector<8x128xf32>
    %1391 = arith.addf %1389, %1390 : vector<8x128xf32>
    %1392 = arith.mulf %261, %375 : vector<8x128xf32>
    %1393 = arith.addf %1391, %1392 : vector<8x128xf32>
    %1394 = arith.mulf %263, %383 : vector<8x128xf32>
    %1395 = arith.addf %1393, %1394 : vector<8x128xf32>
    %1396 = arith.mulf %265, %289 : vector<8x128xf32>
    %1397 = arith.mulf %267, %297 : vector<8x128xf32>
    %1398 = arith.addf %1396, %1397 : vector<8x128xf32>
    %1399 = arith.mulf %269, %305 : vector<8x128xf32>
    %1400 = arith.addf %1398, %1399 : vector<8x128xf32>
    %1401 = arith.mulf %271, %313 : vector<8x128xf32>
    %1402 = arith.addf %1400, %1401 : vector<8x128xf32>
    %1403 = arith.mulf %273, %321 : vector<8x128xf32>
    %1404 = arith.addf %1402, %1403 : vector<8x128xf32>
    %1405 = arith.mulf %275, %329 : vector<8x128xf32>
    %1406 = arith.addf %1404, %1405 : vector<8x128xf32>
    %1407 = arith.mulf %277, %337 : vector<8x128xf32>
    %1408 = arith.addf %1406, %1407 : vector<8x128xf32>
    %1409 = arith.mulf %279, %345 : vector<8x128xf32>
    %1410 = arith.addf %1408, %1409 : vector<8x128xf32>
    %1411 = arith.mulf %281, %353 : vector<8x128xf32>
    %1412 = arith.addf %1410, %1411 : vector<8x128xf32>
    %1413 = arith.mulf %283, %361 : vector<8x128xf32>
    %1414 = arith.addf %1412, %1413 : vector<8x128xf32>
    %1415 = arith.mulf %285, %369 : vector<8x128xf32>
    %1416 = arith.addf %1414, %1415 : vector<8x128xf32>
    %1417 = arith.mulf %287, %377 : vector<8x128xf32>
    %1418 = arith.addf %1416, %1417 : vector<8x128xf32>
    %1419 = arith.mulf %265, %291 : vector<8x128xf32>
    %1420 = arith.mulf %267, %299 : vector<8x128xf32>
    %1421 = arith.addf %1419, %1420 : vector<8x128xf32>
    %1422 = arith.mulf %269, %307 : vector<8x128xf32>
    %1423 = arith.addf %1421, %1422 : vector<8x128xf32>
    %1424 = arith.mulf %271, %315 : vector<8x128xf32>
    %1425 = arith.addf %1423, %1424 : vector<8x128xf32>
    %1426 = arith.mulf %273, %323 : vector<8x128xf32>
    %1427 = arith.addf %1425, %1426 : vector<8x128xf32>
    %1428 = arith.mulf %275, %331 : vector<8x128xf32>
    %1429 = arith.addf %1427, %1428 : vector<8x128xf32>
    %1430 = arith.mulf %277, %339 : vector<8x128xf32>
    %1431 = arith.addf %1429, %1430 : vector<8x128xf32>
    %1432 = arith.mulf %279, %347 : vector<8x128xf32>
    %1433 = arith.addf %1431, %1432 : vector<8x128xf32>
    %1434 = arith.mulf %281, %355 : vector<8x128xf32>
    %1435 = arith.addf %1433, %1434 : vector<8x128xf32>
    %1436 = arith.mulf %283, %363 : vector<8x128xf32>
    %1437 = arith.addf %1435, %1436 : vector<8x128xf32>
    %1438 = arith.mulf %285, %371 : vector<8x128xf32>
    %1439 = arith.addf %1437, %1438 : vector<8x128xf32>
    %1440 = arith.mulf %287, %379 : vector<8x128xf32>
    %1441 = arith.addf %1439, %1440 : vector<8x128xf32>
    %1442 = arith.mulf %265, %293 : vector<8x128xf32>
    %1443 = arith.mulf %267, %301 : vector<8x128xf32>
    %1444 = arith.addf %1442, %1443 : vector<8x128xf32>
    %1445 = arith.mulf %269, %309 : vector<8x128xf32>
    %1446 = arith.addf %1444, %1445 : vector<8x128xf32>
    %1447 = arith.mulf %271, %317 : vector<8x128xf32>
    %1448 = arith.addf %1446, %1447 : vector<8x128xf32>
    %1449 = arith.mulf %273, %325 : vector<8x128xf32>
    %1450 = arith.addf %1448, %1449 : vector<8x128xf32>
    %1451 = arith.mulf %275, %333 : vector<8x128xf32>
    %1452 = arith.addf %1450, %1451 : vector<8x128xf32>
    %1453 = arith.mulf %277, %341 : vector<8x128xf32>
    %1454 = arith.addf %1452, %1453 : vector<8x128xf32>
    %1455 = arith.mulf %279, %349 : vector<8x128xf32>
    %1456 = arith.addf %1454, %1455 : vector<8x128xf32>
    %1457 = arith.mulf %281, %357 : vector<8x128xf32>
    %1458 = arith.addf %1456, %1457 : vector<8x128xf32>
    %1459 = arith.mulf %283, %365 : vector<8x128xf32>
    %1460 = arith.addf %1458, %1459 : vector<8x128xf32>
    %1461 = arith.mulf %285, %373 : vector<8x128xf32>
    %1462 = arith.addf %1460, %1461 : vector<8x128xf32>
    %1463 = arith.mulf %287, %381 : vector<8x128xf32>
    %1464 = arith.addf %1462, %1463 : vector<8x128xf32>
    %1465 = arith.mulf %265, %295 : vector<8x128xf32>
    %1466 = arith.mulf %267, %303 : vector<8x128xf32>
    %1467 = arith.addf %1465, %1466 : vector<8x128xf32>
    %1468 = arith.mulf %269, %311 : vector<8x128xf32>
    %1469 = arith.addf %1467, %1468 : vector<8x128xf32>
    %1470 = arith.mulf %271, %319 : vector<8x128xf32>
    %1471 = arith.addf %1469, %1470 : vector<8x128xf32>
    %1472 = arith.mulf %273, %327 : vector<8x128xf32>
    %1473 = arith.addf %1471, %1472 : vector<8x128xf32>
    %1474 = arith.mulf %275, %335 : vector<8x128xf32>
    %1475 = arith.addf %1473, %1474 : vector<8x128xf32>
    %1476 = arith.mulf %277, %343 : vector<8x128xf32>
    %1477 = arith.addf %1475, %1476 : vector<8x128xf32>
    %1478 = arith.mulf %279, %351 : vector<8x128xf32>
    %1479 = arith.addf %1477, %1478 : vector<8x128xf32>
    %1480 = arith.mulf %281, %359 : vector<8x128xf32>
    %1481 = arith.addf %1479, %1480 : vector<8x128xf32>
    %1482 = arith.mulf %283, %367 : vector<8x128xf32>
    %1483 = arith.addf %1481, %1482 : vector<8x128xf32>
    %1484 = arith.mulf %285, %375 : vector<8x128xf32>
    %1485 = arith.addf %1483, %1484 : vector<8x128xf32>
    %1486 = arith.mulf %287, %383 : vector<8x128xf32>
    %1487 = arith.addf %1485, %1486 : vector<8x128xf32>
    %1488 = arith.addf %406, %774 : vector<8x128xf32>
    %1489 = arith.addf %1488, %1142 : vector<8x128xf32>
    %1490 = arith.addf %429, %797 : vector<8x128xf32>
    %1491 = arith.addf %1490, %1165 : vector<8x128xf32>
    %1492 = arith.addf %452, %820 : vector<8x128xf32>
    %1493 = arith.addf %1492, %1188 : vector<8x128xf32>
    %1494 = arith.addf %475, %843 : vector<8x128xf32>
    %1495 = arith.addf %1494, %1211 : vector<8x128xf32>
    %1496 = arith.addf %498, %866 : vector<8x128xf32>
    %1497 = arith.addf %1496, %1234 : vector<8x128xf32>
    %1498 = arith.addf %521, %889 : vector<8x128xf32>
    %1499 = arith.addf %1498, %1257 : vector<8x128xf32>
    %1500 = arith.addf %544, %912 : vector<8x128xf32>
    %1501 = arith.addf %1500, %1280 : vector<8x128xf32>
    %1502 = arith.addf %567, %935 : vector<8x128xf32>
    %1503 = arith.addf %1502, %1303 : vector<8x128xf32>
    %1504 = arith.addf %590, %958 : vector<8x128xf32>
    %1505 = arith.addf %1504, %1326 : vector<8x128xf32>
    %1506 = arith.addf %613, %981 : vector<8x128xf32>
    %1507 = arith.addf %1506, %1349 : vector<8x128xf32>
    %1508 = arith.addf %636, %1004 : vector<8x128xf32>
    %1509 = arith.addf %1508, %1372 : vector<8x128xf32>
    %1510 = arith.addf %659, %1027 : vector<8x128xf32>
    %1511 = arith.addf %1510, %1395 : vector<8x128xf32>
    %1512 = arith.addf %682, %1050 : vector<8x128xf32>
    %1513 = arith.addf %1512, %1418 : vector<8x128xf32>
    %1514 = arith.addf %705, %1073 : vector<8x128xf32>
    %1515 = arith.addf %1514, %1441 : vector<8x128xf32>
    %1516 = arith.addf %728, %1096 : vector<8x128xf32>
    %1517 = arith.addf %1516, %1464 : vector<8x128xf32>
    %1518 = arith.addf %751, %1119 : vector<8x128xf32>
    %1519 = arith.addf %1518, %1487 : vector<8x128xf32>
    %1520 = arith.addf %1, %97 : vector<8x128xf32>
    %1521 = arith.addf %1520, %193 : vector<8x128xf32>
    %1522 = arith.addf %3, %99 : vector<8x128xf32>
    %1523 = arith.addf %1522, %195 : vector<8x128xf32>
    %1524 = arith.addf %5, %101 : vector<8x128xf32>
    %1525 = arith.addf %1524, %197 : vector<8x128xf32>
    %1526 = arith.addf %7, %103 : vector<8x128xf32>
    %1527 = arith.addf %1526, %199 : vector<8x128xf32>
    %1528 = arith.addf %9, %105 : vector<8x128xf32>
    %1529 = arith.addf %1528, %201 : vector<8x128xf32>
    %1530 = arith.addf %11, %107 : vector<8x128xf32>
    %1531 = arith.addf %1530, %203 : vector<8x128xf32>
    %1532 = arith.addf %13, %109 : vector<8x128xf32>
    %1533 = arith.addf %1532, %205 : vector<8x128xf32>
    %1534 = arith.addf %15, %111 : vector<8x128xf32>
    %1535 = arith.addf %1534, %207 : vector<8x128xf32>
    %1536 = arith.addf %17, %113 : vector<8x128xf32>
    %1537 = arith.addf %1536, %209 : vector<8x128xf32>
    %1538 = arith.addf %19, %115 : vector<8x128xf32>
    %1539 = arith.addf %1538, %211 : vector<8x128xf32>
    %1540 = arith.addf %21, %117 : vector<8x128xf32>
    %1541 = arith.addf %1540, %213 : vector<8x128xf32>
    %1542 = arith.addf %23, %119 : vector<8x128xf32>
    %1543 = arith.addf %1542, %215 : vector<8x128xf32>
    %1544 = arith.addf %25, %121 : vector<8x128xf32>
    %1545 = arith.addf %1544, %217 : vector<8x128xf32>
    %1546 = arith.addf %27, %123 : vector<8x128xf32>
    %1547 = arith.addf %1546, %219 : vector<8x128xf32>
    %1548 = arith.addf %29, %125 : vector<8x128xf32>
    %1549 = arith.addf %1548, %221 : vector<8x128xf32>
    %1550 = arith.addf %31, %127 : vector<8x128xf32>
    %1551 = arith.addf %1550, %223 : vector<8x128xf32>
    %1552 = arith.addf %33, %129 : vector<8x128xf32>
    %1553 = arith.addf %1552, %225 : vector<8x128xf32>
    %1554 = arith.addf %35, %131 : vector<8x128xf32>
    %1555 = arith.addf %1554, %227 : vector<8x128xf32>
    %1556 = arith.addf %37, %133 : vector<8x128xf32>
    %1557 = arith.addf %1556, %229 : vector<8x128xf32>
    %1558 = arith.addf %39, %135 : vector<8x128xf32>
    %1559 = arith.addf %1558, %231 : vector<8x128xf32>
    %1560 = arith.addf %41, %137 : vector<8x128xf32>
    %1561 = arith.addf %1560, %233 : vector<8x128xf32>
    %1562 = arith.addf %43, %139 : vector<8x128xf32>
    %1563 = arith.addf %1562, %235 : vector<8x128xf32>
    %1564 = arith.addf %45, %141 : vector<8x128xf32>
    %1565 = arith.addf %1564, %237 : vector<8x128xf32>
    %1566 = arith.addf %47, %143 : vector<8x128xf32>
    %1567 = arith.addf %1566, %239 : vector<8x128xf32>
    %1568 = arith.addf %49, %145 : vector<8x128xf32>
    %1569 = arith.addf %1568, %241 : vector<8x128xf32>
    %1570 = arith.addf %51, %147 : vector<8x128xf32>
    %1571 = arith.addf %1570, %243 : vector<8x128xf32>
    %1572 = arith.addf %53, %149 : vector<8x128xf32>
    %1573 = arith.addf %1572, %245 : vector<8x128xf32>
    %1574 = arith.addf %55, %151 : vector<8x128xf32>
    %1575 = arith.addf %1574, %247 : vector<8x128xf32>
    %1576 = arith.addf %57, %153 : vector<8x128xf32>
    %1577 = arith.addf %1576, %249 : vector<8x128xf32>
    %1578 = arith.addf %59, %155 : vector<8x128xf32>
    %1579 = arith.addf %1578, %251 : vector<8x128xf32>
    %1580 = arith.addf %61, %157 : vector<8x128xf32>
    %1581 = arith.addf %1580, %253 : vector<8x128xf32>
    %1582 = arith.addf %63, %159 : vector<8x128xf32>
    %1583 = arith.addf %1582, %255 : vector<8x128xf32>
    %1584 = arith.addf %65, %161 : vector<8x128xf32>
    %1585 = arith.addf %1584, %257 : vector<8x128xf32>
    %1586 = arith.addf %67, %163 : vector<8x128xf32>
    %1587 = arith.addf %1586, %259 : vector<8x128xf32>
    %1588 = arith.addf %69, %165 : vector<8x128xf32>
    %1589 = arith.addf %1588, %261 : vector<8x128xf32>
    %1590 = arith.addf %71, %167 : vector<8x128xf32>
    %1591 = arith.addf %1590, %263 : vector<8x128xf32>
    %1592 = arith.addf %73, %169 : vector<8x128xf32>
    %1593 = arith.addf %1592, %265 : vector<8x128xf32>
    %1594 = arith.addf %75, %171 : vector<8x128xf32>
    %1595 = arith.addf %1594, %267 : vector<8x128xf32>
    %1596 = arith.addf %77, %173 : vector<8x128xf32>
    %1597 = arith.addf %1596, %269 : vector<8x128xf32>
    %1598 = arith.addf %79, %175 : vector<8x128xf32>
    %1599 = arith.addf %1598, %271 : vector<8x128xf32>
    %1600 = arith.addf %81, %177 : vector<8x128xf32>
    %1601 = arith.addf %1600, %273 : vector<8x128xf32>
    %1602 = arith.addf %83, %179 : vector<8x128xf32>
    %1603 = arith.addf %1602, %275 : vector<8x128xf32>
    %1604 = arith.addf %85, %181 : vector<8x128xf32>
    %1605 = arith.addf %1604, %277 : vector<8x128xf32>
    %1606 = arith.addf %87, %183 : vector<8x128xf32>
    %1607 = arith.addf %1606, %279 : vector<8x128xf32>
    %1608 = arith.addf %89, %185 : vector<8x128xf32>
    %1609 = arith.addf %1608, %281 : vector<8x128xf32>
    %1610 = arith.addf %91, %187 : vector<8x128xf32>
    %1611 = arith.addf %1610, %283 : vector<8x128xf32>
    %1612 = arith.addf %93, %189 : vector<8x128xf32>
    %1613 = arith.addf %1612, %285 : vector<8x128xf32>
    %1614 = arith.addf %95, %191 : vector<8x128xf32>
    %1615 = arith.addf %1614, %287 : vector<8x128xf32>
    %1616 = arith.mulf %406, %1489 : vector<8x128xf32>
    %1617 = arith.mulf %429, %1497 : vector<8x128xf32>
    %1618 = arith.addf %1616, %1617 : vector<8x128xf32>
    %1619 = arith.mulf %452, %1505 : vector<8x128xf32>
    %1620 = arith.addf %1618, %1619 : vector<8x128xf32>
    %1621 = arith.mulf %475, %1513 : vector<8x128xf32>
    %1622 = arith.addf %1620, %1621 : vector<8x128xf32>
    %1623 = arith.mulf %406, %1491 : vector<8x128xf32>
    %1624 = arith.mulf %429, %1499 : vector<8x128xf32>
    %1625 = arith.addf %1623, %1624 : vector<8x128xf32>
    %1626 = arith.mulf %452, %1507 : vector<8x128xf32>
    %1627 = arith.addf %1625, %1626 : vector<8x128xf32>
    %1628 = arith.mulf %475, %1515 : vector<8x128xf32>
    %1629 = arith.addf %1627, %1628 : vector<8x128xf32>
    %1630 = arith.mulf %406, %1493 : vector<8x128xf32>
    %1631 = arith.mulf %429, %1501 : vector<8x128xf32>
    %1632 = arith.addf %1630, %1631 : vector<8x128xf32>
    %1633 = arith.mulf %452, %1509 : vector<8x128xf32>
    %1634 = arith.addf %1632, %1633 : vector<8x128xf32>
    %1635 = arith.mulf %475, %1517 : vector<8x128xf32>
    %1636 = arith.addf %1634, %1635 : vector<8x128xf32>
    %1637 = arith.mulf %406, %1495 : vector<8x128xf32>
    %1638 = arith.mulf %429, %1503 : vector<8x128xf32>
    %1639 = arith.addf %1637, %1638 : vector<8x128xf32>
    %1640 = arith.mulf %452, %1511 : vector<8x128xf32>
    %1641 = arith.addf %1639, %1640 : vector<8x128xf32>
    %1642 = arith.mulf %475, %1519 : vector<8x128xf32>
    %1643 = arith.addf %1641, %1642 : vector<8x128xf32>
    %1644 = arith.mulf %498, %1489 : vector<8x128xf32>
    %1645 = arith.mulf %521, %1497 : vector<8x128xf32>
    %1646 = arith.addf %1644, %1645 : vector<8x128xf32>
    %1647 = arith.mulf %544, %1505 : vector<8x128xf32>
    %1648 = arith.addf %1646, %1647 : vector<8x128xf32>
    %1649 = arith.mulf %567, %1513 : vector<8x128xf32>
    %1650 = arith.addf %1648, %1649 : vector<8x128xf32>
    %1651 = arith.mulf %498, %1491 : vector<8x128xf32>
    %1652 = arith.mulf %521, %1499 : vector<8x128xf32>
    %1653 = arith.addf %1651, %1652 : vector<8x128xf32>
    %1654 = arith.mulf %544, %1507 : vector<8x128xf32>
    %1655 = arith.addf %1653, %1654 : vector<8x128xf32>
    %1656 = arith.mulf %567, %1515 : vector<8x128xf32>
    %1657 = arith.addf %1655, %1656 : vector<8x128xf32>
    %1658 = arith.mulf %498, %1493 : vector<8x128xf32>
    %1659 = arith.mulf %521, %1501 : vector<8x128xf32>
    %1660 = arith.addf %1658, %1659 : vector<8x128xf32>
    %1661 = arith.mulf %544, %1509 : vector<8x128xf32>
    %1662 = arith.addf %1660, %1661 : vector<8x128xf32>
    %1663 = arith.mulf %567, %1517 : vector<8x128xf32>
    %1664 = arith.addf %1662, %1663 : vector<8x128xf32>
    %1665 = arith.mulf %498, %1495 : vector<8x128xf32>
    %1666 = arith.mulf %521, %1503 : vector<8x128xf32>
    %1667 = arith.addf %1665, %1666 : vector<8x128xf32>
    %1668 = arith.mulf %544, %1511 : vector<8x128xf32>
    %1669 = arith.addf %1667, %1668 : vector<8x128xf32>
    %1670 = arith.mulf %567, %1519 : vector<8x128xf32>
    %1671 = arith.addf %1669, %1670 : vector<8x128xf32>
    %1672 = arith.mulf %590, %1489 : vector<8x128xf32>
    %1673 = arith.mulf %613, %1497 : vector<8x128xf32>
    %1674 = arith.addf %1672, %1673 : vector<8x128xf32>
    %1675 = arith.mulf %636, %1505 : vector<8x128xf32>
    %1676 = arith.addf %1674, %1675 : vector<8x128xf32>
    %1677 = arith.mulf %659, %1513 : vector<8x128xf32>
    %1678 = arith.addf %1676, %1677 : vector<8x128xf32>
    %1679 = arith.mulf %590, %1491 : vector<8x128xf32>
    %1680 = arith.mulf %613, %1499 : vector<8x128xf32>
    %1681 = arith.addf %1679, %1680 : vector<8x128xf32>
    %1682 = arith.mulf %636, %1507 : vector<8x128xf32>
    %1683 = arith.addf %1681, %1682 : vector<8x128xf32>
    %1684 = arith.mulf %659, %1515 : vector<8x128xf32>
    %1685 = arith.addf %1683, %1684 : vector<8x128xf32>
    %1686 = arith.mulf %590, %1493 : vector<8x128xf32>
    %1687 = arith.mulf %613, %1501 : vector<8x128xf32>
    %1688 = arith.addf %1686, %1687 : vector<8x128xf32>
    %1689 = arith.mulf %636, %1509 : vector<8x128xf32>
    %1690 = arith.addf %1688, %1689 : vector<8x128xf32>
    %1691 = arith.mulf %659, %1517 : vector<8x128xf32>
    %1692 = arith.addf %1690, %1691 : vector<8x128xf32>
    %1693 = arith.mulf %590, %1495 : vector<8x128xf32>
    %1694 = arith.mulf %613, %1503 : vector<8x128xf32>
    %1695 = arith.addf %1693, %1694 : vector<8x128xf32>
    %1696 = arith.mulf %636, %1511 : vector<8x128xf32>
    %1697 = arith.addf %1695, %1696 : vector<8x128xf32>
    %1698 = arith.mulf %659, %1519 : vector<8x128xf32>
    %1699 = arith.addf %1697, %1698 : vector<8x128xf32>
    %1700 = arith.mulf %682, %1489 : vector<8x128xf32>
    %1701 = arith.mulf %705, %1497 : vector<8x128xf32>
    %1702 = arith.addf %1700, %1701 : vector<8x128xf32>
    %1703 = arith.mulf %728, %1505 : vector<8x128xf32>
    %1704 = arith.addf %1702, %1703 : vector<8x128xf32>
    %1705 = arith.mulf %751, %1513 : vector<8x128xf32>
    %1706 = arith.addf %1704, %1705 : vector<8x128xf32>
    %1707 = arith.mulf %682, %1491 : vector<8x128xf32>
    %1708 = arith.mulf %705, %1499 : vector<8x128xf32>
    %1709 = arith.addf %1707, %1708 : vector<8x128xf32>
    %1710 = arith.mulf %728, %1507 : vector<8x128xf32>
    %1711 = arith.addf %1709, %1710 : vector<8x128xf32>
    %1712 = arith.mulf %751, %1515 : vector<8x128xf32>
    %1713 = arith.addf %1711, %1712 : vector<8x128xf32>
    %1714 = arith.mulf %682, %1493 : vector<8x128xf32>
    %1715 = arith.mulf %705, %1501 : vector<8x128xf32>
    %1716 = arith.addf %1714, %1715 : vector<8x128xf32>
    %1717 = arith.mulf %728, %1509 : vector<8x128xf32>
    %1718 = arith.addf %1716, %1717 : vector<8x128xf32>
    %1719 = arith.mulf %751, %1517 : vector<8x128xf32>
    %1720 = arith.addf %1718, %1719 : vector<8x128xf32>
    %1721 = arith.mulf %682, %1495 : vector<8x128xf32>
    %1722 = arith.mulf %705, %1503 : vector<8x128xf32>
    %1723 = arith.addf %1721, %1722 : vector<8x128xf32>
    %1724 = arith.mulf %728, %1511 : vector<8x128xf32>
    %1725 = arith.addf %1723, %1724 : vector<8x128xf32>
    %1726 = arith.mulf %751, %1519 : vector<8x128xf32>
    %1727 = arith.addf %1725, %1726 : vector<8x128xf32>
    %1728 = arith.mulf %774, %1489 : vector<8x128xf32>
    %1729 = arith.mulf %797, %1497 : vector<8x128xf32>
    %1730 = arith.addf %1728, %1729 : vector<8x128xf32>
    %1731 = arith.mulf %820, %1505 : vector<8x128xf32>
    %1732 = arith.addf %1730, %1731 : vector<8x128xf32>
    %1733 = arith.mulf %843, %1513 : vector<8x128xf32>
    %1734 = arith.addf %1732, %1733 : vector<8x128xf32>
    %1735 = arith.mulf %774, %1491 : vector<8x128xf32>
    %1736 = arith.mulf %797, %1499 : vector<8x128xf32>
    %1737 = arith.addf %1735, %1736 : vector<8x128xf32>
    %1738 = arith.mulf %820, %1507 : vector<8x128xf32>
    %1739 = arith.addf %1737, %1738 : vector<8x128xf32>
    %1740 = arith.mulf %843, %1515 : vector<8x128xf32>
    %1741 = arith.addf %1739, %1740 : vector<8x128xf32>
    %1742 = arith.mulf %774, %1493 : vector<8x128xf32>
    %1743 = arith.mulf %797, %1501 : vector<8x128xf32>
    %1744 = arith.addf %1742, %1743 : vector<8x128xf32>
    %1745 = arith.mulf %820, %1509 : vector<8x128xf32>
    %1746 = arith.addf %1744, %1745 : vector<8x128xf32>
    %1747 = arith.mulf %843, %1517 : vector<8x128xf32>
    %1748 = arith.addf %1746, %1747 : vector<8x128xf32>
    %1749 = arith.mulf %774, %1495 : vector<8x128xf32>
    %1750 = arith.mulf %797, %1503 : vector<8x128xf32>
    %1751 = arith.addf %1749, %1750 : vector<8x128xf32>
    %1752 = arith.mulf %820, %1511 : vector<8x128xf32>
    %1753 = arith.addf %1751, %1752 : vector<8x128xf32>
    %1754 = arith.mulf %843, %1519 : vector<8x128xf32>
    %1755 = arith.addf %1753, %1754 : vector<8x128xf32>
    %1756 = arith.mulf %866, %1489 : vector<8x128xf32>
    %1757 = arith.mulf %889, %1497 : vector<8x128xf32>
    %1758 = arith.addf %1756, %1757 : vector<8x128xf32>
    %1759 = arith.mulf %912, %1505 : vector<8x128xf32>
    %1760 = arith.addf %1758, %1759 : vector<8x128xf32>
    %1761 = arith.mulf %935, %1513 : vector<8x128xf32>
    %1762 = arith.addf %1760, %1761 : vector<8x128xf32>
    %1763 = arith.mulf %866, %1491 : vector<8x128xf32>
    %1764 = arith.mulf %889, %1499 : vector<8x128xf32>
    %1765 = arith.addf %1763, %1764 : vector<8x128xf32>
    %1766 = arith.mulf %912, %1507 : vector<8x128xf32>
    %1767 = arith.addf %1765, %1766 : vector<8x128xf32>
    %1768 = arith.mulf %935, %1515 : vector<8x128xf32>
    %1769 = arith.addf %1767, %1768 : vector<8x128xf32>
    %1770 = arith.mulf %866, %1493 : vector<8x128xf32>
    %1771 = arith.mulf %889, %1501 : vector<8x128xf32>
    %1772 = arith.addf %1770, %1771 : vector<8x128xf32>
    %1773 = arith.mulf %912, %1509 : vector<8x128xf32>
    %1774 = arith.addf %1772, %1773 : vector<8x128xf32>
    %1775 = arith.mulf %935, %1517 : vector<8x128xf32>
    %1776 = arith.addf %1774, %1775 : vector<8x128xf32>
    %1777 = arith.mulf %866, %1495 : vector<8x128xf32>
    %1778 = arith.mulf %889, %1503 : vector<8x128xf32>
    %1779 = arith.addf %1777, %1778 : vector<8x128xf32>
    %1780 = arith.mulf %912, %1511 : vector<8x128xf32>
    %1781 = arith.addf %1779, %1780 : vector<8x128xf32>
    %1782 = arith.mulf %935, %1519 : vector<8x128xf32>
    %1783 = arith.addf %1781, %1782 : vector<8x128xf32>
    %1784 = arith.mulf %958, %1489 : vector<8x128xf32>
    %1785 = arith.mulf %981, %1497 : vector<8x128xf32>
    %1786 = arith.addf %1784, %1785 : vector<8x128xf32>
    %1787 = arith.mulf %1004, %1505 : vector<8x128xf32>
    %1788 = arith.addf %1786, %1787 : vector<8x128xf32>
    %1789 = arith.mulf %1027, %1513 : vector<8x128xf32>
    %1790 = arith.addf %1788, %1789 : vector<8x128xf32>
    %1791 = arith.mulf %958, %1491 : vector<8x128xf32>
    %1792 = arith.mulf %981, %1499 : vector<8x128xf32>
    %1793 = arith.addf %1791, %1792 : vector<8x128xf32>
    %1794 = arith.mulf %1004, %1507 : vector<8x128xf32>
    %1795 = arith.addf %1793, %1794 : vector<8x128xf32>
    %1796 = arith.mulf %1027, %1515 : vector<8x128xf32>
    %1797 = arith.addf %1795, %1796 : vector<8x128xf32>
    %1798 = arith.mulf %958, %1493 : vector<8x128xf32>
    %1799 = arith.mulf %981, %1501 : vector<8x128xf32>
    %1800 = arith.addf %1798, %1799 : vector<8x128xf32>
    %1801 = arith.mulf %1004, %1509 : vector<8x128xf32>
    %1802 = arith.addf %1800, %1801 : vector<8x128xf32>
    %1803 = arith.mulf %1027, %1517 : vector<8x128xf32>
    %1804 = arith.addf %1802, %1803 : vector<8x128xf32>
    %1805 = arith.mulf %958, %1495 : vector<8x128xf32>
    %1806 = arith.mulf %981, %1503 : vector<8x128xf32>
    %1807 = arith.addf %1805, %1806 : vector<8x128xf32>
    %1808 = arith.mulf %1004, %1511 : vector<8x128xf32>
    %1809 = arith.addf %1807, %1808 : vector<8x128xf32>
    %1810 = arith.mulf %1027, %1519 : vector<8x128xf32>
    %1811 = arith.addf %1809, %1810 : vector<8x128xf32>
    %1812 = arith.mulf %1050, %1489 : vector<8x128xf32>
    %1813 = arith.mulf %1073, %1497 : vector<8x128xf32>
    %1814 = arith.addf %1812, %1813 : vector<8x128xf32>
    %1815 = arith.mulf %1096, %1505 : vector<8x128xf32>
    %1816 = arith.addf %1814, %1815 : vector<8x128xf32>
    %1817 = arith.mulf %1119, %1513 : vector<8x128xf32>
    %1818 = arith.addf %1816, %1817 : vector<8x128xf32>
    %1819 = arith.mulf %1050, %1491 : vector<8x128xf32>
    %1820 = arith.mulf %1073, %1499 : vector<8x128xf32>
    %1821 = arith.addf %1819, %1820 : vector<8x128xf32>
    %1822 = arith.mulf %1096, %1507 : vector<8x128xf32>
    %1823 = arith.addf %1821, %1822 : vector<8x128xf32>
    %1824 = arith.mulf %1119, %1515 : vector<8x128xf32>
    %1825 = arith.addf %1823, %1824 : vector<8x128xf32>
    %1826 = arith.mulf %1050, %1493 : vector<8x128xf32>
    %1827 = arith.mulf %1073, %1501 : vector<8x128xf32>
    %1828 = arith.addf %1826, %1827 : vector<8x128xf32>
    %1829 = arith.mulf %1096, %1509 : vector<8x128xf32>
    %1830 = arith.addf %1828, %1829 : vector<8x128xf32>
    %1831 = arith.mulf %1119, %1517 : vector<8x128xf32>
    %1832 = arith.addf %1830, %1831 : vector<8x128xf32>
    %1833 = arith.mulf %1050, %1495 : vector<8x128xf32>
    %1834 = arith.mulf %1073, %1503 : vector<8x128xf32>
    %1835 = arith.addf %1833, %1834 : vector<8x128xf32>
    %1836 = arith.mulf %1096, %1511 : vector<8x128xf32>
    %1837 = arith.addf %1835, %1836 : vector<8x128xf32>
    %1838 = arith.mulf %1119, %1519 : vector<8x128xf32>
    %1839 = arith.addf %1837, %1838 : vector<8x128xf32>
    %1840 = arith.mulf %1142, %1489 : vector<8x128xf32>
    %1841 = arith.mulf %1165, %1497 : vector<8x128xf32>
    %1842 = arith.addf %1840, %1841 : vector<8x128xf32>
    %1843 = arith.mulf %1188, %1505 : vector<8x128xf32>
    %1844 = arith.addf %1842, %1843 : vector<8x128xf32>
    %1845 = arith.mulf %1211, %1513 : vector<8x128xf32>
    %1846 = arith.addf %1844, %1845 : vector<8x128xf32>
    %1847 = arith.mulf %1142, %1491 : vector<8x128xf32>
    %1848 = arith.mulf %1165, %1499 : vector<8x128xf32>
    %1849 = arith.addf %1847, %1848 : vector<8x128xf32>
    %1850 = arith.mulf %1188, %1507 : vector<8x128xf32>
    %1851 = arith.addf %1849, %1850 : vector<8x128xf32>
    %1852 = arith.mulf %1211, %1515 : vector<8x128xf32>
    %1853 = arith.addf %1851, %1852 : vector<8x128xf32>
    %1854 = arith.mulf %1142, %1493 : vector<8x128xf32>
    %1855 = arith.mulf %1165, %1501 : vector<8x128xf32>
    %1856 = arith.addf %1854, %1855 : vector<8x128xf32>
    %1857 = arith.mulf %1188, %1509 : vector<8x128xf32>
    %1858 = arith.addf %1856, %1857 : vector<8x128xf32>
    %1859 = arith.mulf %1211, %1517 : vector<8x128xf32>
    %1860 = arith.addf %1858, %1859 : vector<8x128xf32>
    %1861 = arith.mulf %1142, %1495 : vector<8x128xf32>
    %1862 = arith.mulf %1165, %1503 : vector<8x128xf32>
    %1863 = arith.addf %1861, %1862 : vector<8x128xf32>
    %1864 = arith.mulf %1188, %1511 : vector<8x128xf32>
    %1865 = arith.addf %1863, %1864 : vector<8x128xf32>
    %1866 = arith.mulf %1211, %1519 : vector<8x128xf32>
    %1867 = arith.addf %1865, %1866 : vector<8x128xf32>
    %1868 = arith.mulf %1234, %1489 : vector<8x128xf32>
    %1869 = arith.mulf %1257, %1497 : vector<8x128xf32>
    %1870 = arith.addf %1868, %1869 : vector<8x128xf32>
    %1871 = arith.mulf %1280, %1505 : vector<8x128xf32>
    %1872 = arith.addf %1870, %1871 : vector<8x128xf32>
    %1873 = arith.mulf %1303, %1513 : vector<8x128xf32>
    %1874 = arith.addf %1872, %1873 : vector<8x128xf32>
    %1875 = arith.mulf %1234, %1491 : vector<8x128xf32>
    %1876 = arith.mulf %1257, %1499 : vector<8x128xf32>
    %1877 = arith.addf %1875, %1876 : vector<8x128xf32>
    %1878 = arith.mulf %1280, %1507 : vector<8x128xf32>
    %1879 = arith.addf %1877, %1878 : vector<8x128xf32>
    %1880 = arith.mulf %1303, %1515 : vector<8x128xf32>
    %1881 = arith.addf %1879, %1880 : vector<8x128xf32>
    %1882 = arith.mulf %1234, %1493 : vector<8x128xf32>
    %1883 = arith.mulf %1257, %1501 : vector<8x128xf32>
    %1884 = arith.addf %1882, %1883 : vector<8x128xf32>
    %1885 = arith.mulf %1280, %1509 : vector<8x128xf32>
    %1886 = arith.addf %1884, %1885 : vector<8x128xf32>
    %1887 = arith.mulf %1303, %1517 : vector<8x128xf32>
    %1888 = arith.addf %1886, %1887 : vector<8x128xf32>
    %1889 = arith.mulf %1234, %1495 : vector<8x128xf32>
    %1890 = arith.mulf %1257, %1503 : vector<8x128xf32>
    %1891 = arith.addf %1889, %1890 : vector<8x128xf32>
    %1892 = arith.mulf %1280, %1511 : vector<8x128xf32>
    %1893 = arith.addf %1891, %1892 : vector<8x128xf32>
    %1894 = arith.mulf %1303, %1519 : vector<8x128xf32>
    %1895 = arith.addf %1893, %1894 : vector<8x128xf32>
    %1896 = arith.mulf %1326, %1489 : vector<8x128xf32>
    %1897 = arith.mulf %1349, %1497 : vector<8x128xf32>
    %1898 = arith.addf %1896, %1897 : vector<8x128xf32>
    %1899 = arith.mulf %1372, %1505 : vector<8x128xf32>
    %1900 = arith.addf %1898, %1899 : vector<8x128xf32>
    %1901 = arith.mulf %1395, %1513 : vector<8x128xf32>
    %1902 = arith.addf %1900, %1901 : vector<8x128xf32>
    %1903 = arith.mulf %1326, %1491 : vector<8x128xf32>
    %1904 = arith.mulf %1349, %1499 : vector<8x128xf32>
    %1905 = arith.addf %1903, %1904 : vector<8x128xf32>
    %1906 = arith.mulf %1372, %1507 : vector<8x128xf32>
    %1907 = arith.addf %1905, %1906 : vector<8x128xf32>
    %1908 = arith.mulf %1395, %1515 : vector<8x128xf32>
    %1909 = arith.addf %1907, %1908 : vector<8x128xf32>
    %1910 = arith.mulf %1326, %1493 : vector<8x128xf32>
    %1911 = arith.mulf %1349, %1501 : vector<8x128xf32>
    %1912 = arith.addf %1910, %1911 : vector<8x128xf32>
    %1913 = arith.mulf %1372, %1509 : vector<8x128xf32>
    %1914 = arith.addf %1912, %1913 : vector<8x128xf32>
    %1915 = arith.mulf %1395, %1517 : vector<8x128xf32>
    %1916 = arith.addf %1914, %1915 : vector<8x128xf32>
    %1917 = arith.mulf %1326, %1495 : vector<8x128xf32>
    %1918 = arith.mulf %1349, %1503 : vector<8x128xf32>
    %1919 = arith.addf %1917, %1918 : vector<8x128xf32>
    %1920 = arith.mulf %1372, %1511 : vector<8x128xf32>
    %1921 = arith.addf %1919, %1920 : vector<8x128xf32>
    %1922 = arith.mulf %1395, %1519 : vector<8x128xf32>
    %1923 = arith.addf %1921, %1922 : vector<8x128xf32>
    %1924 = arith.mulf %1418, %1489 : vector<8x128xf32>
    %1925 = arith.mulf %1441, %1497 : vector<8x128xf32>
    %1926 = arith.addf %1924, %1925 : vector<8x128xf32>
    %1927 = arith.mulf %1464, %1505 : vector<8x128xf32>
    %1928 = arith.addf %1926, %1927 : vector<8x128xf32>
    %1929 = arith.mulf %1487, %1513 : vector<8x128xf32>
    %1930 = arith.addf %1928, %1929 : vector<8x128xf32>
    %1931 = arith.mulf %1418, %1491 : vector<8x128xf32>
    %1932 = arith.mulf %1441, %1499 : vector<8x128xf32>
    %1933 = arith.addf %1931, %1932 : vector<8x128xf32>
    %1934 = arith.mulf %1464, %1507 : vector<8x128xf32>
    %1935 = arith.addf %1933, %1934 : vector<8x128xf32>
    %1936 = arith.mulf %1487, %1515 : vector<8x128xf32>
    %1937 = arith.addf %1935, %1936 : vector<8x128xf32>
    %1938 = arith.mulf %1418, %1493 : vector<8x128xf32>
    %1939 = arith.mulf %1441, %1501 : vector<8x128xf32>
    %1940 = arith.addf %1938, %1939 : vector<8x128xf32>
    %1941 = arith.mulf %1464, %1509 : vector<8x128xf32>
    %1942 = arith.addf %1940, %1941 : vector<8x128xf32>
    %1943 = arith.mulf %1487, %1517 : vector<8x128xf32>
    %1944 = arith.addf %1942, %1943 : vector<8x128xf32>
    %1945 = arith.mulf %1418, %1495 : vector<8x128xf32>
    %1946 = arith.mulf %1441, %1503 : vector<8x128xf32>
    %1947 = arith.addf %1945, %1946 : vector<8x128xf32>
    %1948 = arith.mulf %1464, %1511 : vector<8x128xf32>
    %1949 = arith.addf %1947, %1948 : vector<8x128xf32>
    %1950 = arith.mulf %1487, %1519 : vector<8x128xf32>
    %1951 = arith.addf %1949, %1950 : vector<8x128xf32>
    %1952 = arith.mulf %1622, %1521 : vector<8x128xf32>
    %1953 = arith.mulf %1629, %1545 : vector<8x128xf32>
    %1954 = arith.addf %1952, %1953 : vector<8x128xf32>
    %1955 = arith.mulf %1636, %1569 : vector<8x128xf32>
    %1956 = arith.addf %1954, %1955 : vector<8x128xf32>
    %1957 = arith.mulf %1643, %1593 : vector<8x128xf32>
    %1958 = arith.addf %1956, %1957 : vector<8x128xf32>
    %1959 = arith.mulf %1622, %1523 : vector<8x128xf32>
    %1960 = arith.mulf %1629, %1547 : vector<8x128xf32>
    %1961 = arith.addf %1959, %1960 : vector<8x128xf32>
    %1962 = arith.mulf %1636, %1571 : vector<8x128xf32>
    %1963 = arith.addf %1961, %1962 : vector<8x128xf32>
    %1964 = arith.mulf %1643, %1595 : vector<8x128xf32>
    %1965 = arith.addf %1963, %1964 : vector<8x128xf32>
    %1966 = arith.mulf %1622, %1525 : vector<8x128xf32>
    %1967 = arith.mulf %1629, %1549 : vector<8x128xf32>
    %1968 = arith.addf %1966, %1967 : vector<8x128xf32>
    %1969 = arith.mulf %1636, %1573 : vector<8x128xf32>
    %1970 = arith.addf %1968, %1969 : vector<8x128xf32>
    %1971 = arith.mulf %1643, %1597 : vector<8x128xf32>
    %1972 = arith.addf %1970, %1971 : vector<8x128xf32>
    %1973 = arith.mulf %1622, %1527 : vector<8x128xf32>
    %1974 = arith.mulf %1629, %1551 : vector<8x128xf32>
    %1975 = arith.addf %1973, %1974 : vector<8x128xf32>
    %1976 = arith.mulf %1636, %1575 : vector<8x128xf32>
    %1977 = arith.addf %1975, %1976 : vector<8x128xf32>
    %1978 = arith.mulf %1643, %1599 : vector<8x128xf32>
    %1979 = arith.addf %1977, %1978 : vector<8x128xf32>
    %1980 = arith.mulf %1622, %1529 : vector<8x128xf32>
    %1981 = arith.mulf %1629, %1553 : vector<8x128xf32>
    %1982 = arith.addf %1980, %1981 : vector<8x128xf32>
    %1983 = arith.mulf %1636, %1577 : vector<8x128xf32>
    %1984 = arith.addf %1982, %1983 : vector<8x128xf32>
    %1985 = arith.mulf %1643, %1601 : vector<8x128xf32>
    %1986 = arith.addf %1984, %1985 : vector<8x128xf32>
    %1987 = arith.mulf %1622, %1531 : vector<8x128xf32>
    %1988 = arith.mulf %1629, %1555 : vector<8x128xf32>
    %1989 = arith.addf %1987, %1988 : vector<8x128xf32>
    %1990 = arith.mulf %1636, %1579 : vector<8x128xf32>
    %1991 = arith.addf %1989, %1990 : vector<8x128xf32>
    %1992 = arith.mulf %1643, %1603 : vector<8x128xf32>
    %1993 = arith.addf %1991, %1992 : vector<8x128xf32>
    %1994 = arith.mulf %1622, %1533 : vector<8x128xf32>
    %1995 = arith.mulf %1629, %1557 : vector<8x128xf32>
    %1996 = arith.addf %1994, %1995 : vector<8x128xf32>
    %1997 = arith.mulf %1636, %1581 : vector<8x128xf32>
    %1998 = arith.addf %1996, %1997 : vector<8x128xf32>
    %1999 = arith.mulf %1643, %1605 : vector<8x128xf32>
    %2000 = arith.addf %1998, %1999 : vector<8x128xf32>
    %2001 = arith.mulf %1622, %1535 : vector<8x128xf32>
    %2002 = arith.mulf %1629, %1559 : vector<8x128xf32>
    %2003 = arith.addf %2001, %2002 : vector<8x128xf32>
    %2004 = arith.mulf %1636, %1583 : vector<8x128xf32>
    %2005 = arith.addf %2003, %2004 : vector<8x128xf32>
    %2006 = arith.mulf %1643, %1607 : vector<8x128xf32>
    %2007 = arith.addf %2005, %2006 : vector<8x128xf32>
    %2008 = arith.mulf %1622, %1537 : vector<8x128xf32>
    %2009 = arith.mulf %1629, %1561 : vector<8x128xf32>
    %2010 = arith.addf %2008, %2009 : vector<8x128xf32>
    %2011 = arith.mulf %1636, %1585 : vector<8x128xf32>
    %2012 = arith.addf %2010, %2011 : vector<8x128xf32>
    %2013 = arith.mulf %1643, %1609 : vector<8x128xf32>
    %2014 = arith.addf %2012, %2013 : vector<8x128xf32>
    %2015 = arith.mulf %1622, %1539 : vector<8x128xf32>
    %2016 = arith.mulf %1629, %1563 : vector<8x128xf32>
    %2017 = arith.addf %2015, %2016 : vector<8x128xf32>
    %2018 = arith.mulf %1636, %1587 : vector<8x128xf32>
    %2019 = arith.addf %2017, %2018 : vector<8x128xf32>
    %2020 = arith.mulf %1643, %1611 : vector<8x128xf32>
    %2021 = arith.addf %2019, %2020 : vector<8x128xf32>
    %2022 = arith.mulf %1622, %1541 : vector<8x128xf32>
    %2023 = arith.mulf %1629, %1565 : vector<8x128xf32>
    %2024 = arith.addf %2022, %2023 : vector<8x128xf32>
    %2025 = arith.mulf %1636, %1589 : vector<8x128xf32>
    %2026 = arith.addf %2024, %2025 : vector<8x128xf32>
    %2027 = arith.mulf %1643, %1613 : vector<8x128xf32>
    %2028 = arith.addf %2026, %2027 : vector<8x128xf32>
    %2029 = arith.mulf %1622, %1543 : vector<8x128xf32>
    %2030 = arith.mulf %1629, %1567 : vector<8x128xf32>
    %2031 = arith.addf %2029, %2030 : vector<8x128xf32>
    %2032 = arith.mulf %1636, %1591 : vector<8x128xf32>
    %2033 = arith.addf %2031, %2032 : vector<8x128xf32>
    %2034 = arith.mulf %1643, %1615 : vector<8x128xf32>
    %2035 = arith.addf %2033, %2034 : vector<8x128xf32>
    %2036 = arith.mulf %1650, %1521 : vector<8x128xf32>
    %2037 = arith.mulf %1657, %1545 : vector<8x128xf32>
    %2038 = arith.addf %2036, %2037 : vector<8x128xf32>
    %2039 = arith.mulf %1664, %1569 : vector<8x128xf32>
    %2040 = arith.addf %2038, %2039 : vector<8x128xf32>
    %2041 = arith.mulf %1671, %1593 : vector<8x128xf32>
    %2042 = arith.addf %2040, %2041 : vector<8x128xf32>
    %2043 = arith.mulf %1650, %1523 : vector<8x128xf32>
    %2044 = arith.mulf %1657, %1547 : vector<8x128xf32>
    %2045 = arith.addf %2043, %2044 : vector<8x128xf32>
    %2046 = arith.mulf %1664, %1571 : vector<8x128xf32>
    %2047 = arith.addf %2045, %2046 : vector<8x128xf32>
    %2048 = arith.mulf %1671, %1595 : vector<8x128xf32>
    %2049 = arith.addf %2047, %2048 : vector<8x128xf32>
    %2050 = arith.mulf %1650, %1525 : vector<8x128xf32>
    %2051 = arith.mulf %1657, %1549 : vector<8x128xf32>
    %2052 = arith.addf %2050, %2051 : vector<8x128xf32>
    %2053 = arith.mulf %1664, %1573 : vector<8x128xf32>
    %2054 = arith.addf %2052, %2053 : vector<8x128xf32>
    %2055 = arith.mulf %1671, %1597 : vector<8x128xf32>
    %2056 = arith.addf %2054, %2055 : vector<8x128xf32>
    %2057 = arith.mulf %1650, %1527 : vector<8x128xf32>
    %2058 = arith.mulf %1657, %1551 : vector<8x128xf32>
    %2059 = arith.addf %2057, %2058 : vector<8x128xf32>
    %2060 = arith.mulf %1664, %1575 : vector<8x128xf32>
    %2061 = arith.addf %2059, %2060 : vector<8x128xf32>
    %2062 = arith.mulf %1671, %1599 : vector<8x128xf32>
    %2063 = arith.addf %2061, %2062 : vector<8x128xf32>
    %2064 = arith.mulf %1650, %1529 : vector<8x128xf32>
    %2065 = arith.mulf %1657, %1553 : vector<8x128xf32>
    %2066 = arith.addf %2064, %2065 : vector<8x128xf32>
    %2067 = arith.mulf %1664, %1577 : vector<8x128xf32>
    %2068 = arith.addf %2066, %2067 : vector<8x128xf32>
    %2069 = arith.mulf %1671, %1601 : vector<8x128xf32>
    %2070 = arith.addf %2068, %2069 : vector<8x128xf32>
    %2071 = arith.mulf %1650, %1531 : vector<8x128xf32>
    %2072 = arith.mulf %1657, %1555 : vector<8x128xf32>
    %2073 = arith.addf %2071, %2072 : vector<8x128xf32>
    %2074 = arith.mulf %1664, %1579 : vector<8x128xf32>
    %2075 = arith.addf %2073, %2074 : vector<8x128xf32>
    %2076 = arith.mulf %1671, %1603 : vector<8x128xf32>
    %2077 = arith.addf %2075, %2076 : vector<8x128xf32>
    %2078 = arith.mulf %1650, %1533 : vector<8x128xf32>
    %2079 = arith.mulf %1657, %1557 : vector<8x128xf32>
    %2080 = arith.addf %2078, %2079 : vector<8x128xf32>
    %2081 = arith.mulf %1664, %1581 : vector<8x128xf32>
    %2082 = arith.addf %2080, %2081 : vector<8x128xf32>
    %2083 = arith.mulf %1671, %1605 : vector<8x128xf32>
    %2084 = arith.addf %2082, %2083 : vector<8x128xf32>
    %2085 = arith.mulf %1650, %1535 : vector<8x128xf32>
    %2086 = arith.mulf %1657, %1559 : vector<8x128xf32>
    %2087 = arith.addf %2085, %2086 : vector<8x128xf32>
    %2088 = arith.mulf %1664, %1583 : vector<8x128xf32>
    %2089 = arith.addf %2087, %2088 : vector<8x128xf32>
    %2090 = arith.mulf %1671, %1607 : vector<8x128xf32>
    %2091 = arith.addf %2089, %2090 : vector<8x128xf32>
    %2092 = arith.mulf %1650, %1537 : vector<8x128xf32>
    %2093 = arith.mulf %1657, %1561 : vector<8x128xf32>
    %2094 = arith.addf %2092, %2093 : vector<8x128xf32>
    %2095 = arith.mulf %1664, %1585 : vector<8x128xf32>
    %2096 = arith.addf %2094, %2095 : vector<8x128xf32>
    %2097 = arith.mulf %1671, %1609 : vector<8x128xf32>
    %2098 = arith.addf %2096, %2097 : vector<8x128xf32>
    %2099 = arith.mulf %1650, %1539 : vector<8x128xf32>
    %2100 = arith.mulf %1657, %1563 : vector<8x128xf32>
    %2101 = arith.addf %2099, %2100 : vector<8x128xf32>
    %2102 = arith.mulf %1664, %1587 : vector<8x128xf32>
    %2103 = arith.addf %2101, %2102 : vector<8x128xf32>
    %2104 = arith.mulf %1671, %1611 : vector<8x128xf32>
    %2105 = arith.addf %2103, %2104 : vector<8x128xf32>
    %2106 = arith.mulf %1650, %1541 : vector<8x128xf32>
    %2107 = arith.mulf %1657, %1565 : vector<8x128xf32>
    %2108 = arith.addf %2106, %2107 : vector<8x128xf32>
    %2109 = arith.mulf %1664, %1589 : vector<8x128xf32>
    %2110 = arith.addf %2108, %2109 : vector<8x128xf32>
    %2111 = arith.mulf %1671, %1613 : vector<8x128xf32>
    %2112 = arith.addf %2110, %2111 : vector<8x128xf32>
    %2113 = arith.mulf %1650, %1543 : vector<8x128xf32>
    %2114 = arith.mulf %1657, %1567 : vector<8x128xf32>
    %2115 = arith.addf %2113, %2114 : vector<8x128xf32>
    %2116 = arith.mulf %1664, %1591 : vector<8x128xf32>
    %2117 = arith.addf %2115, %2116 : vector<8x128xf32>
    %2118 = arith.mulf %1671, %1615 : vector<8x128xf32>
    %2119 = arith.addf %2117, %2118 : vector<8x128xf32>
    %2120 = arith.mulf %1678, %1521 : vector<8x128xf32>
    %2121 = arith.mulf %1685, %1545 : vector<8x128xf32>
    %2122 = arith.addf %2120, %2121 : vector<8x128xf32>
    %2123 = arith.mulf %1692, %1569 : vector<8x128xf32>
    %2124 = arith.addf %2122, %2123 : vector<8x128xf32>
    %2125 = arith.mulf %1699, %1593 : vector<8x128xf32>
    %2126 = arith.addf %2124, %2125 : vector<8x128xf32>
    %2127 = arith.mulf %1678, %1523 : vector<8x128xf32>
    %2128 = arith.mulf %1685, %1547 : vector<8x128xf32>
    %2129 = arith.addf %2127, %2128 : vector<8x128xf32>
    %2130 = arith.mulf %1692, %1571 : vector<8x128xf32>
    %2131 = arith.addf %2129, %2130 : vector<8x128xf32>
    %2132 = arith.mulf %1699, %1595 : vector<8x128xf32>
    %2133 = arith.addf %2131, %2132 : vector<8x128xf32>
    %2134 = arith.mulf %1678, %1525 : vector<8x128xf32>
    %2135 = arith.mulf %1685, %1549 : vector<8x128xf32>
    %2136 = arith.addf %2134, %2135 : vector<8x128xf32>
    %2137 = arith.mulf %1692, %1573 : vector<8x128xf32>
    %2138 = arith.addf %2136, %2137 : vector<8x128xf32>
    %2139 = arith.mulf %1699, %1597 : vector<8x128xf32>
    %2140 = arith.addf %2138, %2139 : vector<8x128xf32>
    %2141 = arith.mulf %1678, %1527 : vector<8x128xf32>
    %2142 = arith.mulf %1685, %1551 : vector<8x128xf32>
    %2143 = arith.addf %2141, %2142 : vector<8x128xf32>
    %2144 = arith.mulf %1692, %1575 : vector<8x128xf32>
    %2145 = arith.addf %2143, %2144 : vector<8x128xf32>
    %2146 = arith.mulf %1699, %1599 : vector<8x128xf32>
    %2147 = arith.addf %2145, %2146 : vector<8x128xf32>
    %2148 = arith.mulf %1678, %1529 : vector<8x128xf32>
    %2149 = arith.mulf %1685, %1553 : vector<8x128xf32>
    %2150 = arith.addf %2148, %2149 : vector<8x128xf32>
    %2151 = arith.mulf %1692, %1577 : vector<8x128xf32>
    %2152 = arith.addf %2150, %2151 : vector<8x128xf32>
    %2153 = arith.mulf %1699, %1601 : vector<8x128xf32>
    %2154 = arith.addf %2152, %2153 : vector<8x128xf32>
    %2155 = arith.mulf %1678, %1531 : vector<8x128xf32>
    %2156 = arith.mulf %1685, %1555 : vector<8x128xf32>
    %2157 = arith.addf %2155, %2156 : vector<8x128xf32>
    %2158 = arith.mulf %1692, %1579 : vector<8x128xf32>
    %2159 = arith.addf %2157, %2158 : vector<8x128xf32>
    %2160 = arith.mulf %1699, %1603 : vector<8x128xf32>
    %2161 = arith.addf %2159, %2160 : vector<8x128xf32>
    %2162 = arith.mulf %1678, %1533 : vector<8x128xf32>
    %2163 = arith.mulf %1685, %1557 : vector<8x128xf32>
    %2164 = arith.addf %2162, %2163 : vector<8x128xf32>
    %2165 = arith.mulf %1692, %1581 : vector<8x128xf32>
    %2166 = arith.addf %2164, %2165 : vector<8x128xf32>
    %2167 = arith.mulf %1699, %1605 : vector<8x128xf32>
    %2168 = arith.addf %2166, %2167 : vector<8x128xf32>
    %2169 = arith.mulf %1678, %1535 : vector<8x128xf32>
    %2170 = arith.mulf %1685, %1559 : vector<8x128xf32>
    %2171 = arith.addf %2169, %2170 : vector<8x128xf32>
    %2172 = arith.mulf %1692, %1583 : vector<8x128xf32>
    %2173 = arith.addf %2171, %2172 : vector<8x128xf32>
    %2174 = arith.mulf %1699, %1607 : vector<8x128xf32>
    %2175 = arith.addf %2173, %2174 : vector<8x128xf32>
    %2176 = arith.mulf %1678, %1537 : vector<8x128xf32>
    %2177 = arith.mulf %1685, %1561 : vector<8x128xf32>
    %2178 = arith.addf %2176, %2177 : vector<8x128xf32>
    %2179 = arith.mulf %1692, %1585 : vector<8x128xf32>
    %2180 = arith.addf %2178, %2179 : vector<8x128xf32>
    %2181 = arith.mulf %1699, %1609 : vector<8x128xf32>
    %2182 = arith.addf %2180, %2181 : vector<8x128xf32>
    %2183 = arith.mulf %1678, %1539 : vector<8x128xf32>
    %2184 = arith.mulf %1685, %1563 : vector<8x128xf32>
    %2185 = arith.addf %2183, %2184 : vector<8x128xf32>
    %2186 = arith.mulf %1692, %1587 : vector<8x128xf32>
    %2187 = arith.addf %2185, %2186 : vector<8x128xf32>
    %2188 = arith.mulf %1699, %1611 : vector<8x128xf32>
    %2189 = arith.addf %2187, %2188 : vector<8x128xf32>
    %2190 = arith.mulf %1678, %1541 : vector<8x128xf32>
    %2191 = arith.mulf %1685, %1565 : vector<8x128xf32>
    %2192 = arith.addf %2190, %2191 : vector<8x128xf32>
    %2193 = arith.mulf %1692, %1589 : vector<8x128xf32>
    %2194 = arith.addf %2192, %2193 : vector<8x128xf32>
    %2195 = arith.mulf %1699, %1613 : vector<8x128xf32>
    %2196 = arith.addf %2194, %2195 : vector<8x128xf32>
    %2197 = arith.mulf %1678, %1543 : vector<8x128xf32>
    %2198 = arith.mulf %1685, %1567 : vector<8x128xf32>
    %2199 = arith.addf %2197, %2198 : vector<8x128xf32>
    %2200 = arith.mulf %1692, %1591 : vector<8x128xf32>
    %2201 = arith.addf %2199, %2200 : vector<8x128xf32>
    %2202 = arith.mulf %1699, %1615 : vector<8x128xf32>
    %2203 = arith.addf %2201, %2202 : vector<8x128xf32>
    %2204 = arith.mulf %1706, %1521 : vector<8x128xf32>
    %2205 = arith.mulf %1713, %1545 : vector<8x128xf32>
    %2206 = arith.addf %2204, %2205 : vector<8x128xf32>
    %2207 = arith.mulf %1720, %1569 : vector<8x128xf32>
    %2208 = arith.addf %2206, %2207 : vector<8x128xf32>
    %2209 = arith.mulf %1727, %1593 : vector<8x128xf32>
    %2210 = arith.addf %2208, %2209 : vector<8x128xf32>
    %2211 = arith.mulf %1706, %1523 : vector<8x128xf32>
    %2212 = arith.mulf %1713, %1547 : vector<8x128xf32>
    %2213 = arith.addf %2211, %2212 : vector<8x128xf32>
    %2214 = arith.mulf %1720, %1571 : vector<8x128xf32>
    %2215 = arith.addf %2213, %2214 : vector<8x128xf32>
    %2216 = arith.mulf %1727, %1595 : vector<8x128xf32>
    %2217 = arith.addf %2215, %2216 : vector<8x128xf32>
    %2218 = arith.mulf %1706, %1525 : vector<8x128xf32>
    %2219 = arith.mulf %1713, %1549 : vector<8x128xf32>
    %2220 = arith.addf %2218, %2219 : vector<8x128xf32>
    %2221 = arith.mulf %1720, %1573 : vector<8x128xf32>
    %2222 = arith.addf %2220, %2221 : vector<8x128xf32>
    %2223 = arith.mulf %1727, %1597 : vector<8x128xf32>
    %2224 = arith.addf %2222, %2223 : vector<8x128xf32>
    %2225 = arith.mulf %1706, %1527 : vector<8x128xf32>
    %2226 = arith.mulf %1713, %1551 : vector<8x128xf32>
    %2227 = arith.addf %2225, %2226 : vector<8x128xf32>
    %2228 = arith.mulf %1720, %1575 : vector<8x128xf32>
    %2229 = arith.addf %2227, %2228 : vector<8x128xf32>
    %2230 = arith.mulf %1727, %1599 : vector<8x128xf32>
    %2231 = arith.addf %2229, %2230 : vector<8x128xf32>
    %2232 = arith.mulf %1706, %1529 : vector<8x128xf32>
    %2233 = arith.mulf %1713, %1553 : vector<8x128xf32>
    %2234 = arith.addf %2232, %2233 : vector<8x128xf32>
    %2235 = arith.mulf %1720, %1577 : vector<8x128xf32>
    %2236 = arith.addf %2234, %2235 : vector<8x128xf32>
    %2237 = arith.mulf %1727, %1601 : vector<8x128xf32>
    %2238 = arith.addf %2236, %2237 : vector<8x128xf32>
    %2239 = arith.mulf %1706, %1531 : vector<8x128xf32>
    %2240 = arith.mulf %1713, %1555 : vector<8x128xf32>
    %2241 = arith.addf %2239, %2240 : vector<8x128xf32>
    %2242 = arith.mulf %1720, %1579 : vector<8x128xf32>
    %2243 = arith.addf %2241, %2242 : vector<8x128xf32>
    %2244 = arith.mulf %1727, %1603 : vector<8x128xf32>
    %2245 = arith.addf %2243, %2244 : vector<8x128xf32>
    %2246 = arith.mulf %1706, %1533 : vector<8x128xf32>
    %2247 = arith.mulf %1713, %1557 : vector<8x128xf32>
    %2248 = arith.addf %2246, %2247 : vector<8x128xf32>
    %2249 = arith.mulf %1720, %1581 : vector<8x128xf32>
    %2250 = arith.addf %2248, %2249 : vector<8x128xf32>
    %2251 = arith.mulf %1727, %1605 : vector<8x128xf32>
    %2252 = arith.addf %2250, %2251 : vector<8x128xf32>
    %2253 = arith.mulf %1706, %1535 : vector<8x128xf32>
    %2254 = arith.mulf %1713, %1559 : vector<8x128xf32>
    %2255 = arith.addf %2253, %2254 : vector<8x128xf32>
    %2256 = arith.mulf %1720, %1583 : vector<8x128xf32>
    %2257 = arith.addf %2255, %2256 : vector<8x128xf32>
    %2258 = arith.mulf %1727, %1607 : vector<8x128xf32>
    %2259 = arith.addf %2257, %2258 : vector<8x128xf32>
    %2260 = arith.mulf %1706, %1537 : vector<8x128xf32>
    %2261 = arith.mulf %1713, %1561 : vector<8x128xf32>
    %2262 = arith.addf %2260, %2261 : vector<8x128xf32>
    %2263 = arith.mulf %1720, %1585 : vector<8x128xf32>
    %2264 = arith.addf %2262, %2263 : vector<8x128xf32>
    %2265 = arith.mulf %1727, %1609 : vector<8x128xf32>
    %2266 = arith.addf %2264, %2265 : vector<8x128xf32>
    %2267 = arith.mulf %1706, %1539 : vector<8x128xf32>
    %2268 = arith.mulf %1713, %1563 : vector<8x128xf32>
    %2269 = arith.addf %2267, %2268 : vector<8x128xf32>
    %2270 = arith.mulf %1720, %1587 : vector<8x128xf32>
    %2271 = arith.addf %2269, %2270 : vector<8x128xf32>
    %2272 = arith.mulf %1727, %1611 : vector<8x128xf32>
    %2273 = arith.addf %2271, %2272 : vector<8x128xf32>
    %2274 = arith.mulf %1706, %1541 : vector<8x128xf32>
    %2275 = arith.mulf %1713, %1565 : vector<8x128xf32>
    %2276 = arith.addf %2274, %2275 : vector<8x128xf32>
    %2277 = arith.mulf %1720, %1589 : vector<8x128xf32>
    %2278 = arith.addf %2276, %2277 : vector<8x128xf32>
    %2279 = arith.mulf %1727, %1613 : vector<8x128xf32>
    %2280 = arith.addf %2278, %2279 : vector<8x128xf32>
    %2281 = arith.mulf %1706, %1543 : vector<8x128xf32>
    %2282 = arith.mulf %1713, %1567 : vector<8x128xf32>
    %2283 = arith.addf %2281, %2282 : vector<8x128xf32>
    %2284 = arith.mulf %1720, %1591 : vector<8x128xf32>
    %2285 = arith.addf %2283, %2284 : vector<8x128xf32>
    %2286 = arith.mulf %1727, %1615 : vector<8x128xf32>
    %2287 = arith.addf %2285, %2286 : vector<8x128xf32>
    %2288 = arith.mulf %1734, %1521 : vector<8x128xf32>
    %2289 = arith.mulf %1741, %1545 : vector<8x128xf32>
    %2290 = arith.addf %2288, %2289 : vector<8x128xf32>
    %2291 = arith.mulf %1748, %1569 : vector<8x128xf32>
    %2292 = arith.addf %2290, %2291 : vector<8x128xf32>
    %2293 = arith.mulf %1755, %1593 : vector<8x128xf32>
    %2294 = arith.addf %2292, %2293 : vector<8x128xf32>
    %2295 = arith.mulf %1734, %1523 : vector<8x128xf32>
    %2296 = arith.mulf %1741, %1547 : vector<8x128xf32>
    %2297 = arith.addf %2295, %2296 : vector<8x128xf32>
    %2298 = arith.mulf %1748, %1571 : vector<8x128xf32>
    %2299 = arith.addf %2297, %2298 : vector<8x128xf32>
    %2300 = arith.mulf %1755, %1595 : vector<8x128xf32>
    %2301 = arith.addf %2299, %2300 : vector<8x128xf32>
    %2302 = arith.mulf %1734, %1525 : vector<8x128xf32>
    %2303 = arith.mulf %1741, %1549 : vector<8x128xf32>
    %2304 = arith.addf %2302, %2303 : vector<8x128xf32>
    %2305 = arith.mulf %1748, %1573 : vector<8x128xf32>
    %2306 = arith.addf %2304, %2305 : vector<8x128xf32>
    %2307 = arith.mulf %1755, %1597 : vector<8x128xf32>
    %2308 = arith.addf %2306, %2307 : vector<8x128xf32>
    %2309 = arith.mulf %1734, %1527 : vector<8x128xf32>
    %2310 = arith.mulf %1741, %1551 : vector<8x128xf32>
    %2311 = arith.addf %2309, %2310 : vector<8x128xf32>
    %2312 = arith.mulf %1748, %1575 : vector<8x128xf32>
    %2313 = arith.addf %2311, %2312 : vector<8x128xf32>
    %2314 = arith.mulf %1755, %1599 : vector<8x128xf32>
    %2315 = arith.addf %2313, %2314 : vector<8x128xf32>
    %2316 = arith.mulf %1734, %1529 : vector<8x128xf32>
    %2317 = arith.mulf %1741, %1553 : vector<8x128xf32>
    %2318 = arith.addf %2316, %2317 : vector<8x128xf32>
    %2319 = arith.mulf %1748, %1577 : vector<8x128xf32>
    %2320 = arith.addf %2318, %2319 : vector<8x128xf32>
    %2321 = arith.mulf %1755, %1601 : vector<8x128xf32>
    %2322 = arith.addf %2320, %2321 : vector<8x128xf32>
    %2323 = arith.mulf %1734, %1531 : vector<8x128xf32>
    %2324 = arith.mulf %1741, %1555 : vector<8x128xf32>
    %2325 = arith.addf %2323, %2324 : vector<8x128xf32>
    %2326 = arith.mulf %1748, %1579 : vector<8x128xf32>
    %2327 = arith.addf %2325, %2326 : vector<8x128xf32>
    %2328 = arith.mulf %1755, %1603 : vector<8x128xf32>
    %2329 = arith.addf %2327, %2328 : vector<8x128xf32>
    %2330 = arith.mulf %1734, %1533 : vector<8x128xf32>
    %2331 = arith.mulf %1741, %1557 : vector<8x128xf32>
    %2332 = arith.addf %2330, %2331 : vector<8x128xf32>
    %2333 = arith.mulf %1748, %1581 : vector<8x128xf32>
    %2334 = arith.addf %2332, %2333 : vector<8x128xf32>
    %2335 = arith.mulf %1755, %1605 : vector<8x128xf32>
    %2336 = arith.addf %2334, %2335 : vector<8x128xf32>
    %2337 = arith.mulf %1734, %1535 : vector<8x128xf32>
    %2338 = arith.mulf %1741, %1559 : vector<8x128xf32>
    %2339 = arith.addf %2337, %2338 : vector<8x128xf32>
    %2340 = arith.mulf %1748, %1583 : vector<8x128xf32>
    %2341 = arith.addf %2339, %2340 : vector<8x128xf32>
    %2342 = arith.mulf %1755, %1607 : vector<8x128xf32>
    %2343 = arith.addf %2341, %2342 : vector<8x128xf32>
    %2344 = arith.mulf %1734, %1537 : vector<8x128xf32>
    %2345 = arith.mulf %1741, %1561 : vector<8x128xf32>
    %2346 = arith.addf %2344, %2345 : vector<8x128xf32>
    %2347 = arith.mulf %1748, %1585 : vector<8x128xf32>
    %2348 = arith.addf %2346, %2347 : vector<8x128xf32>
    %2349 = arith.mulf %1755, %1609 : vector<8x128xf32>
    %2350 = arith.addf %2348, %2349 : vector<8x128xf32>
    %2351 = arith.mulf %1734, %1539 : vector<8x128xf32>
    %2352 = arith.mulf %1741, %1563 : vector<8x128xf32>
    %2353 = arith.addf %2351, %2352 : vector<8x128xf32>
    %2354 = arith.mulf %1748, %1587 : vector<8x128xf32>
    %2355 = arith.addf %2353, %2354 : vector<8x128xf32>
    %2356 = arith.mulf %1755, %1611 : vector<8x128xf32>
    %2357 = arith.addf %2355, %2356 : vector<8x128xf32>
    %2358 = arith.mulf %1734, %1541 : vector<8x128xf32>
    %2359 = arith.mulf %1741, %1565 : vector<8x128xf32>
    %2360 = arith.addf %2358, %2359 : vector<8x128xf32>
    %2361 = arith.mulf %1748, %1589 : vector<8x128xf32>
    %2362 = arith.addf %2360, %2361 : vector<8x128xf32>
    %2363 = arith.mulf %1755, %1613 : vector<8x128xf32>
    %2364 = arith.addf %2362, %2363 : vector<8x128xf32>
    %2365 = arith.mulf %1734, %1543 : vector<8x128xf32>
    %2366 = arith.mulf %1741, %1567 : vector<8x128xf32>
    %2367 = arith.addf %2365, %2366 : vector<8x128xf32>
    %2368 = arith.mulf %1748, %1591 : vector<8x128xf32>
    %2369 = arith.addf %2367, %2368 : vector<8x128xf32>
    %2370 = arith.mulf %1755, %1615 : vector<8x128xf32>
    %2371 = arith.addf %2369, %2370 : vector<8x128xf32>
    %2372 = arith.mulf %1762, %1521 : vector<8x128xf32>
    %2373 = arith.mulf %1769, %1545 : vector<8x128xf32>
    %2374 = arith.addf %2372, %2373 : vector<8x128xf32>
    %2375 = arith.mulf %1776, %1569 : vector<8x128xf32>
    %2376 = arith.addf %2374, %2375 : vector<8x128xf32>
    %2377 = arith.mulf %1783, %1593 : vector<8x128xf32>
    %2378 = arith.addf %2376, %2377 : vector<8x128xf32>
    %2379 = arith.mulf %1762, %1523 : vector<8x128xf32>
    %2380 = arith.mulf %1769, %1547 : vector<8x128xf32>
    %2381 = arith.addf %2379, %2380 : vector<8x128xf32>
    %2382 = arith.mulf %1776, %1571 : vector<8x128xf32>
    %2383 = arith.addf %2381, %2382 : vector<8x128xf32>
    %2384 = arith.mulf %1783, %1595 : vector<8x128xf32>
    %2385 = arith.addf %2383, %2384 : vector<8x128xf32>
    %2386 = arith.mulf %1762, %1525 : vector<8x128xf32>
    %2387 = arith.mulf %1769, %1549 : vector<8x128xf32>
    %2388 = arith.addf %2386, %2387 : vector<8x128xf32>
    %2389 = arith.mulf %1776, %1573 : vector<8x128xf32>
    %2390 = arith.addf %2388, %2389 : vector<8x128xf32>
    %2391 = arith.mulf %1783, %1597 : vector<8x128xf32>
    %2392 = arith.addf %2390, %2391 : vector<8x128xf32>
    %2393 = arith.mulf %1762, %1527 : vector<8x128xf32>
    %2394 = arith.mulf %1769, %1551 : vector<8x128xf32>
    %2395 = arith.addf %2393, %2394 : vector<8x128xf32>
    %2396 = arith.mulf %1776, %1575 : vector<8x128xf32>
    %2397 = arith.addf %2395, %2396 : vector<8x128xf32>
    %2398 = arith.mulf %1783, %1599 : vector<8x128xf32>
    %2399 = arith.addf %2397, %2398 : vector<8x128xf32>
    %2400 = arith.mulf %1762, %1529 : vector<8x128xf32>
    %2401 = arith.mulf %1769, %1553 : vector<8x128xf32>
    %2402 = arith.addf %2400, %2401 : vector<8x128xf32>
    %2403 = arith.mulf %1776, %1577 : vector<8x128xf32>
    %2404 = arith.addf %2402, %2403 : vector<8x128xf32>
    %2405 = arith.mulf %1783, %1601 : vector<8x128xf32>
    %2406 = arith.addf %2404, %2405 : vector<8x128xf32>
    %2407 = arith.mulf %1762, %1531 : vector<8x128xf32>
    %2408 = arith.mulf %1769, %1555 : vector<8x128xf32>
    %2409 = arith.addf %2407, %2408 : vector<8x128xf32>
    %2410 = arith.mulf %1776, %1579 : vector<8x128xf32>
    %2411 = arith.addf %2409, %2410 : vector<8x128xf32>
    %2412 = arith.mulf %1783, %1603 : vector<8x128xf32>
    %2413 = arith.addf %2411, %2412 : vector<8x128xf32>
    %2414 = arith.mulf %1762, %1533 : vector<8x128xf32>
    %2415 = arith.mulf %1769, %1557 : vector<8x128xf32>
    %2416 = arith.addf %2414, %2415 : vector<8x128xf32>
    %2417 = arith.mulf %1776, %1581 : vector<8x128xf32>
    %2418 = arith.addf %2416, %2417 : vector<8x128xf32>
    %2419 = arith.mulf %1783, %1605 : vector<8x128xf32>
    %2420 = arith.addf %2418, %2419 : vector<8x128xf32>
    %2421 = arith.mulf %1762, %1535 : vector<8x128xf32>
    %2422 = arith.mulf %1769, %1559 : vector<8x128xf32>
    %2423 = arith.addf %2421, %2422 : vector<8x128xf32>
    %2424 = arith.mulf %1776, %1583 : vector<8x128xf32>
    %2425 = arith.addf %2423, %2424 : vector<8x128xf32>
    %2426 = arith.mulf %1783, %1607 : vector<8x128xf32>
    %2427 = arith.addf %2425, %2426 : vector<8x128xf32>
    %2428 = arith.mulf %1762, %1537 : vector<8x128xf32>
    %2429 = arith.mulf %1769, %1561 : vector<8x128xf32>
    %2430 = arith.addf %2428, %2429 : vector<8x128xf32>
    %2431 = arith.mulf %1776, %1585 : vector<8x128xf32>
    %2432 = arith.addf %2430, %2431 : vector<8x128xf32>
    %2433 = arith.mulf %1783, %1609 : vector<8x128xf32>
    %2434 = arith.addf %2432, %2433 : vector<8x128xf32>
    %2435 = arith.mulf %1762, %1539 : vector<8x128xf32>
    %2436 = arith.mulf %1769, %1563 : vector<8x128xf32>
    %2437 = arith.addf %2435, %2436 : vector<8x128xf32>
    %2438 = arith.mulf %1776, %1587 : vector<8x128xf32>
    %2439 = arith.addf %2437, %2438 : vector<8x128xf32>
    %2440 = arith.mulf %1783, %1611 : vector<8x128xf32>
    %2441 = arith.addf %2439, %2440 : vector<8x128xf32>
    %2442 = arith.mulf %1762, %1541 : vector<8x128xf32>
    %2443 = arith.mulf %1769, %1565 : vector<8x128xf32>
    %2444 = arith.addf %2442, %2443 : vector<8x128xf32>
    %2445 = arith.mulf %1776, %1589 : vector<8x128xf32>
    %2446 = arith.addf %2444, %2445 : vector<8x128xf32>
    %2447 = arith.mulf %1783, %1613 : vector<8x128xf32>
    %2448 = arith.addf %2446, %2447 : vector<8x128xf32>
    %2449 = arith.mulf %1762, %1543 : vector<8x128xf32>
    %2450 = arith.mulf %1769, %1567 : vector<8x128xf32>
    %2451 = arith.addf %2449, %2450 : vector<8x128xf32>
    %2452 = arith.mulf %1776, %1591 : vector<8x128xf32>
    %2453 = arith.addf %2451, %2452 : vector<8x128xf32>
    %2454 = arith.mulf %1783, %1615 : vector<8x128xf32>
    %2455 = arith.addf %2453, %2454 : vector<8x128xf32>
    %2456 = arith.mulf %1790, %1521 : vector<8x128xf32>
    %2457 = arith.mulf %1797, %1545 : vector<8x128xf32>
    %2458 = arith.addf %2456, %2457 : vector<8x128xf32>
    %2459 = arith.mulf %1804, %1569 : vector<8x128xf32>
    %2460 = arith.addf %2458, %2459 : vector<8x128xf32>
    %2461 = arith.mulf %1811, %1593 : vector<8x128xf32>
    %2462 = arith.addf %2460, %2461 : vector<8x128xf32>
    %2463 = arith.mulf %1790, %1523 : vector<8x128xf32>
    %2464 = arith.mulf %1797, %1547 : vector<8x128xf32>
    %2465 = arith.addf %2463, %2464 : vector<8x128xf32>
    %2466 = arith.mulf %1804, %1571 : vector<8x128xf32>
    %2467 = arith.addf %2465, %2466 : vector<8x128xf32>
    %2468 = arith.mulf %1811, %1595 : vector<8x128xf32>
    %2469 = arith.addf %2467, %2468 : vector<8x128xf32>
    %2470 = arith.mulf %1790, %1525 : vector<8x128xf32>
    %2471 = arith.mulf %1797, %1549 : vector<8x128xf32>
    %2472 = arith.addf %2470, %2471 : vector<8x128xf32>
    %2473 = arith.mulf %1804, %1573 : vector<8x128xf32>
    %2474 = arith.addf %2472, %2473 : vector<8x128xf32>
    %2475 = arith.mulf %1811, %1597 : vector<8x128xf32>
    %2476 = arith.addf %2474, %2475 : vector<8x128xf32>
    %2477 = arith.mulf %1790, %1527 : vector<8x128xf32>
    %2478 = arith.mulf %1797, %1551 : vector<8x128xf32>
    %2479 = arith.addf %2477, %2478 : vector<8x128xf32>
    %2480 = arith.mulf %1804, %1575 : vector<8x128xf32>
    %2481 = arith.addf %2479, %2480 : vector<8x128xf32>
    %2482 = arith.mulf %1811, %1599 : vector<8x128xf32>
    %2483 = arith.addf %2481, %2482 : vector<8x128xf32>
    %2484 = arith.mulf %1790, %1529 : vector<8x128xf32>
    %2485 = arith.mulf %1797, %1553 : vector<8x128xf32>
    %2486 = arith.addf %2484, %2485 : vector<8x128xf32>
    %2487 = arith.mulf %1804, %1577 : vector<8x128xf32>
    %2488 = arith.addf %2486, %2487 : vector<8x128xf32>
    %2489 = arith.mulf %1811, %1601 : vector<8x128xf32>
    %2490 = arith.addf %2488, %2489 : vector<8x128xf32>
    %2491 = arith.mulf %1790, %1531 : vector<8x128xf32>
    %2492 = arith.mulf %1797, %1555 : vector<8x128xf32>
    %2493 = arith.addf %2491, %2492 : vector<8x128xf32>
    %2494 = arith.mulf %1804, %1579 : vector<8x128xf32>
    %2495 = arith.addf %2493, %2494 : vector<8x128xf32>
    %2496 = arith.mulf %1811, %1603 : vector<8x128xf32>
    %2497 = arith.addf %2495, %2496 : vector<8x128xf32>
    %2498 = arith.mulf %1790, %1533 : vector<8x128xf32>
    %2499 = arith.mulf %1797, %1557 : vector<8x128xf32>
    %2500 = arith.addf %2498, %2499 : vector<8x128xf32>
    %2501 = arith.mulf %1804, %1581 : vector<8x128xf32>
    %2502 = arith.addf %2500, %2501 : vector<8x128xf32>
    %2503 = arith.mulf %1811, %1605 : vector<8x128xf32>
    %2504 = arith.addf %2502, %2503 : vector<8x128xf32>
    %2505 = arith.mulf %1790, %1535 : vector<8x128xf32>
    %2506 = arith.mulf %1797, %1559 : vector<8x128xf32>
    %2507 = arith.addf %2505, %2506 : vector<8x128xf32>
    %2508 = arith.mulf %1804, %1583 : vector<8x128xf32>
    %2509 = arith.addf %2507, %2508 : vector<8x128xf32>
    %2510 = arith.mulf %1811, %1607 : vector<8x128xf32>
    %2511 = arith.addf %2509, %2510 : vector<8x128xf32>
    %2512 = arith.mulf %1790, %1537 : vector<8x128xf32>
    %2513 = arith.mulf %1797, %1561 : vector<8x128xf32>
    %2514 = arith.addf %2512, %2513 : vector<8x128xf32>
    %2515 = arith.mulf %1804, %1585 : vector<8x128xf32>
    %2516 = arith.addf %2514, %2515 : vector<8x128xf32>
    %2517 = arith.mulf %1811, %1609 : vector<8x128xf32>
    %2518 = arith.addf %2516, %2517 : vector<8x128xf32>
    %2519 = arith.mulf %1790, %1539 : vector<8x128xf32>
    %2520 = arith.mulf %1797, %1563 : vector<8x128xf32>
    %2521 = arith.addf %2519, %2520 : vector<8x128xf32>
    %2522 = arith.mulf %1804, %1587 : vector<8x128xf32>
    %2523 = arith.addf %2521, %2522 : vector<8x128xf32>
    %2524 = arith.mulf %1811, %1611 : vector<8x128xf32>
    %2525 = arith.addf %2523, %2524 : vector<8x128xf32>
    %2526 = arith.mulf %1790, %1541 : vector<8x128xf32>
    %2527 = arith.mulf %1797, %1565 : vector<8x128xf32>
    %2528 = arith.addf %2526, %2527 : vector<8x128xf32>
    %2529 = arith.mulf %1804, %1589 : vector<8x128xf32>
    %2530 = arith.addf %2528, %2529 : vector<8x128xf32>
    %2531 = arith.mulf %1811, %1613 : vector<8x128xf32>
    %2532 = arith.addf %2530, %2531 : vector<8x128xf32>
    %2533 = arith.mulf %1790, %1543 : vector<8x128xf32>
    %2534 = arith.mulf %1797, %1567 : vector<8x128xf32>
    %2535 = arith.addf %2533, %2534 : vector<8x128xf32>
    %2536 = arith.mulf %1804, %1591 : vector<8x128xf32>
    %2537 = arith.addf %2535, %2536 : vector<8x128xf32>
    %2538 = arith.mulf %1811, %1615 : vector<8x128xf32>
    %2539 = arith.addf %2537, %2538 : vector<8x128xf32>
    %2540 = arith.mulf %1818, %1521 : vector<8x128xf32>
    %2541 = arith.mulf %1825, %1545 : vector<8x128xf32>
    %2542 = arith.addf %2540, %2541 : vector<8x128xf32>
    %2543 = arith.mulf %1832, %1569 : vector<8x128xf32>
    %2544 = arith.addf %2542, %2543 : vector<8x128xf32>
    %2545 = arith.mulf %1839, %1593 : vector<8x128xf32>
    %2546 = arith.addf %2544, %2545 : vector<8x128xf32>
    %2547 = arith.mulf %1818, %1523 : vector<8x128xf32>
    %2548 = arith.mulf %1825, %1547 : vector<8x128xf32>
    %2549 = arith.addf %2547, %2548 : vector<8x128xf32>
    %2550 = arith.mulf %1832, %1571 : vector<8x128xf32>
    %2551 = arith.addf %2549, %2550 : vector<8x128xf32>
    %2552 = arith.mulf %1839, %1595 : vector<8x128xf32>
    %2553 = arith.addf %2551, %2552 : vector<8x128xf32>
    %2554 = arith.mulf %1818, %1525 : vector<8x128xf32>
    %2555 = arith.mulf %1825, %1549 : vector<8x128xf32>
    %2556 = arith.addf %2554, %2555 : vector<8x128xf32>
    %2557 = arith.mulf %1832, %1573 : vector<8x128xf32>
    %2558 = arith.addf %2556, %2557 : vector<8x128xf32>
    %2559 = arith.mulf %1839, %1597 : vector<8x128xf32>
    %2560 = arith.addf %2558, %2559 : vector<8x128xf32>
    %2561 = arith.mulf %1818, %1527 : vector<8x128xf32>
    %2562 = arith.mulf %1825, %1551 : vector<8x128xf32>
    %2563 = arith.addf %2561, %2562 : vector<8x128xf32>
    %2564 = arith.mulf %1832, %1575 : vector<8x128xf32>
    %2565 = arith.addf %2563, %2564 : vector<8x128xf32>
    %2566 = arith.mulf %1839, %1599 : vector<8x128xf32>
    %2567 = arith.addf %2565, %2566 : vector<8x128xf32>
    %2568 = arith.mulf %1818, %1529 : vector<8x128xf32>
    %2569 = arith.mulf %1825, %1553 : vector<8x128xf32>
    %2570 = arith.addf %2568, %2569 : vector<8x128xf32>
    %2571 = arith.mulf %1832, %1577 : vector<8x128xf32>
    %2572 = arith.addf %2570, %2571 : vector<8x128xf32>
    %2573 = arith.mulf %1839, %1601 : vector<8x128xf32>
    %2574 = arith.addf %2572, %2573 : vector<8x128xf32>
    %2575 = arith.mulf %1818, %1531 : vector<8x128xf32>
    %2576 = arith.mulf %1825, %1555 : vector<8x128xf32>
    %2577 = arith.addf %2575, %2576 : vector<8x128xf32>
    %2578 = arith.mulf %1832, %1579 : vector<8x128xf32>
    %2579 = arith.addf %2577, %2578 : vector<8x128xf32>
    %2580 = arith.mulf %1839, %1603 : vector<8x128xf32>
    %2581 = arith.addf %2579, %2580 : vector<8x128xf32>
    %2582 = arith.mulf %1818, %1533 : vector<8x128xf32>
    %2583 = arith.mulf %1825, %1557 : vector<8x128xf32>
    %2584 = arith.addf %2582, %2583 : vector<8x128xf32>
    %2585 = arith.mulf %1832, %1581 : vector<8x128xf32>
    %2586 = arith.addf %2584, %2585 : vector<8x128xf32>
    %2587 = arith.mulf %1839, %1605 : vector<8x128xf32>
    %2588 = arith.addf %2586, %2587 : vector<8x128xf32>
    %2589 = arith.mulf %1818, %1535 : vector<8x128xf32>
    %2590 = arith.mulf %1825, %1559 : vector<8x128xf32>
    %2591 = arith.addf %2589, %2590 : vector<8x128xf32>
    %2592 = arith.mulf %1832, %1583 : vector<8x128xf32>
    %2593 = arith.addf %2591, %2592 : vector<8x128xf32>
    %2594 = arith.mulf %1839, %1607 : vector<8x128xf32>
    %2595 = arith.addf %2593, %2594 : vector<8x128xf32>
    %2596 = arith.mulf %1818, %1537 : vector<8x128xf32>
    %2597 = arith.mulf %1825, %1561 : vector<8x128xf32>
    %2598 = arith.addf %2596, %2597 : vector<8x128xf32>
    %2599 = arith.mulf %1832, %1585 : vector<8x128xf32>
    %2600 = arith.addf %2598, %2599 : vector<8x128xf32>
    %2601 = arith.mulf %1839, %1609 : vector<8x128xf32>
    %2602 = arith.addf %2600, %2601 : vector<8x128xf32>
    %2603 = arith.mulf %1818, %1539 : vector<8x128xf32>
    %2604 = arith.mulf %1825, %1563 : vector<8x128xf32>
    %2605 = arith.addf %2603, %2604 : vector<8x128xf32>
    %2606 = arith.mulf %1832, %1587 : vector<8x128xf32>
    %2607 = arith.addf %2605, %2606 : vector<8x128xf32>
    %2608 = arith.mulf %1839, %1611 : vector<8x128xf32>
    %2609 = arith.addf %2607, %2608 : vector<8x128xf32>
    %2610 = arith.mulf %1818, %1541 : vector<8x128xf32>
    %2611 = arith.mulf %1825, %1565 : vector<8x128xf32>
    %2612 = arith.addf %2610, %2611 : vector<8x128xf32>
    %2613 = arith.mulf %1832, %1589 : vector<8x128xf32>
    %2614 = arith.addf %2612, %2613 : vector<8x128xf32>
    %2615 = arith.mulf %1839, %1613 : vector<8x128xf32>
    %2616 = arith.addf %2614, %2615 : vector<8x128xf32>
    %2617 = arith.mulf %1818, %1543 : vector<8x128xf32>
    %2618 = arith.mulf %1825, %1567 : vector<8x128xf32>
    %2619 = arith.addf %2617, %2618 : vector<8x128xf32>
    %2620 = arith.mulf %1832, %1591 : vector<8x128xf32>
    %2621 = arith.addf %2619, %2620 : vector<8x128xf32>
    %2622 = arith.mulf %1839, %1615 : vector<8x128xf32>
    %2623 = arith.addf %2621, %2622 : vector<8x128xf32>
    %2624 = arith.mulf %1846, %1521 : vector<8x128xf32>
    %2625 = arith.mulf %1853, %1545 : vector<8x128xf32>
    %2626 = arith.addf %2624, %2625 : vector<8x128xf32>
    %2627 = arith.mulf %1860, %1569 : vector<8x128xf32>
    %2628 = arith.addf %2626, %2627 : vector<8x128xf32>
    %2629 = arith.mulf %1867, %1593 : vector<8x128xf32>
    %2630 = arith.addf %2628, %2629 : vector<8x128xf32>
    %2631 = arith.mulf %1846, %1523 : vector<8x128xf32>
    %2632 = arith.mulf %1853, %1547 : vector<8x128xf32>
    %2633 = arith.addf %2631, %2632 : vector<8x128xf32>
    %2634 = arith.mulf %1860, %1571 : vector<8x128xf32>
    %2635 = arith.addf %2633, %2634 : vector<8x128xf32>
    %2636 = arith.mulf %1867, %1595 : vector<8x128xf32>
    %2637 = arith.addf %2635, %2636 : vector<8x128xf32>
    %2638 = arith.mulf %1846, %1525 : vector<8x128xf32>
    %2639 = arith.mulf %1853, %1549 : vector<8x128xf32>
    %2640 = arith.addf %2638, %2639 : vector<8x128xf32>
    %2641 = arith.mulf %1860, %1573 : vector<8x128xf32>
    %2642 = arith.addf %2640, %2641 : vector<8x128xf32>
    %2643 = arith.mulf %1867, %1597 : vector<8x128xf32>
    %2644 = arith.addf %2642, %2643 : vector<8x128xf32>
    %2645 = arith.mulf %1846, %1527 : vector<8x128xf32>
    %2646 = arith.mulf %1853, %1551 : vector<8x128xf32>
    %2647 = arith.addf %2645, %2646 : vector<8x128xf32>
    %2648 = arith.mulf %1860, %1575 : vector<8x128xf32>
    %2649 = arith.addf %2647, %2648 : vector<8x128xf32>
    %2650 = arith.mulf %1867, %1599 : vector<8x128xf32>
    %2651 = arith.addf %2649, %2650 : vector<8x128xf32>
    %2652 = arith.mulf %1846, %1529 : vector<8x128xf32>
    %2653 = arith.mulf %1853, %1553 : vector<8x128xf32>
    %2654 = arith.addf %2652, %2653 : vector<8x128xf32>
    %2655 = arith.mulf %1860, %1577 : vector<8x128xf32>
    %2656 = arith.addf %2654, %2655 : vector<8x128xf32>
    %2657 = arith.mulf %1867, %1601 : vector<8x128xf32>
    %2658 = arith.addf %2656, %2657 : vector<8x128xf32>
    %2659 = arith.mulf %1846, %1531 : vector<8x128xf32>
    %2660 = arith.mulf %1853, %1555 : vector<8x128xf32>
    %2661 = arith.addf %2659, %2660 : vector<8x128xf32>
    %2662 = arith.mulf %1860, %1579 : vector<8x128xf32>
    %2663 = arith.addf %2661, %2662 : vector<8x128xf32>
    %2664 = arith.mulf %1867, %1603 : vector<8x128xf32>
    %2665 = arith.addf %2663, %2664 : vector<8x128xf32>
    %2666 = arith.mulf %1846, %1533 : vector<8x128xf32>
    %2667 = arith.mulf %1853, %1557 : vector<8x128xf32>
    %2668 = arith.addf %2666, %2667 : vector<8x128xf32>
    %2669 = arith.mulf %1860, %1581 : vector<8x128xf32>
    %2670 = arith.addf %2668, %2669 : vector<8x128xf32>
    %2671 = arith.mulf %1867, %1605 : vector<8x128xf32>
    %2672 = arith.addf %2670, %2671 : vector<8x128xf32>
    %2673 = arith.mulf %1846, %1535 : vector<8x128xf32>
    %2674 = arith.mulf %1853, %1559 : vector<8x128xf32>
    %2675 = arith.addf %2673, %2674 : vector<8x128xf32>
    %2676 = arith.mulf %1860, %1583 : vector<8x128xf32>
    %2677 = arith.addf %2675, %2676 : vector<8x128xf32>
    %2678 = arith.mulf %1867, %1607 : vector<8x128xf32>
    %2679 = arith.addf %2677, %2678 : vector<8x128xf32>
    %2680 = arith.mulf %1846, %1537 : vector<8x128xf32>
    %2681 = arith.mulf %1853, %1561 : vector<8x128xf32>
    %2682 = arith.addf %2680, %2681 : vector<8x128xf32>
    %2683 = arith.mulf %1860, %1585 : vector<8x128xf32>
    %2684 = arith.addf %2682, %2683 : vector<8x128xf32>
    %2685 = arith.mulf %1867, %1609 : vector<8x128xf32>
    %2686 = arith.addf %2684, %2685 : vector<8x128xf32>
    %2687 = arith.mulf %1846, %1539 : vector<8x128xf32>
    %2688 = arith.mulf %1853, %1563 : vector<8x128xf32>
    %2689 = arith.addf %2687, %2688 : vector<8x128xf32>
    %2690 = arith.mulf %1860, %1587 : vector<8x128xf32>
    %2691 = arith.addf %2689, %2690 : vector<8x128xf32>
    %2692 = arith.mulf %1867, %1611 : vector<8x128xf32>
    %2693 = arith.addf %2691, %2692 : vector<8x128xf32>
    %2694 = arith.mulf %1846, %1541 : vector<8x128xf32>
    %2695 = arith.mulf %1853, %1565 : vector<8x128xf32>
    %2696 = arith.addf %2694, %2695 : vector<8x128xf32>
    %2697 = arith.mulf %1860, %1589 : vector<8x128xf32>
    %2698 = arith.addf %2696, %2697 : vector<8x128xf32>
    %2699 = arith.mulf %1867, %1613 : vector<8x128xf32>
    %2700 = arith.addf %2698, %2699 : vector<8x128xf32>
    %2701 = arith.mulf %1846, %1543 : vector<8x128xf32>
    %2702 = arith.mulf %1853, %1567 : vector<8x128xf32>
    %2703 = arith.addf %2701, %2702 : vector<8x128xf32>
    %2704 = arith.mulf %1860, %1591 : vector<8x128xf32>
    %2705 = arith.addf %2703, %2704 : vector<8x128xf32>
    %2706 = arith.mulf %1867, %1615 : vector<8x128xf32>
    %2707 = arith.addf %2705, %2706 : vector<8x128xf32>
    %2708 = arith.mulf %1874, %1521 : vector<8x128xf32>
    %2709 = arith.mulf %1881, %1545 : vector<8x128xf32>
    %2710 = arith.addf %2708, %2709 : vector<8x128xf32>
    %2711 = arith.mulf %1888, %1569 : vector<8x128xf32>
    %2712 = arith.addf %2710, %2711 : vector<8x128xf32>
    %2713 = arith.mulf %1895, %1593 : vector<8x128xf32>
    %2714 = arith.addf %2712, %2713 : vector<8x128xf32>
    %2715 = arith.mulf %1874, %1523 : vector<8x128xf32>
    %2716 = arith.mulf %1881, %1547 : vector<8x128xf32>
    %2717 = arith.addf %2715, %2716 : vector<8x128xf32>
    %2718 = arith.mulf %1888, %1571 : vector<8x128xf32>
    %2719 = arith.addf %2717, %2718 : vector<8x128xf32>
    %2720 = arith.mulf %1895, %1595 : vector<8x128xf32>
    %2721 = arith.addf %2719, %2720 : vector<8x128xf32>
    %2722 = arith.mulf %1874, %1525 : vector<8x128xf32>
    %2723 = arith.mulf %1881, %1549 : vector<8x128xf32>
    %2724 = arith.addf %2722, %2723 : vector<8x128xf32>
    %2725 = arith.mulf %1888, %1573 : vector<8x128xf32>
    %2726 = arith.addf %2724, %2725 : vector<8x128xf32>
    %2727 = arith.mulf %1895, %1597 : vector<8x128xf32>
    %2728 = arith.addf %2726, %2727 : vector<8x128xf32>
    %2729 = arith.mulf %1874, %1527 : vector<8x128xf32>
    %2730 = arith.mulf %1881, %1551 : vector<8x128xf32>
    %2731 = arith.addf %2729, %2730 : vector<8x128xf32>
    %2732 = arith.mulf %1888, %1575 : vector<8x128xf32>
    %2733 = arith.addf %2731, %2732 : vector<8x128xf32>
    %2734 = arith.mulf %1895, %1599 : vector<8x128xf32>
    %2735 = arith.addf %2733, %2734 : vector<8x128xf32>
    %2736 = arith.mulf %1874, %1529 : vector<8x128xf32>
    %2737 = arith.mulf %1881, %1553 : vector<8x128xf32>
    %2738 = arith.addf %2736, %2737 : vector<8x128xf32>
    %2739 = arith.mulf %1888, %1577 : vector<8x128xf32>
    %2740 = arith.addf %2738, %2739 : vector<8x128xf32>
    %2741 = arith.mulf %1895, %1601 : vector<8x128xf32>
    %2742 = arith.addf %2740, %2741 : vector<8x128xf32>
    %2743 = arith.mulf %1874, %1531 : vector<8x128xf32>
    %2744 = arith.mulf %1881, %1555 : vector<8x128xf32>
    %2745 = arith.addf %2743, %2744 : vector<8x128xf32>
    %2746 = arith.mulf %1888, %1579 : vector<8x128xf32>
    %2747 = arith.addf %2745, %2746 : vector<8x128xf32>
    %2748 = arith.mulf %1895, %1603 : vector<8x128xf32>
    %2749 = arith.addf %2747, %2748 : vector<8x128xf32>
    %2750 = arith.mulf %1874, %1533 : vector<8x128xf32>
    %2751 = arith.mulf %1881, %1557 : vector<8x128xf32>
    %2752 = arith.addf %2750, %2751 : vector<8x128xf32>
    %2753 = arith.mulf %1888, %1581 : vector<8x128xf32>
    %2754 = arith.addf %2752, %2753 : vector<8x128xf32>
    %2755 = arith.mulf %1895, %1605 : vector<8x128xf32>
    %2756 = arith.addf %2754, %2755 : vector<8x128xf32>
    %2757 = arith.mulf %1874, %1535 : vector<8x128xf32>
    %2758 = arith.mulf %1881, %1559 : vector<8x128xf32>
    %2759 = arith.addf %2757, %2758 : vector<8x128xf32>
    %2760 = arith.mulf %1888, %1583 : vector<8x128xf32>
    %2761 = arith.addf %2759, %2760 : vector<8x128xf32>
    %2762 = arith.mulf %1895, %1607 : vector<8x128xf32>
    %2763 = arith.addf %2761, %2762 : vector<8x128xf32>
    %2764 = arith.mulf %1874, %1537 : vector<8x128xf32>
    %2765 = arith.mulf %1881, %1561 : vector<8x128xf32>
    %2766 = arith.addf %2764, %2765 : vector<8x128xf32>
    %2767 = arith.mulf %1888, %1585 : vector<8x128xf32>
    %2768 = arith.addf %2766, %2767 : vector<8x128xf32>
    %2769 = arith.mulf %1895, %1609 : vector<8x128xf32>
    %2770 = arith.addf %2768, %2769 : vector<8x128xf32>
    %2771 = arith.mulf %1874, %1539 : vector<8x128xf32>
    %2772 = arith.mulf %1881, %1563 : vector<8x128xf32>
    %2773 = arith.addf %2771, %2772 : vector<8x128xf32>
    %2774 = arith.mulf %1888, %1587 : vector<8x128xf32>
    %2775 = arith.addf %2773, %2774 : vector<8x128xf32>
    %2776 = arith.mulf %1895, %1611 : vector<8x128xf32>
    %2777 = arith.addf %2775, %2776 : vector<8x128xf32>
    %2778 = arith.mulf %1874, %1541 : vector<8x128xf32>
    %2779 = arith.mulf %1881, %1565 : vector<8x128xf32>
    %2780 = arith.addf %2778, %2779 : vector<8x128xf32>
    %2781 = arith.mulf %1888, %1589 : vector<8x128xf32>
    %2782 = arith.addf %2780, %2781 : vector<8x128xf32>
    %2783 = arith.mulf %1895, %1613 : vector<8x128xf32>
    %2784 = arith.addf %2782, %2783 : vector<8x128xf32>
    %2785 = arith.mulf %1874, %1543 : vector<8x128xf32>
    %2786 = arith.mulf %1881, %1567 : vector<8x128xf32>
    %2787 = arith.addf %2785, %2786 : vector<8x128xf32>
    %2788 = arith.mulf %1888, %1591 : vector<8x128xf32>
    %2789 = arith.addf %2787, %2788 : vector<8x128xf32>
    %2790 = arith.mulf %1895, %1615 : vector<8x128xf32>
    %2791 = arith.addf %2789, %2790 : vector<8x128xf32>
    %2792 = arith.mulf %1902, %1521 : vector<8x128xf32>
    %2793 = arith.mulf %1909, %1545 : vector<8x128xf32>
    %2794 = arith.addf %2792, %2793 : vector<8x128xf32>
    %2795 = arith.mulf %1916, %1569 : vector<8x128xf32>
    %2796 = arith.addf %2794, %2795 : vector<8x128xf32>
    %2797 = arith.mulf %1923, %1593 : vector<8x128xf32>
    %2798 = arith.addf %2796, %2797 : vector<8x128xf32>
    %2799 = arith.mulf %1902, %1523 : vector<8x128xf32>
    %2800 = arith.mulf %1909, %1547 : vector<8x128xf32>
    %2801 = arith.addf %2799, %2800 : vector<8x128xf32>
    %2802 = arith.mulf %1916, %1571 : vector<8x128xf32>
    %2803 = arith.addf %2801, %2802 : vector<8x128xf32>
    %2804 = arith.mulf %1923, %1595 : vector<8x128xf32>
    %2805 = arith.addf %2803, %2804 : vector<8x128xf32>
    %2806 = arith.mulf %1902, %1525 : vector<8x128xf32>
    %2807 = arith.mulf %1909, %1549 : vector<8x128xf32>
    %2808 = arith.addf %2806, %2807 : vector<8x128xf32>
    %2809 = arith.mulf %1916, %1573 : vector<8x128xf32>
    %2810 = arith.addf %2808, %2809 : vector<8x128xf32>
    %2811 = arith.mulf %1923, %1597 : vector<8x128xf32>
    %2812 = arith.addf %2810, %2811 : vector<8x128xf32>
    %2813 = arith.mulf %1902, %1527 : vector<8x128xf32>
    %2814 = arith.mulf %1909, %1551 : vector<8x128xf32>
    %2815 = arith.addf %2813, %2814 : vector<8x128xf32>
    %2816 = arith.mulf %1916, %1575 : vector<8x128xf32>
    %2817 = arith.addf %2815, %2816 : vector<8x128xf32>
    %2818 = arith.mulf %1923, %1599 : vector<8x128xf32>
    %2819 = arith.addf %2817, %2818 : vector<8x128xf32>
    %2820 = arith.mulf %1902, %1529 : vector<8x128xf32>
    %2821 = arith.mulf %1909, %1553 : vector<8x128xf32>
    %2822 = arith.addf %2820, %2821 : vector<8x128xf32>
    %2823 = arith.mulf %1916, %1577 : vector<8x128xf32>
    %2824 = arith.addf %2822, %2823 : vector<8x128xf32>
    %2825 = arith.mulf %1923, %1601 : vector<8x128xf32>
    %2826 = arith.addf %2824, %2825 : vector<8x128xf32>
    %2827 = arith.mulf %1902, %1531 : vector<8x128xf32>
    %2828 = arith.mulf %1909, %1555 : vector<8x128xf32>
    %2829 = arith.addf %2827, %2828 : vector<8x128xf32>
    %2830 = arith.mulf %1916, %1579 : vector<8x128xf32>
    %2831 = arith.addf %2829, %2830 : vector<8x128xf32>
    %2832 = arith.mulf %1923, %1603 : vector<8x128xf32>
    %2833 = arith.addf %2831, %2832 : vector<8x128xf32>
    %2834 = arith.mulf %1902, %1533 : vector<8x128xf32>
    %2835 = arith.mulf %1909, %1557 : vector<8x128xf32>
    %2836 = arith.addf %2834, %2835 : vector<8x128xf32>
    %2837 = arith.mulf %1916, %1581 : vector<8x128xf32>
    %2838 = arith.addf %2836, %2837 : vector<8x128xf32>
    %2839 = arith.mulf %1923, %1605 : vector<8x128xf32>
    %2840 = arith.addf %2838, %2839 : vector<8x128xf32>
    %2841 = arith.mulf %1902, %1535 : vector<8x128xf32>
    %2842 = arith.mulf %1909, %1559 : vector<8x128xf32>
    %2843 = arith.addf %2841, %2842 : vector<8x128xf32>
    %2844 = arith.mulf %1916, %1583 : vector<8x128xf32>
    %2845 = arith.addf %2843, %2844 : vector<8x128xf32>
    %2846 = arith.mulf %1923, %1607 : vector<8x128xf32>
    %2847 = arith.addf %2845, %2846 : vector<8x128xf32>
    %2848 = arith.mulf %1902, %1537 : vector<8x128xf32>
    %2849 = arith.mulf %1909, %1561 : vector<8x128xf32>
    %2850 = arith.addf %2848, %2849 : vector<8x128xf32>
    %2851 = arith.mulf %1916, %1585 : vector<8x128xf32>
    %2852 = arith.addf %2850, %2851 : vector<8x128xf32>
    %2853 = arith.mulf %1923, %1609 : vector<8x128xf32>
    %2854 = arith.addf %2852, %2853 : vector<8x128xf32>
    %2855 = arith.mulf %1902, %1539 : vector<8x128xf32>
    %2856 = arith.mulf %1909, %1563 : vector<8x128xf32>
    %2857 = arith.addf %2855, %2856 : vector<8x128xf32>
    %2858 = arith.mulf %1916, %1587 : vector<8x128xf32>
    %2859 = arith.addf %2857, %2858 : vector<8x128xf32>
    %2860 = arith.mulf %1923, %1611 : vector<8x128xf32>
    %2861 = arith.addf %2859, %2860 : vector<8x128xf32>
    %2862 = arith.mulf %1902, %1541 : vector<8x128xf32>
    %2863 = arith.mulf %1909, %1565 : vector<8x128xf32>
    %2864 = arith.addf %2862, %2863 : vector<8x128xf32>
    %2865 = arith.mulf %1916, %1589 : vector<8x128xf32>
    %2866 = arith.addf %2864, %2865 : vector<8x128xf32>
    %2867 = arith.mulf %1923, %1613 : vector<8x128xf32>
    %2868 = arith.addf %2866, %2867 : vector<8x128xf32>
    %2869 = arith.mulf %1902, %1543 : vector<8x128xf32>
    %2870 = arith.mulf %1909, %1567 : vector<8x128xf32>
    %2871 = arith.addf %2869, %2870 : vector<8x128xf32>
    %2872 = arith.mulf %1916, %1591 : vector<8x128xf32>
    %2873 = arith.addf %2871, %2872 : vector<8x128xf32>
    %2874 = arith.mulf %1923, %1615 : vector<8x128xf32>
    %2875 = arith.addf %2873, %2874 : vector<8x128xf32>
    %2876 = arith.mulf %1930, %1521 : vector<8x128xf32>
    %2877 = arith.mulf %1937, %1545 : vector<8x128xf32>
    %2878 = arith.addf %2876, %2877 : vector<8x128xf32>
    %2879 = arith.mulf %1944, %1569 : vector<8x128xf32>
    %2880 = arith.addf %2878, %2879 : vector<8x128xf32>
    %2881 = arith.mulf %1951, %1593 : vector<8x128xf32>
    %2882 = arith.addf %2880, %2881 : vector<8x128xf32>
    %2883 = arith.mulf %1930, %1523 : vector<8x128xf32>
    %2884 = arith.mulf %1937, %1547 : vector<8x128xf32>
    %2885 = arith.addf %2883, %2884 : vector<8x128xf32>
    %2886 = arith.mulf %1944, %1571 : vector<8x128xf32>
    %2887 = arith.addf %2885, %2886 : vector<8x128xf32>
    %2888 = arith.mulf %1951, %1595 : vector<8x128xf32>
    %2889 = arith.addf %2887, %2888 : vector<8x128xf32>
    %2890 = arith.mulf %1930, %1525 : vector<8x128xf32>
    %2891 = arith.mulf %1937, %1549 : vector<8x128xf32>
    %2892 = arith.addf %2890, %2891 : vector<8x128xf32>
    %2893 = arith.mulf %1944, %1573 : vector<8x128xf32>
    %2894 = arith.addf %2892, %2893 : vector<8x128xf32>
    %2895 = arith.mulf %1951, %1597 : vector<8x128xf32>
    %2896 = arith.addf %2894, %2895 : vector<8x128xf32>
    %2897 = arith.mulf %1930, %1527 : vector<8x128xf32>
    %2898 = arith.mulf %1937, %1551 : vector<8x128xf32>
    %2899 = arith.addf %2897, %2898 : vector<8x128xf32>
    %2900 = arith.mulf %1944, %1575 : vector<8x128xf32>
    %2901 = arith.addf %2899, %2900 : vector<8x128xf32>
    %2902 = arith.mulf %1951, %1599 : vector<8x128xf32>
    %2903 = arith.addf %2901, %2902 : vector<8x128xf32>
    %2904 = arith.mulf %1930, %1529 : vector<8x128xf32>
    %2905 = arith.mulf %1937, %1553 : vector<8x128xf32>
    %2906 = arith.addf %2904, %2905 : vector<8x128xf32>
    %2907 = arith.mulf %1944, %1577 : vector<8x128xf32>
    %2908 = arith.addf %2906, %2907 : vector<8x128xf32>
    %2909 = arith.mulf %1951, %1601 : vector<8x128xf32>
    %2910 = arith.addf %2908, %2909 : vector<8x128xf32>
    %2911 = arith.mulf %1930, %1531 : vector<8x128xf32>
    %2912 = arith.mulf %1937, %1555 : vector<8x128xf32>
    %2913 = arith.addf %2911, %2912 : vector<8x128xf32>
    %2914 = arith.mulf %1944, %1579 : vector<8x128xf32>
    %2915 = arith.addf %2913, %2914 : vector<8x128xf32>
    %2916 = arith.mulf %1951, %1603 : vector<8x128xf32>
    %2917 = arith.addf %2915, %2916 : vector<8x128xf32>
    %2918 = arith.mulf %1930, %1533 : vector<8x128xf32>
    %2919 = arith.mulf %1937, %1557 : vector<8x128xf32>
    %2920 = arith.addf %2918, %2919 : vector<8x128xf32>
    %2921 = arith.mulf %1944, %1581 : vector<8x128xf32>
    %2922 = arith.addf %2920, %2921 : vector<8x128xf32>
    %2923 = arith.mulf %1951, %1605 : vector<8x128xf32>
    %2924 = arith.addf %2922, %2923 : vector<8x128xf32>
    %2925 = arith.mulf %1930, %1535 : vector<8x128xf32>
    %2926 = arith.mulf %1937, %1559 : vector<8x128xf32>
    %2927 = arith.addf %2925, %2926 : vector<8x128xf32>
    %2928 = arith.mulf %1944, %1583 : vector<8x128xf32>
    %2929 = arith.addf %2927, %2928 : vector<8x128xf32>
    %2930 = arith.mulf %1951, %1607 : vector<8x128xf32>
    %2931 = arith.addf %2929, %2930 : vector<8x128xf32>
    %2932 = arith.mulf %1930, %1537 : vector<8x128xf32>
    %2933 = arith.mulf %1937, %1561 : vector<8x128xf32>
    %2934 = arith.addf %2932, %2933 : vector<8x128xf32>
    %2935 = arith.mulf %1944, %1585 : vector<8x128xf32>
    %2936 = arith.addf %2934, %2935 : vector<8x128xf32>
    %2937 = arith.mulf %1951, %1609 : vector<8x128xf32>
    %2938 = arith.addf %2936, %2937 : vector<8x128xf32>
    %2939 = arith.mulf %1930, %1539 : vector<8x128xf32>
    %2940 = arith.mulf %1937, %1563 : vector<8x128xf32>
    %2941 = arith.addf %2939, %2940 : vector<8x128xf32>
    %2942 = arith.mulf %1944, %1587 : vector<8x128xf32>
    %2943 = arith.addf %2941, %2942 : vector<8x128xf32>
    %2944 = arith.mulf %1951, %1611 : vector<8x128xf32>
    %2945 = arith.addf %2943, %2944 : vector<8x128xf32>
    %2946 = arith.mulf %1930, %1541 : vector<8x128xf32>
    %2947 = arith.mulf %1937, %1565 : vector<8x128xf32>
    %2948 = arith.addf %2946, %2947 : vector<8x128xf32>
    %2949 = arith.mulf %1944, %1589 : vector<8x128xf32>
    %2950 = arith.addf %2948, %2949 : vector<8x128xf32>
    %2951 = arith.mulf %1951, %1613 : vector<8x128xf32>
    %2952 = arith.addf %2950, %2951 : vector<8x128xf32>
    %2953 = arith.mulf %1930, %1543 : vector<8x128xf32>
    %2954 = arith.mulf %1937, %1567 : vector<8x128xf32>
    %2955 = arith.addf %2953, %2954 : vector<8x128xf32>
    %2956 = arith.mulf %1944, %1591 : vector<8x128xf32>
    %2957 = arith.addf %2955, %2956 : vector<8x128xf32>
    %2958 = arith.mulf %1951, %1615 : vector<8x128xf32>
    %2959 = arith.addf %2957, %2958 : vector<8x128xf32>
    %2960 = arith.addf %1, %1958 : vector<8x128xf32>
    %c0_756 = arith.constant 0 : index
    %c0_757 = arith.constant 0 : index
    %c0_758 = arith.constant 0 : index
    %c0_759 = arith.constant 0 : index
    %2961 = vector.load %arg3[%c0_756, %c0_757, %c0_758, %c0_759] : memref<12x12x8x128xf32, #tpu.memory_space<vmem>>, vector<1x1x8x128xf32>
    %2962 = vector.shape_cast %2961 : vector<1x1x8x128xf32> to vector<8x128xf32>
    %2963 = vector.shape_cast %2960 : vector<8x128xf32> to vector<1x1x8x128xf32>
    tpu.vector_store %arg3[%c0_756, %c0_757, %c0_758, %c0_759], %2963 {strides = array<i32>} : memref<12x12x8x128xf32, #tpu.memory_space<vmem>>, vector<1x1x8x128xf32>,
    %2964 = arith.addf %3, %1965 : vector<8x128xf32>
    %c0_760 = arith.constant 0 : index
    %c1_761 = arith.constant 1 : index
    %c0_762 = arith.constant 0 : index
    %c0_763 = arith.constant 0 : index
    %2965 = vector.load %arg3[%c0_760, %c1_761, %c0_762, %c0_763] : memref<12x12x8x128xf32, #tpu.memory_space<vmem>>, vector<1x1x8x128xf32>
    %2966 = vector.shape_cast %2965 : vector<1x1x8x128xf32> to vector<8x128xf32>
    %2967 = vector.shape_cast %2964 : vector<8x128xf32> to vector<1x1x8x128xf32>
    tpu.vector_store %arg3[%c0_760, %c1_761, %c0_762, %c0_763], %2967 {strides = array<i32>} : memref<12x12x8x128xf32, #tpu.memory_space<vmem>>, vector<1x1x8x128xf32>,
    %2968 = arith.addf %5, %1972 : vector<8x128xf32>
    %c0_764 = arith.constant 0 : index
    %c2_765 = arith.constant 2 : index
    %c0_766 = arith.constant 0 : index
    %c0_767 = arith.constant 0 : index
    %2969 = vector.load %arg3[%c0_764, %c2_765, %c0_766, %c0_767] : memref<12x12x8x128xf32, #tpu.memory_space<vmem>>, vector<1x1x8x128xf32>
    %2970 = vector.shape_cast %2969 : vector<1x1x8x128xf32> to vector<8x128xf32>
    %2971 = vector.shape_cast %2968 : vector<8x128xf32> to vector<1x1x8x128xf32>
    tpu.vector_store %arg3[%c0_764, %c2_765, %c0_766, %c0_767], %2971 {strides = array<i32>} : memref<12x12x8x128xf32, #tpu.memory_space<vmem>>, vector<1x1x8x128xf32>,
    %2972 = arith.addf %7, %1979 : vector<8x128xf32>
    %c0_768 = arith.constant 0 : index
    %c3_769 = arith.constant 3 : index
    %c0_770 = arith.constant 0 : index
    %c0_771 = arith.constant 0 : index
    %2973 = vector.load %arg3[%c0_768, %c3_769, %c0_770, %c0_771] : memref<12x12x8x128xf32, #tpu.memory_space<vmem>>, vector<1x1x8x128xf32>
    %2974 = vector.shape_cast %2973 : vector<1x1x8x128xf32> to vector<8x128xf32>
    %2975 = vector.shape_cast %2972 : vector<8x128xf32> to vector<1x1x8x128xf32>
    tpu.vector_store %arg3[%c0_768, %c3_769, %c0_770, %c0_771], %2975 {strides = array<i32>} : memref<12x12x8x128xf32, #tpu.memory_space<vmem>>, vector<1x1x8x128xf32>,
    %2976 = arith.addf %9, %1986 : vector<8x128xf32>
    %c0_772 = arith.constant 0 : index
    %c4_773 = arith.constant 4 : index
    %c0_774 = arith.constant 0 : index
    %c0_775 = arith.constant 0 : index
    %2977 = vector.load %arg3[%c0_772, %c4_773, %c0_774, %c0_775] : memref<12x12x8x128xf32, #tpu.memory_space<vmem>>, vector<1x1x8x128xf32>
    %2978 = vector.shape_cast %2977 : vector<1x1x8x128xf32> to vector<8x128xf32>
    %2979 = vector.shape_cast %2976 : vector<8x128xf32> to vector<1x1x8x128xf32>
    tpu.vector_store %arg3[%c0_772, %c4_773, %c0_774, %c0_775], %2979 {strides = array<i32>} : memref<12x12x8x128xf32, #tpu.memory_space<vmem>>, vector<1x1x8x128xf32>,
    %2980 = arith.addf %11, %1993 : vector<8x128xf32>
    %c0_776 = arith.constant 0 : index
    %c5_777 = arith.constant 5 : index
    %c0_778 = arith.constant 0 : index
    %c0_779 = arith.constant 0 : index
    %2981 = vector.load %arg3[%c0_776, %c5_777, %c0_778, %c0_779] : memref<12x12x8x128xf32, #tpu.memory_space<vmem>>, vector<1x1x8x128xf32>
    %2982 = vector.shape_cast %2981 : vector<1x1x8x128xf32> to vector<8x128xf32>
    %2983 = vector.shape_cast %2980 : vector<8x128xf32> to vector<1x1x8x128xf32>
    tpu.vector_store %arg3[%c0_776, %c5_777, %c0_778, %c0_779], %2983 {strides = array<i32>} : memref<12x12x8x128xf32, #tpu.memory_space<vmem>>, vector<1x1x8x128xf32>,
    %2984 = arith.addf %13, %2000 : vector<8x128xf32>
    %c0_780 = arith.constant 0 : index
    %c6_781 = arith.constant 6 : index
    %c0_782 = arith.constant 0 : index
    %c0_783 = arith.constant 0 : index
    %2985 = vector.load %arg3[%c0_780, %c6_781, %c0_782, %c0_783] : memref<12x12x8x128xf32, #tpu.memory_space<vmem>>, vector<1x1x8x128xf32>
    %2986 = vector.shape_cast %2985 : vector<1x1x8x128xf32> to vector<8x128xf32>
    %2987 = vector.shape_cast %2984 : vector<8x128xf32> to vector<1x1x8x128xf32>
    tpu.vector_store %arg3[%c0_780, %c6_781, %c0_782, %c0_783], %2987 {strides = array<i32>} : memref<12x12x8x128xf32, #tpu.memory_space<vmem>>, vector<1x1x8x128xf32>,
    %2988 = arith.addf %15, %2007 : vector<8x128xf32>
    %c0_784 = arith.constant 0 : index
    %c7_785 = arith.constant 7 : index
    %c0_786 = arith.constant 0 : index
    %c0_787 = arith.constant 0 : index
    %2989 = vector.load %arg3[%c0_784, %c7_785, %c0_786, %c0_787] : memref<12x12x8x128xf32, #tpu.memory_space<vmem>>, vector<1x1x8x128xf32>
    %2990 = vector.shape_cast %2989 : vector<1x1x8x128xf32> to vector<8x128xf32>
    %2991 = vector.shape_cast %2988 : vector<8x128xf32> to vector<1x1x8x128xf32>
    tpu.vector_store %arg3[%c0_784, %c7_785, %c0_786, %c0_787], %2991 {strides = array<i32>} : memref<12x12x8x128xf32, #tpu.memory_space<vmem>>, vector<1x1x8x128xf32>,
    %2992 = arith.addf %17, %2014 : vector<8x128xf32>
    %c0_788 = arith.constant 0 : index
    %c8_789 = arith.constant 8 : index
    %c0_790 = arith.constant 0 : index
    %c0_791 = arith.constant 0 : index
    %2993 = vector.load %arg3[%c0_788, %c8_789, %c0_790, %c0_791] : memref<12x12x8x128xf32, #tpu.memory_space<vmem>>, vector<1x1x8x128xf32>
    %2994 = vector.shape_cast %2993 : vector<1x1x8x128xf32> to vector<8x128xf32>
    %2995 = vector.shape_cast %2992 : vector<8x128xf32> to vector<1x1x8x128xf32>
    tpu.vector_store %arg3[%c0_788, %c8_789, %c0_790, %c0_791], %2995 {strides = array<i32>} : memref<12x12x8x128xf32, #tpu.memory_space<vmem>>, vector<1x1x8x128xf32>,
    %2996 = arith.addf %19, %2021 : vector<8x128xf32>
    %c0_792 = arith.constant 0 : index
    %c9_793 = arith.constant 9 : index
    %c0_794 = arith.constant 0 : index
    %c0_795 = arith.constant 0 : index
    %2997 = vector.load %arg3[%c0_792, %c9_793, %c0_794, %c0_795] : memref<12x12x8x128xf32, #tpu.memory_space<vmem>>, vector<1x1x8x128xf32>
    %2998 = vector.shape_cast %2997 : vector<1x1x8x128xf32> to vector<8x128xf32>
    %2999 = vector.shape_cast %2996 : vector<8x128xf32> to vector<1x1x8x128xf32>
    tpu.vector_store %arg3[%c0_792, %c9_793, %c0_794, %c0_795], %2999 {strides = array<i32>} : memref<12x12x8x128xf32, #tpu.memory_space<vmem>>, vector<1x1x8x128xf32>,
    %3000 = arith.addf %21, %2028 : vector<8x128xf32>
    %c0_796 = arith.constant 0 : index
    %c10_797 = arith.constant 10 : index
    %c0_798 = arith.constant 0 : index
    %c0_799 = arith.constant 0 : index
    %3001 = vector.load %arg3[%c0_796, %c10_797, %c0_798, %c0_799] : memref<12x12x8x128xf32, #tpu.memory_space<vmem>>, vector<1x1x8x128xf32>
    %3002 = vector.shape_cast %3001 : vector<1x1x8x128xf32> to vector<8x128xf32>
    %3003 = vector.shape_cast %3000 : vector<8x128xf32> to vector<1x1x8x128xf32>
    tpu.vector_store %arg3[%c0_796, %c10_797, %c0_798, %c0_799], %3003 {strides = array<i32>} : memref<12x12x8x128xf32, #tpu.memory_space<vmem>>, vector<1x1x8x128xf32>,
    %3004 = arith.addf %23, %2035 : vector<8x128xf32>
    %c0_800 = arith.constant 0 : index
    %c11_801 = arith.constant 11 : index
    %c0_802 = arith.constant 0 : index
    %c0_803 = arith.constant 0 : index
    %3005 = vector.load %arg3[%c0_800, %c11_801, %c0_802, %c0_803] : memref<12x12x8x128xf32, #tpu.memory_space<vmem>>, vector<1x1x8x128xf32>
    %3006 = vector.shape_cast %3005 : vector<1x1x8x128xf32> to vector<8x128xf32>
    %3007 = vector.shape_cast %3004 : vector<8x128xf32> to vector<1x1x8x128xf32>
    tpu.vector_store %arg3[%c0_800, %c11_801, %c0_802, %c0_803], %3007 {strides = array<i32>} : memref<12x12x8x128xf32, #tpu.memory_space<vmem>>, vector<1x1x8x128xf32>,
    %3008 = arith.addf %25, %2042 : vector<8x128xf32>
    %c1_804 = arith.constant 1 : index
    %c0_805 = arith.constant 0 : index
    %c0_806 = arith.constant 0 : index
    %c0_807 = arith.constant 0 : index
    %3009 = vector.load %arg3[%c1_804, %c0_805, %c0_806, %c0_807] : memref<12x12x8x128xf32, #tpu.memory_space<vmem>>, vector<1x1x8x128xf32>
    %3010 = vector.shape_cast %3009 : vector<1x1x8x128xf32> to vector<8x128xf32>
    %3011 = vector.shape_cast %3008 : vector<8x128xf32> to vector<1x1x8x128xf32>
    tpu.vector_store %arg3[%c1_804, %c0_805, %c0_806, %c0_807], %3011 {strides = array<i32>} : memref<12x12x8x128xf32, #tpu.memory_space<vmem>>, vector<1x1x8x128xf32>,
    %3012 = arith.addf %27, %2049 : vector<8x128xf32>
    %c1_808 = arith.constant 1 : index
    %c1_809 = arith.constant 1 : index
    %c0_810 = arith.constant 0 : index
    %c0_811 = arith.constant 0 : index
    %3013 = vector.load %arg3[%c1_808, %c1_809, %c0_810, %c0_811] : memref<12x12x8x128xf32, #tpu.memory_space<vmem>>, vector<1x1x8x128xf32>
    %3014 = vector.shape_cast %3013 : vector<1x1x8x128xf32> to vector<8x128xf32>
    %3015 = vector.shape_cast %3012 : vector<8x128xf32> to vector<1x1x8x128xf32>
    tpu.vector_store %arg3[%c1_808, %c1_809, %c0_810, %c0_811], %3015 {strides = array<i32>} : memref<12x12x8x128xf32, #tpu.memory_space<vmem>>, vector<1x1x8x128xf32>,
    %3016 = arith.addf %29, %2056 : vector<8x128xf32>
    %c1_812 = arith.constant 1 : index
    %c2_813 = arith.constant 2 : index
    %c0_814 = arith.constant 0 : index
    %c0_815 = arith.constant 0 : index
    %3017 = vector.load %arg3[%c1_812, %c2_813, %c0_814, %c0_815] : memref<12x12x8x128xf32, #tpu.memory_space<vmem>>, vector<1x1x8x128xf32>
    %3018 = vector.shape_cast %3017 : vector<1x1x8x128xf32> to vector<8x128xf32>
    %3019 = vector.shape_cast %3016 : vector<8x128xf32> to vector<1x1x8x128xf32>
    tpu.vector_store %arg3[%c1_812, %c2_813, %c0_814, %c0_815], %3019 {strides = array<i32>} : memref<12x12x8x128xf32, #tpu.memory_space<vmem>>, vector<1x1x8x128xf32>,
    %3020 = arith.addf %31, %2063 : vector<8x128xf32>
    %c1_816 = arith.constant 1 : index
    %c3_817 = arith.constant 3 : index
    %c0_818 = arith.constant 0 : index
    %c0_819 = arith.constant 0 : index
    %3021 = vector.load %arg3[%c1_816, %c3_817, %c0_818, %c0_819] : memref<12x12x8x128xf32, #tpu.memory_space<vmem>>, vector<1x1x8x128xf32>
    %3022 = vector.shape_cast %3021 : vector<1x1x8x128xf32> to vector<8x128xf32>
    %3023 = vector.shape_cast %3020 : vector<8x128xf32> to vector<1x1x8x128xf32>
    tpu.vector_store %arg3[%c1_816, %c3_817, %c0_818, %c0_819], %3023 {strides = array<i32>} : memref<12x12x8x128xf32, #tpu.memory_space<vmem>>, vector<1x1x8x128xf32>,
    %3024 = arith.addf %33, %2070 : vector<8x128xf32>
    %c1_820 = arith.constant 1 : index
    %c4_821 = arith.constant 4 : index
    %c0_822 = arith.constant 0 : index
    %c0_823 = arith.constant 0 : index
    %3025 = vector.load %arg3[%c1_820, %c4_821, %c0_822, %c0_823] : memref<12x12x8x128xf32, #tpu.memory_space<vmem>>, vector<1x1x8x128xf32>
    %3026 = vector.shape_cast %3025 : vector<1x1x8x128xf32> to vector<8x128xf32>
    %3027 = vector.shape_cast %3024 : vector<8x128xf32> to vector<1x1x8x128xf32>
    tpu.vector_store %arg3[%c1_820, %c4_821, %c0_822, %c0_823], %3027 {strides = array<i32>} : memref<12x12x8x128xf32, #tpu.memory_space<vmem>>, vector<1x1x8x128xf32>,
    %3028 = arith.addf %35, %2077 : vector<8x128xf32>
    %c1_824 = arith.constant 1 : index
    %c5_825 = arith.constant 5 : index
    %c0_826 = arith.constant 0 : index
    %c0_827 = arith.constant 0 : index
    %3029 = vector.load %arg3[%c1_824, %c5_825, %c0_826, %c0_827] : memref<12x12x8x128xf32, #tpu.memory_space<vmem>>, vector<1x1x8x128xf32>
    %3030 = vector.shape_cast %3029 : vector<1x1x8x128xf32> to vector<8x128xf32>
    %3031 = vector.shape_cast %3028 : vector<8x128xf32> to vector<1x1x8x128xf32>
    tpu.vector_store %arg3[%c1_824, %c5_825, %c0_826, %c0_827], %3031 {strides = array<i32>} : memref<12x12x8x128xf32, #tpu.memory_space<vmem>>, vector<1x1x8x128xf32>,
    %3032 = arith.addf %37, %2084 : vector<8x128xf32>
    %c1_828 = arith.constant 1 : index
    %c6_829 = arith.constant 6 : index
    %c0_830 = arith.constant 0 : index
    %c0_831 = arith.constant 0 : index
    %3033 = vector.load %arg3[%c1_828, %c6_829, %c0_830, %c0_831] : memref<12x12x8x128xf32, #tpu.memory_space<vmem>>, vector<1x1x8x128xf32>
    %3034 = vector.shape_cast %3033 : vector<1x1x8x128xf32> to vector<8x128xf32>
    %3035 = vector.shape_cast %3032 : vector<8x128xf32> to vector<1x1x8x128xf32>
    tpu.vector_store %arg3[%c1_828, %c6_829, %c0_830, %c0_831], %3035 {strides = array<i32>} : memref<12x12x8x128xf32, #tpu.memory_space<vmem>>, vector<1x1x8x128xf32>,
    %3036 = arith.addf %39, %2091 : vector<8x128xf32>
    %c1_832 = arith.constant 1 : index
    %c7_833 = arith.constant 7 : index
    %c0_834 = arith.constant 0 : index
    %c0_835 = arith.constant 0 : index
    %3037 = vector.load %arg3[%c1_832, %c7_833, %c0_834, %c0_835] : memref<12x12x8x128xf32, #tpu.memory_space<vmem>>, vector<1x1x8x128xf32>
    %3038 = vector.shape_cast %3037 : vector<1x1x8x128xf32> to vector<8x128xf32>
    %3039 = vector.shape_cast %3036 : vector<8x128xf32> to vector<1x1x8x128xf32>
    tpu.vector_store %arg3[%c1_832, %c7_833, %c0_834, %c0_835], %3039 {strides = array<i32>} : memref<12x12x8x128xf32, #tpu.memory_space<vmem>>, vector<1x1x8x128xf32>,
    %3040 = arith.addf %41, %2098 : vector<8x128xf32>
    %c1_836 = arith.constant 1 : index
    %c8_837 = arith.constant 8 : index
    %c0_838 = arith.constant 0 : index
    %c0_839 = arith.constant 0 : index
    %3041 = vector.load %arg3[%c1_836, %c8_837, %c0_838, %c0_839] : memref<12x12x8x128xf32, #tpu.memory_space<vmem>>, vector<1x1x8x128xf32>
    %3042 = vector.shape_cast %3041 : vector<1x1x8x128xf32> to vector<8x128xf32>
    %3043 = vector.shape_cast %3040 : vector<8x128xf32> to vector<1x1x8x128xf32>
    tpu.vector_store %arg3[%c1_836, %c8_837, %c0_838, %c0_839], %3043 {strides = array<i32>} : memref<12x12x8x128xf32, #tpu.memory_space<vmem>>, vector<1x1x8x128xf32>,
    %3044 = arith.addf %43, %2105 : vector<8x128xf32>
    %c1_840 = arith.constant 1 : index
    %c9_841 = arith.constant 9 : index
    %c0_842 = arith.constant 0 : index
    %c0_843 = arith.constant 0 : index
    %3045 = vector.load %arg3[%c1_840, %c9_841, %c0_842, %c0_843] : memref<12x12x8x128xf32, #tpu.memory_space<vmem>>, vector<1x1x8x128xf32>
    %3046 = vector.shape_cast %3045 : vector<1x1x8x128xf32> to vector<8x128xf32>
    %3047 = vector.shape_cast %3044 : vector<8x128xf32> to vector<1x1x8x128xf32>
    tpu.vector_store %arg3[%c1_840, %c9_841, %c0_842, %c0_843], %3047 {strides = array<i32>} : memref<12x12x8x128xf32, #tpu.memory_space<vmem>>, vector<1x1x8x128xf32>,
    %3048 = arith.addf %45, %2112 : vector<8x128xf32>
    %c1_844 = arith.constant 1 : index
    %c10_845 = arith.constant 10 : index
    %c0_846 = arith.constant 0 : index
    %c0_847 = arith.constant 0 : index
    %3049 = vector.load %arg3[%c1_844, %c10_845, %c0_846, %c0_847] : memref<12x12x8x128xf32, #tpu.memory_space<vmem>>, vector<1x1x8x128xf32>
    %3050 = vector.shape_cast %3049 : vector<1x1x8x128xf32> to vector<8x128xf32>
    %3051 = vector.shape_cast %3048 : vector<8x128xf32> to vector<1x1x8x128xf32>
    tpu.vector_store %arg3[%c1_844, %c10_845, %c0_846, %c0_847], %3051 {strides = array<i32>} : memref<12x12x8x128xf32, #tpu.memory_space<vmem>>, vector<1x1x8x128xf32>,
    %3052 = arith.addf %47, %2119 : vector<8x128xf32>
    %c1_848 = arith.constant 1 : index
    %c11_849 = arith.constant 11 : index
    %c0_850 = arith.constant 0 : index
    %c0_851 = arith.constant 0 : index
    %3053 = vector.load %arg3[%c1_848, %c11_849, %c0_850, %c0_851] : memref<12x12x8x128xf32, #tpu.memory_space<vmem>>, vector<1x1x8x128xf32>
    %3054 = vector.shape_cast %3053 : vector<1x1x8x128xf32> to vector<8x128xf32>
    %3055 = vector.shape_cast %3052 : vector<8x128xf32> to vector<1x1x8x128xf32>
    tpu.vector_store %arg3[%c1_848, %c11_849, %c0_850, %c0_851], %3055 {strides = array<i32>} : memref<12x12x8x128xf32, #tpu.memory_space<vmem>>, vector<1x1x8x128xf32>,
    %3056 = arith.addf %49, %2126 : vector<8x128xf32>
    %c2_852 = arith.constant 2 : index
    %c0_853 = arith.constant 0 : index
    %c0_854 = arith.constant 0 : index
    %c0_855 = arith.constant 0 : index
    %3057 = vector.load %arg3[%c2_852, %c0_853, %c0_854, %c0_855] : memref<12x12x8x128xf32, #tpu.memory_space<vmem>>, vector<1x1x8x128xf32>
    %3058 = vector.shape_cast %3057 : vector<1x1x8x128xf32> to vector<8x128xf32>
    %3059 = vector.shape_cast %3056 : vector<8x128xf32> to vector<1x1x8x128xf32>
    tpu.vector_store %arg3[%c2_852, %c0_853, %c0_854, %c0_855], %3059 {strides = array<i32>} : memref<12x12x8x128xf32, #tpu.memory_space<vmem>>, vector<1x1x8x128xf32>,
    %3060 = arith.addf %51, %2133 : vector<8x128xf32>
    %c2_856 = arith.constant 2 : index
    %c1_857 = arith.constant 1 : index
    %c0_858 = arith.constant 0 : index
    %c0_859 = arith.constant 0 : index
    %3061 = vector.load %arg3[%c2_856, %c1_857, %c0_858, %c0_859] : memref<12x12x8x128xf32, #tpu.memory_space<vmem>>, vector<1x1x8x128xf32>
    %3062 = vector.shape_cast %3061 : vector<1x1x8x128xf32> to vector<8x128xf32>
    %3063 = vector.shape_cast %3060 : vector<8x128xf32> to vector<1x1x8x128xf32>
    tpu.vector_store %arg3[%c2_856, %c1_857, %c0_858, %c0_859], %3063 {strides = array<i32>} : memref<12x12x8x128xf32, #tpu.memory_space<vmem>>, vector<1x1x8x128xf32>,
    %3064 = arith.addf %53, %2140 : vector<8x128xf32>
    %c2_860 = arith.constant 2 : index
    %c2_861 = arith.constant 2 : index
    %c0_862 = arith.constant 0 : index
    %c0_863 = arith.constant 0 : index
    %3065 = vector.load %arg3[%c2_860, %c2_861, %c0_862, %c0_863] : memref<12x12x8x128xf32, #tpu.memory_space<vmem>>, vector<1x1x8x128xf32>
    %3066 = vector.shape_cast %3065 : vector<1x1x8x128xf32> to vector<8x128xf32>
    %3067 = vector.shape_cast %3064 : vector<8x128xf32> to vector<1x1x8x128xf32>
    tpu.vector_store %arg3[%c2_860, %c2_861, %c0_862, %c0_863], %3067 {strides = array<i32>} : memref<12x12x8x128xf32, #tpu.memory_space<vmem>>, vector<1x1x8x128xf32>,
    %3068 = arith.addf %55, %2147 : vector<8x128xf32>
    %c2_864 = arith.constant 2 : index
    %c3_865 = arith.constant 3 : index
    %c0_866 = arith.constant 0 : index
    %c0_867 = arith.constant 0 : index
    %3069 = vector.load %arg3[%c2_864, %c3_865, %c0_866, %c0_867] : memref<12x12x8x128xf32, #tpu.memory_space<vmem>>, vector<1x1x8x128xf32>
    %3070 = vector.shape_cast %3069 : vector<1x1x8x128xf32> to vector<8x128xf32>
    %3071 = vector.shape_cast %3068 : vector<8x128xf32> to vector<1x1x8x128xf32>
    tpu.vector_store %arg3[%c2_864, %c3_865, %c0_866, %c0_867], %3071 {strides = array<i32>} : memref<12x12x8x128xf32, #tpu.memory_space<vmem>>, vector<1x1x8x128xf32>,
    %3072 = arith.addf %57, %2154 : vector<8x128xf32>
    %c2_868 = arith.constant 2 : index
    %c4_869 = arith.constant 4 : index
    %c0_870 = arith.constant 0 : index
    %c0_871 = arith.constant 0 : index
    %3073 = vector.load %arg3[%c2_868, %c4_869, %c0_870, %c0_871] : memref<12x12x8x128xf32, #tpu.memory_space<vmem>>, vector<1x1x8x128xf32>
    %3074 = vector.shape_cast %3073 : vector<1x1x8x128xf32> to vector<8x128xf32>
    %3075 = vector.shape_cast %3072 : vector<8x128xf32> to vector<1x1x8x128xf32>
    tpu.vector_store %arg3[%c2_868, %c4_869, %c0_870, %c0_871], %3075 {strides = array<i32>} : memref<12x12x8x128xf32, #tpu.memory_space<vmem>>, vector<1x1x8x128xf32>,
    %3076 = arith.addf %59, %2161 : vector<8x128xf32>
    %c2_872 = arith.constant 2 : index
    %c5_873 = arith.constant 5 : index
    %c0_874 = arith.constant 0 : index
    %c0_875 = arith.constant 0 : index
    %3077 = vector.load %arg3[%c2_872, %c5_873, %c0_874, %c0_875] : memref<12x12x8x128xf32, #tpu.memory_space<vmem>>, vector<1x1x8x128xf32>
    %3078 = vector.shape_cast %3077 : vector<1x1x8x128xf32> to vector<8x128xf32>
    %3079 = vector.shape_cast %3076 : vector<8x128xf32> to vector<1x1x8x128xf32>
    tpu.vector_store %arg3[%c2_872, %c5_873, %c0_874, %c0_875], %3079 {strides = array<i32>} : memref<12x12x8x128xf32, #tpu.memory_space<vmem>>, vector<1x1x8x128xf32>,
    %3080 = arith.addf %61, %2168 : vector<8x128xf32>
    %c2_876 = arith.constant 2 : index
    %c6_877 = arith.constant 6 : index
    %c0_878 = arith.constant 0 : index
    %c0_879 = arith.constant 0 : index
    %3081 = vector.load %arg3[%c2_876, %c6_877, %c0_878, %c0_879] : memref<12x12x8x128xf32, #tpu.memory_space<vmem>>, vector<1x1x8x128xf32>
    %3082 = vector.shape_cast %3081 : vector<1x1x8x128xf32> to vector<8x128xf32>
    %3083 = vector.shape_cast %3080 : vector<8x128xf32> to vector<1x1x8x128xf32>
    tpu.vector_store %arg3[%c2_876, %c6_877, %c0_878, %c0_879], %3083 {strides = array<i32>} : memref<12x12x8x128xf32, #tpu.memory_space<vmem>>, vector<1x1x8x128xf32>,
    %3084 = arith.addf %63, %2175 : vector<8x128xf32>
    %c2_880 = arith.constant 2 : index
    %c7_881 = arith.constant 7 : index
    %c0_882 = arith.constant 0 : index
    %c0_883 = arith.constant 0 : index
    %3085 = vector.load %arg3[%c2_880, %c7_881, %c0_882, %c0_883] : memref<12x12x8x128xf32, #tpu.memory_space<vmem>>, vector<1x1x8x128xf32>
    %3086 = vector.shape_cast %3085 : vector<1x1x8x128xf32> to vector<8x128xf32>
    %3087 = vector.shape_cast %3084 : vector<8x128xf32> to vector<1x1x8x128xf32>
    tpu.vector_store %arg3[%c2_880, %c7_881, %c0_882, %c0_883], %3087 {strides = array<i32>} : memref<12x12x8x128xf32, #tpu.memory_space<vmem>>, vector<1x1x8x128xf32>,
    %3088 = arith.addf %65, %2182 : vector<8x128xf32>
    %c2_884 = arith.constant 2 : index
    %c8_885 = arith.constant 8 : index
    %c0_886 = arith.constant 0 : index
    %c0_887 = arith.constant 0 : index
    %3089 = vector.load %arg3[%c2_884, %c8_885, %c0_886, %c0_887] : memref<12x12x8x128xf32, #tpu.memory_space<vmem>>, vector<1x1x8x128xf32>
    %3090 = vector.shape_cast %3089 : vector<1x1x8x128xf32> to vector<8x128xf32>
    %3091 = vector.shape_cast %3088 : vector<8x128xf32> to vector<1x1x8x128xf32>
    tpu.vector_store %arg3[%c2_884, %c8_885, %c0_886, %c0_887], %3091 {strides = array<i32>} : memref<12x12x8x128xf32, #tpu.memory_space<vmem>>, vector<1x1x8x128xf32>,
    %3092 = arith.addf %67, %2189 : vector<8x128xf32>
    %c2_888 = arith.constant 2 : index
    %c9_889 = arith.constant 9 : index
    %c0_890 = arith.constant 0 : index
    %c0_891 = arith.constant 0 : index
    %3093 = vector.load %arg3[%c2_888, %c9_889, %c0_890, %c0_891] : memref<12x12x8x128xf32, #tpu.memory_space<vmem>>, vector<1x1x8x128xf32>
    %3094 = vector.shape_cast %3093 : vector<1x1x8x128xf32> to vector<8x128xf32>
    %3095 = vector.shape_cast %3092 : vector<8x128xf32> to vector<1x1x8x128xf32>
    tpu.vector_store %arg3[%c2_888, %c9_889, %c0_890, %c0_891], %3095 {strides = array<i32>} : memref<12x12x8x128xf32, #tpu.memory_space<vmem>>, vector<1x1x8x128xf32>,
    %3096 = arith.addf %69, %2196 : vector<8x128xf32>
    %c2_892 = arith.constant 2 : index
    %c10_893 = arith.constant 10 : index
    %c0_894 = arith.constant 0 : index
    %c0_895 = arith.constant 0 : index
    %3097 = vector.load %arg3[%c2_892, %c10_893, %c0_894, %c0_895] : memref<12x12x8x128xf32, #tpu.memory_space<vmem>>, vector<1x1x8x128xf32>
    %3098 = vector.shape_cast %3097 : vector<1x1x8x128xf32> to vector<8x128xf32>
    %3099 = vector.shape_cast %3096 : vector<8x128xf32> to vector<1x1x8x128xf32>
    tpu.vector_store %arg3[%c2_892, %c10_893, %c0_894, %c0_895], %3099 {strides = array<i32>} : memref<12x12x8x128xf32, #tpu.memory_space<vmem>>, vector<1x1x8x128xf32>,
    %3100 = arith.addf %71, %2203 : vector<8x128xf32>
    %c2_896 = arith.constant 2 : index
    %c11_897 = arith.constant 11 : index
    %c0_898 = arith.constant 0 : index
    %c0_899 = arith.constant 0 : index
    %3101 = vector.load %arg3[%c2_896, %c11_897, %c0_898, %c0_899] : memref<12x12x8x128xf32, #tpu.memory_space<vmem>>, vector<1x1x8x128xf32>
    %3102 = vector.shape_cast %3101 : vector<1x1x8x128xf32> to vector<8x128xf32>
    %3103 = vector.shape_cast %3100 : vector<8x128xf32> to vector<1x1x8x128xf32>
    tpu.vector_store %arg3[%c2_896, %c11_897, %c0_898, %c0_899], %3103 {strides = array<i32>} : memref<12x12x8x128xf32, #tpu.memory_space<vmem>>, vector<1x1x8x128xf32>,
    %3104 = arith.addf %73, %2210 : vector<8x128xf32>
    %c3_900 = arith.constant 3 : index
    %c0_901 = arith.constant 0 : index
    %c0_902 = arith.constant 0 : index
    %c0_903 = arith.constant 0 : index
    %3105 = vector.load %arg3[%c3_900, %c0_901, %c0_902, %c0_903] : memref<12x12x8x128xf32, #tpu.memory_space<vmem>>, vector<1x1x8x128xf32>
    %3106 = vector.shape_cast %3105 : vector<1x1x8x128xf32> to vector<8x128xf32>
    %3107 = vector.shape_cast %3104 : vector<8x128xf32> to vector<1x1x8x128xf32>
    tpu.vector_store %arg3[%c3_900, %c0_901, %c0_902, %c0_903], %3107 {strides = array<i32>} : memref<12x12x8x128xf32, #tpu.memory_space<vmem>>, vector<1x1x8x128xf32>,
    %3108 = arith.addf %75, %2217 : vector<8x128xf32>
    %c3_904 = arith.constant 3 : index
    %c1_905 = arith.constant 1 : index
    %c0_906 = arith.constant 0 : index
    %c0_907 = arith.constant 0 : index
    %3109 = vector.load %arg3[%c3_904, %c1_905, %c0_906, %c0_907] : memref<12x12x8x128xf32, #tpu.memory_space<vmem>>, vector<1x1x8x128xf32>
    %3110 = vector.shape_cast %3109 : vector<1x1x8x128xf32> to vector<8x128xf32>
    %3111 = vector.shape_cast %3108 : vector<8x128xf32> to vector<1x1x8x128xf32>
    tpu.vector_store %arg3[%c3_904, %c1_905, %c0_906, %c0_907], %3111 {strides = array<i32>} : memref<12x12x8x128xf32, #tpu.memory_space<vmem>>, vector<1x1x8x128xf32>,
    %3112 = arith.addf %77, %2224 : vector<8x128xf32>
    %c3_908 = arith.constant 3 : index
    %c2_909 = arith.constant 2 : index
    %c0_910 = arith.constant 0 : index
    %c0_911 = arith.constant 0 : index
    %3113 = vector.load %arg3[%c3_908, %c2_909, %c0_910, %c0_911] : memref<12x12x8x128xf32, #tpu.memory_space<vmem>>, vector<1x1x8x128xf32>
    %3114 = vector.shape_cast %3113 : vector<1x1x8x128xf32> to vector<8x128xf32>
    %3115 = vector.shape_cast %3112 : vector<8x128xf32> to vector<1x1x8x128xf32>
    tpu.vector_store %arg3[%c3_908, %c2_909, %c0_910, %c0_911], %3115 {strides = array<i32>} : memref<12x12x8x128xf32, #tpu.memory_space<vmem>>, vector<1x1x8x128xf32>,
    %3116 = arith.addf %79, %2231 : vector<8x128xf32>
    %c3_912 = arith.constant 3 : index
    %c3_913 = arith.constant 3 : index
    %c0_914 = arith.constant 0 : index
    %c0_915 = arith.constant 0 : index
    %3117 = vector.load %arg3[%c3_912, %c3_913, %c0_914, %c0_915] : memref<12x12x8x128xf32, #tpu.memory_space<vmem>>, vector<1x1x8x128xf32>
    %3118 = vector.shape_cast %3117 : vector<1x1x8x128xf32> to vector<8x128xf32>
    %3119 = vector.shape_cast %3116 : vector<8x128xf32> to vector<1x1x8x128xf32>
    tpu.vector_store %arg3[%c3_912, %c3_913, %c0_914, %c0_915], %3119 {strides = array<i32>} : memref<12x12x8x128xf32, #tpu.memory_space<vmem>>, vector<1x1x8x128xf32>,
    %3120 = arith.addf %81, %2238 : vector<8x128xf32>
    %c3_916 = arith.constant 3 : index
    %c4_917 = arith.constant 4 : index
    %c0_918 = arith.constant 0 : index
    %c0_919 = arith.constant 0 : index
    %3121 = vector.load %arg3[%c3_916, %c4_917, %c0_918, %c0_919] : memref<12x12x8x128xf32, #tpu.memory_space<vmem>>, vector<1x1x8x128xf32>
    %3122 = vector.shape_cast %3121 : vector<1x1x8x128xf32> to vector<8x128xf32>
    %3123 = vector.shape_cast %3120 : vector<8x128xf32> to vector<1x1x8x128xf32>
    tpu.vector_store %arg3[%c3_916, %c4_917, %c0_918, %c0_919], %3123 {strides = array<i32>} : memref<12x12x8x128xf32, #tpu.memory_space<vmem>>, vector<1x1x8x128xf32>,
    %3124 = arith.addf %83, %2245 : vector<8x128xf32>
    %c3_920 = arith.constant 3 : index
    %c5_921 = arith.constant 5 : index
    %c0_922 = arith.constant 0 : index
    %c0_923 = arith.constant 0 : index
    %3125 = vector.load %arg3[%c3_920, %c5_921, %c0_922, %c0_923] : memref<12x12x8x128xf32, #tpu.memory_space<vmem>>, vector<1x1x8x128xf32>
    %3126 = vector.shape_cast %3125 : vector<1x1x8x128xf32> to vector<8x128xf32>
    %3127 = vector.shape_cast %3124 : vector<8x128xf32> to vector<1x1x8x128xf32>
    tpu.vector_store %arg3[%c3_920, %c5_921, %c0_922, %c0_923], %3127 {strides = array<i32>} : memref<12x12x8x128xf32, #tpu.memory_space<vmem>>, vector<1x1x8x128xf32>,
    %3128 = arith.addf %85, %2252 : vector<8x128xf32>
    %c3_924 = arith.constant 3 : index
    %c6_925 = arith.constant 6 : index
    %c0_926 = arith.constant 0 : index
    %c0_927 = arith.constant 0 : index
    %3129 = vector.load %arg3[%c3_924, %c6_925, %c0_926, %c0_927] : memref<12x12x8x128xf32, #tpu.memory_space<vmem>>, vector<1x1x8x128xf32>
    %3130 = vector.shape_cast %3129 : vector<1x1x8x128xf32> to vector<8x128xf32>
    %3131 = vector.shape_cast %3128 : vector<8x128xf32> to vector<1x1x8x128xf32>
    tpu.vector_store %arg3[%c3_924, %c6_925, %c0_926, %c0_927], %3131 {strides = array<i32>} : memref<12x12x8x128xf32, #tpu.memory_space<vmem>>, vector<1x1x8x128xf32>,
    %3132 = arith.addf %87, %2259 : vector<8x128xf32>
    %c3_928 = arith.constant 3 : index
    %c7_929 = arith.constant 7 : index
    %c0_930 = arith.constant 0 : index
    %c0_931 = arith.constant 0 : index
    %3133 = vector.load %arg3[%c3_928, %c7_929, %c0_930, %c0_931] : memref<12x12x8x128xf32, #tpu.memory_space<vmem>>, vector<1x1x8x128xf32>
    %3134 = vector.shape_cast %3133 : vector<1x1x8x128xf32> to vector<8x128xf32>
    %3135 = vector.shape_cast %3132 : vector<8x128xf32> to vector<1x1x8x128xf32>
    tpu.vector_store %arg3[%c3_928, %c7_929, %c0_930, %c0_931], %3135 {strides = array<i32>} : memref<12x12x8x128xf32, #tpu.memory_space<vmem>>, vector<1x1x8x128xf32>,
    %3136 = arith.addf %89, %2266 : vector<8x128xf32>
    %c3_932 = arith.constant 3 : index
    %c8_933 = arith.constant 8 : index
    %c0_934 = arith.constant 0 : index
    %c0_935 = arith.constant 0 : index
    %3137 = vector.load %arg3[%c3_932, %c8_933, %c0_934, %c0_935] : memref<12x12x8x128xf32, #tpu.memory_space<vmem>>, vector<1x1x8x128xf32>
    %3138 = vector.shape_cast %3137 : vector<1x1x8x128xf32> to vector<8x128xf32>
    %3139 = vector.shape_cast %3136 : vector<8x128xf32> to vector<1x1x8x128xf32>
    tpu.vector_store %arg3[%c3_932, %c8_933, %c0_934, %c0_935], %3139 {strides = array<i32>} : memref<12x12x8x128xf32, #tpu.memory_space<vmem>>, vector<1x1x8x128xf32>,
    %3140 = arith.addf %91, %2273 : vector<8x128xf32>
    %c3_936 = arith.constant 3 : index
    %c9_937 = arith.constant 9 : index
    %c0_938 = arith.constant 0 : index
    %c0_939 = arith.constant 0 : index
    %3141 = vector.load %arg3[%c3_936, %c9_937, %c0_938, %c0_939] : memref<12x12x8x128xf32, #tpu.memory_space<vmem>>, vector<1x1x8x128xf32>
    %3142 = vector.shape_cast %3141 : vector<1x1x8x128xf32> to vector<8x128xf32>
    %3143 = vector.shape_cast %3140 : vector<8x128xf32> to vector<1x1x8x128xf32>
    tpu.vector_store %arg3[%c3_936, %c9_937, %c0_938, %c0_939], %3143 {strides = array<i32>} : memref<12x12x8x128xf32, #tpu.memory_space<vmem>>, vector<1x1x8x128xf32>,
    %3144 = arith.addf %93, %2280 : vector<8x128xf32>
    %c3_940 = arith.constant 3 : index
    %c10_941 = arith.constant 10 : index
    %c0_942 = arith.constant 0 : index
    %c0_943 = arith.constant 0 : index
    %3145 = vector.load %arg3[%c3_940, %c10_941, %c0_942, %c0_943] : memref<12x12x8x128xf32, #tpu.memory_space<vmem>>, vector<1x1x8x128xf32>
    %3146 = vector.shape_cast %3145 : vector<1x1x8x128xf32> to vector<8x128xf32>
    %3147 = vector.shape_cast %3144 : vector<8x128xf32> to vector<1x1x8x128xf32>
    tpu.vector_store %arg3[%c3_940, %c10_941, %c0_942, %c0_943], %3147 {strides = array<i32>} : memref<12x12x8x128xf32, #tpu.memory_space<vmem>>, vector<1x1x8x128xf32>,
    %3148 = arith.addf %95, %2287 : vector<8x128xf32>
    %c3_944 = arith.constant 3 : index
    %c11_945 = arith.constant 11 : index
    %c0_946 = arith.constant 0 : index
    %c0_947 = arith.constant 0 : index
    %3149 = vector.load %arg3[%c3_944, %c11_945, %c0_946, %c0_947] : memref<12x12x8x128xf32, #tpu.memory_space<vmem>>, vector<1x1x8x128xf32>
    %3150 = vector.shape_cast %3149 : vector<1x1x8x128xf32> to vector<8x128xf32>
    %3151 = vector.shape_cast %3148 : vector<8x128xf32> to vector<1x1x8x128xf32>
    tpu.vector_store %arg3[%c3_944, %c11_945, %c0_946, %c0_947], %3151 {strides = array<i32>} : memref<12x12x8x128xf32, #tpu.memory_space<vmem>>, vector<1x1x8x128xf32>,
    %3152 = arith.addf %97, %2294 : vector<8x128xf32>
    %c4_948 = arith.constant 4 : index
    %c0_949 = arith.constant 0 : index
    %c0_950 = arith.constant 0 : index
    %c0_951 = arith.constant 0 : index
    %3153 = vector.load %arg3[%c4_948, %c0_949, %c0_950, %c0_951] : memref<12x12x8x128xf32, #tpu.memory_space<vmem>>, vector<1x1x8x128xf32>
    %3154 = vector.shape_cast %3153 : vector<1x1x8x128xf32> to vector<8x128xf32>
    %3155 = vector.shape_cast %3152 : vector<8x128xf32> to vector<1x1x8x128xf32>
    tpu.vector_store %arg3[%c4_948, %c0_949, %c0_950, %c0_951], %3155 {strides = array<i32>} : memref<12x12x8x128xf32, #tpu.memory_space<vmem>>, vector<1x1x8x128xf32>,
    %3156 = arith.addf %99, %2301 : vector<8x128xf32>
    %c4_952 = arith.constant 4 : index
    %c1_953 = arith.constant 1 : index
    %c0_954 = arith.constant 0 : index
    %c0_955 = arith.constant 0 : index
    %3157 = vector.load %arg3[%c4_952, %c1_953, %c0_954, %c0_955] : memref<12x12x8x128xf32, #tpu.memory_space<vmem>>, vector<1x1x8x128xf32>
    %3158 = vector.shape_cast %3157 : vector<1x1x8x128xf32> to vector<8x128xf32>
    %3159 = vector.shape_cast %3156 : vector<8x128xf32> to vector<1x1x8x128xf32>
    tpu.vector_store %arg3[%c4_952, %c1_953, %c0_954, %c0_955], %3159 {strides = array<i32>} : memref<12x12x8x128xf32, #tpu.memory_space<vmem>>, vector<1x1x8x128xf32>,
    %3160 = arith.addf %101, %2308 : vector<8x128xf32>
    %c4_956 = arith.constant 4 : index
    %c2_957 = arith.constant 2 : index
    %c0_958 = arith.constant 0 : index
    %c0_959 = arith.constant 0 : index
    %3161 = vector.load %arg3[%c4_956, %c2_957, %c0_958, %c0_959] : memref<12x12x8x128xf32, #tpu.memory_space<vmem>>, vector<1x1x8x128xf32>
    %3162 = vector.shape_cast %3161 : vector<1x1x8x128xf32> to vector<8x128xf32>
    %3163 = vector.shape_cast %3160 : vector<8x128xf32> to vector<1x1x8x128xf32>
    tpu.vector_store %arg3[%c4_956, %c2_957, %c0_958, %c0_959], %3163 {strides = array<i32>} : memref<12x12x8x128xf32, #tpu.memory_space<vmem>>, vector<1x1x8x128xf32>,
    %3164 = arith.addf %103, %2315 : vector<8x128xf32>
    %c4_960 = arith.constant 4 : index
    %c3_961 = arith.constant 3 : index
    %c0_962 = arith.constant 0 : index
    %c0_963 = arith.constant 0 : index
    %3165 = vector.load %arg3[%c4_960, %c3_961, %c0_962, %c0_963] : memref<12x12x8x128xf32, #tpu.memory_space<vmem>>, vector<1x1x8x128xf32>
    %3166 = vector.shape_cast %3165 : vector<1x1x8x128xf32> to vector<8x128xf32>
    %3167 = vector.shape_cast %3164 : vector<8x128xf32> to vector<1x1x8x128xf32>
    tpu.vector_store %arg3[%c4_960, %c3_961, %c0_962, %c0_963], %3167 {strides = array<i32>} : memref<12x12x8x128xf32, #tpu.memory_space<vmem>>, vector<1x1x8x128xf32>,
    %3168 = arith.addf %105, %2322 : vector<8x128xf32>
    %c4_964 = arith.constant 4 : index
    %c4_965 = arith.constant 4 : index
    %c0_966 = arith.constant 0 : index
    %c0_967 = arith.constant 0 : index
    %3169 = vector.load %arg3[%c4_964, %c4_965, %c0_966, %c0_967] : memref<12x12x8x128xf32, #tpu.memory_space<vmem>>, vector<1x1x8x128xf32>
    %3170 = vector.shape_cast %3169 : vector<1x1x8x128xf32> to vector<8x128xf32>
    %3171 = vector.shape_cast %3168 : vector<8x128xf32> to vector<1x1x8x128xf32>
    tpu.vector_store %arg3[%c4_964, %c4_965, %c0_966, %c0_967], %3171 {strides = array<i32>} : memref<12x12x8x128xf32, #tpu.memory_space<vmem>>, vector<1x1x8x128xf32>,
    %3172 = arith.addf %107, %2329 : vector<8x128xf32>
    %c4_968 = arith.constant 4 : index
    %c5_969 = arith.constant 5 : index
    %c0_970 = arith.constant 0 : index
    %c0_971 = arith.constant 0 : index
    %3173 = vector.load %arg3[%c4_968, %c5_969, %c0_970, %c0_971] : memref<12x12x8x128xf32, #tpu.memory_space<vmem>>, vector<1x1x8x128xf32>
    %3174 = vector.shape_cast %3173 : vector<1x1x8x128xf32> to vector<8x128xf32>
    %3175 = vector.shape_cast %3172 : vector<8x128xf32> to vector<1x1x8x128xf32>
    tpu.vector_store %arg3[%c4_968, %c5_969, %c0_970, %c0_971], %3175 {strides = array<i32>} : memref<12x12x8x128xf32, #tpu.memory_space<vmem>>, vector<1x1x8x128xf32>,
    %3176 = arith.addf %109, %2336 : vector<8x128xf32>
    %c4_972 = arith.constant 4 : index
    %c6_973 = arith.constant 6 : index
    %c0_974 = arith.constant 0 : index
    %c0_975 = arith.constant 0 : index
    %3177 = vector.load %arg3[%c4_972, %c6_973, %c0_974, %c0_975] : memref<12x12x8x128xf32, #tpu.memory_space<vmem>>, vector<1x1x8x128xf32>
    %3178 = vector.shape_cast %3177 : vector<1x1x8x128xf32> to vector<8x128xf32>
    %3179 = vector.shape_cast %3176 : vector<8x128xf32> to vector<1x1x8x128xf32>
    tpu.vector_store %arg3[%c4_972, %c6_973, %c0_974, %c0_975], %3179 {strides = array<i32>} : memref<12x12x8x128xf32, #tpu.memory_space<vmem>>, vector<1x1x8x128xf32>,
    %3180 = arith.addf %111, %2343 : vector<8x128xf32>
    %c4_976 = arith.constant 4 : index
    %c7_977 = arith.constant 7 : index
    %c0_978 = arith.constant 0 : index
    %c0_979 = arith.constant 0 : index
    %3181 = vector.load %arg3[%c4_976, %c7_977, %c0_978, %c0_979] : memref<12x12x8x128xf32, #tpu.memory_space<vmem>>, vector<1x1x8x128xf32>
    %3182 = vector.shape_cast %3181 : vector<1x1x8x128xf32> to vector<8x128xf32>
    %3183 = vector.shape_cast %3180 : vector<8x128xf32> to vector<1x1x8x128xf32>
    tpu.vector_store %arg3[%c4_976, %c7_977, %c0_978, %c0_979], %3183 {strides = array<i32>} : memref<12x12x8x128xf32, #tpu.memory_space<vmem>>, vector<1x1x8x128xf32>,
    %3184 = arith.addf %113, %2350 : vector<8x128xf32>
    %c4_980 = arith.constant 4 : index
    %c8_981 = arith.constant 8 : index
    %c0_982 = arith.constant 0 : index
    %c0_983 = arith.constant 0 : index
    %3185 = vector.load %arg3[%c4_980, %c8_981, %c0_982, %c0_983] : memref<12x12x8x128xf32, #tpu.memory_space<vmem>>, vector<1x1x8x128xf32>
    %3186 = vector.shape_cast %3185 : vector<1x1x8x128xf32> to vector<8x128xf32>
    %3187 = vector.shape_cast %3184 : vector<8x128xf32> to vector<1x1x8x128xf32>
    tpu.vector_store %arg3[%c4_980, %c8_981, %c0_982, %c0_983], %3187 {strides = array<i32>} : memref<12x12x8x128xf32, #tpu.memory_space<vmem>>, vector<1x1x8x128xf32>,
    %3188 = arith.addf %115, %2357 : vector<8x128xf32>
    %c4_984 = arith.constant 4 : index
    %c9_985 = arith.constant 9 : index
    %c0_986 = arith.constant 0 : index
    %c0_987 = arith.constant 0 : index
    %3189 = vector.load %arg3[%c4_984, %c9_985, %c0_986, %c0_987] : memref<12x12x8x128xf32, #tpu.memory_space<vmem>>, vector<1x1x8x128xf32>
    %3190 = vector.shape_cast %3189 : vector<1x1x8x128xf32> to vector<8x128xf32>
    %3191 = vector.shape_cast %3188 : vector<8x128xf32> to vector<1x1x8x128xf32>
    tpu.vector_store %arg3[%c4_984, %c9_985, %c0_986, %c0_987], %3191 {strides = array<i32>} : memref<12x12x8x128xf32, #tpu.memory_space<vmem>>, vector<1x1x8x128xf32>,
    %3192 = arith.addf %117, %2364 : vector<8x128xf32>
    %c4_988 = arith.constant 4 : index
    %c10_989 = arith.constant 10 : index
    %c0_990 = arith.constant 0 : index
    %c0_991 = arith.constant 0 : index
    %3193 = vector.load %arg3[%c4_988, %c10_989, %c0_990, %c0_991] : memref<12x12x8x128xf32, #tpu.memory_space<vmem>>, vector<1x1x8x128xf32>
    %3194 = vector.shape_cast %3193 : vector<1x1x8x128xf32> to vector<8x128xf32>
    %3195 = vector.shape_cast %3192 : vector<8x128xf32> to vector<1x1x8x128xf32>
    tpu.vector_store %arg3[%c4_988, %c10_989, %c0_990, %c0_991], %3195 {strides = array<i32>} : memref<12x12x8x128xf32, #tpu.memory_space<vmem>>, vector<1x1x8x128xf32>,
    %3196 = arith.addf %119, %2371 : vector<8x128xf32>
    %c4_992 = arith.constant 4 : index
    %c11_993 = arith.constant 11 : index
    %c0_994 = arith.constant 0 : index
    %c0_995 = arith.constant 0 : index
    %3197 = vector.load %arg3[%c4_992, %c11_993, %c0_994, %c0_995] : memref<12x12x8x128xf32, #tpu.memory_space<vmem>>, vector<1x1x8x128xf32>
    %3198 = vector.shape_cast %3197 : vector<1x1x8x128xf32> to vector<8x128xf32>
    %3199 = vector.shape_cast %3196 : vector<8x128xf32> to vector<1x1x8x128xf32>
    tpu.vector_store %arg3[%c4_992, %c11_993, %c0_994, %c0_995], %3199 {strides = array<i32>} : memref<12x12x8x128xf32, #tpu.memory_space<vmem>>, vector<1x1x8x128xf32>,
    %3200 = arith.addf %121, %2378 : vector<8x128xf32>
    %c5_996 = arith.constant 5 : index
    %c0_997 = arith.constant 0 : index
    %c0_998 = arith.constant 0 : index
    %c0_999 = arith.constant 0 : index
    %3201 = vector.load %arg3[%c5_996, %c0_997, %c0_998, %c0_999] : memref<12x12x8x128xf32, #tpu.memory_space<vmem>>, vector<1x1x8x128xf32>
    %3202 = vector.shape_cast %3201 : vector<1x1x8x128xf32> to vector<8x128xf32>
    %3203 = vector.shape_cast %3200 : vector<8x128xf32> to vector<1x1x8x128xf32>
    tpu.vector_store %arg3[%c5_996, %c0_997, %c0_998, %c0_999], %3203 {strides = array<i32>} : memref<12x12x8x128xf32, #tpu.memory_space<vmem>>, vector<1x1x8x128xf32>,
    %3204 = arith.addf %123, %2385 : vector<8x128xf32>
    %c5_1000 = arith.constant 5 : index
    %c1_1001 = arith.constant 1 : index
    %c0_1002 = arith.constant 0 : index
    %c0_1003 = arith.constant 0 : index
    %3205 = vector.load %arg3[%c5_1000, %c1_1001, %c0_1002, %c0_1003] : memref<12x12x8x128xf32, #tpu.memory_space<vmem>>, vector<1x1x8x128xf32>
    %3206 = vector.shape_cast %3205 : vector<1x1x8x128xf32> to vector<8x128xf32>
    %3207 = vector.shape_cast %3204 : vector<8x128xf32> to vector<1x1x8x128xf32>
    tpu.vector_store %arg3[%c5_1000, %c1_1001, %c0_1002, %c0_1003], %3207 {strides = array<i32>} : memref<12x12x8x128xf32, #tpu.memory_space<vmem>>, vector<1x1x8x128xf32>,
    %3208 = arith.addf %125, %2392 : vector<8x128xf32>
    %c5_1004 = arith.constant 5 : index
    %c2_1005 = arith.constant 2 : index
    %c0_1006 = arith.constant 0 : index
    %c0_1007 = arith.constant 0 : index
    %3209 = vector.load %arg3[%c5_1004, %c2_1005, %c0_1006, %c0_1007] : memref<12x12x8x128xf32, #tpu.memory_space<vmem>>, vector<1x1x8x128xf32>
    %3210 = vector.shape_cast %3209 : vector<1x1x8x128xf32> to vector<8x128xf32>
    %3211 = vector.shape_cast %3208 : vector<8x128xf32> to vector<1x1x8x128xf32>
    tpu.vector_store %arg3[%c5_1004, %c2_1005, %c0_1006, %c0_1007], %3211 {strides = array<i32>} : memref<12x12x8x128xf32, #tpu.memory_space<vmem>>, vector<1x1x8x128xf32>,
    %3212 = arith.addf %127, %2399 : vector<8x128xf32>
    %c5_1008 = arith.constant 5 : index
    %c3_1009 = arith.constant 3 : index
    %c0_1010 = arith.constant 0 : index
    %c0_1011 = arith.constant 0 : index
    %3213 = vector.load %arg3[%c5_1008, %c3_1009, %c0_1010, %c0_1011] : memref<12x12x8x128xf32, #tpu.memory_space<vmem>>, vector<1x1x8x128xf32>
    %3214 = vector.shape_cast %3213 : vector<1x1x8x128xf32> to vector<8x128xf32>
    %3215 = vector.shape_cast %3212 : vector<8x128xf32> to vector<1x1x8x128xf32>
    tpu.vector_store %arg3[%c5_1008, %c3_1009, %c0_1010, %c0_1011], %3215 {strides = array<i32>} : memref<12x12x8x128xf32, #tpu.memory_space<vmem>>, vector<1x1x8x128xf32>,
    %3216 = arith.addf %129, %2406 : vector<8x128xf32>
    %c5_1012 = arith.constant 5 : index
    %c4_1013 = arith.constant 4 : index
    %c0_1014 = arith.constant 0 : index
    %c0_1015 = arith.constant 0 : index
    %3217 = vector.load %arg3[%c5_1012, %c4_1013, %c0_1014, %c0_1015] : memref<12x12x8x128xf32, #tpu.memory_space<vmem>>, vector<1x1x8x128xf32>
    %3218 = vector.shape_cast %3217 : vector<1x1x8x128xf32> to vector<8x128xf32>
    %3219 = vector.shape_cast %3216 : vector<8x128xf32> to vector<1x1x8x128xf32>
    tpu.vector_store %arg3[%c5_1012, %c4_1013, %c0_1014, %c0_1015], %3219 {strides = array<i32>} : memref<12x12x8x128xf32, #tpu.memory_space<vmem>>, vector<1x1x8x128xf32>,
    %3220 = arith.addf %131, %2413 : vector<8x128xf32>
    %c5_1016 = arith.constant 5 : index
    %c5_1017 = arith.constant 5 : index
    %c0_1018 = arith.constant 0 : index
    %c0_1019 = arith.constant 0 : index
    %3221 = vector.load %arg3[%c5_1016, %c5_1017, %c0_1018, %c0_1019] : memref<12x12x8x128xf32, #tpu.memory_space<vmem>>, vector<1x1x8x128xf32>
    %3222 = vector.shape_cast %3221 : vector<1x1x8x128xf32> to vector<8x128xf32>
    %3223 = vector.shape_cast %3220 : vector<8x128xf32> to vector<1x1x8x128xf32>
    tpu.vector_store %arg3[%c5_1016, %c5_1017, %c0_1018, %c0_1019], %3223 {strides = array<i32>} : memref<12x12x8x128xf32, #tpu.memory_space<vmem>>, vector<1x1x8x128xf32>,
    %3224 = arith.addf %133, %2420 : vector<8x128xf32>
    %c5_1020 = arith.constant 5 : index
    %c6_1021 = arith.constant 6 : index
    %c0_1022 = arith.constant 0 : index
    %c0_1023 = arith.constant 0 : index
    %3225 = vector.load %arg3[%c5_1020, %c6_1021, %c0_1022, %c0_1023] : memref<12x12x8x128xf32, #tpu.memory_space<vmem>>, vector<1x1x8x128xf32>
    %3226 = vector.shape_cast %3225 : vector<1x1x8x128xf32> to vector<8x128xf32>
    %3227 = vector.shape_cast %3224 : vector<8x128xf32> to vector<1x1x8x128xf32>
    tpu.vector_store %arg3[%c5_1020, %c6_1021, %c0_1022, %c0_1023], %3227 {strides = array<i32>} : memref<12x12x8x128xf32, #tpu.memory_space<vmem>>, vector<1x1x8x128xf32>,
    %3228 = arith.addf %135, %2427 : vector<8x128xf32>
    %c5_1024 = arith.constant 5 : index
    %c7_1025 = arith.constant 7 : index
    %c0_1026 = arith.constant 0 : index
    %c0_1027 = arith.constant 0 : index
    %3229 = vector.load %arg3[%c5_1024, %c7_1025, %c0_1026, %c0_1027] : memref<12x12x8x128xf32, #tpu.memory_space<vmem>>, vector<1x1x8x128xf32>
    %3230 = vector.shape_cast %3229 : vector<1x1x8x128xf32> to vector<8x128xf32>
    %3231 = vector.shape_cast %3228 : vector<8x128xf32> to vector<1x1x8x128xf32>
    tpu.vector_store %arg3[%c5_1024, %c7_1025, %c0_1026, %c0_1027], %3231 {strides = array<i32>} : memref<12x12x8x128xf32, #tpu.memory_space<vmem>>, vector<1x1x8x128xf32>,
    %3232 = arith.addf %137, %2434 : vector<8x128xf32>
    %c5_1028 = arith.constant 5 : index
    %c8_1029 = arith.constant 8 : index
    %c0_1030 = arith.constant 0 : index
    %c0_1031 = arith.constant 0 : index
    %3233 = vector.load %arg3[%c5_1028, %c8_1029, %c0_1030, %c0_1031] : memref<12x12x8x128xf32, #tpu.memory_space<vmem>>, vector<1x1x8x128xf32>
    %3234 = vector.shape_cast %3233 : vector<1x1x8x128xf32> to vector<8x128xf32>
    %3235 = vector.shape_cast %3232 : vector<8x128xf32> to vector<1x1x8x128xf32>
    tpu.vector_store %arg3[%c5_1028, %c8_1029, %c0_1030, %c0_1031], %3235 {strides = array<i32>} : memref<12x12x8x128xf32, #tpu.memory_space<vmem>>, vector<1x1x8x128xf32>,
    %3236 = arith.addf %139, %2441 : vector<8x128xf32>
    %c5_1032 = arith.constant 5 : index
    %c9_1033 = arith.constant 9 : index
    %c0_1034 = arith.constant 0 : index
    %c0_1035 = arith.constant 0 : index
    %3237 = vector.load %arg3[%c5_1032, %c9_1033, %c0_1034, %c0_1035] : memref<12x12x8x128xf32, #tpu.memory_space<vmem>>, vector<1x1x8x128xf32>
    %3238 = vector.shape_cast %3237 : vector<1x1x8x128xf32> to vector<8x128xf32>
    %3239 = vector.shape_cast %3236 : vector<8x128xf32> to vector<1x1x8x128xf32>
    tpu.vector_store %arg3[%c5_1032, %c9_1033, %c0_1034, %c0_1035], %3239 {strides = array<i32>} : memref<12x12x8x128xf32, #tpu.memory_space<vmem>>, vector<1x1x8x128xf32>,
    %3240 = arith.addf %141, %2448 : vector<8x128xf32>
    %c5_1036 = arith.constant 5 : index
    %c10_1037 = arith.constant 10 : index
    %c0_1038 = arith.constant 0 : index
    %c0_1039 = arith.constant 0 : index
    %3241 = vector.load %arg3[%c5_1036, %c10_1037, %c0_1038, %c0_1039] : memref<12x12x8x128xf32, #tpu.memory_space<vmem>>, vector<1x1x8x128xf32>
    %3242 = vector.shape_cast %3241 : vector<1x1x8x128xf32> to vector<8x128xf32>
    %3243 = vector.shape_cast %3240 : vector<8x128xf32> to vector<1x1x8x128xf32>
    tpu.vector_store %arg3[%c5_1036, %c10_1037, %c0_1038, %c0_1039], %3243 {strides = array<i32>} : memref<12x12x8x128xf32, #tpu.memory_space<vmem>>, vector<1x1x8x128xf32>,
    %3244 = arith.addf %143, %2455 : vector<8x128xf32>
    %c5_1040 = arith.constant 5 : index
    %c11_1041 = arith.constant 11 : index
    %c0_1042 = arith.constant 0 : index
    %c0_1043 = arith.constant 0 : index
    %3245 = vector.load %arg3[%c5_1040, %c11_1041, %c0_1042, %c0_1043] : memref<12x12x8x128xf32, #tpu.memory_space<vmem>>, vector<1x1x8x128xf32>
    %3246 = vector.shape_cast %3245 : vector<1x1x8x128xf32> to vector<8x128xf32>
    %3247 = vector.shape_cast %3244 : vector<8x128xf32> to vector<1x1x8x128xf32>
    tpu.vector_store %arg3[%c5_1040, %c11_1041, %c0_1042, %c0_1043], %3247 {strides = array<i32>} : memref<12x12x8x128xf32, #tpu.memory_space<vmem>>, vector<1x1x8x128xf32>,
    %3248 = arith.addf %145, %2462 : vector<8x128xf32>
    %c6_1044 = arith.constant 6 : index
    %c0_1045 = arith.constant 0 : index
    %c0_1046 = arith.constant 0 : index
    %c0_1047 = arith.constant 0 : index
    %3249 = vector.load %arg3[%c6_1044, %c0_1045, %c0_1046, %c0_1047] : memref<12x12x8x128xf32, #tpu.memory_space<vmem>>, vector<1x1x8x128xf32>
    %3250 = vector.shape_cast %3249 : vector<1x1x8x128xf32> to vector<8x128xf32>
    %3251 = vector.shape_cast %3248 : vector<8x128xf32> to vector<1x1x8x128xf32>
    tpu.vector_store %arg3[%c6_1044, %c0_1045, %c0_1046, %c0_1047], %3251 {strides = array<i32>} : memref<12x12x8x128xf32, #tpu.memory_space<vmem>>, vector<1x1x8x128xf32>,
    %3252 = arith.addf %147, %2469 : vector<8x128xf32>
    %c6_1048 = arith.constant 6 : index
    %c1_1049 = arith.constant 1 : index
    %c0_1050 = arith.constant 0 : index
    %c0_1051 = arith.constant 0 : index
    %3253 = vector.load %arg3[%c6_1048, %c1_1049, %c0_1050, %c0_1051] : memref<12x12x8x128xf32, #tpu.memory_space<vmem>>, vector<1x1x8x128xf32>
    %3254 = vector.shape_cast %3253 : vector<1x1x8x128xf32> to vector<8x128xf32>
    %3255 = vector.shape_cast %3252 : vector<8x128xf32> to vector<1x1x8x128xf32>
    tpu.vector_store %arg3[%c6_1048, %c1_1049, %c0_1050, %c0_1051], %3255 {strides = array<i32>} : memref<12x12x8x128xf32, #tpu.memory_space<vmem>>, vector<1x1x8x128xf32>,
    %3256 = arith.addf %149, %2476 : vector<8x128xf32>
    %c6_1052 = arith.constant 6 : index
    %c2_1053 = arith.constant 2 : index
    %c0_1054 = arith.constant 0 : index
    %c0_1055 = arith.constant 0 : index
    %3257 = vector.load %arg3[%c6_1052, %c2_1053, %c0_1054, %c0_1055] : memref<12x12x8x128xf32, #tpu.memory_space<vmem>>, vector<1x1x8x128xf32>
    %3258 = vector.shape_cast %3257 : vector<1x1x8x128xf32> to vector<8x128xf32>
    %3259 = vector.shape_cast %3256 : vector<8x128xf32> to vector<1x1x8x128xf32>
    tpu.vector_store %arg3[%c6_1052, %c2_1053, %c0_1054, %c0_1055], %3259 {strides = array<i32>} : memref<12x12x8x128xf32, #tpu.memory_space<vmem>>, vector<1x1x8x128xf32>,
    %3260 = arith.addf %151, %2483 : vector<8x128xf32>
    %c6_1056 = arith.constant 6 : index
    %c3_1057 = arith.constant 3 : index
    %c0_1058 = arith.constant 0 : index
    %c0_1059 = arith.constant 0 : index
    %3261 = vector.load %arg3[%c6_1056, %c3_1057, %c0_1058, %c0_1059] : memref<12x12x8x128xf32, #tpu.memory_space<vmem>>, vector<1x1x8x128xf32>
    %3262 = vector.shape_cast %3261 : vector<1x1x8x128xf32> to vector<8x128xf32>
    %3263 = vector.shape_cast %3260 : vector<8x128xf32> to vector<1x1x8x128xf32>
    tpu.vector_store %arg3[%c6_1056, %c3_1057, %c0_1058, %c0_1059], %3263 {strides = array<i32>} : memref<12x12x8x128xf32, #tpu.memory_space<vmem>>, vector<1x1x8x128xf32>,
    %3264 = arith.addf %153, %2490 : vector<8x128xf32>
    %c6_1060 = arith.constant 6 : index
    %c4_1061 = arith.constant 4 : index
    %c0_1062 = arith.constant 0 : index
    %c0_1063 = arith.constant 0 : index
    %3265 = vector.load %arg3[%c6_1060, %c4_1061, %c0_1062, %c0_1063] : memref<12x12x8x128xf32, #tpu.memory_space<vmem>>, vector<1x1x8x128xf32>
    %3266 = vector.shape_cast %3265 : vector<1x1x8x128xf32> to vector<8x128xf32>
    %3267 = vector.shape_cast %3264 : vector<8x128xf32> to vector<1x1x8x128xf32>
    tpu.vector_store %arg3[%c6_1060, %c4_1061, %c0_1062, %c0_1063], %3267 {strides = array<i32>} : memref<12x12x8x128xf32, #tpu.memory_space<vmem>>, vector<1x1x8x128xf32>,
    %3268 = arith.addf %155, %2497 : vector<8x128xf32>
    %c6_1064 = arith.constant 6 : index
    %c5_1065 = arith.constant 5 : index
    %c0_1066 = arith.constant 0 : index
    %c0_1067 = arith.constant 0 : index
    %3269 = vector.load %arg3[%c6_1064, %c5_1065, %c0_1066, %c0_1067] : memref<12x12x8x128xf32, #tpu.memory_space<vmem>>, vector<1x1x8x128xf32>
    %3270 = vector.shape_cast %3269 : vector<1x1x8x128xf32> to vector<8x128xf32>
    %3271 = vector.shape_cast %3268 : vector<8x128xf32> to vector<1x1x8x128xf32>
    tpu.vector_store %arg3[%c6_1064, %c5_1065, %c0_1066, %c0_1067], %3271 {strides = array<i32>} : memref<12x12x8x128xf32, #tpu.memory_space<vmem>>, vector<1x1x8x128xf32>,
    %3272 = arith.addf %157, %2504 : vector<8x128xf32>
    %c6_1068 = arith.constant 6 : index
    %c6_1069 = arith.constant 6 : index
    %c0_1070 = arith.constant 0 : index
    %c0_1071 = arith.constant 0 : index
    %3273 = vector.load %arg3[%c6_1068, %c6_1069, %c0_1070, %c0_1071] : memref<12x12x8x128xf32, #tpu.memory_space<vmem>>, vector<1x1x8x128xf32>
    %3274 = vector.shape_cast %3273 : vector<1x1x8x128xf32> to vector<8x128xf32>
    %3275 = vector.shape_cast %3272 : vector<8x128xf32> to vector<1x1x8x128xf32>
    tpu.vector_store %arg3[%c6_1068, %c6_1069, %c0_1070, %c0_1071], %3275 {strides = array<i32>} : memref<12x12x8x128xf32, #tpu.memory_space<vmem>>, vector<1x1x8x128xf32>,
    %3276 = arith.addf %159, %2511 : vector<8x128xf32>
    %c6_1072 = arith.constant 6 : index
    %c7_1073 = arith.constant 7 : index
    %c0_1074 = arith.constant 0 : index
    %c0_1075 = arith.constant 0 : index
    %3277 = vector.load %arg3[%c6_1072, %c7_1073, %c0_1074, %c0_1075] : memref<12x12x8x128xf32, #tpu.memory_space<vmem>>, vector<1x1x8x128xf32>
    %3278 = vector.shape_cast %3277 : vector<1x1x8x128xf32> to vector<8x128xf32>
    %3279 = vector.shape_cast %3276 : vector<8x128xf32> to vector<1x1x8x128xf32>
    tpu.vector_store %arg3[%c6_1072, %c7_1073, %c0_1074, %c0_1075], %3279 {strides = array<i32>} : memref<12x12x8x128xf32, #tpu.memory_space<vmem>>, vector<1x1x8x128xf32>,
    %3280 = arith.addf %161, %2518 : vector<8x128xf32>
    %c6_1076 = arith.constant 6 : index
    %c8_1077 = arith.constant 8 : index
    %c0_1078 = arith.constant 0 : index
    %c0_1079 = arith.constant 0 : index
    %3281 = vector.load %arg3[%c6_1076, %c8_1077, %c0_1078, %c0_1079] : memref<12x12x8x128xf32, #tpu.memory_space<vmem>>, vector<1x1x8x128xf32>
    %3282 = vector.shape_cast %3281 : vector<1x1x8x128xf32> to vector<8x128xf32>
    %3283 = vector.shape_cast %3280 : vector<8x128xf32> to vector<1x1x8x128xf32>
    tpu.vector_store %arg3[%c6_1076, %c8_1077, %c0_1078, %c0_1079], %3283 {strides = array<i32>} : memref<12x12x8x128xf32, #tpu.memory_space<vmem>>, vector<1x1x8x128xf32>,
    %3284 = arith.addf %163, %2525 : vector<8x128xf32>
    %c6_1080 = arith.constant 6 : index
    %c9_1081 = arith.constant 9 : index
    %c0_1082 = arith.constant 0 : index
    %c0_1083 = arith.constant 0 : index
    %3285 = vector.load %arg3[%c6_1080, %c9_1081, %c0_1082, %c0_1083] : memref<12x12x8x128xf32, #tpu.memory_space<vmem>>, vector<1x1x8x128xf32>
    %3286 = vector.shape_cast %3285 : vector<1x1x8x128xf32> to vector<8x128xf32>
    %3287 = vector.shape_cast %3284 : vector<8x128xf32> to vector<1x1x8x128xf32>
    tpu.vector_store %arg3[%c6_1080, %c9_1081, %c0_1082, %c0_1083], %3287 {strides = array<i32>} : memref<12x12x8x128xf32, #tpu.memory_space<vmem>>, vector<1x1x8x128xf32>,
    %3288 = arith.addf %165, %2532 : vector<8x128xf32>
    %c6_1084 = arith.constant 6 : index
    %c10_1085 = arith.constant 10 : index
    %c0_1086 = arith.constant 0 : index
    %c0_1087 = arith.constant 0 : index
    %3289 = vector.load %arg3[%c6_1084, %c10_1085, %c0_1086, %c0_1087] : memref<12x12x8x128xf32, #tpu.memory_space<vmem>>, vector<1x1x8x128xf32>
    %3290 = vector.shape_cast %3289 : vector<1x1x8x128xf32> to vector<8x128xf32>
    %3291 = vector.shape_cast %3288 : vector<8x128xf32> to vector<1x1x8x128xf32>
    tpu.vector_store %arg3[%c6_1084, %c10_1085, %c0_1086, %c0_1087], %3291 {strides = array<i32>} : memref<12x12x8x128xf32, #tpu.memory_space<vmem>>, vector<1x1x8x128xf32>,
    %3292 = arith.addf %167, %2539 : vector<8x128xf32>
    %c6_1088 = arith.constant 6 : index
    %c11_1089 = arith.constant 11 : index
    %c0_1090 = arith.constant 0 : index
    %c0_1091 = arith.constant 0 : index
    %3293 = vector.load %arg3[%c6_1088, %c11_1089, %c0_1090, %c0_1091] : memref<12x12x8x128xf32, #tpu.memory_space<vmem>>, vector<1x1x8x128xf32>
    %3294 = vector.shape_cast %3293 : vector<1x1x8x128xf32> to vector<8x128xf32>
    %3295 = vector.shape_cast %3292 : vector<8x128xf32> to vector<1x1x8x128xf32>
    tpu.vector_store %arg3[%c6_1088, %c11_1089, %c0_1090, %c0_1091], %3295 {strides = array<i32>} : memref<12x12x8x128xf32, #tpu.memory_space<vmem>>, vector<1x1x8x128xf32>,
    %3296 = arith.addf %169, %2546 : vector<8x128xf32>
    %c7_1092 = arith.constant 7 : index
    %c0_1093 = arith.constant 0 : index
    %c0_1094 = arith.constant 0 : index
    %c0_1095 = arith.constant 0 : index
    %3297 = vector.load %arg3[%c7_1092, %c0_1093, %c0_1094, %c0_1095] : memref<12x12x8x128xf32, #tpu.memory_space<vmem>>, vector<1x1x8x128xf32>
    %3298 = vector.shape_cast %3297 : vector<1x1x8x128xf32> to vector<8x128xf32>
    %3299 = vector.shape_cast %3296 : vector<8x128xf32> to vector<1x1x8x128xf32>
    tpu.vector_store %arg3[%c7_1092, %c0_1093, %c0_1094, %c0_1095], %3299 {strides = array<i32>} : memref<12x12x8x128xf32, #tpu.memory_space<vmem>>, vector<1x1x8x128xf32>,
    %3300 = arith.addf %171, %2553 : vector<8x128xf32>
    %c7_1096 = arith.constant 7 : index
    %c1_1097 = arith.constant 1 : index
    %c0_1098 = arith.constant 0 : index
    %c0_1099 = arith.constant 0 : index
    %3301 = vector.load %arg3[%c7_1096, %c1_1097, %c0_1098, %c0_1099] : memref<12x12x8x128xf32, #tpu.memory_space<vmem>>, vector<1x1x8x128xf32>
    %3302 = vector.shape_cast %3301 : vector<1x1x8x128xf32> to vector<8x128xf32>
    %3303 = vector.shape_cast %3300 : vector<8x128xf32> to vector<1x1x8x128xf32>
    tpu.vector_store %arg3[%c7_1096, %c1_1097, %c0_1098, %c0_1099], %3303 {strides = array<i32>} : memref<12x12x8x128xf32, #tpu.memory_space<vmem>>, vector<1x1x8x128xf32>,
    %3304 = arith.addf %173, %2560 : vector<8x128xf32>
    %c7_1100 = arith.constant 7 : index
    %c2_1101 = arith.constant 2 : index
    %c0_1102 = arith.constant 0 : index
    %c0_1103 = arith.constant 0 : index
    %3305 = vector.load %arg3[%c7_1100, %c2_1101, %c0_1102, %c0_1103] : memref<12x12x8x128xf32, #tpu.memory_space<vmem>>, vector<1x1x8x128xf32>
    %3306 = vector.shape_cast %3305 : vector<1x1x8x128xf32> to vector<8x128xf32>
    %3307 = vector.shape_cast %3304 : vector<8x128xf32> to vector<1x1x8x128xf32>
    tpu.vector_store %arg3[%c7_1100, %c2_1101, %c0_1102, %c0_1103], %3307 {strides = array<i32>} : memref<12x12x8x128xf32, #tpu.memory_space<vmem>>, vector<1x1x8x128xf32>,
    %3308 = arith.addf %175, %2567 : vector<8x128xf32>
    %c7_1104 = arith.constant 7 : index
    %c3_1105 = arith.constant 3 : index
    %c0_1106 = arith.constant 0 : index
    %c0_1107 = arith.constant 0 : index
    %3309 = vector.load %arg3[%c7_1104, %c3_1105, %c0_1106, %c0_1107] : memref<12x12x8x128xf32, #tpu.memory_space<vmem>>, vector<1x1x8x128xf32>
    %3310 = vector.shape_cast %3309 : vector<1x1x8x128xf32> to vector<8x128xf32>
    %3311 = vector.shape_cast %3308 : vector<8x128xf32> to vector<1x1x8x128xf32>
    tpu.vector_store %arg3[%c7_1104, %c3_1105, %c0_1106, %c0_1107], %3311 {strides = array<i32>} : memref<12x12x8x128xf32, #tpu.memory_space<vmem>>, vector<1x1x8x128xf32>,
    %3312 = arith.addf %177, %2574 : vector<8x128xf32>
    %c7_1108 = arith.constant 7 : index
    %c4_1109 = arith.constant 4 : index
    %c0_1110 = arith.constant 0 : index
    %c0_1111 = arith.constant 0 : index
    %3313 = vector.load %arg3[%c7_1108, %c4_1109, %c0_1110, %c0_1111] : memref<12x12x8x128xf32, #tpu.memory_space<vmem>>, vector<1x1x8x128xf32>
    %3314 = vector.shape_cast %3313 : vector<1x1x8x128xf32> to vector<8x128xf32>
    %3315 = vector.shape_cast %3312 : vector<8x128xf32> to vector<1x1x8x128xf32>
    tpu.vector_store %arg3[%c7_1108, %c4_1109, %c0_1110, %c0_1111], %3315 {strides = array<i32>} : memref<12x12x8x128xf32, #tpu.memory_space<vmem>>, vector<1x1x8x128xf32>,
    %3316 = arith.addf %179, %2581 : vector<8x128xf32>
    %c7_1112 = arith.constant 7 : index
    %c5_1113 = arith.constant 5 : index
    %c0_1114 = arith.constant 0 : index
    %c0_1115 = arith.constant 0 : index
    %3317 = vector.load %arg3[%c7_1112, %c5_1113, %c0_1114, %c0_1115] : memref<12x12x8x128xf32, #tpu.memory_space<vmem>>, vector<1x1x8x128xf32>
    %3318 = vector.shape_cast %3317 : vector<1x1x8x128xf32> to vector<8x128xf32>
    %3319 = vector.shape_cast %3316 : vector<8x128xf32> to vector<1x1x8x128xf32>
    tpu.vector_store %arg3[%c7_1112, %c5_1113, %c0_1114, %c0_1115], %3319 {strides = array<i32>} : memref<12x12x8x128xf32, #tpu.memory_space<vmem>>, vector<1x1x8x128xf32>,
    %3320 = arith.addf %181, %2588 : vector<8x128xf32>
    %c7_1116 = arith.constant 7 : index
    %c6_1117 = arith.constant 6 : index
    %c0_1118 = arith.constant 0 : index
    %c0_1119 = arith.constant 0 : index
    %3321 = vector.load %arg3[%c7_1116, %c6_1117, %c0_1118, %c0_1119] : memref<12x12x8x128xf32, #tpu.memory_space<vmem>>, vector<1x1x8x128xf32>
    %3322 = vector.shape_cast %3321 : vector<1x1x8x128xf32> to vector<8x128xf32>
    %3323 = vector.shape_cast %3320 : vector<8x128xf32> to vector<1x1x8x128xf32>
    tpu.vector_store %arg3[%c7_1116, %c6_1117, %c0_1118, %c0_1119], %3323 {strides = array<i32>} : memref<12x12x8x128xf32, #tpu.memory_space<vmem>>, vector<1x1x8x128xf32>,
    %3324 = arith.addf %183, %2595 : vector<8x128xf32>
    %c7_1120 = arith.constant 7 : index
    %c7_1121 = arith.constant 7 : index
    %c0_1122 = arith.constant 0 : index
    %c0_1123 = arith.constant 0 : index
    %3325 = vector.load %arg3[%c7_1120, %c7_1121, %c0_1122, %c0_1123] : memref<12x12x8x128xf32, #tpu.memory_space<vmem>>, vector<1x1x8x128xf32>
    %3326 = vector.shape_cast %3325 : vector<1x1x8x128xf32> to vector<8x128xf32>
    %3327 = vector.shape_cast %3324 : vector<8x128xf32> to vector<1x1x8x128xf32>
    tpu.vector_store %arg3[%c7_1120, %c7_1121, %c0_1122, %c0_1123], %3327 {strides = array<i32>} : memref<12x12x8x128xf32, #tpu.memory_space<vmem>>, vector<1x1x8x128xf32>,
    %3328 = arith.addf %185, %2602 : vector<8x128xf32>
    %c7_1124 = arith.constant 7 : index
    %c8_1125 = arith.constant 8 : index
    %c0_1126 = arith.constant 0 : index
    %c0_1127 = arith.constant 0 : index
    %3329 = vector.load %arg3[%c7_1124, %c8_1125, %c0_1126, %c0_1127] : memref<12x12x8x128xf32, #tpu.memory_space<vmem>>, vector<1x1x8x128xf32>
    %3330 = vector.shape_cast %3329 : vector<1x1x8x128xf32> to vector<8x128xf32>
    %3331 = vector.shape_cast %3328 : vector<8x128xf32> to vector<1x1x8x128xf32>
    tpu.vector_store %arg3[%c7_1124, %c8_1125, %c0_1126, %c0_1127], %3331 {strides = array<i32>} : memref<12x12x8x128xf32, #tpu.memory_space<vmem>>, vector<1x1x8x128xf32>,
    %3332 = arith.addf %187, %2609 : vector<8x128xf32>
    %c7_1128 = arith.constant 7 : index
    %c9_1129 = arith.constant 9 : index
    %c0_1130 = arith.constant 0 : index
    %c0_1131 = arith.constant 0 : index
    %3333 = vector.load %arg3[%c7_1128, %c9_1129, %c0_1130, %c0_1131] : memref<12x12x8x128xf32, #tpu.memory_space<vmem>>, vector<1x1x8x128xf32>
    %3334 = vector.shape_cast %3333 : vector<1x1x8x128xf32> to vector<8x128xf32>
    %3335 = vector.shape_cast %3332 : vector<8x128xf32> to vector<1x1x8x128xf32>
    tpu.vector_store %arg3[%c7_1128, %c9_1129, %c0_1130, %c0_1131], %3335 {strides = array<i32>} : memref<12x12x8x128xf32, #tpu.memory_space<vmem>>, vector<1x1x8x128xf32>,
    %3336 = arith.addf %189, %2616 : vector<8x128xf32>
    %c7_1132 = arith.constant 7 : index
    %c10_1133 = arith.constant 10 : index
    %c0_1134 = arith.constant 0 : index
    %c0_1135 = arith.constant 0 : index
    %3337 = vector.load %arg3[%c7_1132, %c10_1133, %c0_1134, %c0_1135] : memref<12x12x8x128xf32, #tpu.memory_space<vmem>>, vector<1x1x8x128xf32>
    %3338 = vector.shape_cast %3337 : vector<1x1x8x128xf32> to vector<8x128xf32>
    %3339 = vector.shape_cast %3336 : vector<8x128xf32> to vector<1x1x8x128xf32>
    tpu.vector_store %arg3[%c7_1132, %c10_1133, %c0_1134, %c0_1135], %3339 {strides = array<i32>} : memref<12x12x8x128xf32, #tpu.memory_space<vmem>>, vector<1x1x8x128xf32>,
    %3340 = arith.addf %191, %2623 : vector<8x128xf32>
    %c7_1136 = arith.constant 7 : index
    %c11_1137 = arith.constant 11 : index
    %c0_1138 = arith.constant 0 : index
    %c0_1139 = arith.constant 0 : index
    %3341 = vector.load %arg3[%c7_1136, %c11_1137, %c0_1138, %c0_1139] : memref<12x12x8x128xf32, #tpu.memory_space<vmem>>, vector<1x1x8x128xf32>
    %3342 = vector.shape_cast %3341 : vector<1x1x8x128xf32> to vector<8x128xf32>
    %3343 = vector.shape_cast %3340 : vector<8x128xf32> to vector<1x1x8x128xf32>
    tpu.vector_store %arg3[%c7_1136, %c11_1137, %c0_1138, %c0_1139], %3343 {strides = array<i32>} : memref<12x12x8x128xf32, #tpu.memory_space<vmem>>, vector<1x1x8x128xf32>,
    %3344 = arith.addf %193, %2630 : vector<8x128xf32>
    %c8_1140 = arith.constant 8 : index
    %c0_1141 = arith.constant 0 : index
    %c0_1142 = arith.constant 0 : index
    %c0_1143 = arith.constant 0 : index
    %3345 = vector.load %arg3[%c8_1140, %c0_1141, %c0_1142, %c0_1143] : memref<12x12x8x128xf32, #tpu.memory_space<vmem>>, vector<1x1x8x128xf32>
    %3346 = vector.shape_cast %3345 : vector<1x1x8x128xf32> to vector<8x128xf32>
    %3347 = vector.shape_cast %3344 : vector<8x128xf32> to vector<1x1x8x128xf32>
    tpu.vector_store %arg3[%c8_1140, %c0_1141, %c0_1142, %c0_1143], %3347 {strides = array<i32>} : memref<12x12x8x128xf32, #tpu.memory_space<vmem>>, vector<1x1x8x128xf32>,
    %3348 = arith.addf %195, %2637 : vector<8x128xf32>
    %c8_1144 = arith.constant 8 : index
    %c1_1145 = arith.constant 1 : index
    %c0_1146 = arith.constant 0 : index
    %c0_1147 = arith.constant 0 : index
    %3349 = vector.load %arg3[%c8_1144, %c1_1145, %c0_1146, %c0_1147] : memref<12x12x8x128xf32, #tpu.memory_space<vmem>>, vector<1x1x8x128xf32>
    %3350 = vector.shape_cast %3349 : vector<1x1x8x128xf32> to vector<8x128xf32>
    %3351 = vector.shape_cast %3348 : vector<8x128xf32> to vector<1x1x8x128xf32>
    tpu.vector_store %arg3[%c8_1144, %c1_1145, %c0_1146, %c0_1147], %3351 {strides = array<i32>} : memref<12x12x8x128xf32, #tpu.memory_space<vmem>>, vector<1x1x8x128xf32>,
    %3352 = arith.addf %197, %2644 : vector<8x128xf32>
    %c8_1148 = arith.constant 8 : index
    %c2_1149 = arith.constant 2 : index
    %c0_1150 = arith.constant 0 : index
    %c0_1151 = arith.constant 0 : index
    %3353 = vector.load %arg3[%c8_1148, %c2_1149, %c0_1150, %c0_1151] : memref<12x12x8x128xf32, #tpu.memory_space<vmem>>, vector<1x1x8x128xf32>
    %3354 = vector.shape_cast %3353 : vector<1x1x8x128xf32> to vector<8x128xf32>
    %3355 = vector.shape_cast %3352 : vector<8x128xf32> to vector<1x1x8x128xf32>
    tpu.vector_store %arg3[%c8_1148, %c2_1149, %c0_1150, %c0_1151], %3355 {strides = array<i32>} : memref<12x12x8x128xf32, #tpu.memory_space<vmem>>, vector<1x1x8x128xf32>,
    %3356 = arith.addf %199, %2651 : vector<8x128xf32>
    %c8_1152 = arith.constant 8 : index
    %c3_1153 = arith.constant 3 : index
    %c0_1154 = arith.constant 0 : index
    %c0_1155 = arith.constant 0 : index
    %3357 = vector.load %arg3[%c8_1152, %c3_1153, %c0_1154, %c0_1155] : memref<12x12x8x128xf32, #tpu.memory_space<vmem>>, vector<1x1x8x128xf32>
    %3358 = vector.shape_cast %3357 : vector<1x1x8x128xf32> to vector<8x128xf32>
    %3359 = vector.shape_cast %3356 : vector<8x128xf32> to vector<1x1x8x128xf32>
    tpu.vector_store %arg3[%c8_1152, %c3_1153, %c0_1154, %c0_1155], %3359 {strides = array<i32>} : memref<12x12x8x128xf32, #tpu.memory_space<vmem>>, vector<1x1x8x128xf32>,
    %3360 = arith.addf %201, %2658 : vector<8x128xf32>
    %c8_1156 = arith.constant 8 : index
    %c4_1157 = arith.constant 4 : index
    %c0_1158 = arith.constant 0 : index
    %c0_1159 = arith.constant 0 : index
    %3361 = vector.load %arg3[%c8_1156, %c4_1157, %c0_1158, %c0_1159] : memref<12x12x8x128xf32, #tpu.memory_space<vmem>>, vector<1x1x8x128xf32>
    %3362 = vector.shape_cast %3361 : vector<1x1x8x128xf32> to vector<8x128xf32>
    %3363 = vector.shape_cast %3360 : vector<8x128xf32> to vector<1x1x8x128xf32>
    tpu.vector_store %arg3[%c8_1156, %c4_1157, %c0_1158, %c0_1159], %3363 {strides = array<i32>} : memref<12x12x8x128xf32, #tpu.memory_space<vmem>>, vector<1x1x8x128xf32>,
    %3364 = arith.addf %203, %2665 : vector<8x128xf32>
    %c8_1160 = arith.constant 8 : index
    %c5_1161 = arith.constant 5 : index
    %c0_1162 = arith.constant 0 : index
    %c0_1163 = arith.constant 0 : index
    %3365 = vector.load %arg3[%c8_1160, %c5_1161, %c0_1162, %c0_1163] : memref<12x12x8x128xf32, #tpu.memory_space<vmem>>, vector<1x1x8x128xf32>
    %3366 = vector.shape_cast %3365 : vector<1x1x8x128xf32> to vector<8x128xf32>
    %3367 = vector.shape_cast %3364 : vector<8x128xf32> to vector<1x1x8x128xf32>
    tpu.vector_store %arg3[%c8_1160, %c5_1161, %c0_1162, %c0_1163], %3367 {strides = array<i32>} : memref<12x12x8x128xf32, #tpu.memory_space<vmem>>, vector<1x1x8x128xf32>,
    %3368 = arith.addf %205, %2672 : vector<8x128xf32>
    %c8_1164 = arith.constant 8 : index
    %c6_1165 = arith.constant 6 : index
    %c0_1166 = arith.constant 0 : index
    %c0_1167 = arith.constant 0 : index
    %3369 = vector.load %arg3[%c8_1164, %c6_1165, %c0_1166, %c0_1167] : memref<12x12x8x128xf32, #tpu.memory_space<vmem>>, vector<1x1x8x128xf32>
    %3370 = vector.shape_cast %3369 : vector<1x1x8x128xf32> to vector<8x128xf32>
    %3371 = vector.shape_cast %3368 : vector<8x128xf32> to vector<1x1x8x128xf32>
    tpu.vector_store %arg3[%c8_1164, %c6_1165, %c0_1166, %c0_1167], %3371 {strides = array<i32>} : memref<12x12x8x128xf32, #tpu.memory_space<vmem>>, vector<1x1x8x128xf32>,
    %3372 = arith.addf %207, %2679 : vector<8x128xf32>
    %c8_1168 = arith.constant 8 : index
    %c7_1169 = arith.constant 7 : index
    %c0_1170 = arith.constant 0 : index
    %c0_1171 = arith.constant 0 : index
    %3373 = vector.load %arg3[%c8_1168, %c7_1169, %c0_1170, %c0_1171] : memref<12x12x8x128xf32, #tpu.memory_space<vmem>>, vector<1x1x8x128xf32>
    %3374 = vector.shape_cast %3373 : vector<1x1x8x128xf32> to vector<8x128xf32>
    %3375 = vector.shape_cast %3372 : vector<8x128xf32> to vector<1x1x8x128xf32>
    tpu.vector_store %arg3[%c8_1168, %c7_1169, %c0_1170, %c0_1171], %3375 {strides = array<i32>} : memref<12x12x8x128xf32, #tpu.memory_space<vmem>>, vector<1x1x8x128xf32>,
    %3376 = arith.addf %209, %2686 : vector<8x128xf32>
    %c8_1172 = arith.constant 8 : index
    %c8_1173 = arith.constant 8 : index
    %c0_1174 = arith.constant 0 : index
    %c0_1175 = arith.constant 0 : index
    %3377 = vector.load %arg3[%c8_1172, %c8_1173, %c0_1174, %c0_1175] : memref<12x12x8x128xf32, #tpu.memory_space<vmem>>, vector<1x1x8x128xf32>
    %3378 = vector.shape_cast %3377 : vector<1x1x8x128xf32> to vector<8x128xf32>
    %3379 = vector.shape_cast %3376 : vector<8x128xf32> to vector<1x1x8x128xf32>
    tpu.vector_store %arg3[%c8_1172, %c8_1173, %c0_1174, %c0_1175], %3379 {strides = array<i32>} : memref<12x12x8x128xf32, #tpu.memory_space<vmem>>, vector<1x1x8x128xf32>,
    %3380 = arith.addf %211, %2693 : vector<8x128xf32>
    %c8_1176 = arith.constant 8 : index
    %c9_1177 = arith.constant 9 : index
    %c0_1178 = arith.constant 0 : index
    %c0_1179 = arith.constant 0 : index
    %3381 = vector.load %arg3[%c8_1176, %c9_1177, %c0_1178, %c0_1179] : memref<12x12x8x128xf32, #tpu.memory_space<vmem>>, vector<1x1x8x128xf32>
    %3382 = vector.shape_cast %3381 : vector<1x1x8x128xf32> to vector<8x128xf32>
    %3383 = vector.shape_cast %3380 : vector<8x128xf32> to vector<1x1x8x128xf32>
    tpu.vector_store %arg3[%c8_1176, %c9_1177, %c0_1178, %c0_1179], %3383 {strides = array<i32>} : memref<12x12x8x128xf32, #tpu.memory_space<vmem>>, vector<1x1x8x128xf32>,
    %3384 = arith.addf %213, %2700 : vector<8x128xf32>
    %c8_1180 = arith.constant 8 : index
    %c10_1181 = arith.constant 10 : index
    %c0_1182 = arith.constant 0 : index
    %c0_1183 = arith.constant 0 : index
    %3385 = vector.load %arg3[%c8_1180, %c10_1181, %c0_1182, %c0_1183] : memref<12x12x8x128xf32, #tpu.memory_space<vmem>>, vector<1x1x8x128xf32>
    %3386 = vector.shape_cast %3385 : vector<1x1x8x128xf32> to vector<8x128xf32>
    %3387 = vector.shape_cast %3384 : vector<8x128xf32> to vector<1x1x8x128xf32>
    tpu.vector_store %arg3[%c8_1180, %c10_1181, %c0_1182, %c0_1183], %3387 {strides = array<i32>} : memref<12x12x8x128xf32, #tpu.memory_space<vmem>>, vector<1x1x8x128xf32>,
    %3388 = arith.addf %215, %2707 : vector<8x128xf32>
    %c8_1184 = arith.constant 8 : index
    %c11_1185 = arith.constant 11 : index
    %c0_1186 = arith.constant 0 : index
    %c0_1187 = arith.constant 0 : index
    %3389 = vector.load %arg3[%c8_1184, %c11_1185, %c0_1186, %c0_1187] : memref<12x12x8x128xf32, #tpu.memory_space<vmem>>, vector<1x1x8x128xf32>
    %3390 = vector.shape_cast %3389 : vector<1x1x8x128xf32> to vector<8x128xf32>
    %3391 = vector.shape_cast %3388 : vector<8x128xf32> to vector<1x1x8x128xf32>
    tpu.vector_store %arg3[%c8_1184, %c11_1185, %c0_1186, %c0_1187], %3391 {strides = array<i32>} : memref<12x12x8x128xf32, #tpu.memory_space<vmem>>, vector<1x1x8x128xf32>,
    %3392 = arith.addf %217, %2714 : vector<8x128xf32>
    %c9_1188 = arith.constant 9 : index
    %c0_1189 = arith.constant 0 : index
    %c0_1190 = arith.constant 0 : index
    %c0_1191 = arith.constant 0 : index
    %3393 = vector.load %arg3[%c9_1188, %c0_1189, %c0_1190, %c0_1191] : memref<12x12x8x128xf32, #tpu.memory_space<vmem>>, vector<1x1x8x128xf32>
    %3394 = vector.shape_cast %3393 : vector<1x1x8x128xf32> to vector<8x128xf32>
    %3395 = vector.shape_cast %3392 : vector<8x128xf32> to vector<1x1x8x128xf32>
    tpu.vector_store %arg3[%c9_1188, %c0_1189, %c0_1190, %c0_1191], %3395 {strides = array<i32>} : memref<12x12x8x128xf32, #tpu.memory_space<vmem>>, vector<1x1x8x128xf32>,
    %3396 = arith.addf %219, %2721 : vector<8x128xf32>
    %c9_1192 = arith.constant 9 : index
    %c1_1193 = arith.constant 1 : index
    %c0_1194 = arith.constant 0 : index
    %c0_1195 = arith.constant 0 : index
    %3397 = vector.load %arg3[%c9_1192, %c1_1193, %c0_1194, %c0_1195] : memref<12x12x8x128xf32, #tpu.memory_space<vmem>>, vector<1x1x8x128xf32>
    %3398 = vector.shape_cast %3397 : vector<1x1x8x128xf32> to vector<8x128xf32>
    %3399 = vector.shape_cast %3396 : vector<8x128xf32> to vector<1x1x8x128xf32>
    tpu.vector_store %arg3[%c9_1192, %c1_1193, %c0_1194, %c0_1195], %3399 {strides = array<i32>} : memref<12x12x8x128xf32, #tpu.memory_space<vmem>>, vector<1x1x8x128xf32>,
    %3400 = arith.addf %221, %2728 : vector<8x128xf32>
    %c9_1196 = arith.constant 9 : index
    %c2_1197 = arith.constant 2 : index
    %c0_1198 = arith.constant 0 : index
    %c0_1199 = arith.constant 0 : index
    %3401 = vector.load %arg3[%c9_1196, %c2_1197, %c0_1198, %c0_1199] : memref<12x12x8x128xf32, #tpu.memory_space<vmem>>, vector<1x1x8x128xf32>
    %3402 = vector.shape_cast %3401 : vector<1x1x8x128xf32> to vector<8x128xf32>
    %3403 = vector.shape_cast %3400 : vector<8x128xf32> to vector<1x1x8x128xf32>
    tpu.vector_store %arg3[%c9_1196, %c2_1197, %c0_1198, %c0_1199], %3403 {strides = array<i32>} : memref<12x12x8x128xf32, #tpu.memory_space<vmem>>, vector<1x1x8x128xf32>,
    %3404 = arith.addf %223, %2735 : vector<8x128xf32>
    %c9_1200 = arith.constant 9 : index
    %c3_1201 = arith.constant 3 : index
    %c0_1202 = arith.constant 0 : index
    %c0_1203 = arith.constant 0 : index
    %3405 = vector.load %arg3[%c9_1200, %c3_1201, %c0_1202, %c0_1203] : memref<12x12x8x128xf32, #tpu.memory_space<vmem>>, vector<1x1x8x128xf32>
    %3406 = vector.shape_cast %3405 : vector<1x1x8x128xf32> to vector<8x128xf32>
    %3407 = vector.shape_cast %3404 : vector<8x128xf32> to vector<1x1x8x128xf32>
    tpu.vector_store %arg3[%c9_1200, %c3_1201, %c0_1202, %c0_1203], %3407 {strides = array<i32>} : memref<12x12x8x128xf32, #tpu.memory_space<vmem>>, vector<1x1x8x128xf32>,
    %3408 = arith.addf %225, %2742 : vector<8x128xf32>
    %c9_1204 = arith.constant 9 : index
    %c4_1205 = arith.constant 4 : index
    %c0_1206 = arith.constant 0 : index
    %c0_1207 = arith.constant 0 : index
    %3409 = vector.load %arg3[%c9_1204, %c4_1205, %c0_1206, %c0_1207] : memref<12x12x8x128xf32, #tpu.memory_space<vmem>>, vector<1x1x8x128xf32>
    %3410 = vector.shape_cast %3409 : vector<1x1x8x128xf32> to vector<8x128xf32>
    %3411 = vector.shape_cast %3408 : vector<8x128xf32> to vector<1x1x8x128xf32>
    tpu.vector_store %arg3[%c9_1204, %c4_1205, %c0_1206, %c0_1207], %3411 {strides = array<i32>} : memref<12x12x8x128xf32, #tpu.memory_space<vmem>>, vector<1x1x8x128xf32>,
    %3412 = arith.addf %227, %2749 : vector<8x128xf32>
    %c9_1208 = arith.constant 9 : index
    %c5_1209 = arith.constant 5 : index
    %c0_1210 = arith.constant 0 : index
    %c0_1211 = arith.constant 0 : index
    %3413 = vector.load %arg3[%c9_1208, %c5_1209, %c0_1210, %c0_1211] : memref<12x12x8x128xf32, #tpu.memory_space<vmem>>, vector<1x1x8x128xf32>
    %3414 = vector.shape_cast %3413 : vector<1x1x8x128xf32> to vector<8x128xf32>
    %3415 = vector.shape_cast %3412 : vector<8x128xf32> to vector<1x1x8x128xf32>
    tpu.vector_store %arg3[%c9_1208, %c5_1209, %c0_1210, %c0_1211], %3415 {strides = array<i32>} : memref<12x12x8x128xf32, #tpu.memory_space<vmem>>, vector<1x1x8x128xf32>,
    %3416 = arith.addf %229, %2756 : vector<8x128xf32>
    %c9_1212 = arith.constant 9 : index
    %c6_1213 = arith.constant 6 : index
    %c0_1214 = arith.constant 0 : index
    %c0_1215 = arith.constant 0 : index
    %3417 = vector.load %arg3[%c9_1212, %c6_1213, %c0_1214, %c0_1215] : memref<12x12x8x128xf32, #tpu.memory_space<vmem>>, vector<1x1x8x128xf32>
    %3418 = vector.shape_cast %3417 : vector<1x1x8x128xf32> to vector<8x128xf32>
    %3419 = vector.shape_cast %3416 : vector<8x128xf32> to vector<1x1x8x128xf32>
    tpu.vector_store %arg3[%c9_1212, %c6_1213, %c0_1214, %c0_1215], %3419 {strides = array<i32>} : memref<12x12x8x128xf32, #tpu.memory_space<vmem>>, vector<1x1x8x128xf32>,
    %3420 = arith.addf %231, %2763 : vector<8x128xf32>
    %c9_1216 = arith.constant 9 : index
    %c7_1217 = arith.constant 7 : index
    %c0_1218 = arith.constant 0 : index
    %c0_1219 = arith.constant 0 : index
    %3421 = vector.load %arg3[%c9_1216, %c7_1217, %c0_1218, %c0_1219] : memref<12x12x8x128xf32, #tpu.memory_space<vmem>>, vector<1x1x8x128xf32>
    %3422 = vector.shape_cast %3421 : vector<1x1x8x128xf32> to vector<8x128xf32>
    %3423 = vector.shape_cast %3420 : vector<8x128xf32> to vector<1x1x8x128xf32>
    tpu.vector_store %arg3[%c9_1216, %c7_1217, %c0_1218, %c0_1219], %3423 {strides = array<i32>} : memref<12x12x8x128xf32, #tpu.memory_space<vmem>>, vector<1x1x8x128xf32>,
    %3424 = arith.addf %233, %2770 : vector<8x128xf32>
    %c9_1220 = arith.constant 9 : index
    %c8_1221 = arith.constant 8 : index
    %c0_1222 = arith.constant 0 : index
    %c0_1223 = arith.constant 0 : index
    %3425 = vector.load %arg3[%c9_1220, %c8_1221, %c0_1222, %c0_1223] : memref<12x12x8x128xf32, #tpu.memory_space<vmem>>, vector<1x1x8x128xf32>
    %3426 = vector.shape_cast %3425 : vector<1x1x8x128xf32> to vector<8x128xf32>
    %3427 = vector.shape_cast %3424 : vector<8x128xf32> to vector<1x1x8x128xf32>
    tpu.vector_store %arg3[%c9_1220, %c8_1221, %c0_1222, %c0_1223], %3427 {strides = array<i32>} : memref<12x12x8x128xf32, #tpu.memory_space<vmem>>, vector<1x1x8x128xf32>,
    %3428 = arith.addf %235, %2777 : vector<8x128xf32>
    %c9_1224 = arith.constant 9 : index
    %c9_1225 = arith.constant 9 : index
    %c0_1226 = arith.constant 0 : index
    %c0_1227 = arith.constant 0 : index
    %3429 = vector.load %arg3[%c9_1224, %c9_1225, %c0_1226, %c0_1227] : memref<12x12x8x128xf32, #tpu.memory_space<vmem>>, vector<1x1x8x128xf32>
    %3430 = vector.shape_cast %3429 : vector<1x1x8x128xf32> to vector<8x128xf32>
    %3431 = vector.shape_cast %3428 : vector<8x128xf32> to vector<1x1x8x128xf32>
    tpu.vector_store %arg3[%c9_1224, %c9_1225, %c0_1226, %c0_1227], %3431 {strides = array<i32>} : memref<12x12x8x128xf32, #tpu.memory_space<vmem>>, vector<1x1x8x128xf32>,
    %3432 = arith.addf %237, %2784 : vector<8x128xf32>
    %c9_1228 = arith.constant 9 : index
    %c10_1229 = arith.constant 10 : index
    %c0_1230 = arith.constant 0 : index
    %c0_1231 = arith.constant 0 : index
    %3433 = vector.load %arg3[%c9_1228, %c10_1229, %c0_1230, %c0_1231] : memref<12x12x8x128xf32, #tpu.memory_space<vmem>>, vector<1x1x8x128xf32>
    %3434 = vector.shape_cast %3433 : vector<1x1x8x128xf32> to vector<8x128xf32>
    %3435 = vector.shape_cast %3432 : vector<8x128xf32> to vector<1x1x8x128xf32>
    tpu.vector_store %arg3[%c9_1228, %c10_1229, %c0_1230, %c0_1231], %3435 {strides = array<i32>} : memref<12x12x8x128xf32, #tpu.memory_space<vmem>>, vector<1x1x8x128xf32>,
    %3436 = arith.addf %239, %2791 : vector<8x128xf32>
    %c9_1232 = arith.constant 9 : index
    %c11_1233 = arith.constant 11 : index
    %c0_1234 = arith.constant 0 : index
    %c0_1235 = arith.constant 0 : index
    %3437 = vector.load %arg3[%c9_1232, %c11_1233, %c0_1234, %c0_1235] : memref<12x12x8x128xf32, #tpu.memory_space<vmem>>, vector<1x1x8x128xf32>
    %3438 = vector.shape_cast %3437 : vector<1x1x8x128xf32> to vector<8x128xf32>
    %3439 = vector.shape_cast %3436 : vector<8x128xf32> to vector<1x1x8x128xf32>
    tpu.vector_store %arg3[%c9_1232, %c11_1233, %c0_1234, %c0_1235], %3439 {strides = array<i32>} : memref<12x12x8x128xf32, #tpu.memory_space<vmem>>, vector<1x1x8x128xf32>,
    %3440 = arith.addf %241, %2798 : vector<8x128xf32>
    %c10_1236 = arith.constant 10 : index
    %c0_1237 = arith.constant 0 : index
    %c0_1238 = arith.constant 0 : index
    %c0_1239 = arith.constant 0 : index
    %3441 = vector.load %arg3[%c10_1236, %c0_1237, %c0_1238, %c0_1239] : memref<12x12x8x128xf32, #tpu.memory_space<vmem>>, vector<1x1x8x128xf32>
    %3442 = vector.shape_cast %3441 : vector<1x1x8x128xf32> to vector<8x128xf32>
    %3443 = vector.shape_cast %3440 : vector<8x128xf32> to vector<1x1x8x128xf32>
    tpu.vector_store %arg3[%c10_1236, %c0_1237, %c0_1238, %c0_1239], %3443 {strides = array<i32>} : memref<12x12x8x128xf32, #tpu.memory_space<vmem>>, vector<1x1x8x128xf32>,
    %3444 = arith.addf %243, %2805 : vector<8x128xf32>
    %c10_1240 = arith.constant 10 : index
    %c1_1241 = arith.constant 1 : index
    %c0_1242 = arith.constant 0 : index
    %c0_1243 = arith.constant 0 : index
    %3445 = vector.load %arg3[%c10_1240, %c1_1241, %c0_1242, %c0_1243] : memref<12x12x8x128xf32, #tpu.memory_space<vmem>>, vector<1x1x8x128xf32>
    %3446 = vector.shape_cast %3445 : vector<1x1x8x128xf32> to vector<8x128xf32>
    %3447 = vector.shape_cast %3444 : vector<8x128xf32> to vector<1x1x8x128xf32>
    tpu.vector_store %arg3[%c10_1240, %c1_1241, %c0_1242, %c0_1243], %3447 {strides = array<i32>} : memref<12x12x8x128xf32, #tpu.memory_space<vmem>>, vector<1x1x8x128xf32>,
    %3448 = arith.addf %245, %2812 : vector<8x128xf32>
    %c10_1244 = arith.constant 10 : index
    %c2_1245 = arith.constant 2 : index
    %c0_1246 = arith.constant 0 : index
    %c0_1247 = arith.constant 0 : index
    %3449 = vector.load %arg3[%c10_1244, %c2_1245, %c0_1246, %c0_1247] : memref<12x12x8x128xf32, #tpu.memory_space<vmem>>, vector<1x1x8x128xf32>
    %3450 = vector.shape_cast %3449 : vector<1x1x8x128xf32> to vector<8x128xf32>
    %3451 = vector.shape_cast %3448 : vector<8x128xf32> to vector<1x1x8x128xf32>
    tpu.vector_store %arg3[%c10_1244, %c2_1245, %c0_1246, %c0_1247], %3451 {strides = array<i32>} : memref<12x12x8x128xf32, #tpu.memory_space<vmem>>, vector<1x1x8x128xf32>,
    %3452 = arith.addf %247, %2819 : vector<8x128xf32>
    %c10_1248 = arith.constant 10 : index
    %c3_1249 = arith.constant 3 : index
    %c0_1250 = arith.constant 0 : index
    %c0_1251 = arith.constant 0 : index
    %3453 = vector.load %arg3[%c10_1248, %c3_1249, %c0_1250, %c0_1251] : memref<12x12x8x128xf32, #tpu.memory_space<vmem>>, vector<1x1x8x128xf32>
    %3454 = vector.shape_cast %3453 : vector<1x1x8x128xf32> to vector<8x128xf32>
    %3455 = vector.shape_cast %3452 : vector<8x128xf32> to vector<1x1x8x128xf32>
    tpu.vector_store %arg3[%c10_1248, %c3_1249, %c0_1250, %c0_1251], %3455 {strides = array<i32>} : memref<12x12x8x128xf32, #tpu.memory_space<vmem>>, vector<1x1x8x128xf32>,
    %3456 = arith.addf %249, %2826 : vector<8x128xf32>
    %c10_1252 = arith.constant 10 : index
    %c4_1253 = arith.constant 4 : index
    %c0_1254 = arith.constant 0 : index
    %c0_1255 = arith.constant 0 : index
    %3457 = vector.load %arg3[%c10_1252, %c4_1253, %c0_1254, %c0_1255] : memref<12x12x8x128xf32, #tpu.memory_space<vmem>>, vector<1x1x8x128xf32>
    %3458 = vector.shape_cast %3457 : vector<1x1x8x128xf32> to vector<8x128xf32>
    %3459 = vector.shape_cast %3456 : vector<8x128xf32> to vector<1x1x8x128xf32>
    tpu.vector_store %arg3[%c10_1252, %c4_1253, %c0_1254, %c0_1255], %3459 {strides = array<i32>} : memref<12x12x8x128xf32, #tpu.memory_space<vmem>>, vector<1x1x8x128xf32>,
    %3460 = arith.addf %251, %2833 : vector<8x128xf32>
    %c10_1256 = arith.constant 10 : index
    %c5_1257 = arith.constant 5 : index
    %c0_1258 = arith.constant 0 : index
    %c0_1259 = arith.constant 0 : index
    %3461 = vector.load %arg3[%c10_1256, %c5_1257, %c0_1258, %c0_1259] : memref<12x12x8x128xf32, #tpu.memory_space<vmem>>, vector<1x1x8x128xf32>
    %3462 = vector.shape_cast %3461 : vector<1x1x8x128xf32> to vector<8x128xf32>
    %3463 = vector.shape_cast %3460 : vector<8x128xf32> to vector<1x1x8x128xf32>
    tpu.vector_store %arg3[%c10_1256, %c5_1257, %c0_1258, %c0_1259], %3463 {strides = array<i32>} : memref<12x12x8x128xf32, #tpu.memory_space<vmem>>, vector<1x1x8x128xf32>,
    %3464 = arith.addf %253, %2840 : vector<8x128xf32>
    %c10_1260 = arith.constant 10 : index
    %c6_1261 = arith.constant 6 : index
    %c0_1262 = arith.constant 0 : index
    %c0_1263 = arith.constant 0 : index
    %3465 = vector.load %arg3[%c10_1260, %c6_1261, %c0_1262, %c0_1263] : memref<12x12x8x128xf32, #tpu.memory_space<vmem>>, vector<1x1x8x128xf32>
    %3466 = vector.shape_cast %3465 : vector<1x1x8x128xf32> to vector<8x128xf32>
    %3467 = vector.shape_cast %3464 : vector<8x128xf32> to vector<1x1x8x128xf32>
    tpu.vector_store %arg3[%c10_1260, %c6_1261, %c0_1262, %c0_1263], %3467 {strides = array<i32>} : memref<12x12x8x128xf32, #tpu.memory_space<vmem>>, vector<1x1x8x128xf32>,
    %3468 = arith.addf %255, %2847 : vector<8x128xf32>
    %c10_1264 = arith.constant 10 : index
    %c7_1265 = arith.constant 7 : index
    %c0_1266 = arith.constant 0 : index
    %c0_1267 = arith.constant 0 : index
    %3469 = vector.load %arg3[%c10_1264, %c7_1265, %c0_1266, %c0_1267] : memref<12x12x8x128xf32, #tpu.memory_space<vmem>>, vector<1x1x8x128xf32>
    %3470 = vector.shape_cast %3469 : vector<1x1x8x128xf32> to vector<8x128xf32>
    %3471 = vector.shape_cast %3468 : vector<8x128xf32> to vector<1x1x8x128xf32>
    tpu.vector_store %arg3[%c10_1264, %c7_1265, %c0_1266, %c0_1267], %3471 {strides = array<i32>} : memref<12x12x8x128xf32, #tpu.memory_space<vmem>>, vector<1x1x8x128xf32>,
    %3472 = arith.addf %257, %2854 : vector<8x128xf32>
    %c10_1268 = arith.constant 10 : index
    %c8_1269 = arith.constant 8 : index
    %c0_1270 = arith.constant 0 : index
    %c0_1271 = arith.constant 0 : index
    %3473 = vector.load %arg3[%c10_1268, %c8_1269, %c0_1270, %c0_1271] : memref<12x12x8x128xf32, #tpu.memory_space<vmem>>, vector<1x1x8x128xf32>
    %3474 = vector.shape_cast %3473 : vector<1x1x8x128xf32> to vector<8x128xf32>
    %3475 = vector.shape_cast %3472 : vector<8x128xf32> to vector<1x1x8x128xf32>
    tpu.vector_store %arg3[%c10_1268, %c8_1269, %c0_1270, %c0_1271], %3475 {strides = array<i32>} : memref<12x12x8x128xf32, #tpu.memory_space<vmem>>, vector<1x1x8x128xf32>,
    %3476 = arith.addf %259, %2861 : vector<8x128xf32>
    %c10_1272 = arith.constant 10 : index
    %c9_1273 = arith.constant 9 : index
    %c0_1274 = arith.constant 0 : index
    %c0_1275 = arith.constant 0 : index
    %3477 = vector.load %arg3[%c10_1272, %c9_1273, %c0_1274, %c0_1275] : memref<12x12x8x128xf32, #tpu.memory_space<vmem>>, vector<1x1x8x128xf32>
    %3478 = vector.shape_cast %3477 : vector<1x1x8x128xf32> to vector<8x128xf32>
    %3479 = vector.shape_cast %3476 : vector<8x128xf32> to vector<1x1x8x128xf32>
    tpu.vector_store %arg3[%c10_1272, %c9_1273, %c0_1274, %c0_1275], %3479 {strides = array<i32>} : memref<12x12x8x128xf32, #tpu.memory_space<vmem>>, vector<1x1x8x128xf32>,
    %3480 = arith.addf %261, %2868 : vector<8x128xf32>
    %c10_1276 = arith.constant 10 : index
    %c10_1277 = arith.constant 10 : index
    %c0_1278 = arith.constant 0 : index
    %c0_1279 = arith.constant 0 : index
    %3481 = vector.load %arg3[%c10_1276, %c10_1277, %c0_1278, %c0_1279] : memref<12x12x8x128xf32, #tpu.memory_space<vmem>>, vector<1x1x8x128xf32>
    %3482 = vector.shape_cast %3481 : vector<1x1x8x128xf32> to vector<8x128xf32>
    %3483 = vector.shape_cast %3480 : vector<8x128xf32> to vector<1x1x8x128xf32>
    tpu.vector_store %arg3[%c10_1276, %c10_1277, %c0_1278, %c0_1279], %3483 {strides = array<i32>} : memref<12x12x8x128xf32, #tpu.memory_space<vmem>>, vector<1x1x8x128xf32>,
    %3484 = arith.addf %263, %2875 : vector<8x128xf32>
    %c10_1280 = arith.constant 10 : index
    %c11_1281 = arith.constant 11 : index
    %c0_1282 = arith.constant 0 : index
    %c0_1283 = arith.constant 0 : index
    %3485 = vector.load %arg3[%c10_1280, %c11_1281, %c0_1282, %c0_1283] : memref<12x12x8x128xf32, #tpu.memory_space<vmem>>, vector<1x1x8x128xf32>
    %3486 = vector.shape_cast %3485 : vector<1x1x8x128xf32> to vector<8x128xf32>
    %3487 = vector.shape_cast %3484 : vector<8x128xf32> to vector<1x1x8x128xf32>
    tpu.vector_store %arg3[%c10_1280, %c11_1281, %c0_1282, %c0_1283], %3487 {strides = array<i32>} : memref<12x12x8x128xf32, #tpu.memory_space<vmem>>, vector<1x1x8x128xf32>,
    %3488 = arith.addf %265, %2882 : vector<8x128xf32>
    %c11_1284 = arith.constant 11 : index
    %c0_1285 = arith.constant 0 : index
    %c0_1286 = arith.constant 0 : index
    %c0_1287 = arith.constant 0 : index
    %3489 = vector.load %arg3[%c11_1284, %c0_1285, %c0_1286, %c0_1287] : memref<12x12x8x128xf32, #tpu.memory_space<vmem>>, vector<1x1x8x128xf32>
    %3490 = vector.shape_cast %3489 : vector<1x1x8x128xf32> to vector<8x128xf32>
    %3491 = vector.shape_cast %3488 : vector<8x128xf32> to vector<1x1x8x128xf32>
    tpu.vector_store %arg3[%c11_1284, %c0_1285, %c0_1286, %c0_1287], %3491 {strides = array<i32>} : memref<12x12x8x128xf32, #tpu.memory_space<vmem>>, vector<1x1x8x128xf32>,
    %3492 = arith.addf %267, %2889 : vector<8x128xf32>
    %c11_1288 = arith.constant 11 : index
    %c1_1289 = arith.constant 1 : index
    %c0_1290 = arith.constant 0 : index
    %c0_1291 = arith.constant 0 : index
    %3493 = vector.load %arg3[%c11_1288, %c1_1289, %c0_1290, %c0_1291] : memref<12x12x8x128xf32, #tpu.memory_space<vmem>>, vector<1x1x8x128xf32>
    %3494 = vector.shape_cast %3493 : vector<1x1x8x128xf32> to vector<8x128xf32>
    %3495 = vector.shape_cast %3492 : vector<8x128xf32> to vector<1x1x8x128xf32>
    tpu.vector_store %arg3[%c11_1288, %c1_1289, %c0_1290, %c0_1291], %3495 {strides = array<i32>} : memref<12x12x8x128xf32, #tpu.memory_space<vmem>>, vector<1x1x8x128xf32>,
    %3496 = arith.addf %269, %2896 : vector<8x128xf32>
    %c11_1292 = arith.constant 11 : index
    %c2_1293 = arith.constant 2 : index
    %c0_1294 = arith.constant 0 : index
    %c0_1295 = arith.constant 0 : index
    %3497 = vector.load %arg3[%c11_1292, %c2_1293, %c0_1294, %c0_1295] : memref<12x12x8x128xf32, #tpu.memory_space<vmem>>, vector<1x1x8x128xf32>
    %3498 = vector.shape_cast %3497 : vector<1x1x8x128xf32> to vector<8x128xf32>
    %3499 = vector.shape_cast %3496 : vector<8x128xf32> to vector<1x1x8x128xf32>
    tpu.vector_store %arg3[%c11_1292, %c2_1293, %c0_1294, %c0_1295], %3499 {strides = array<i32>} : memref<12x12x8x128xf32, #tpu.memory_space<vmem>>, vector<1x1x8x128xf32>,
    %3500 = arith.addf %271, %2903 : vector<8x128xf32>
    %c11_1296 = arith.constant 11 : index
    %c3_1297 = arith.constant 3 : index
    %c0_1298 = arith.constant 0 : index
    %c0_1299 = arith.constant 0 : index
    %3501 = vector.load %arg3[%c11_1296, %c3_1297, %c0_1298, %c0_1299] : memref<12x12x8x128xf32, #tpu.memory_space<vmem>>, vector<1x1x8x128xf32>
    %3502 = vector.shape_cast %3501 : vector<1x1x8x128xf32> to vector<8x128xf32>
    %3503 = vector.shape_cast %3500 : vector<8x128xf32> to vector<1x1x8x128xf32>
    tpu.vector_store %arg3[%c11_1296, %c3_1297, %c0_1298, %c0_1299], %3503 {strides = array<i32>} : memref<12x12x8x128xf32, #tpu.memory_space<vmem>>, vector<1x1x8x128xf32>,
    %3504 = arith.addf %273, %2910 : vector<8x128xf32>
    %c11_1300 = arith.constant 11 : index
    %c4_1301 = arith.constant 4 : index
    %c0_1302 = arith.constant 0 : index
    %c0_1303 = arith.constant 0 : index
    %3505 = vector.load %arg3[%c11_1300, %c4_1301, %c0_1302, %c0_1303] : memref<12x12x8x128xf32, #tpu.memory_space<vmem>>, vector<1x1x8x128xf32>
    %3506 = vector.shape_cast %3505 : vector<1x1x8x128xf32> to vector<8x128xf32>
    %3507 = vector.shape_cast %3504 : vector<8x128xf32> to vector<1x1x8x128xf32>
    tpu.vector_store %arg3[%c11_1300, %c4_1301, %c0_1302, %c0_1303], %3507 {strides = array<i32>} : memref<12x12x8x128xf32, #tpu.memory_space<vmem>>, vector<1x1x8x128xf32>,
    %3508 = arith.addf %275, %2917 : vector<8x128xf32>
    %c11_1304 = arith.constant 11 : index
    %c5_1305 = arith.constant 5 : index
    %c0_1306 = arith.constant 0 : index
    %c0_1307 = arith.constant 0 : index
    %3509 = vector.load %arg3[%c11_1304, %c5_1305, %c0_1306, %c0_1307] : memref<12x12x8x128xf32, #tpu.memory_space<vmem>>, vector<1x1x8x128xf32>
    %3510 = vector.shape_cast %3509 : vector<1x1x8x128xf32> to vector<8x128xf32>
    %3511 = vector.shape_cast %3508 : vector<8x128xf32> to vector<1x1x8x128xf32>
    tpu.vector_store %arg3[%c11_1304, %c5_1305, %c0_1306, %c0_1307], %3511 {strides = array<i32>} : memref<12x12x8x128xf32, #tpu.memory_space<vmem>>, vector<1x1x8x128xf32>,
    %3512 = arith.addf %277, %2924 : vector<8x128xf32>
    %c11_1308 = arith.constant 11 : index
    %c6_1309 = arith.constant 6 : index
    %c0_1310 = arith.constant 0 : index
    %c0_1311 = arith.constant 0 : index
    %3513 = vector.load %arg3[%c11_1308, %c6_1309, %c0_1310, %c0_1311] : memref<12x12x8x128xf32, #tpu.memory_space<vmem>>, vector<1x1x8x128xf32>
    %3514 = vector.shape_cast %3513 : vector<1x1x8x128xf32> to vector<8x128xf32>
    %3515 = vector.shape_cast %3512 : vector<8x128xf32> to vector<1x1x8x128xf32>
    tpu.vector_store %arg3[%c11_1308, %c6_1309, %c0_1310, %c0_1311], %3515 {strides = array<i32>} : memref<12x12x8x128xf32, #tpu.memory_space<vmem>>, vector<1x1x8x128xf32>,
    %3516 = arith.addf %279, %2931 : vector<8x128xf32>
    %c11_1312 = arith.constant 11 : index
    %c7_1313 = arith.constant 7 : index
    %c0_1314 = arith.constant 0 : index
    %c0_1315 = arith.constant 0 : index
    %3517 = vector.load %arg3[%c11_1312, %c7_1313, %c0_1314, %c0_1315] : memref<12x12x8x128xf32, #tpu.memory_space<vmem>>, vector<1x1x8x128xf32>
    %3518 = vector.shape_cast %3517 : vector<1x1x8x128xf32> to vector<8x128xf32>
    %3519 = vector.shape_cast %3516 : vector<8x128xf32> to vector<1x1x8x128xf32>
    tpu.vector_store %arg3[%c11_1312, %c7_1313, %c0_1314, %c0_1315], %3519 {strides = array<i32>} : memref<12x12x8x128xf32, #tpu.memory_space<vmem>>, vector<1x1x8x128xf32>,
    %3520 = arith.addf %281, %2938 : vector<8x128xf32>
    %c11_1316 = arith.constant 11 : index
    %c8_1317 = arith.constant 8 : index
    %c0_1318 = arith.constant 0 : index
    %c0_1319 = arith.constant 0 : index
    %3521 = vector.load %arg3[%c11_1316, %c8_1317, %c0_1318, %c0_1319] : memref<12x12x8x128xf32, #tpu.memory_space<vmem>>, vector<1x1x8x128xf32>
    %3522 = vector.shape_cast %3521 : vector<1x1x8x128xf32> to vector<8x128xf32>
    %3523 = vector.shape_cast %3520 : vector<8x128xf32> to vector<1x1x8x128xf32>
    tpu.vector_store %arg3[%c11_1316, %c8_1317, %c0_1318, %c0_1319], %3523 {strides = array<i32>} : memref<12x12x8x128xf32, #tpu.memory_space<vmem>>, vector<1x1x8x128xf32>,
    %3524 = arith.addf %283, %2945 : vector<8x128xf32>
    %c11_1320 = arith.constant 11 : index
    %c9_1321 = arith.constant 9 : index
    %c0_1322 = arith.constant 0 : index
    %c0_1323 = arith.constant 0 : index
    %3525 = vector.load %arg3[%c11_1320, %c9_1321, %c0_1322, %c0_1323] : memref<12x12x8x128xf32, #tpu.memory_space<vmem>>, vector<1x1x8x128xf32>
    %3526 = vector.shape_cast %3525 : vector<1x1x8x128xf32> to vector<8x128xf32>
    %3527 = vector.shape_cast %3524 : vector<8x128xf32> to vector<1x1x8x128xf32>
    tpu.vector_store %arg3[%c11_1320, %c9_1321, %c0_1322, %c0_1323], %3527 {strides = array<i32>} : memref<12x12x8x128xf32, #tpu.memory_space<vmem>>, vector<1x1x8x128xf32>,
    %3528 = arith.addf %285, %2952 : vector<8x128xf32>
    %c11_1324 = arith.constant 11 : index
    %c10_1325 = arith.constant 10 : index
    %c0_1326 = arith.constant 0 : index
    %c0_1327 = arith.constant 0 : index
    %3529 = vector.load %arg3[%c11_1324, %c10_1325, %c0_1326, %c0_1327] : memref<12x12x8x128xf32, #tpu.memory_space<vmem>>, vector<1x1x8x128xf32>
    %3530 = vector.shape_cast %3529 : vector<1x1x8x128xf32> to vector<8x128xf32>
    %3531 = vector.shape_cast %3528 : vector<8x128xf32> to vector<1x1x8x128xf32>
    tpu.vector_store %arg3[%c11_1324, %c10_1325, %c0_1326, %c0_1327], %3531 {strides = array<i32>} : memref<12x12x8x128xf32, #tpu.memory_space<vmem>>, vector<1x1x8x128xf32>,
    %3532 = arith.addf %287, %2959 : vector<8x128xf32>
    %c11_1328 = arith.constant 11 : index
    %c11_1329 = arith.constant 11 : index
    %c0_1330 = arith.constant 0 : index
    %c0_1331 = arith.constant 0 : index
    %3533 = vector.load %arg3[%c11_1328, %c11_1329, %c0_1330, %c0_1331] : memref<12x12x8x128xf32, #tpu.memory_space<vmem>>, vector<1x1x8x128xf32>
    %3534 = vector.shape_cast %3533 : vector<1x1x8x128xf32> to vector<8x128xf32>
    %3535 = vector.shape_cast %3532 : vector<8x128xf32> to vector<1x1x8x128xf32>
    tpu.vector_store %arg3[%c11_1328, %c11_1329, %c0_1330, %c0_1331], %3535 {strides = array<i32>} : memref<12x12x8x128xf32, #tpu.memory_space<vmem>>, vector<1x1x8x128xf32>,
    return
  }
  func.func @transform_0(%arg0: i32) -> (i32, i32, i32, i32) {
    %c0_i32 = arith.constant 0 : i32
    %c0_i32_0 = arith.constant 0 : i32
    %c0_i32_1 = arith.constant 0 : i32
    %c0_i32_2 = arith.constant 0 : i32
    return %c0_i32, %c0_i32_0, %c0_i32_1, %arg0 : i32, i32, i32, i32
  }
  func.func @transform_1(%arg0: i32) -> (i32, i32, i32, i32) {
    %c0_i32 = arith.constant 0 : i32
    %c0_i32_0 = arith.constant 0 : i32
    %c0_i32_1 = arith.constant 0 : i32
    %c0_i32_2 = arith.constant 0 : i32
    return %c0_i32, %c0_i32_0, %c0_i32_1, %arg0 : i32, i32, i32, i32
  }
  func.func @transform_2(%arg0: i32) -> (i32, i32, i32, i32) {
    %c0_i32 = arith.constant 0 : i32
    %c0_i32_0 = arith.constant 0 : i32
    %c0_i32_1 = arith.constant 0 : i32
    %c0_i32_2 = arith.constant 0 : i32
    return %c0_i32, %c0_i32_0, %c0_i32_1, %arg0 : i32, i32, i32, i32
  }
}

</mosaic_0001>

<llo_original>
// kernel: _forward_batched_impl.1
$region0: #{_forward_batched_impl.1}
  #allocation0 [shape = 'u32[]', space=smem, size = 0x4, offset = 0x4, fixed_abs, tag = 'smem constant byte address 0x4 - core index']
  #allocation1 [shape = 'u32[72,128]{1,0:T(1,128)}', space=vmem, size = 0x9000, scoped, tag = 'internal scratch']
  %s0 = inlined_call_operand.vmem [shape: f32[12,12,8,128], index: 0, kind: input, shape index: {}, may-alias: {0,2}]
  %s1 = inlined_call_operand.vmem [shape: f32[12,4,8,128], index: 1, kind: input, shape index: {}]
  %s2 = inlined_call_operand.vmem [shape: f32[12,12,8,128], index: 2, kind: output, shape index: {}, may-alias: {0,2}]
  %s3 = sld [smem:[#allocation0]]
  $region18: #{_forward_batched_impl.1} parent=0
    _
  %s5 = ssub.s32 1, %s3
  %s6 = scalar_select 0, %s5, %s3
  // Predicated region
  $region2: #{_forward_batched_impl.1} parent=0 // pred_check
    _
  $region3: #{_forward_batched_impl.1} parent=0 // pred_check_branch
    %8 = sbr.rel (0) target = $region5
  $region4: #{_forward_batched_impl.1} parent=0 // pred_region
    _
  $region5: #{_forward_batched_impl.1} parent=0 // pred_fallthru
    _
  // Predicated region
  $region6: #{_forward_batched_impl.1} parent=0 // pred_check
    _
  $region7: #{_forward_batched_impl.1} parent=0 // pred_check_branch
    %10 = sbr.rel (0) target = $region9
  $region8: #{_forward_batched_impl.1} parent=0 // pred_region
    _
  $region9: #{_forward_batched_impl.1} parent=0 // pred_fallthru
    _
  %v11 = vld [vmem:[%s0] sm:$0xff]
  %s12 = scalar_lea.vmem %s0, 8
  %v13 = vld [vmem:[%s12] sm:$0xff]
  %s14 = scalar_lea.vmem %s0, 16
  %v15 = vld [vmem:[%s14] sm:$0xff]
  %s16 = scalar_lea.vmem %s0, 24
  %v17 = vld [vmem:[%s16] sm:$0xff]
  %s18 = scalar_lea.vmem %s0, 32
  %v19 = vld [vmem:[%s18] sm:$0xff]
  %s20 = scalar_lea.vmem %s0, 40
  %v21 = vld [vmem:[%s20] sm:$0xff]
  %s22 = scalar_lea.vmem %s0, 48
  %v23 = vld [vmem:[%s22] sm:$0xff]
  %s24 = scalar_lea.vmem %s0, 56
  %v25 = vld [vmem:[%s24] sm:$0xff]
  %s26 = scalar_lea.vmem %s0, 64
  %v27 = vld [vmem:[%s26] sm:$0xff]
  %s28 = scalar_lea.vmem %s0, 72
  %v29 = vld [vmem:[%s28] sm:$0xff]
  %s30 = scalar_lea.vmem %s0, 80
  %v31 = vld [vmem:[%s30] sm:$0xff]
  %s32 = scalar_lea.vmem %s0, 88
  %v33 = vld [vmem:[%s32] sm:$0xff]
  %s34 = scalar_lea.vmem %s0, 96
  %v35 = vld [vmem:[%s34] sm:$0xff]
  %s36 = scalar_lea.vmem %s0, 104
  %v37 = vld [vmem:[%s36] sm:$0xff]
  %s38 = scalar_lea.vmem %s0, 112
  %v39 = vld [vmem:[%s38] sm:$0xff]
  %s40 = scalar_lea.vmem %s0, 120
  %v41 = vld [vmem:[%s40] sm:$0xff]
  %s42 = scalar_lea.vmem %s0, 128
  %v43 = vld [vmem:[%s42] sm:$0xff]
  %s44 = scalar_lea.vmem %s0, 136
  %v45 = vld [vmem:[%s44] sm:$0xff]
  %s46 = scalar_lea.vmem %s0, 144
  %v47 = vld [vmem:[%s46] sm:$0xff]
  %s48 = scalar_lea.vmem %s0, 152
  %v49 = vld [vmem:[%s48] sm:$0xff]
  %s50 = scalar_lea.vmem %s0, 160
  %v51 = vld [vmem:[%s50] sm:$0xff]
  %s52 = scalar_lea.vmem %s0, 168
  %v53 = vld [vmem:[%s52] sm:$0xff]
  %s54 = scalar_lea.vmem %s0, 176
  %v55 = vld [vmem:[%s54] sm:$0xff]
  %s56 = scalar_lea.vmem %s0, 184
  %v57 = vld [vmem:[%s56] sm:$0xff]
  %s58 = scalar_lea.vmem %s0, 192
  %v59 = vld [vmem:[%s58] sm:$0xff]
  %s60 = scalar_lea.vmem %s0, 200
  %v61 = vld [vmem:[%s60] sm:$0xff]
  %s62 = scalar_lea.vmem %s0, 208
  %v63 = vld [vmem:[%s62] sm:$0xff]
  %s64 = scalar_lea.vmem %s0, 216
  %v65 = vld [vmem:[%s64] sm:$0xff]
  %s66 = scalar_lea.vmem %s0, 224
  %v67 = vld [vmem:[%s66] sm:$0xff]
  %s68 = scalar_lea.vmem %s0, 232
  %v69 = vld [vmem:[%s68] sm:$0xff]
  %s70 = scalar_lea.vmem %s0, 240
  %v71 = vld [vmem:[%s70] sm:$0xff]
  %s72 = scalar_lea.vmem %s0, 248
  %v73 = vld [vmem:[%s72] sm:$0xff]
  %s74 = scalar_lea.vmem %s0, 256
  %v75 = vld [vmem:[%s74] sm:$0xff]
  %s76 = scalar_lea.vmem %s0, 264
  %v77 = vld [vmem:[%s76] sm:$0xff]
  %s78 = scalar_lea.vmem %s0, 272
  %v79 = vld [vmem:[%s78] sm:$0xff]
  %s80 = scalar_lea.vmem %s0, 280
  %v81 = vld [vmem:[%s80] sm:$0xff]
  %s82 = scalar_lea.vmem %s0, 288
  %v83 = vld [vmem:[%s82] sm:$0xff]
  %s84 = scalar_lea.vmem %s0, 296
  %v85 = vld [vmem:[%s84] sm:$0xff]
  %s86 = scalar_lea.vmem %s0, 304
  %v87 = vld [vmem:[%s86] sm:$0xff]
  %s88 = scalar_lea.vmem %s0, 312
  %v89 = vld [vmem:[%s88] sm:$0xff]
  %s90 = scalar_lea.vmem %s0, 320
  %v91 = vld [vmem:[%s90] sm:$0xff]
  %s92 = scalar_lea.vmem %s0, 328
  %v93 = vld [vmem:[%s92] sm:$0xff]
  %s94 = scalar_lea.vmem %s0, 336
  %v95 = vld [vmem:[%s94] sm:$0xff]
  %s96 = scalar_lea.vmem %s0, 344
  %v97 = vld [vmem:[%s96] sm:$0xff]
  %s98 = scalar_lea.vmem %s0, 352
  %v99 = vld [vmem:[%s98] sm:$0xff]
  %s100 = scalar_lea.vmem %s0, 360
  %v101 = vld [vmem:[%s100] sm:$0xff]
  %s102 = scalar_lea.vmem %s0, 368
  %v103 = vld [vmem:[%s102] sm:$0xff]
  %s104 = scalar_lea.vmem %s0, 376
  %v105 = vld [vmem:[%s104] sm:$0xff]
  %s106 = scalar_lea.vmem %s0, 384
  %v107 = vld [vmem:[%s106] sm:$0xff]
  %s108 = scalar_lea.vmem %s0, 392
  %v109 = vld [vmem:[%s108] sm:$0xff]
  %s110 = scalar_lea.vmem %s0, 400
  %v111 = vld [vmem:[%s110] sm:$0xff]
  %s112 = scalar_lea.vmem %s0, 408
  %v113 = vld [vmem:[%s112] sm:$0xff]
  %s114 = scalar_lea.vmem %s0, 416
  %v115 = vld [vmem:[%s114] sm:$0xff]
  %s116 = scalar_lea.vmem %s0, 424
  %v117 = vld [vmem:[%s116] sm:$0xff]
  %s118 = scalar_lea.vmem %s0, 432
  %v119 = vld [vmem:[%s118] sm:$0xff]
  %s120 = scalar_lea.vmem %s0, 440
  %v121 = vld [vmem:[%s120] sm:$0xff]
  %s122 = scalar_lea.vmem %s0, 448
  %v123 = vld [vmem:[%s122] sm:$0xff]
  %s124 = scalar_lea.vmem %s0, 456
  %v125 = vld [vmem:[%s124] sm:$0xff]
  %s126 = scalar_lea.vmem %s0, 464
  %v127 = vld [vmem:[%s126] sm:$0xff]
  %s128 = scalar_lea.vmem %s0, 472
  %v129 = vld [vmem:[%s128] sm:$0xff]
  %s130 = scalar_lea.vmem %s0, 480
  %v131 = vld [vmem:[%s130] sm:$0xff]
  %s132 = scalar_lea.vmem %s0, 488
  %v133 = vld [vmem:[%s132] sm:$0xff]
  %s134 = scalar_lea.vmem %s0, 496
  %v135 = vld [vmem:[%s134] sm:$0xff]
  %s136 = scalar_lea.vmem %s0, 504
  %v137 = vld [vmem:[%s136] sm:$0xff]
  %s138 = scalar_lea.vmem %s0, 512
  %v139 = vld [vmem:[%s138] sm:$0xff]
  %s140 = scalar_lea.vmem %s0, 520
  %v141 = vld [vmem:[%s140] sm:$0xff]
  %s142 = scalar_lea.vmem %s0, 528
  %v143 = vld [vmem:[%s142] sm:$0xff]
  %s144 = scalar_lea.vmem %s0, 536
  %v145 = vld [vmem:[%s144] sm:$0xff]
  %s146 = scalar_lea.vmem %s0, 544
  %v147 = vld [vmem:[%s146] sm:$0xff]
  %s148 = scalar_lea.vmem %s0, 552
  %v149 = vld [vmem:[%s148] sm:$0xff]
  %s150 = scalar_lea.vmem %s0, 560
  %v151 = vld [vmem:[%s150] sm:$0xff]
  %s152 = scalar_lea.vmem %s0, 568
  %v153 = vld [vmem:[%s152] sm:$0xff]
  %s154 = scalar_lea.vmem %s0, 576
  %v155 = vld [vmem:[%s154] sm:$0xff]
  %s156 = scalar_lea.vmem %s0, 584
  %v157 = vld [vmem:[%s156] sm:$0xff]
  %s158 = scalar_lea.vmem %s0, 592
  %v159 = vld [vmem:[%s158] sm:$0xff]
  %s160 = scalar_lea.vmem %s0, 600
  %v161 = vld [vmem:[%s160] sm:$0xff]
  %s162 = scalar_lea.vmem %s0, 608
  %v163 = vld [vmem:[%s162] sm:$0xff]
  %s164 = scalar_lea.vmem %s0, 616
  %v165 = vld [vmem:[%s164] sm:$0xff]
  %s166 = scalar_lea.vmem %s0, 624
  %v167 = vld [vmem:[%s166] sm:$0xff]
  %s168 = scalar_lea.vmem %s0, 632
  %v169 = vld [vmem:[%s168] sm:$0xff]
  %s170 = scalar_lea.vmem %s0, 640
  %v171 = vld [vmem:[%s170] sm:$0xff]
  %s172 = scalar_lea.vmem %s0, 648
  %v173 = vld [vmem:[%s172] sm:$0xff]
  %s174 = scalar_lea.vmem %s0, 656
  %v175 = vld [vmem:[%s174] sm:$0xff]
  %s176 = scalar_lea.vmem %s0, 664
  %v177 = vld [vmem:[%s176] sm:$0xff]
  %s178 = scalar_lea.vmem %s0, 672
  %v179 = vld [vmem:[%s178] sm:$0xff]
  %s180 = scalar_lea.vmem %s0, 680
  %v181 = vld [vmem:[%s180] sm:$0xff]
  %s182 = scalar_lea.vmem %s0, 688
  %v183 = vld [vmem:[%s182] sm:$0xff]
  %s184 = scalar_lea.vmem %s0, 696
  %v185 = vld [vmem:[%s184] sm:$0xff]
  %s186 = scalar_lea.vmem %s0, 704
  %v187 = vld [vmem:[%s186] sm:$0xff]
  %s188 = scalar_lea.vmem %s0, 712
  %v189 = vld [vmem:[%s188] sm:$0xff]
  %s190 = scalar_lea.vmem %s0, 720
  %v191 = vld [vmem:[%s190] sm:$0xff]
  %s192 = scalar_lea.vmem %s0, 728
  %v193 = vld [vmem:[%s192] sm:$0xff]
  %s194 = scalar_lea.vmem %s0, 736
  %v195 = vld [vmem:[%s194] sm:$0xff]
  %s196 = scalar_lea.vmem %s0, 744
  %v197 = vld [vmem:[%s196] sm:$0xff]
  %s198 = scalar_lea.vmem %s0, 752
  %v199 = vld [vmem:[%s198] sm:$0xff]
  %s200 = scalar_lea.vmem %s0, 760
  %v201 = vld [vmem:[%s200] sm:$0xff]
  %s202 = scalar_lea.vmem %s0, 768
  %v203 = vld [vmem:[%s202] sm:$0xff]
  %s204 = scalar_lea.vmem %s0, 776
  %v205 = vld [vmem:[%s204] sm:$0xff]
  %s206 = scalar_lea.vmem %s0, 784
  %v207 = vld [vmem:[%s206] sm:$0xff]
  %s208 = scalar_lea.vmem %s0, 792
  %v209 = vld [vmem:[%s208] sm:$0xff]
  %s210 = scalar_lea.vmem %s0, 800
  %v211 = vld [vmem:[%s210] sm:$0xff]
  %s212 = scalar_lea.vmem %s0, 808
  %v213 = vld [vmem:[%s212] sm:$0xff]
  %s214 = scalar_lea.vmem %s0, 816
  %v215 = vld [vmem:[%s214] sm:$0xff]
  %s216 = scalar_lea.vmem %s0, 824
  %v217 = vld [vmem:[%s216] sm:$0xff]
  %s218 = scalar_lea.vmem %s0, 832
  %v219 = vld [vmem:[%s218] sm:$0xff]
  %s220 = scalar_lea.vmem %s0, 840
  %v221 = vld [vmem:[%s220] sm:$0xff]
  %s222 = scalar_lea.vmem %s0, 848
  %v223 = vld [vmem:[%s222] sm:$0xff]
  %s224 = scalar_lea.vmem %s0, 856
  %v225 = vld [vmem:[%s224] sm:$0xff]
  %s226 = scalar_lea.vmem %s0, 864
  %v227 = vld [vmem:[%s226] sm:$0xff]
  %s228 = scalar_lea.vmem %s0, 872
  %v229 = vld [vmem:[%s228] sm:$0xff]
  %s230 = scalar_lea.vmem %s0, 880
  %v231 = vld [vmem:[%s230] sm:$0xff]
  %s232 = scalar_lea.vmem %s0, 888
  %v233 = vld [vmem:[%s232] sm:$0xff]
  %s234 = scalar_lea.vmem %s0, 896
  %v235 = vld [vmem:[%s234] sm:$0xff]
  %s236 = scalar_lea.vmem %s0, 904
  %v237 = vld [vmem:[%s236] sm:$0xff]
  %s238 = scalar_lea.vmem %s0, 912
  %v239 = vld [vmem:[%s238] sm:$0xff]
  %s240 = scalar_lea.vmem %s0, 920
  %v241 = vld [vmem:[%s240] sm:$0xff]
  %s242 = scalar_lea.vmem %s0, 928
  %v243 = vld [vmem:[%s242] sm:$0xff]
  %s244 = scalar_lea.vmem %s0, 936
  %v245 = vld [vmem:[%s244] sm:$0xff]
  %s246 = scalar_lea.vmem %s0, 944
  %v247 = vld [vmem:[%s246] sm:$0xff]
  %s248 = scalar_lea.vmem %s0, 952
  %v249 = vld [vmem:[%s248] sm:$0xff]
  %s250 = scalar_lea.vmem %s0, 960
  %v251 = vld [vmem:[%s250] sm:$0xff]
  %s252 = scalar_lea.vmem %s0, 968
  %v253 = vld [vmem:[%s252] sm:$0xff]
  %s254 = scalar_lea.vmem %s0, 976
  %v255 = vld [vmem:[%s254] sm:$0xff]
  %s256 = scalar_lea.vmem %s0, 984
  %v257 = vld [vmem:[%s256] sm:$0xff]
  %s258 = scalar_lea.vmem %s0, 992
  %v259 = vld [vmem:[%s258] sm:$0xff]
  %s260 = scalar_lea.vmem %s0, 1000
  %v261 = vld [vmem:[%s260] sm:$0xff]
  %s262 = scalar_lea.vmem %s0, 1008
  %v263 = vld [vmem:[%s262] sm:$0xff]
  %s264 = scalar_lea.vmem %s0, 1016
  %v265 = vld [vmem:[%s264] sm:$0xff]
  %s266 = scalar_lea.vmem %s0, 1024
  %v267 = vld [vmem:[%s266] sm:$0xff]
  %s268 = scalar_lea.vmem %s0, 1032
  %v269 = vld [vmem:[%s268] sm:$0xff]
  %s270 = scalar_lea.vmem %s0, 1040
  %v271 = vld [vmem:[%s270] sm:$0xff]
  %s272 = scalar_lea.vmem %s0, 1048
  %v273 = vld [vmem:[%s272] sm:$0xff]
  %s274 = scalar_lea.vmem %s0, 1056
  %v275 = vld [vmem:[%s274] sm:$0xff]
  %s276 = scalar_lea.vmem %s0, 1064
  %v277 = vld [vmem:[%s276] sm:$0xff]
  %s278 = scalar_lea.vmem %s0, 1072
  %v279 = vld [vmem:[%s278] sm:$0xff]
  %s280 = scalar_lea.vmem %s0, 1080
  %v281 = vld [vmem:[%s280] sm:$0xff]
  %s282 = scalar_lea.vmem %s0, 1088
  %v283 = vld [vmem:[%s282] sm:$0xff]
  %s284 = scalar_lea.vmem %s0, 1096
  %v285 = vld [vmem:[%s284] sm:$0xff]
  %s286 = scalar_lea.vmem %s0, 1104
  %v287 = vld [vmem:[%s286] sm:$0xff]
  %s288 = scalar_lea.vmem %s0, 1112
  %v289 = vld [vmem:[%s288] sm:$0xff]
  %s290 = scalar_lea.vmem %s0, 1120
  %v291 = vld [vmem:[%s290] sm:$0xff]
  %s292 = scalar_lea.vmem %s0, 1128
  %v293 = vld [vmem:[%s292] sm:$0xff]
  %s294 = scalar_lea.vmem %s0, 1136
  %v295 = vld [vmem:[%s294] sm:$0xff]
  %s296 = scalar_lea.vmem %s0, 1144
  %v297 = vld [vmem:[%s296] sm:$0xff]
  %v298 = vld [vmem:[%s1] sm:$0xff]
  %s299 = scalar_lea.vmem %s1, 8
  %v300 = vld [vmem:[%s299] sm:$0xff]
  %s301 = scalar_lea.vmem %s1, 16
  %v302 = vld [vmem:[%s301] sm:$0xff]
  %s303 = scalar_lea.vmem %s1, 24
  %v304 = vld [vmem:[%s303] sm:$0xff]
  %s305 = scalar_lea.vmem %s1, 32
  %v306 = vld [vmem:[%s305] sm:$0xff]
  %s307 = scalar_lea.vmem %s1, 40
  %v308 = vld [vmem:[%s307] sm:$0xff]
  %s309 = scalar_lea.vmem %s1, 48
  %v310 = vld [vmem:[%s309] sm:$0xff]
  %s311 = scalar_lea.vmem %s1, 56
  %v312 = vld [vmem:[%s311] sm:$0xff]
  %s313 = scalar_lea.vmem %s1, 64
  %v314 = vld [vmem:[%s313] sm:$0xff]
  %s315 = scalar_lea.vmem %s1, 72
  %v316 = vld [vmem:[%s315] sm:$0xff]
  %s317 = scalar_lea.vmem %s1, 80
  %v318 = vld [vmem:[%s317] sm:$0xff]
  %s319 = scalar_lea.vmem %s1, 88
  %v320 = vld [vmem:[%s319] sm:$0xff]
  %s321 = scalar_lea.vmem %s1, 96
  %v322 = vld [vmem:[%s321] sm:$0xff]
  %s323 = scalar_lea.vmem %s1, 104
  %v324 = vld [vmem:[%s323] sm:$0xff]
  %s325 = scalar_lea.vmem %s1, 112
  %v326 = vld [vmem:[%s325] sm:$0xff]
  %s327 = scalar_lea.vmem %s1, 120
  %v328 = vld [vmem:[%s327] sm:$0xff]
  %s329 = scalar_lea.vmem %s1, 128
  %v330 = vld [vmem:[%s329] sm:$0xff]
  %s331 = scalar_lea.vmem %s1, 136
  %v332 = vld [vmem:[%s331] sm:$0xff]
  %s333 = scalar_lea.vmem %s1, 144
  %v334 = vld [vmem:[%s333] sm:$0xff]
  %s335 = scalar_lea.vmem %s1, 152
  %v336 = vld [vmem:[%s335] sm:$0xff]
  %s337 = scalar_lea.vmem %s1, 160
  %v338 = vld [vmem:[%s337] sm:$0xff]
  %s339 = scalar_lea.vmem %s1, 168
  %v340 = vld [vmem:[%s339] sm:$0xff]
  %s341 = scalar_lea.vmem %s1, 176
  %v342 = vld [vmem:[%s341] sm:$0xff]
  %s343 = scalar_lea.vmem %s1, 184
  %v344 = vld [vmem:[%s343] sm:$0xff]
  %s345 = scalar_lea.vmem %s1, 192
  %v346 = vld [vmem:[%s345] sm:$0xff]
  %s347 = scalar_lea.vmem %s1, 200
  %v348 = vld [vmem:[%s347] sm:$0xff]
  %s349 = scalar_lea.vmem %s1, 208
  %v350 = vld [vmem:[%s349] sm:$0xff]
  %s351 = scalar_lea.vmem %s1, 216
  %v352 = vld [vmem:[%s351] sm:$0xff]
  %s353 = scalar_lea.vmem %s1, 224
  %v354 = vld [vmem:[%s353] sm:$0xff]
  %s355 = scalar_lea.vmem %s1, 232
  %v356 = vld [vmem:[%s355] sm:$0xff]
  %s357 = scalar_lea.vmem %s1, 240
  %v358 = vld [vmem:[%s357] sm:$0xff]
  %s359 = scalar_lea.vmem %s1, 248
  %v360 = vld [vmem:[%s359] sm:$0xff]
  %s361 = scalar_lea.vmem %s1, 256
  %v362 = vld [vmem:[%s361] sm:$0xff]
  %s363 = scalar_lea.vmem %s1, 264
  %v364 = vld [vmem:[%s363] sm:$0xff]
  %s365 = scalar_lea.vmem %s1, 272
  %v366 = vld [vmem:[%s365] sm:$0xff]
  %s367 = scalar_lea.vmem %s1, 280
  %v368 = vld [vmem:[%s367] sm:$0xff]
  %s369 = scalar_lea.vmem %s1, 288
  %v370 = vld [vmem:[%s369] sm:$0xff]
  %s371 = scalar_lea.vmem %s1, 296
  %v372 = vld [vmem:[%s371] sm:$0xff]
  %s373 = scalar_lea.vmem %s1, 304
  %v374 = vld [vmem:[%s373] sm:$0xff]
  %s375 = scalar_lea.vmem %s1, 312
  %v376 = vld [vmem:[%s375] sm:$0xff]
  %s377 = scalar_lea.vmem %s1, 320
  %v378 = vld [vmem:[%s377] sm:$0xff]
  %s379 = scalar_lea.vmem %s1, 328
  %v380 = vld [vmem:[%s379] sm:$0xff]
  %s381 = scalar_lea.vmem %s1, 336
  %v382 = vld [vmem:[%s381] sm:$0xff]
  %s383 = scalar_lea.vmem %s1, 344
  %v384 = vld [vmem:[%s383] sm:$0xff]
  %s385 = scalar_lea.vmem %s1, 352
  %v386 = vld [vmem:[%s385] sm:$0xff]
  %s387 = scalar_lea.vmem %s1, 360
  %v388 = vld [vmem:[%s387] sm:$0xff]
  %s389 = scalar_lea.vmem %s1, 368
  %v390 = vld [vmem:[%s389] sm:$0xff]
  %s391 = scalar_lea.vmem %s1, 376
  %v392 = vld [vmem:[%s391] sm:$0xff]
  %v393 = vmul.f32 %v11, %v298
  %v394 = vmul.f32 %v13, %v306
  %v395 = vadd.f32 %v393, %v394
  %v396 = vmul.f32 %v15, %v314
  %v397 = vadd.f32 %v395, %v396
  %v398 = vmul.f32 %v17, %v322
  %v399 = vadd.f32 %v397, %v398
  %v400 = vmul.f32 %v19, %v330
  %v401 = vadd.f32 %v399, %v400
  %v402 = vmul.f32 %v21, %v338
  %v403 = vadd.f32 %v401, %v402
  %v404 = vmul.f32 %v23, %v346
  %v405 = vadd.f32 %v403, %v404
  %v406 = vmul.f32 %v25, %v354
  %v407 = vadd.f32 %v405, %v406
  %v408 = vmul.f32 %v27, %v362
  %v409 = vadd.f32 %v407, %v408
  %v410 = vmul.f32 %v29, %v370
  %v411 = vadd.f32 %v409, %v410
  %v412 = vmul.f32 %v31, %v378
  %v413 = vadd.f32 %v411, %v412
  %v414 = vmul.f32 %v33, %v386
  %v415 = vadd.f32 %v413, %v414
  %v416 = vmul.f32 %v11, %v300
  %v417 = vmul.f32 %v13, %v308
  %v418 = vadd.f32 %v416, %v417
  %v419 = vmul.f32 %v15, %v316
  %v420 = vadd.f32 %v418, %v419
  %v421 = vmul.f32 %v17, %v324
  %v422 = vadd.f32 %v420, %v421
  %v423 = vmul.f32 %v19, %v332
  %v424 = vadd.f32 %v422, %v423
  %v425 = vmul.f32 %v21, %v340
  %v426 = vadd.f32 %v424, %v425
  %v427 = vmul.f32 %v23, %v348
  %v428 = vadd.f32 %v426, %v427
  %v429 = vmul.f32 %v25, %v356
  %v430 = vadd.f32 %v428, %v429
  %v431 = vmul.f32 %v27, %v364
  %v432 = vadd.f32 %v430, %v431
  %v433 = vmul.f32 %v29, %v372
  %v434 = vadd.f32 %v432, %v433
  %v435 = vmul.f32 %v31, %v380
  %v436 = vadd.f32 %v434, %v435
  %v437 = vmul.f32 %v33, %v388
  %v438 = vadd.f32 %v436, %v437
  %v439 = vmul.f32 %v11, %v302
  %v440 = vmul.f32 %v13, %v310
  %v441 = vadd.f32 %v439, %v440
  %v442 = vmul.f32 %v15, %v318
  %v443 = vadd.f32 %v441, %v442
  %v444 = vmul.f32 %v17, %v326
  %v445 = vadd.f32 %v443, %v444
  %v446 = vmul.f32 %v19, %v334
  %v447 = vadd.f32 %v445, %v446
  %v448 = vmul.f32 %v21, %v342
  %v449 = vadd.f32 %v447, %v448
  %v450 = vmul.f32 %v23, %v350
  %v451 = vadd.f32 %v449, %v450
  %v452 = vmul.f32 %v25, %v358
  %v453 = vadd.f32 %v451, %v452
  %v454 = vmul.f32 %v27, %v366
  %v455 = vadd.f32 %v453, %v454
  %v456 = vmul.f32 %v29, %v374
  %v457 = vadd.f32 %v455, %v456
  %v458 = vmul.f32 %v31, %v382
  %v459 = vadd.f32 %v457, %v458
  %v460 = vmul.f32 %v33, %v390
  %v461 = vadd.f32 %v459, %v460
  %v462 = vmul.f32 %v11, %v304
  %v463 = vmul.f32 %v13, %v312
  %v464 = vadd.f32 %v462, %v463
  %v465 = vmul.f32 %v15, %v320
  %v466 = vadd.f32 %v464, %v465
  %v467 = vmul.f32 %v17, %v328
  %v468 = vadd.f32 %v466, %v467
  %v469 = vmul.f32 %v19, %v336
  %v470 = vadd.f32 %v468, %v469
  %v471 = vmul.f32 %v21, %v344
  %v472 = vadd.f32 %v470, %v471
  %v473 = vmul.f32 %v23, %v352
  %v474 = vadd.f32 %v472, %v473
  %v475 = vmul.f32 %v25, %v360
  %v476 = vadd.f32 %v474, %v475
  %v477 = vmul.f32 %v27, %v368
  %v478 = vadd.f32 %v476, %v477
  %v479 = vmul.f32 %v29, %v376
  %v480 = vadd.f32 %v478, %v479
  %v481 = vmul.f32 %v31, %v384
  %v482 = vadd.f32 %v480, %v481
  %v483 = vmul.f32 %v33, %v392
  %v484 = vadd.f32 %v482, %v483
  %v485 = vmul.f32 %v35, %v298
  %v486 = vmul.f32 %v37, %v306
  %v487 = vadd.f32 %v485, %v486
  %v488 = vmul.f32 %v39, %v314
  %v489 = vadd.f32 %v487, %v488
  %v490 = vmul.f32 %v41, %v322
  %v491 = vadd.f32 %v489, %v490
  %v492 = vmul.f32 %v43, %v330
  %v493 = vadd.f32 %v491, %v492
  %v494 = vmul.f32 %v45, %v338
  %v495 = vadd.f32 %v493, %v494
  %v496 = vmul.f32 %v47, %v346
  %v497 = vadd.f32 %v495, %v496
  %v498 = vmul.f32 %v49, %v354
  %v499 = vadd.f32 %v497, %v498
  %v500 = vmul.f32 %v51, %v362
  %v501 = vadd.f32 %v499, %v500
  %v502 = vmul.f32 %v53, %v370
  %v503 = vadd.f32 %v501, %v502
  %v504 = vmul.f32 %v55, %v378
  %v505 = vadd.f32 %v503, %v504
  %v506 = vmul.f32 %v57, %v386
  %v507 = vadd.f32 %v505, %v506
  %v508 = vmul.f32 %v35, %v300
  %v509 = vmul.f32 %v37, %v308
  %v510 = vadd.f32 %v508, %v509
  %v511 = vmul.f32 %v39, %v316
  %v512 = vadd.f32 %v510, %v511
  %v513 = vmul.f32 %v41, %v324
  %v514 = vadd.f32 %v512, %v513
  %v515 = vmul.f32 %v43, %v332
  %v516 = vadd.f32 %v514, %v515
  %v517 = vmul.f32 %v45, %v340
  %v518 = vadd.f32 %v516, %v517
  %v519 = vmul.f32 %v47, %v348
  %v520 = vadd.f32 %v518, %v519
  %v521 = vmul.f32 %v49, %v356
  %v522 = vadd.f32 %v520, %v521
  %v523 = vmul.f32 %v51, %v364
  %v524 = vadd.f32 %v522, %v523
  %v525 = vmul.f32 %v53, %v372
  %v526 = vadd.f32 %v524, %v525
  %v527 = vmul.f32 %v55, %v380
  %v528 = vadd.f32 %v526, %v527
  %v529 = vmul.f32 %v57, %v388
  %v530 = vadd.f32 %v528, %v529
  %v531 = vmul.f32 %v35, %v302
  %v532 = vmul.f32 %v37, %v310
  %v533 = vadd.f32 %v531, %v532
  %v534 = vmul.f32 %v39, %v318
  %v535 = vadd.f32 %v533, %v534
  %v536 = vmul.f32 %v41, %v326
  %v537 = vadd.f32 %v535, %v536
  %v538 = vmul.f32 %v43, %v334
  %v539 = vadd.f32 %v537, %v538
  %v540 = vmul.f32 %v45, %v342
  %v541 = vadd.f32 %v539, %v540
  %v542 = vmul.f32 %v47, %v350
  %v543 = vadd.f32 %v541, %v542
  %v544 = vmul.f32 %v49, %v358
  %v545 = vadd.f32 %v543, %v544
  %v546 = vmul.f32 %v51, %v366
  %v547 = vadd.f32 %v545, %v546
  %v548 = vmul.f32 %v53, %v374
  %v549 = vadd.f32 %v547, %v548
  %v550 = vmul.f32 %v55, %v382
  %v551 = vadd.f32 %v549, %v550
  %v552 = vmul.f32 %v57, %v390
  %v553 = vadd.f32 %v551, %v552
  %v554 = vmul.f32 %v35, %v304
  %v555 = vmul.f32 %v37, %v312
  %v556 = vadd.f32 %v554, %v555
  %v557 = vmul.f32 %v39, %v320
  %v558 = vadd.f32 %v556, %v557
  %v559 = vmul.f32 %v41, %v328
  %v560 = vadd.f32 %v558, %v559
  %v561 = vmul.f32 %v43, %v336
  %v562 = vadd.f32 %v560, %v561
  %v563 = vmul.f32 %v45, %v344
  %v564 = vadd.f32 %v562, %v563
  %v565 = vmul.f32 %v47, %v352
  %v566 = vadd.f32 %v564, %v565
  %v567 = vmul.f32 %v49, %v360
  %v568 = vadd.f32 %v566, %v567
  %v569 = vmul.f32 %v51, %v368
  %v570 = vadd.f32 %v568, %v569
  %v571 = vmul.f32 %v53, %v376
  %v572 = vadd.f32 %v570, %v571
  %v573 = vmul.f32 %v55, %v384
  %v574 = vadd.f32 %v572, %v573
  %v575 = vmul.f32 %v57, %v392
  %v576 = vadd.f32 %v574, %v575
  %v577 = vmul.f32 %v59, %v298
  %v578 = vmul.f32 %v61, %v306
  %v579 = vadd.f32 %v577, %v578
  %v580 = vmul.f32 %v63, %v314
  %v581 = vadd.f32 %v579, %v580
  %v582 = vmul.f32 %v65, %v322
  %v583 = vadd.f32 %v581, %v582
  %v584 = vmul.f32 %v67, %v330
  %v585 = vadd.f32 %v583, %v584
  %v586 = vmul.f32 %v69, %v338
  %v587 = vadd.f32 %v585, %v586
  %v588 = vmul.f32 %v71, %v346
  %v589 = vadd.f32 %v587, %v588
  %v590 = vmul.f32 %v73, %v354
  %v591 = vadd.f32 %v589, %v590
  %v592 = vmul.f32 %v75, %v362
  %v593 = vadd.f32 %v591, %v592
  %v594 = vmul.f32 %v77, %v370
  %v595 = vadd.f32 %v593, %v594
  %v596 = vmul.f32 %v79, %v378
  %v597 = vadd.f32 %v595, %v596
  %v598 = vmul.f32 %v81, %v386
  %v599 = vadd.f32 %v597, %v598
  %v600 = vmul.f32 %v59, %v300
  %v601 = vmul.f32 %v61, %v308
  %v602 = vadd.f32 %v600, %v601
  %v603 = vmul.f32 %v63, %v316
  %v604 = vadd.f32 %v602, %v603
  %v605 = vmul.f32 %v65, %v324
  %v606 = vadd.f32 %v604, %v605
  %v607 = vmul.f32 %v67, %v332
  %v608 = vadd.f32 %v606, %v607
  %v609 = vmul.f32 %v69, %v340
  %v610 = vadd.f32 %v608, %v609
  %v611 = vmul.f32 %v71, %v348
  %v612 = vadd.f32 %v610, %v611
  %v613 = vmul.f32 %v73, %v356
  %v614 = vadd.f32 %v612, %v613
  %v615 = vmul.f32 %v75, %v364
  %v616 = vadd.f32 %v614, %v615
  %v617 = vmul.f32 %v77, %v372
  %v618 = vadd.f32 %v616, %v617
  %v619 = vmul.f32 %v79, %v380
  %v620 = vadd.f32 %v618, %v619
  %v621 = vmul.f32 %v81, %v388
  %v622 = vadd.f32 %v620, %v621
  %v623 = vmul.f32 %v59, %v302
  %v624 = vmul.f32 %v61, %v310
  %v625 = vadd.f32 %v623, %v624
  %v626 = vmul.f32 %v63, %v318
  %v627 = vadd.f32 %v625, %v626
  %v628 = vmul.f32 %v65, %v326
  %v629 = vadd.f32 %v627, %v628
  %v630 = vmul.f32 %v67, %v334
  %v631 = vadd.f32 %v629, %v630
  %v632 = vmul.f32 %v69, %v342
  %v633 = vadd.f32 %v631, %v632
  %v634 = vmul.f32 %v71, %v350
  %v635 = vadd.f32 %v633, %v634
  %v636 = vmul.f32 %v73, %v358
  %v637 = vadd.f32 %v635, %v636
  %v638 = vmul.f32 %v75, %v366
  %v639 = vadd.f32 %v637, %v638
  %v640 = vmul.f32 %v77, %v374
  %v641 = vadd.f32 %v639, %v640
  %v642 = vmul.f32 %v79, %v382
  %v643 = vadd.f32 %v641, %v642
  %v644 = vmul.f32 %v81, %v390
  %v645 = vadd.f32 %v643, %v644
  %v646 = vmul.f32 %v59, %v304
  %v647 = vmul.f32 %v61, %v312
  %v648 = vadd.f32 %v646, %v647
  %v649 = vmul.f32 %v63, %v320
  %v650 = vadd.f32 %v648, %v649
  %v651 = vmul.f32 %v65, %v328
  %v652 = vadd.f32 %v650, %v651
  %v653 = vmul.f32 %v67, %v336
  %v654 = vadd.f32 %v652, %v653
  %v655 = vmul.f32 %v69, %v344
  %v656 = vadd.f32 %v654, %v655
  %v657 = vmul.f32 %v71, %v352
  %v658 = vadd.f32 %v656, %v657
  %v659 = vmul.f32 %v73, %v360
  %v660 = vadd.f32 %v658, %v659
  %v661 = vmul.f32 %v75, %v368
  %v662 = vadd.f32 %v660, %v661
  %v663 = vmul.f32 %v77, %v376
  %v664 = vadd.f32 %v662, %v663
  %v665 = vmul.f32 %v79, %v384
  %v666 = vadd.f32 %v664, %v665
  %v667 = vmul.f32 %v81, %v392
  %v668 = vadd.f32 %v666, %v667
  %v669 = vmul.f32 %v83, %v298
  %v670 = vmul.f32 %v85, %v306
  %v671 = vadd.f32 %v669, %v670
  %v672 = vmul.f32 %v87, %v314
  %v673 = vadd.f32 %v671, %v672
  %v674 = vmul.f32 %v89, %v322
  %v675 = vadd.f32 %v673, %v674
  %v676 = vmul.f32 %v91, %v330
  %v677 = vadd.f32 %v675, %v676
  %v678 = vmul.f32 %v93, %v338
  %v679 = vadd.f32 %v677, %v678
  %v680 = vmul.f32 %v95, %v346
  %v681 = vadd.f32 %v679, %v680
  %v682 = vmul.f32 %v97, %v354
  %v683 = vadd.f32 %v681, %v682
  %v684 = vmul.f32 %v99, %v362
  %v685 = vadd.f32 %v683, %v684
  %v686 = vmul.f32 %v101, %v370
  %v687 = vadd.f32 %v685, %v686
  %v688 = vmul.f32 %v103, %v378
  %v689 = vadd.f32 %v687, %v688
  %v690 = vmul.f32 %v105, %v386
  %v691 = vadd.f32 %v689, %v690
  %v692 = vmul.f32 %v83, %v300
  %v693 = vmul.f32 %v85, %v308
  %v694 = vadd.f32 %v692, %v693
  %v695 = vmul.f32 %v87, %v316
  %v696 = vadd.f32 %v694, %v695
  %v697 = vmul.f32 %v89, %v324
  %v698 = vadd.f32 %v696, %v697
  %v699 = vmul.f32 %v91, %v332
  %v700 = vadd.f32 %v698, %v699
  %v701 = vmul.f32 %v93, %v340
  %v702 = vadd.f32 %v700, %v701
  %v703 = vmul.f32 %v95, %v348
  %v704 = vadd.f32 %v702, %v703
  %v705 = vmul.f32 %v97, %v356
  %v706 = vadd.f32 %v704, %v705
  %v707 = vmul.f32 %v99, %v364
  %v708 = vadd.f32 %v706, %v707
  %v709 = vmul.f32 %v101, %v372
  %v710 = vadd.f32 %v708, %v709
  %v711 = vmul.f32 %v103, %v380
  %v712 = vadd.f32 %v710, %v711
  %v713 = vmul.f32 %v105, %v388
  %v714 = vadd.f32 %v712, %v713
  %v715 = vmul.f32 %v83, %v302
  %v716 = vmul.f32 %v85, %v310
  %v717 = vadd.f32 %v715, %v716
  %v718 = vmul.f32 %v87, %v318
  %v719 = vadd.f32 %v717, %v718
  %v720 = vmul.f32 %v89, %v326
  %v721 = vadd.f32 %v719, %v720
  %v722 = vmul.f32 %v91, %v334
  %v723 = vadd.f32 %v721, %v722
  %v724 = vmul.f32 %v93, %v342
  %v725 = vadd.f32 %v723, %v724
  %v726 = vmul.f32 %v95, %v350
  %v727 = vadd.f32 %v725, %v726
  %v728 = vmul.f32 %v97, %v358
  %v729 = vadd.f32 %v727, %v728
  %v730 = vmul.f32 %v99, %v366
  %v731 = vadd.f32 %v729, %v730
  %v732 = vmul.f32 %v101, %v374
  %v733 = vadd.f32 %v731, %v732
  %v734 = vmul.f32 %v103, %v382
  %v735 = vadd.f32 %v733, %v734
  %v736 = vmul.f32 %v105, %v390
  %v737 = vadd.f32 %v735, %v736
  %v738 = vmul.f32 %v83, %v304
  %v739 = vmul.f32 %v85, %v312
  %v740 = vadd.f32 %v738, %v739
  %v741 = vmul.f32 %v87, %v320
  %v742 = vadd.f32 %v740, %v741
  %v743 = vmul.f32 %v89, %v328
  %v744 = vadd.f32 %v742, %v743
  %v745 = vmul.f32 %v91, %v336
  %v746 = vadd.f32 %v744, %v745
  %v747 = vmul.f32 %v93, %v344
  %v748 = vadd.f32 %v746, %v747
  %v749 = vmul.f32 %v95, %v352
  %v750 = vadd.f32 %v748, %v749
  %v751 = vmul.f32 %v97, %v360
  %v752 = vadd.f32 %v750, %v751
  %v753 = vmul.f32 %v99, %v368
  %v754 = vadd.f32 %v752, %v753
  %v755 = vmul.f32 %v101, %v376
  %v756 = vadd.f32 %v754, %v755
  %v757 = vmul.f32 %v103, %v384
  %v758 = vadd.f32 %v756, %v757
  %v759 = vmul.f32 %v105, %v392
  %v760 = vadd.f32 %v758, %v759
  %v761 = vmul.f32 %v107, %v298
  %v762 = vmul.f32 %v109, %v306
  %v763 = vadd.f32 %v761, %v762
  %v764 = vmul.f32 %v111, %v314
  %v765 = vadd.f32 %v763, %v764
  %v766 = vmul.f32 %v113, %v322
  %v767 = vadd.f32 %v765, %v766
  %v768 = vmul.f32 %v115, %v330
  %v769 = vadd.f32 %v767, %v768
  %v770 = vmul.f32 %v117, %v338
  %v771 = vadd.f32 %v769, %v770
  %v772 = vmul.f32 %v119, %v346
  %v773 = vadd.f32 %v771, %v772
  %v774 = vmul.f32 %v121, %v354
  %v775 = vadd.f32 %v773, %v774
  %v776 = vmul.f32 %v123, %v362
  %v777 = vadd.f32 %v775, %v776
  %v778 = vmul.f32 %v125, %v370
  %v779 = vadd.f32 %v777, %v778
  %v780 = vmul.f32 %v127, %v378
  %v781 = vadd.f32 %v779, %v780
  %v782 = vmul.f32 %v129, %v386
  %v783 = vadd.f32 %v781, %v782
  %v784 = vmul.f32 %v107, %v300
  %v785 = vmul.f32 %v109, %v308
  %v786 = vadd.f32 %v784, %v785
  %v787 = vmul.f32 %v111, %v316
  %v788 = vadd.f32 %v786, %v787
  %v789 = vmul.f32 %v113, %v324
  %v790 = vadd.f32 %v788, %v789
  %v791 = vmul.f32 %v115, %v332
  %v792 = vadd.f32 %v790, %v791
  %v793 = vmul.f32 %v117, %v340
  %v794 = vadd.f32 %v792, %v793
  %v795 = vmul.f32 %v119, %v348
  %v796 = vadd.f32 %v794, %v795
  %v797 = vmul.f32 %v121, %v356
  %v798 = vadd.f32 %v796, %v797
  %v799 = vmul.f32 %v123, %v364
  %v800 = vadd.f32 %v798, %v799
  %v801 = vmul.f32 %v125, %v372
  %v802 = vadd.f32 %v800, %v801
  %v803 = vmul.f32 %v127, %v380
  %v804 = vadd.f32 %v802, %v803
  %v805 = vmul.f32 %v129, %v388
  %v806 = vadd.f32 %v804, %v805
  %v807 = vmul.f32 %v107, %v302
  %v808 = vmul.f32 %v109, %v310
  %v809 = vadd.f32 %v807, %v808
  %v810 = vmul.f32 %v111, %v318
  %v811 = vadd.f32 %v809, %v810
  %v812 = vmul.f32 %v113, %v326
  %v813 = vadd.f32 %v811, %v812
  %v814 = vmul.f32 %v115, %v334
  %v815 = vadd.f32 %v813, %v814
  %v816 = vmul.f32 %v117, %v342
  %v817 = vadd.f32 %v815, %v816
  %v818 = vmul.f32 %v119, %v350
  %v819 = vadd.f32 %v817, %v818
  %v820 = vmul.f32 %v121, %v358
  %v821 = vadd.f32 %v819, %v820
  %v822 = vmul.f32 %v123, %v366
  %v823 = vadd.f32 %v821, %v822
  %v824 = vmul.f32 %v125, %v374
  %v825 = vadd.f32 %v823, %v824
  %v826 = vmul.f32 %v127, %v382
  %v827 = vadd.f32 %v825, %v826
  %v828 = vmul.f32 %v129, %v390
  %v829 = vadd.f32 %v827, %v828
  %v830 = vmul.f32 %v107, %v304
  %v831 = vmul.f32 %v109, %v312
  %v832 = vadd.f32 %v830, %v831
  %v833 = vmul.f32 %v111, %v320
  %v834 = vadd.f32 %v832, %v833
  %v835 = vmul.f32 %v113, %v328
  %v836 = vadd.f32 %v834, %v835
  %v837 = vmul.f32 %v115, %v336
  %v838 = vadd.f32 %v836, %v837
  %v839 = vmul.f32 %v117, %v344
  %v840 = vadd.f32 %v838, %v839
  %v841 = vmul.f32 %v119, %v352
  %v842 = vadd.f32 %v840, %v841
  %v843 = vmul.f32 %v121, %v360
  %v844 = vadd.f32 %v842, %v843
  %v845 = vmul.f32 %v123, %v368
  %v846 = vadd.f32 %v844, %v845
  %v847 = vmul.f32 %v125, %v376
  %v848 = vadd.f32 %v846, %v847
  %v849 = vmul.f32 %v127, %v384
  %v850 = vadd.f32 %v848, %v849
  %v851 = vmul.f32 %v129, %v392
  %v852 = vadd.f32 %v850, %v851
  %v853 = vmul.f32 %v131, %v298
  %v854 = vmul.f32 %v133, %v306
  %v855 = vadd.f32 %v853, %v854
  %v856 = vmul.f32 %v135, %v314
  %v857 = vadd.f32 %v855, %v856
  %v858 = vmul.f32 %v137, %v322
  %v859 = vadd.f32 %v857, %v858
  %v860 = vmul.f32 %v139, %v330
  %v861 = vadd.f32 %v859, %v860
  %v862 = vmul.f32 %v141, %v338
  %v863 = vadd.f32 %v861, %v862
  %v864 = vmul.f32 %v143, %v346
  %v865 = vadd.f32 %v863, %v864
  %v866 = vmul.f32 %v145, %v354
  %v867 = vadd.f32 %v865, %v866
  %v868 = vmul.f32 %v147, %v362
  %v869 = vadd.f32 %v867, %v868
  %v870 = vmul.f32 %v149, %v370
  %v871 = vadd.f32 %v869, %v870
  %v872 = vmul.f32 %v151, %v378
  %v873 = vadd.f32 %v871, %v872
  %v874 = vmul.f32 %v153, %v386
  %v875 = vadd.f32 %v873, %v874
  %v876 = vmul.f32 %v131, %v300
  %v877 = vmul.f32 %v133, %v308
  %v878 = vadd.f32 %v876, %v877
  %v879 = vmul.f32 %v135, %v316
  %v880 = vadd.f32 %v878, %v879
  %v881 = vmul.f32 %v137, %v324
  %v882 = vadd.f32 %v880, %v881
  %v883 = vmul.f32 %v139, %v332
  %v884 = vadd.f32 %v882, %v883
  %v885 = vmul.f32 %v141, %v340
  %v886 = vadd.f32 %v884, %v885
  %v887 = vmul.f32 %v143, %v348
  %v888 = vadd.f32 %v886, %v887
  %v889 = vmul.f32 %v145, %v356
  %v890 = vadd.f32 %v888, %v889
  %v891 = vmul.f32 %v147, %v364
  %v892 = vadd.f32 %v890, %v891
  %v893 = vmul.f32 %v149, %v372
  %v894 = vadd.f32 %v892, %v893
  %v895 = vmul.f32 %v151, %v380
  %v896 = vadd.f32 %v894, %v895
  %v897 = vmul.f32 %v153, %v388
  %v898 = vadd.f32 %v896, %v897
  %v899 = vmul.f32 %v131, %v302
  %v900 = vmul.f32 %v133, %v310
  %v901 = vadd.f32 %v899, %v900
  %v902 = vmul.f32 %v135, %v318
  %v903 = vadd.f32 %v901, %v902
  %v904 = vmul.f32 %v137, %v326
  %v905 = vadd.f32 %v903, %v904
  %v906 = vmul.f32 %v139, %v334
  %v907 = vadd.f32 %v905, %v906
  %v908 = vmul.f32 %v141, %v342
  %v909 = vadd.f32 %v907, %v908
  %v910 = vmul.f32 %v143, %v350
  %v911 = vadd.f32 %v909, %v910
  %v912 = vmul.f32 %v145, %v358
  %v913 = vadd.f32 %v911, %v912
  %v914 = vmul.f32 %v147, %v366
  %v915 = vadd.f32 %v913, %v914
  %v916 = vmul.f32 %v149, %v374
  %v917 = vadd.f32 %v915, %v916
  %v918 = vmul.f32 %v151, %v382
  %v919 = vadd.f32 %v917, %v918
  %v920 = vmul.f32 %v153, %v390
  %v921 = vadd.f32 %v919, %v920
  %v922 = vmul.f32 %v131, %v304
  %v923 = vmul.f32 %v133, %v312
  %v924 = vadd.f32 %v922, %v923
  %v925 = vmul.f32 %v135, %v320
  %v926 = vadd.f32 %v924, %v925
  %v927 = vmul.f32 %v137, %v328
  %v928 = vadd.f32 %v926, %v927
  %v929 = vmul.f32 %v139, %v336
  %v930 = vadd.f32 %v928, %v929
  %v931 = vmul.f32 %v141, %v344
  %v932 = vadd.f32 %v930, %v931
  %v933 = vmul.f32 %v143, %v352
  %v934 = vadd.f32 %v932, %v933
  %v935 = vmul.f32 %v145, %v360
  %v936 = vadd.f32 %v934, %v935
  %v937 = vmul.f32 %v147, %v368
  %v938 = vadd.f32 %v936, %v937
  %v939 = vmul.f32 %v149, %v376
  %v940 = vadd.f32 %v938, %v939
  %v941 = vmul.f32 %v151, %v384
  %v942 = vadd.f32 %v940, %v941
  %v943 = vmul.f32 %v153, %v392
  %v944 = vadd.f32 %v942, %v943
  %v945 = vmul.f32 %v155, %v298
  %v946 = vmul.f32 %v157, %v306
  %v947 = vadd.f32 %v945, %v946
  %v948 = vmul.f32 %v159, %v314
  %v949 = vadd.f32 %v947, %v948
  %v950 = vmul.f32 %v161, %v322
  %v951 = vadd.f32 %v949, %v950
  %v952 = vmul.f32 %v163, %v330
  %v953 = vadd.f32 %v951, %v952
  %v954 = vmul.f32 %v165, %v338
  %v955 = vadd.f32 %v953, %v954
  %v956 = vmul.f32 %v167, %v346
  %v957 = vadd.f32 %v955, %v956
  %v958 = vmul.f32 %v169, %v354
  %v959 = vadd.f32 %v957, %v958
  %v960 = vmul.f32 %v171, %v362
  %v961 = vadd.f32 %v959, %v960
  %v962 = vmul.f32 %v173, %v370
  %v963 = vadd.f32 %v961, %v962
  %v964 = vmul.f32 %v175, %v378
  %v965 = vadd.f32 %v963, %v964
  %v966 = vmul.f32 %v177, %v386
  %v967 = vadd.f32 %v965, %v966
  %v968 = vmul.f32 %v155, %v300
  %v969 = vmul.f32 %v157, %v308
  %v970 = vadd.f32 %v968, %v969
  %v971 = vmul.f32 %v159, %v316
  %v972 = vadd.f32 %v970, %v971
  %v973 = vmul.f32 %v161, %v324
  %v974 = vadd.f32 %v972, %v973
  %v975 = vmul.f32 %v163, %v332
  %v976 = vadd.f32 %v974, %v975
  %v977 = vmul.f32 %v165, %v340
  %v978 = vadd.f32 %v976, %v977
  %v979 = vmul.f32 %v167, %v348
  %v980 = vadd.f32 %v978, %v979
  %v981 = vmul.f32 %v169, %v356
  %v982 = vadd.f32 %v980, %v981
  %v983 = vmul.f32 %v171, %v364
  %v984 = vadd.f32 %v982, %v983
  %v985 = vmul.f32 %v173, %v372
  %v986 = vadd.f32 %v984, %v985
  %v987 = vmul.f32 %v175, %v380
  %v988 = vadd.f32 %v986, %v987
  %v989 = vmul.f32 %v177, %v388
  %v990 = vadd.f32 %v988, %v989
  %v991 = vmul.f32 %v155, %v302
  %v992 = vmul.f32 %v157, %v310
  %v993 = vadd.f32 %v991, %v992
  %v994 = vmul.f32 %v159, %v318
  %v995 = vadd.f32 %v993, %v994
  %v996 = vmul.f32 %v161, %v326
  %v997 = vadd.f32 %v995, %v996
  %v998 = vmul.f32 %v163, %v334
  %v999 = vadd.f32 %v997, %v998
  %v1000 = vmul.f32 %v165, %v342
  %v1001 = vadd.f32 %v999, %v1000
  %v1002 = vmul.f32 %v167, %v350
  %v1003 = vadd.f32 %v1001, %v1002
  %v1004 = vmul.f32 %v169, %v358
  %v1005 = vadd.f32 %v1003, %v1004
  %v1006 = vmul.f32 %v171, %v366
  %v1007 = vadd.f32 %v1005, %v1006
  %v1008 = vmul.f32 %v173, %v374
  %v1009 = vadd.f32 %v1007, %v1008
  %v1010 = vmul.f32 %v175, %v382
  %v1011 = vadd.f32 %v1009, %v1010
  %v1012 = vmul.f32 %v177, %v390
  %v1013 = vadd.f32 %v1011, %v1012
  %v1014 = vmul.f32 %v155, %v304
  %v1015 = vmul.f32 %v157, %v312
  %v1016 = vadd.f32 %v1014, %v1015
  %v1017 = vmul.f32 %v159, %v320
  %v1018 = vadd.f32 %v1016, %v1017
  %v1019 = vmul.f32 %v161, %v328
  %v1020 = vadd.f32 %v1018, %v1019
  %v1021 = vmul.f32 %v163, %v336
  %v1022 = vadd.f32 %v1020, %v1021
  %v1023 = vmul.f32 %v165, %v344
  %v1024 = vadd.f32 %v1022, %v1023
  %v1025 = vmul.f32 %v167, %v352
  %v1026 = vadd.f32 %v1024, %v1025
  %v1027 = vmul.f32 %v169, %v360
  %v1028 = vadd.f32 %v1026, %v1027
  %v1029 = vmul.f32 %v171, %v368
  %v1030 = vadd.f32 %v1028, %v1029
  %v1031 = vmul.f32 %v173, %v376
  %v1032 = vadd.f32 %v1030, %v1031
  %v1033 = vmul.f32 %v175, %v384
  %v1034 = vadd.f32 %v1032, %v1033
  %v1035 = vmul.f32 %v177, %v392
  %v1036 = vadd.f32 %v1034, %v1035
  %v1037 = vmul.f32 %v179, %v298
  %v1038 = vmul.f32 %v181, %v306
  %v1039 = vadd.f32 %v1037, %v1038
  %v1040 = vmul.f32 %v183, %v314
  %v1041 = vadd.f32 %v1039, %v1040
  %v1042 = vmul.f32 %v185, %v322
  %v1043 = vadd.f32 %v1041, %v1042
  %v1044 = vmul.f32 %v187, %v330
  %v1045 = vadd.f32 %v1043, %v1044
  %v1046 = vmul.f32 %v189, %v338
  %v1047 = vadd.f32 %v1045, %v1046
  %v1048 = vmul.f32 %v191, %v346
  %v1049 = vadd.f32 %v1047, %v1048
  %v1050 = vmul.f32 %v193, %v354
  %v1051 = vadd.f32 %v1049, %v1050
  %v1052 = vmul.f32 %v195, %v362
  %v1053 = vadd.f32 %v1051, %v1052
  %v1054 = vmul.f32 %v197, %v370
  %v1055 = vadd.f32 %v1053, %v1054
  %v1056 = vmul.f32 %v199, %v378
  %v1057 = vadd.f32 %v1055, %v1056
  %v1058 = vmul.f32 %v201, %v386
  %v1059 = vadd.f32 %v1057, %v1058
  %v1060 = vmul.f32 %v179, %v300
  %v1061 = vmul.f32 %v181, %v308
  %v1062 = vadd.f32 %v1060, %v1061
  %v1063 = vmul.f32 %v183, %v316
  %v1064 = vadd.f32 %v1062, %v1063
  %v1065 = vmul.f32 %v185, %v324
  %v1066 = vadd.f32 %v1064, %v1065
  %v1067 = vmul.f32 %v187, %v332
  %v1068 = vadd.f32 %v1066, %v1067
  %v1069 = vmul.f32 %v189, %v340
  %v1070 = vadd.f32 %v1068, %v1069
  %v1071 = vmul.f32 %v191, %v348
  %v1072 = vadd.f32 %v1070, %v1071
  %v1073 = vmul.f32 %v193, %v356
  %v1074 = vadd.f32 %v1072, %v1073
  %v1075 = vmul.f32 %v195, %v364
  %v1076 = vadd.f32 %v1074, %v1075
  %v1077 = vmul.f32 %v197, %v372
  %v1078 = vadd.f32 %v1076, %v1077
  %v1079 = vmul.f32 %v199, %v380
  %v1080 = vadd.f32 %v1078, %v1079
  %v1081 = vmul.f32 %v201, %v388
  %v1082 = vadd.f32 %v1080, %v1081
  %v1083 = vmul.f32 %v179, %v302
  %v1084 = vmul.f32 %v181, %v310
  %v1085 = vadd.f32 %v1083, %v1084
  %v1086 = vmul.f32 %v183, %v318
  %v1087 = vadd.f32 %v1085, %v1086
  %v1088 = vmul.f32 %v185, %v326
  %v1089 = vadd.f32 %v1087, %v1088
  %v1090 = vmul.f32 %v187, %v334
  %v1091 = vadd.f32 %v1089, %v1090
  %v1092 = vmul.f32 %v189, %v342
  %v1093 = vadd.f32 %v1091, %v1092
  %v1094 = vmul.f32 %v191, %v350
  %v1095 = vadd.f32 %v1093, %v1094
  %v1096 = vmul.f32 %v193, %v358
  %v1097 = vadd.f32 %v1095, %v1096
  %v1098 = vmul.f32 %v195, %v366
  %v1099 = vadd.f32 %v1097, %v1098
  %v1100 = vmul.f32 %v197, %v374
  %v1101 = vadd.f32 %v1099, %v1100
  %v1102 = vmul.f32 %v199, %v382
  %v1103 = vadd.f32 %v1101, %v1102
  %v1104 = vmul.f32 %v201, %v390
  %v1105 = vadd.f32 %v1103, %v1104
  %v1106 = vmul.f32 %v179, %v304
  %v1107 = vmul.f32 %v181, %v312
  %v1108 = vadd.f32 %v1106, %v1107
  %v1109 = vmul.f32 %v183, %v320
  %v1110 = vadd.f32 %v1108, %v1109
  %v1111 = vmul.f32 %v185, %v328
  %v1112 = vadd.f32 %v1110, %v1111
  %v1113 = vmul.f32 %v187, %v336
  %v1114 = vadd.f32 %v1112, %v1113
  %v1115 = vmul.f32 %v189, %v344
  %v1116 = vadd.f32 %v1114, %v1115
  %v1117 = vmul.f32 %v191, %v352
  %v1118 = vadd.f32 %v1116, %v1117
  %v1119 = vmul.f32 %v193, %v360
  %v1120 = vadd.f32 %v1118, %v1119
  %v1121 = vmul.f32 %v195, %v368
  %v1122 = vadd.f32 %v1120, %v1121
  %v1123 = vmul.f32 %v197, %v376
  %v1124 = vadd.f32 %v1122, %v1123
  %v1125 = vmul.f32 %v199, %v384
  %v1126 = vadd.f32 %v1124, %v1125
  %v1127 = vmul.f32 %v201, %v392
  %v1128 = vadd.f32 %v1126, %v1127
  %v1129 = vmul.f32 %v203, %v298
  %v1130 = vmul.f32 %v205, %v306
  %v1131 = vadd.f32 %v1129, %v1130
  %v1132 = vmul.f32 %v207, %v314
  %v1133 = vadd.f32 %v1131, %v1132
  %v1134 = vmul.f32 %v209, %v322
  %v1135 = vadd.f32 %v1133, %v1134
  %v1136 = vmul.f32 %v211, %v330
  %v1137 = vadd.f32 %v1135, %v1136
  %v1138 = vmul.f32 %v213, %v338
  %v1139 = vadd.f32 %v1137, %v1138
  %v1140 = vmul.f32 %v215, %v346
  %v1141 = vadd.f32 %v1139, %v1140
  %v1142 = vmul.f32 %v217, %v354
  %v1143 = vadd.f32 %v1141, %v1142
  %v1144 = vmul.f32 %v219, %v362
  %v1145 = vadd.f32 %v1143, %v1144
  %v1146 = vmul.f32 %v221, %v370
  %v1147 = vadd.f32 %v1145, %v1146
  %v1148 = vmul.f32 %v223, %v378
  %v1149 = vadd.f32 %v1147, %v1148
  %v1150 = vmul.f32 %v225, %v386
  %v1151 = vadd.f32 %v1149, %v1150
  %v1152 = vmul.f32 %v203, %v300
  %v1153 = vmul.f32 %v205, %v308
  %v1154 = vadd.f32 %v1152, %v1153
  %v1155 = vmul.f32 %v207, %v316
  %v1156 = vadd.f32 %v1154, %v1155
  %v1157 = vmul.f32 %v209, %v324
  %v1158 = vadd.f32 %v1156, %v1157
  %v1159 = vmul.f32 %v211, %v332
  %v1160 = vadd.f32 %v1158, %v1159
  %v1161 = vmul.f32 %v213, %v340
  %v1162 = vadd.f32 %v1160, %v1161
  %v1163 = vmul.f32 %v215, %v348
  %v1164 = vadd.f32 %v1162, %v1163
  %v1165 = vmul.f32 %v217, %v356
  %v1166 = vadd.f32 %v1164, %v1165
  %v1167 = vmul.f32 %v219, %v364
  %v1168 = vadd.f32 %v1166, %v1167
  %v1169 = vmul.f32 %v221, %v372
  %v1170 = vadd.f32 %v1168, %v1169
  %v1171 = vmul.f32 %v223, %v380
  %v1172 = vadd.f32 %v1170, %v1171
  %v1173 = vmul.f32 %v225, %v388
  %v1174 = vadd.f32 %v1172, %v1173
  %v1175 = vmul.f32 %v203, %v302
  %v1176 = vmul.f32 %v205, %v310
  %v1177 = vadd.f32 %v1175, %v1176
  %v1178 = vmul.f32 %v207, %v318
  %v1179 = vadd.f32 %v1177, %v1178
  %v1180 = vmul.f32 %v209, %v326
  %v1181 = vadd.f32 %v1179, %v1180
  %v1182 = vmul.f32 %v211, %v334
  %v1183 = vadd.f32 %v1181, %v1182
  %v1184 = vmul.f32 %v213, %v342
  %v1185 = vadd.f32 %v1183, %v1184
  %v1186 = vmul.f32 %v215, %v350
  %v1187 = vadd.f32 %v1185, %v1186
  %v1188 = vmul.f32 %v217, %v358
  %v1189 = vadd.f32 %v1187, %v1188
  %v1190 = vmul.f32 %v219, %v366
  %v1191 = vadd.f32 %v1189, %v1190
  %v1192 = vmul.f32 %v221, %v374
  %v1193 = vadd.f32 %v1191, %v1192
  %v1194 = vmul.f32 %v223, %v382
  %v1195 = vadd.f32 %v1193, %v1194
  %v1196 = vmul.f32 %v225, %v390
  %v1197 = vadd.f32 %v1195, %v1196
  %v1198 = vmul.f32 %v203, %v304
  %v1199 = vmul.f32 %v205, %v312
  %v1200 = vadd.f32 %v1198, %v1199
  %v1201 = vmul.f32 %v207, %v320
  %v1202 = vadd.f32 %v1200, %v1201
  %v1203 = vmul.f32 %v209, %v328
  %v1204 = vadd.f32 %v1202, %v1203
  %v1205 = vmul.f32 %v211, %v336
  %v1206 = vadd.f32 %v1204, %v1205
  %v1207 = vmul.f32 %v213, %v344
  %v1208 = vadd.f32 %v1206, %v1207
  %v1209 = vmul.f32 %v215, %v352
  %v1210 = vadd.f32 %v1208, %v1209
  %v1211 = vmul.f32 %v217, %v360
  %v1212 = vadd.f32 %v1210, %v1211
  %v1213 = vmul.f32 %v219, %v368
  %v1214 = vadd.f32 %v1212, %v1213
  %v1215 = vmul.f32 %v221, %v376
  %v1216 = vadd.f32 %v1214, %v1215
  %v1217 = vmul.f32 %v223, %v384
  %v1218 = vadd.f32 %v1216, %v1217
  %v1219 = vmul.f32 %v225, %v392
  %v1220 = vadd.f32 %v1218, %v1219
  %v1221 = vmul.f32 %v227, %v298
  %v1222 = vmul.f32 %v229, %v306
  %v1223 = vadd.f32 %v1221, %v1222
  %v1224 = vmul.f32 %v231, %v314
  %v1225 = vadd.f32 %v1223, %v1224
  %v1226 = vmul.f32 %v233, %v322
  %v1227 = vadd.f32 %v1225, %v1226
  %v1228 = vmul.f32 %v235, %v330
  %v1229 = vadd.f32 %v1227, %v1228
  %v1230 = vmul.f32 %v237, %v338
  %v1231 = vadd.f32 %v1229, %v1230
  %v1232 = vmul.f32 %v239, %v346
  %v1233 = vadd.f32 %v1231, %v1232
  %v1234 = vmul.f32 %v241, %v354
  %v1235 = vadd.f32 %v1233, %v1234
  %v1236 = vmul.f32 %v243, %v362
  %v1237 = vadd.f32 %v1235, %v1236
  %v1238 = vmul.f32 %v245, %v370
  %v1239 = vadd.f32 %v1237, %v1238
  %v1240 = vmul.f32 %v247, %v378
  %v1241 = vadd.f32 %v1239, %v1240
  %v1242 = vmul.f32 %v249, %v386
  %v1243 = vadd.f32 %v1241, %v1242
  %v1244 = vmul.f32 %v227, %v300
  %v1245 = vmul.f32 %v229, %v308
  %v1246 = vadd.f32 %v1244, %v1245
  %v1247 = vmul.f32 %v231, %v316
  %v1248 = vadd.f32 %v1246, %v1247
  %v1249 = vmul.f32 %v233, %v324
  %v1250 = vadd.f32 %v1248, %v1249
  %v1251 = vmul.f32 %v235, %v332
  %v1252 = vadd.f32 %v1250, %v1251
  %v1253 = vmul.f32 %v237, %v340
  %v1254 = vadd.f32 %v1252, %v1253
  %v1255 = vmul.f32 %v239, %v348
  %v1256 = vadd.f32 %v1254, %v1255
  %v1257 = vmul.f32 %v241, %v356
  %v1258 = vadd.f32 %v1256, %v1257
  %v1259 = vmul.f32 %v243, %v364
  %v1260 = vadd.f32 %v1258, %v1259
  %v1261 = vmul.f32 %v245, %v372
  %v1262 = vadd.f32 %v1260, %v1261
  %v1263 = vmul.f32 %v247, %v380
  %v1264 = vadd.f32 %v1262, %v1263
  %v1265 = vmul.f32 %v249, %v388
  %v1266 = vadd.f32 %v1264, %v1265
  %v1267 = vmul.f32 %v227, %v302
  %v1268 = vmul.f32 %v229, %v310
  %v1269 = vadd.f32 %v1267, %v1268
  %v1270 = vmul.f32 %v231, %v318
  %v1271 = vadd.f32 %v1269, %v1270
  %v1272 = vmul.f32 %v233, %v326
  %v1273 = vadd.f32 %v1271, %v1272
  %v1274 = vmul.f32 %v235, %v334
  %v1275 = vadd.f32 %v1273, %v1274
  %v1276 = vmul.f32 %v237, %v342
  %v1277 = vadd.f32 %v1275, %v1276
  %v1278 = vmul.f32 %v239, %v350
  %v1279 = vadd.f32 %v1277, %v1278
  %v1280 = vmul.f32 %v241, %v358
  %v1281 = vadd.f32 %v1279, %v1280
  %v1282 = vmul.f32 %v243, %v366
  %v1283 = vadd.f32 %v1281, %v1282
  %v1284 = vmul.f32 %v245, %v374
  %v1285 = vadd.f32 %v1283, %v1284
  %v1286 = vmul.f32 %v247, %v382
  %v1287 = vadd.f32 %v1285, %v1286
  %v1288 = vmul.f32 %v249, %v390
  %v1289 = vadd.f32 %v1287, %v1288
  %v1290 = vmul.f32 %v227, %v304
  %v1291 = vmul.f32 %v229, %v312
  %v1292 = vadd.f32 %v1290, %v1291
  %v1293 = vmul.f32 %v231, %v320
  %v1294 = vadd.f32 %v1292, %v1293
  %v1295 = vmul.f32 %v233, %v328
  %v1296 = vadd.f32 %v1294, %v1295
  %v1297 = vmul.f32 %v235, %v336
  %v1298 = vadd.f32 %v1296, %v1297
  %v1299 = vmul.f32 %v237, %v344
  %v1300 = vadd.f32 %v1298, %v1299
  %v1301 = vmul.f32 %v239, %v352
  %v1302 = vadd.f32 %v1300, %v1301
  %v1303 = vmul.f32 %v241, %v360
  %v1304 = vadd.f32 %v1302, %v1303
  %v1305 = vmul.f32 %v243, %v368
  %v1306 = vadd.f32 %v1304, %v1305
  %v1307 = vmul.f32 %v245, %v376
  %v1308 = vadd.f32 %v1306, %v1307
  %v1309 = vmul.f32 %v247, %v384
  %v1310 = vadd.f32 %v1308, %v1309
  %v1311 = vmul.f32 %v249, %v392
  %v1312 = vadd.f32 %v1310, %v1311
  %v1313 = vmul.f32 %v251, %v298
  %v1314 = vmul.f32 %v253, %v306
  %v1315 = vadd.f32 %v1313, %v1314
  %v1316 = vmul.f32 %v255, %v314
  %v1317 = vadd.f32 %v1315, %v1316
  %v1318 = vmul.f32 %v257, %v322
  %v1319 = vadd.f32 %v1317, %v1318
  %v1320 = vmul.f32 %v259, %v330
  %v1321 = vadd.f32 %v1319, %v1320
  %v1322 = vmul.f32 %v261, %v338
  %v1323 = vadd.f32 %v1321, %v1322
  %v1324 = vmul.f32 %v263, %v346
  %v1325 = vadd.f32 %v1323, %v1324
  %v1326 = vmul.f32 %v265, %v354
  %v1327 = vadd.f32 %v1325, %v1326
  %v1328 = vmul.f32 %v267, %v362
  %v1329 = vadd.f32 %v1327, %v1328
  %v1330 = vmul.f32 %v269, %v370
  %v1331 = vadd.f32 %v1329, %v1330
  %v1332 = vmul.f32 %v271, %v378
  %v1333 = vadd.f32 %v1331, %v1332
  %v1334 = vmul.f32 %v273, %v386
  %v1335 = vadd.f32 %v1333, %v1334
  %v1336 = vmul.f32 %v251, %v300
  %v1337 = vmul.f32 %v253, %v308
  %v1338 = vadd.f32 %v1336, %v1337
  %v1339 = vmul.f32 %v255, %v316
  %v1340 = vadd.f32 %v1338, %v1339
  %v1341 = vmul.f32 %v257, %v324
  %v1342 = vadd.f32 %v1340, %v1341
  %v1343 = vmul.f32 %v259, %v332
  %v1344 = vadd.f32 %v1342, %v1343
  %v1345 = vmul.f32 %v261, %v340
  %v1346 = vadd.f32 %v1344, %v1345
  %v1347 = vmul.f32 %v263, %v348
  %v1348 = vadd.f32 %v1346, %v1347
  %v1349 = vmul.f32 %v265, %v356
  %v1350 = vadd.f32 %v1348, %v1349
  %v1351 = vmul.f32 %v267, %v364
  %v1352 = vadd.f32 %v1350, %v1351
  %v1353 = vmul.f32 %v269, %v372
  %v1354 = vadd.f32 %v1352, %v1353
  %v1355 = vmul.f32 %v271, %v380
  %v1356 = vadd.f32 %v1354, %v1355
  %v1357 = vmul.f32 %v273, %v388
  %v1358 = vadd.f32 %v1356, %v1357
  %v1359 = vmul.f32 %v251, %v302
  %v1360 = vmul.f32 %v253, %v310
  %v1361 = vadd.f32 %v1359, %v1360
  %v1362 = vmul.f32 %v255, %v318
  %v1363 = vadd.f32 %v1361, %v1362
  %v1364 = vmul.f32 %v257, %v326
  %v1365 = vadd.f32 %v1363, %v1364
  %v1366 = vmul.f32 %v259, %v334
  %v1367 = vadd.f32 %v1365, %v1366
  %v1368 = vmul.f32 %v261, %v342
  %v1369 = vadd.f32 %v1367, %v1368
  %v1370 = vmul.f32 %v263, %v350
  %v1371 = vadd.f32 %v1369, %v1370
  %v1372 = vmul.f32 %v265, %v358
  %v1373 = vadd.f32 %v1371, %v1372
  %v1374 = vmul.f32 %v267, %v366
  %v1375 = vadd.f32 %v1373, %v1374
  %v1376 = vmul.f32 %v269, %v374
  %v1377 = vadd.f32 %v1375, %v1376
  %v1378 = vmul.f32 %v271, %v382
  %v1379 = vadd.f32 %v1377, %v1378
  %v1380 = vmul.f32 %v273, %v390
  %v1381 = vadd.f32 %v1379, %v1380
  %v1382 = vmul.f32 %v251, %v304
  %v1383 = vmul.f32 %v253, %v312
  %v1384 = vadd.f32 %v1382, %v1383
  %v1385 = vmul.f32 %v255, %v320
  %v1386 = vadd.f32 %v1384, %v1385
  %v1387 = vmul.f32 %v257, %v328
  %v1388 = vadd.f32 %v1386, %v1387
  %v1389 = vmul.f32 %v259, %v336
  %v1390 = vadd.f32 %v1388, %v1389
  %v1391 = vmul.f32 %v261, %v344
  %v1392 = vadd.f32 %v1390, %v1391
  %v1393 = vmul.f32 %v263, %v352
  %v1394 = vadd.f32 %v1392, %v1393
  %v1395 = vmul.f32 %v265, %v360
  %v1396 = vadd.f32 %v1394, %v1395
  %v1397 = vmul.f32 %v267, %v368
  %v1398 = vadd.f32 %v1396, %v1397
  %v1399 = vmul.f32 %v269, %v376
  %v1400 = vadd.f32 %v1398, %v1399
  %v1401 = vmul.f32 %v271, %v384
  %v1402 = vadd.f32 %v1400, %v1401
  %v1403 = vmul.f32 %v273, %v392
  %v1404 = vadd.f32 %v1402, %v1403
  %v1405 = vmul.f32 %v275, %v298
  %v1406 = vmul.f32 %v277, %v306
  %v1407 = vadd.f32 %v1405, %v1406
  %v1408 = vmul.f32 %v279, %v314
  %v1409 = vadd.f32 %v1407, %v1408
  %v1410 = vmul.f32 %v281, %v322
  %v1411 = vadd.f32 %v1409, %v1410
  %v1412 = vmul.f32 %v283, %v330
  %v1413 = vadd.f32 %v1411, %v1412
  %v1414 = vmul.f32 %v285, %v338
  %v1415 = vadd.f32 %v1413, %v1414
  %v1416 = vmul.f32 %v287, %v346
  %v1417 = vadd.f32 %v1415, %v1416
  %v1418 = vmul.f32 %v289, %v354
  %v1419 = vadd.f32 %v1417, %v1418
  %v1420 = vmul.f32 %v291, %v362
  %v1421 = vadd.f32 %v1419, %v1420
  %v1422 = vmul.f32 %v293, %v370
  %v1423 = vadd.f32 %v1421, %v1422
  %v1424 = vmul.f32 %v295, %v378
  %v1425 = vadd.f32 %v1423, %v1424
  %v1426 = vmul.f32 %v297, %v386
  %v1427 = vadd.f32 %v1425, %v1426
  %v1428 = vmul.f32 %v275, %v300
  %v1429 = vmul.f32 %v277, %v308
  %v1430 = vadd.f32 %v1428, %v1429
  %v1431 = vmul.f32 %v279, %v316
  %v1432 = vadd.f32 %v1430, %v1431
  %v1433 = vmul.f32 %v281, %v324
  %v1434 = vadd.f32 %v1432, %v1433
  %v1435 = vmul.f32 %v283, %v332
  %v1436 = vadd.f32 %v1434, %v1435
  %v1437 = vmul.f32 %v285, %v340
  %v1438 = vadd.f32 %v1436, %v1437
  %v1439 = vmul.f32 %v287, %v348
  %v1440 = vadd.f32 %v1438, %v1439
  %v1441 = vmul.f32 %v289, %v356
  %v1442 = vadd.f32 %v1440, %v1441
  %v1443 = vmul.f32 %v291, %v364
  %v1444 = vadd.f32 %v1442, %v1443
  %v1445 = vmul.f32 %v293, %v372
  %v1446 = vadd.f32 %v1444, %v1445
  %v1447 = vmul.f32 %v295, %v380
  %v1448 = vadd.f32 %v1446, %v1447
  %v1449 = vmul.f32 %v297, %v388
  %v1450 = vadd.f32 %v1448, %v1449
  %v1451 = vmul.f32 %v275, %v302
  %v1452 = vmul.f32 %v277, %v310
  %v1453 = vadd.f32 %v1451, %v1452
  %v1454 = vmul.f32 %v279, %v318
  %v1455 = vadd.f32 %v1453, %v1454
  %v1456 = vmul.f32 %v281, %v326
  %v1457 = vadd.f32 %v1455, %v1456
  %v1458 = vmul.f32 %v283, %v334
  %v1459 = vadd.f32 %v1457, %v1458
  %v1460 = vmul.f32 %v285, %v342
  %v1461 = vadd.f32 %v1459, %v1460
  %v1462 = vmul.f32 %v287, %v350
  %v1463 = vadd.f32 %v1461, %v1462
  %v1464 = vmul.f32 %v289, %v358
  %v1465 = vadd.f32 %v1463, %v1464
  %v1466 = vmul.f32 %v291, %v366
  %v1467 = vadd.f32 %v1465, %v1466
  %v1468 = vmul.f32 %v293, %v374
  %v1469 = vadd.f32 %v1467, %v1468
  %v1470 = vmul.f32 %v295, %v382
  %v1471 = vadd.f32 %v1469, %v1470
  %v1472 = vmul.f32 %v297, %v390
  %v1473 = vadd.f32 %v1471, %v1472
  %v1474 = vmul.f32 %v275, %v304
  %v1475 = vmul.f32 %v277, %v312
  %v1476 = vadd.f32 %v1474, %v1475
  %v1477 = vmul.f32 %v279, %v320
  %v1478 = vadd.f32 %v1476, %v1477
  %v1479 = vmul.f32 %v281, %v328
  %v1480 = vadd.f32 %v1478, %v1479
  %v1481 = vmul.f32 %v283, %v336
  %v1482 = vadd.f32 %v1480, %v1481
  %v1483 = vmul.f32 %v285, %v344
  %v1484 = vadd.f32 %v1482, %v1483
  %v1485 = vmul.f32 %v287, %v352
  %v1486 = vadd.f32 %v1484, %v1485
  %v1487 = vmul.f32 %v289, %v360
  %v1488 = vadd.f32 %v1486, %v1487
  %v1489 = vmul.f32 %v291, %v368
  %v1490 = vadd.f32 %v1488, %v1489
  %v1491 = vmul.f32 %v293, %v376
  %v1492 = vadd.f32 %v1490, %v1491
  %v1493 = vmul.f32 %v295, %v384
  %v1494 = vadd.f32 %v1492, %v1493
  %v1495 = vmul.f32 %v297, %v392
  %v1496 = vadd.f32 %v1494, %v1495
  %v1497 = vadd.f32 %v415, %v783
  %v1498 = vadd.f32 %v1497, %v1151
  %v1499 = vadd.f32 %v438, %v806
  %v1500 = vadd.f32 %v1499, %v1174
  %v1501 = vadd.f32 %v461, %v829
  %v1502 = vadd.f32 %v1501, %v1197
  %v1503 = vadd.f32 %v484, %v852
  %v1504 = vadd.f32 %v1503, %v1220
  %v1505 = vadd.f32 %v507, %v875
  %v1506 = vadd.f32 %v1505, %v1243
  %v1507 = vadd.f32 %v530, %v898
  %v1508 = vadd.f32 %v1507, %v1266
  %v1509 = vadd.f32 %v553, %v921
  %v1510 = vadd.f32 %v1509, %v1289
  %v1511 = vadd.f32 %v576, %v944
  %v1512 = vadd.f32 %v1511, %v1312
  %v1513 = vadd.f32 %v599, %v967
  %v1514 = vadd.f32 %v1513, %v1335
  %v1515 = vadd.f32 %v622, %v990
  %v1516 = vadd.f32 %v1515, %v1358
  %v1517 = vadd.f32 %v645, %v1013
  %v1518 = vadd.f32 %v1517, %v1381
  %v1519 = vadd.f32 %v668, %v1036
  %v1520 = vadd.f32 %v1519, %v1404
  %v1521 = vadd.f32 %v691, %v1059
  %v1522 = vadd.f32 %v1521, %v1427
  %v1523 = vadd.f32 %v714, %v1082
  %v1524 = vadd.f32 %v1523, %v1450
  %v1525 = vadd.f32 %v737, %v1105
  %v1526 = vadd.f32 %v1525, %v1473
  %v1527 = vadd.f32 %v760, %v1128
  %v1528 = vadd.f32 %v1527, %v1496
  %v1529 = vadd.f32 %v11, %v107
  %v1530 = vadd.f32 %v1529, %v203
  %v1531 = vadd.f32 %v13, %v109
  %v1532 = vadd.f32 %v1531, %v205
  %v1533 = vadd.f32 %v15, %v111
  %v1534 = vadd.f32 %v1533, %v207
  %v1535 = vadd.f32 %v17, %v113
  %v1536 = vadd.f32 %v1535, %v209
  %v1537 = vadd.f32 %v19, %v115
  %v1538 = vadd.f32 %v1537, %v211
  %v1539 = vadd.f32 %v21, %v117
  %v1540 = vadd.f32 %v1539, %v213
  %v1541 = vadd.f32 %v23, %v119
  %v1542 = vadd.f32 %v1541, %v215
  %v1543 = vadd.f32 %v25, %v121
  %v1544 = vadd.f32 %v1543, %v217
  %v1545 = vadd.f32 %v27, %v123
  %v1546 = vadd.f32 %v1545, %v219
  %v1547 = vadd.f32 %v29, %v125
  %v1548 = vadd.f32 %v1547, %v221
  %v1549 = vadd.f32 %v31, %v127
  %v1550 = vadd.f32 %v1549, %v223
  %v1551 = vadd.f32 %v33, %v129
  %v1552 = vadd.f32 %v1551, %v225
  %v1553 = vadd.f32 %v35, %v131
  %v1554 = vadd.f32 %v1553, %v227
  %v1555 = vadd.f32 %v37, %v133
  %v1556 = vadd.f32 %v1555, %v229
  %v1557 = vadd.f32 %v39, %v135
  %v1558 = vadd.f32 %v1557, %v231
  %v1559 = vadd.f32 %v41, %v137
  %v1560 = vadd.f32 %v1559, %v233
  %v1561 = vadd.f32 %v43, %v139
  %v1562 = vadd.f32 %v1561, %v235
  %v1563 = vadd.f32 %v45, %v141
  %v1564 = vadd.f32 %v1563, %v237
  %v1565 = vadd.f32 %v47, %v143
  %v1566 = vadd.f32 %v1565, %v239
  %v1567 = vadd.f32 %v49, %v145
  %v1568 = vadd.f32 %v1567, %v241
  %v1569 = vadd.f32 %v51, %v147
  %v1570 = vadd.f32 %v1569, %v243
  %v1571 = vadd.f32 %v53, %v149
  %v1572 = vadd.f32 %v1571, %v245
  %v1573 = vadd.f32 %v55, %v151
  %v1574 = vadd.f32 %v1573, %v247
  %v1575 = vadd.f32 %v57, %v153
  %v1576 = vadd.f32 %v1575, %v249
  %v1577 = vadd.f32 %v59, %v155
  %v1578 = vadd.f32 %v1577, %v251
  %v1579 = vadd.f32 %v61, %v157
  %v1580 = vadd.f32 %v1579, %v253
  %v1581 = vadd.f32 %v63, %v159
  %v1582 = vadd.f32 %v1581, %v255
  %v1583 = vadd.f32 %v65, %v161
  %v1584 = vadd.f32 %v1583, %v257
  %v1585 = vadd.f32 %v67, %v163
  %v1586 = vadd.f32 %v1585, %v259
  %v1587 = vadd.f32 %v69, %v165
  %v1588 = vadd.f32 %v1587, %v261
  %v1589 = vadd.f32 %v71, %v167
  %v1590 = vadd.f32 %v1589, %v263
  %v1591 = vadd.f32 %v73, %v169
  %v1592 = vadd.f32 %v1591, %v265
  %v1593 = vadd.f32 %v75, %v171
  %v1594 = vadd.f32 %v1593, %v267
  %v1595 = vadd.f32 %v77, %v173
  %v1596 = vadd.f32 %v1595, %v269
  %v1597 = vadd.f32 %v79, %v175
  %v1598 = vadd.f32 %v1597, %v271
  %v1599 = vadd.f32 %v81, %v177
  %v1600 = vadd.f32 %v1599, %v273
  %v1601 = vadd.f32 %v83, %v179
  %v1602 = vadd.f32 %v1601, %v275
  %v1603 = vadd.f32 %v85, %v181
  %v1604 = vadd.f32 %v1603, %v277
  %v1605 = vadd.f32 %v87, %v183
  %v1606 = vadd.f32 %v1605, %v279
  %v1607 = vadd.f32 %v89, %v185
  %v1608 = vadd.f32 %v1607, %v281
  %v1609 = vadd.f32 %v91, %v187
  %v1610 = vadd.f32 %v1609, %v283
  %v1611 = vadd.f32 %v93, %v189
  %v1612 = vadd.f32 %v1611, %v285
  %v1613 = vadd.f32 %v95, %v191
  %v1614 = vadd.f32 %v1613, %v287
  %v1615 = vadd.f32 %v97, %v193
  %v1616 = vadd.f32 %v1615, %v289
  %v1617 = vadd.f32 %v99, %v195
  %v1618 = vadd.f32 %v1617, %v291
  %v1619 = vadd.f32 %v101, %v197
  %v1620 = vadd.f32 %v1619, %v293
  %v1621 = vadd.f32 %v103, %v199
  %v1622 = vadd.f32 %v1621, %v295
  %v1623 = vadd.f32 %v105, %v201
  %v1624 = vadd.f32 %v1623, %v297
  %v1625 = vmul.f32 %v415, %v1498
  %v1626 = vmul.f32 %v438, %v1506
  %v1627 = vadd.f32 %v1625, %v1626
  %v1628 = vmul.f32 %v461, %v1514
  %v1629 = vadd.f32 %v1627, %v1628
  %v1630 = vmul.f32 %v484, %v1522
  %v1631 = vadd.f32 %v1629, %v1630
  %v1632 = vmul.f32 %v415, %v1500
  %v1633 = vmul.f32 %v438, %v1508
  %v1634 = vadd.f32 %v1632, %v1633
  %v1635 = vmul.f32 %v461, %v1516
  %v1636 = vadd.f32 %v1634, %v1635
  %v1637 = vmul.f32 %v484, %v1524
  %v1638 = vadd.f32 %v1636, %v1637
  %v1639 = vmul.f32 %v415, %v1502
  %v1640 = vmul.f32 %v438, %v1510
  %v1641 = vadd.f32 %v1639, %v1640
  %v1642 = vmul.f32 %v461, %v1518
  %v1643 = vadd.f32 %v1641, %v1642
  %v1644 = vmul.f32 %v484, %v1526
  %v1645 = vadd.f32 %v1643, %v1644
  %v1646 = vmul.f32 %v415, %v1504
  %v1647 = vmul.f32 %v438, %v1512
  %v1648 = vadd.f32 %v1646, %v1647
  %v1649 = vmul.f32 %v461, %v1520
  %v1650 = vadd.f32 %v1648, %v1649
  %v1651 = vmul.f32 %v484, %v1528
  %v1652 = vadd.f32 %v1650, %v1651
  %v1653 = vmul.f32 %v507, %v1498
  %v1654 = vmul.f32 %v530, %v1506
  %v1655 = vadd.f32 %v1653, %v1654
  %v1656 = vmul.f32 %v553, %v1514
  %v1657 = vadd.f32 %v1655, %v1656
  %v1658 = vmul.f32 %v576, %v1522
  %v1659 = vadd.f32 %v1657, %v1658
  %v1660 = vmul.f32 %v507, %v1500
  %v1661 = vmul.f32 %v530, %v1508
  %v1662 = vadd.f32 %v1660, %v1661
  %v1663 = vmul.f32 %v553, %v1516
  %v1664 = vadd.f32 %v1662, %v1663
  %v1665 = vmul.f32 %v576, %v1524
  %v1666 = vadd.f32 %v1664, %v1665
  %v1667 = vmul.f32 %v507, %v1502
  %v1668 = vmul.f32 %v530, %v1510
  %v1669 = vadd.f32 %v1667, %v1668
  %v1670 = vmul.f32 %v553, %v1518
  %v1671 = vadd.f32 %v1669, %v1670
  %v1672 = vmul.f32 %v576, %v1526
  %v1673 = vadd.f32 %v1671, %v1672
  %v1674 = vmul.f32 %v507, %v1504
  %v1675 = vmul.f32 %v530, %v1512
  %v1676 = vadd.f32 %v1674, %v1675
  %v1677 = vmul.f32 %v553, %v1520
  %v1678 = vadd.f32 %v1676, %v1677
  %v1679 = vmul.f32 %v576, %v1528
  %v1680 = vadd.f32 %v1678, %v1679
  %v1681 = vmul.f32 %v599, %v1498
  %v1682 = vmul.f32 %v622, %v1506
  %v1683 = vadd.f32 %v1681, %v1682
  %v1684 = vmul.f32 %v645, %v1514
  %v1685 = vadd.f32 %v1683, %v1684
  %v1686 = vmul.f32 %v668, %v1522
  %v1687 = vadd.f32 %v1685, %v1686
  %v1688 = vmul.f32 %v599, %v1500
  %v1689 = vmul.f32 %v622, %v1508
  %v1690 = vadd.f32 %v1688, %v1689
  %v1691 = vmul.f32 %v645, %v1516
  %v1692 = vadd.f32 %v1690, %v1691
  %v1693 = vmul.f32 %v668, %v1524
  %v1694 = vadd.f32 %v1692, %v1693
  %v1695 = vmul.f32 %v599, %v1502
  %v1696 = vmul.f32 %v622, %v1510
  %v1697 = vadd.f32 %v1695, %v1696
  %v1698 = vmul.f32 %v645, %v1518
  %v1699 = vadd.f32 %v1697, %v1698
  %v1700 = vmul.f32 %v668, %v1526
  %v1701 = vadd.f32 %v1699, %v1700
  %v1702 = vmul.f32 %v599, %v1504
  %v1703 = vmul.f32 %v622, %v1512
  %v1704 = vadd.f32 %v1702, %v1703
  %v1705 = vmul.f32 %v645, %v1520
  %v1706 = vadd.f32 %v1704, %v1705
  %v1707 = vmul.f32 %v668, %v1528
  %v1708 = vadd.f32 %v1706, %v1707
  %v1709 = vmul.f32 %v691, %v1498
  %v1710 = vmul.f32 %v714, %v1506
  %v1711 = vadd.f32 %v1709, %v1710
  %v1712 = vmul.f32 %v737, %v1514
  %v1713 = vadd.f32 %v1711, %v1712
  %v1714 = vmul.f32 %v760, %v1522
  %v1715 = vadd.f32 %v1713, %v1714
  %v1716 = vmul.f32 %v691, %v1500
  %v1717 = vmul.f32 %v714, %v1508
  %v1718 = vadd.f32 %v1716, %v1717
  %v1719 = vmul.f32 %v737, %v1516
  %v1720 = vadd.f32 %v1718, %v1719
  %v1721 = vmul.f32 %v760, %v1524
  %v1722 = vadd.f32 %v1720, %v1721
  %v1723 = vmul.f32 %v691, %v1502
  %v1724 = vmul.f32 %v714, %v1510
  %v1725 = vadd.f32 %v1723, %v1724
  %v1726 = vmul.f32 %v737, %v1518
  %v1727 = vadd.f32 %v1725, %v1726
  %v1728 = vmul.f32 %v760, %v1526
  %v1729 = vadd.f32 %v1727, %v1728
  %v1730 = vmul.f32 %v691, %v1504
  %v1731 = vmul.f32 %v714, %v1512
  %v1732 = vadd.f32 %v1730, %v1731
  %v1733 = vmul.f32 %v737, %v1520
  %v1734 = vadd.f32 %v1732, %v1733
  %v1735 = vmul.f32 %v760, %v1528
  %v1736 = vadd.f32 %v1734, %v1735
  %v1737 = vmul.f32 %v783, %v1498
  %v1738 = vmul.f32 %v806, %v1506
  %v1739 = vadd.f32 %v1737, %v1738
  %v1740 = vmul.f32 %v829, %v1514
  %v1741 = vadd.f32 %v1739, %v1740
  %v1742 = vmul.f32 %v852, %v1522
  %v1743 = vadd.f32 %v1741, %v1742
  %v1744 = vmul.f32 %v783, %v1500
  %v1745 = vmul.f32 %v806, %v1508
  %v1746 = vadd.f32 %v1744, %v1745
  %v1747 = vmul.f32 %v829, %v1516
  %v1748 = vadd.f32 %v1746, %v1747
  %v1749 = vmul.f32 %v852, %v1524
  %v1750 = vadd.f32 %v1748, %v1749
  %v1751 = vmul.f32 %v783, %v1502
  %v1752 = vmul.f32 %v806, %v1510
  %v1753 = vadd.f32 %v1751, %v1752
  %v1754 = vmul.f32 %v829, %v1518
  %v1755 = vadd.f32 %v1753, %v1754
  %v1756 = vmul.f32 %v852, %v1526
  %v1757 = vadd.f32 %v1755, %v1756
  %v1758 = vmul.f32 %v783, %v1504
  %v1759 = vmul.f32 %v806, %v1512
  %v1760 = vadd.f32 %v1758, %v1759
  %v1761 = vmul.f32 %v829, %v1520
  %v1762 = vadd.f32 %v1760, %v1761
  %v1763 = vmul.f32 %v852, %v1528
  %v1764 = vadd.f32 %v1762, %v1763
  %v1765 = vmul.f32 %v875, %v1498
  %v1766 = vmul.f32 %v898, %v1506
  %v1767 = vadd.f32 %v1765, %v1766
  %v1768 = vmul.f32 %v921, %v1514
  %v1769 = vadd.f32 %v1767, %v1768
  %v1770 = vmul.f32 %v944, %v1522
  %v1771 = vadd.f32 %v1769, %v1770
  %v1772 = vmul.f32 %v875, %v1500
  %v1773 = vmul.f32 %v898, %v1508
  %v1774 = vadd.f32 %v1772, %v1773
  %v1775 = vmul.f32 %v921, %v1516
  %v1776 = vadd.f32 %v1774, %v1775
  %v1777 = vmul.f32 %v944, %v1524
  %v1778 = vadd.f32 %v1776, %v1777
  %v1779 = vmul.f32 %v875, %v1502
  %v1780 = vmul.f32 %v898, %v1510
  %v1781 = vadd.f32 %v1779, %v1780
  %v1782 = vmul.f32 %v921, %v1518
  %v1783 = vadd.f32 %v1781, %v1782
  %v1784 = vmul.f32 %v944, %v1526
  %v1785 = vadd.f32 %v1783, %v1784
  %v1786 = vmul.f32 %v875, %v1504
  %v1787 = vmul.f32 %v898, %v1512
  %v1788 = vadd.f32 %v1786, %v1787
  %v1789 = vmul.f32 %v921, %v1520
  %v1790 = vadd.f32 %v1788, %v1789
  %v1791 = vmul.f32 %v944, %v1528
  %v1792 = vadd.f32 %v1790, %v1791
  %v1793 = vmul.f32 %v967, %v1498
  %v1794 = vmul.f32 %v990, %v1506
  %v1795 = vadd.f32 %v1793, %v1794
  %v1796 = vmul.f32 %v1013, %v1514
  %v1797 = vadd.f32 %v1795, %v1796
  %v1798 = vmul.f32 %v1036, %v1522
  %v1799 = vadd.f32 %v1797, %v1798
  %v1800 = vmul.f32 %v967, %v1500
  %v1801 = vmul.f32 %v990, %v1508
  %v1802 = vadd.f32 %v1800, %v1801
  %v1803 = vmul.f32 %v1013, %v1516
  %v1804 = vadd.f32 %v1802, %v1803
  %v1805 = vmul.f32 %v1036, %v1524
  %v1806 = vadd.f32 %v1804, %v1805
  %v1807 = vmul.f32 %v967, %v1502
  %v1808 = vmul.f32 %v990, %v1510
  %v1809 = vadd.f32 %v1807, %v1808
  %v1810 = vmul.f32 %v1013, %v1518
  %v1811 = vadd.f32 %v1809, %v1810
  %v1812 = vmul.f32 %v1036, %v1526
  %v1813 = vadd.f32 %v1811, %v1812
  %v1814 = vmul.f32 %v967, %v1504
  %v1815 = vmul.f32 %v990, %v1512
  %v1816 = vadd.f32 %v1814, %v1815
  %v1817 = vmul.f32 %v1013, %v1520
  %v1818 = vadd.f32 %v1816, %v1817
  %v1819 = vmul.f32 %v1036, %v1528
  %v1820 = vadd.f32 %v1818, %v1819
  %v1821 = vmul.f32 %v1059, %v1498
  %v1822 = vmul.f32 %v1082, %v1506
  %v1823 = vadd.f32 %v1821, %v1822
  %v1824 = vmul.f32 %v1105, %v1514
  %v1825 = vadd.f32 %v1823, %v1824
  %v1826 = vmul.f32 %v1128, %v1522
  %v1827 = vadd.f32 %v1825, %v1826
  %v1828 = vmul.f32 %v1059, %v1500
  %v1829 = vmul.f32 %v1082, %v1508
  %v1830 = vadd.f32 %v1828, %v1829
  %v1831 = vmul.f32 %v1105, %v1516
  %v1832 = vadd.f32 %v1830, %v1831
  %v1833 = vmul.f32 %v1128, %v1524
  %v1834 = vadd.f32 %v1832, %v1833
  %v1835 = vmul.f32 %v1059, %v1502
  %v1836 = vmul.f32 %v1082, %v1510
  %v1837 = vadd.f32 %v1835, %v1836
  %v1838 = vmul.f32 %v1105, %v1518
  %v1839 = vadd.f32 %v1837, %v1838
  %v1840 = vmul.f32 %v1128, %v1526
  %v1841 = vadd.f32 %v1839, %v1840
  %v1842 = vmul.f32 %v1059, %v1504
  %v1843 = vmul.f32 %v1082, %v1512
  %v1844 = vadd.f32 %v1842, %v1843
  %v1845 = vmul.f32 %v1105, %v1520
  %v1846 = vadd.f32 %v1844, %v1845
  %v1847 = vmul.f32 %v1128, %v1528
  %v1848 = vadd.f32 %v1846, %v1847
  %v1849 = vmul.f32 %v1151, %v1498
  %v1850 = vmul.f32 %v1174, %v1506
  %v1851 = vadd.f32 %v1849, %v1850
  %v1852 = vmul.f32 %v1197, %v1514
  %v1853 = vadd.f32 %v1851, %v1852
  %v1854 = vmul.f32 %v1220, %v1522
  %v1855 = vadd.f32 %v1853, %v1854
  %v1856 = vmul.f32 %v1151, %v1500
  %v1857 = vmul.f32 %v1174, %v1508
  %v1858 = vadd.f32 %v1856, %v1857
  %v1859 = vmul.f32 %v1197, %v1516
  %v1860 = vadd.f32 %v1858, %v1859
  %v1861 = vmul.f32 %v1220, %v1524
  %v1862 = vadd.f32 %v1860, %v1861
  %v1863 = vmul.f32 %v1151, %v1502
  %v1864 = vmul.f32 %v1174, %v1510
  %v1865 = vadd.f32 %v1863, %v1864
  %v1866 = vmul.f32 %v1197, %v1518
  %v1867 = vadd.f32 %v1865, %v1866
  %v1868 = vmul.f32 %v1220, %v1526
  %v1869 = vadd.f32 %v1867, %v1868
  %v1870 = vmul.f32 %v1151, %v1504
  %v1871 = vmul.f32 %v1174, %v1512
  %v1872 = vadd.f32 %v1870, %v1871
  %v1873 = vmul.f32 %v1197, %v1520
  %v1874 = vadd.f32 %v1872, %v1873
  %v1875 = vmul.f32 %v1220, %v1528
  %v1876 = vadd.f32 %v1874, %v1875
  %v1877 = vmul.f32 %v1243, %v1498
  %v1878 = vmul.f32 %v1266, %v1506
  %v1879 = vadd.f32 %v1877, %v1878
  %v1880 = vmul.f32 %v1289, %v1514
  %v1881 = vadd.f32 %v1879, %v1880
  %v1882 = vmul.f32 %v1312, %v1522
  %v1883 = vadd.f32 %v1881, %v1882
  %v1884 = vmul.f32 %v1243, %v1500
  %v1885 = vmul.f32 %v1266, %v1508
  %v1886 = vadd.f32 %v1884, %v1885
  %v1887 = vmul.f32 %v1289, %v1516
  %v1888 = vadd.f32 %v1886, %v1887
  %v1889 = vmul.f32 %v1312, %v1524
  %v1890 = vadd.f32 %v1888, %v1889
  %v1891 = vmul.f32 %v1243, %v1502
  %v1892 = vmul.f32 %v1266, %v1510
  %v1893 = vadd.f32 %v1891, %v1892
  %v1894 = vmul.f32 %v1289, %v1518
  %v1895 = vadd.f32 %v1893, %v1894
  %v1896 = vmul.f32 %v1312, %v1526
  %v1897 = vadd.f32 %v1895, %v1896
  %v1898 = vmul.f32 %v1243, %v1504
  %v1899 = vmul.f32 %v1266, %v1512
  %v1900 = vadd.f32 %v1898, %v1899
  %v1901 = vmul.f32 %v1289, %v1520
  %v1902 = vadd.f32 %v1900, %v1901
  %v1903 = vmul.f32 %v1312, %v1528
  %v1904 = vadd.f32 %v1902, %v1903
  %v1905 = vmul.f32 %v1335, %v1498
  %v1906 = vmul.f32 %v1358, %v1506
  %v1907 = vadd.f32 %v1905, %v1906
  %v1908 = vmul.f32 %v1381, %v1514
  %v1909 = vadd.f32 %v1907, %v1908
  %v1910 = vmul.f32 %v1404, %v1522
  %v1911 = vadd.f32 %v1909, %v1910
  %v1912 = vmul.f32 %v1335, %v1500
  %v1913 = vmul.f32 %v1358, %v1508
  %v1914 = vadd.f32 %v1912, %v1913
  %v1915 = vmul.f32 %v1381, %v1516
  %v1916 = vadd.f32 %v1914, %v1915
  %v1917 = vmul.f32 %v1404, %v1524
  %v1918 = vadd.f32 %v1916, %v1917
  %v1919 = vmul.f32 %v1335, %v1502
  %v1920 = vmul.f32 %v1358, %v1510
  %v1921 = vadd.f32 %v1919, %v1920
  %v1922 = vmul.f32 %v1381, %v1518
  %v1923 = vadd.f32 %v1921, %v1922
  %v1924 = vmul.f32 %v1404, %v1526
  %v1925 = vadd.f32 %v1923, %v1924
  %v1926 = vmul.f32 %v1335, %v1504
  %v1927 = vmul.f32 %v1358, %v1512
  %v1928 = vadd.f32 %v1926, %v1927
  %v1929 = vmul.f32 %v1381, %v1520
  %v1930 = vadd.f32 %v1928, %v1929
  %v1931 = vmul.f32 %v1404, %v1528
  %v1932 = vadd.f32 %v1930, %v1931
  %v1933 = vmul.f32 %v1427, %v1498
  %v1934 = vmul.f32 %v1450, %v1506
  %v1935 = vadd.f32 %v1933, %v1934
  %v1936 = vmul.f32 %v1473, %v1514
  %v1937 = vadd.f32 %v1935, %v1936
  %v1938 = vmul.f32 %v1496, %v1522
  %v1939 = vadd.f32 %v1937, %v1938
  %v1940 = vmul.f32 %v1427, %v1500
  %v1941 = vmul.f32 %v1450, %v1508
  %v1942 = vadd.f32 %v1940, %v1941
  %v1943 = vmul.f32 %v1473, %v1516
  %v1944 = vadd.f32 %v1942, %v1943
  %v1945 = vmul.f32 %v1496, %v1524
  %v1946 = vadd.f32 %v1944, %v1945
  %v1947 = vmul.f32 %v1427, %v1502
  %v1948 = vmul.f32 %v1450, %v1510
  %v1949 = vadd.f32 %v1947, %v1948
  %v1950 = vmul.f32 %v1473, %v1518
  %v1951 = vadd.f32 %v1949, %v1950
  %v1952 = vmul.f32 %v1496, %v1526
  %v1953 = vadd.f32 %v1951, %v1952
  %v1954 = vmul.f32 %v1427, %v1504
  %v1955 = vmul.f32 %v1450, %v1512
  %v1956 = vadd.f32 %v1954, %v1955
  %v1957 = vmul.f32 %v1473, %v1520
  %v1958 = vadd.f32 %v1956, %v1957
  %v1959 = vmul.f32 %v1496, %v1528
  %v1960 = vadd.f32 %v1958, %v1959
  %v1961 = vmul.f32 %v1631, %v1530
  %v1962 = vmul.f32 %v1638, %v1554
  %v1963 = vadd.f32 %v1961, %v1962
  %v1964 = vmul.f32 %v1645, %v1578
  %v1965 = vadd.f32 %v1963, %v1964
  %v1966 = vmul.f32 %v1652, %v1602
  %v1967 = vadd.f32 %v1965, %v1966
  %v1968 = vmul.f32 %v1631, %v1532
  %v1969 = vmul.f32 %v1638, %v1556
  %v1970 = vadd.f32 %v1968, %v1969
  %v1971 = vmul.f32 %v1645, %v1580
  %v1972 = vadd.f32 %v1970, %v1971
  %v1973 = vmul.f32 %v1652, %v1604
  %v1974 = vadd.f32 %v1972, %v1973
  %v1975 = vmul.f32 %v1631, %v1534
  %v1976 = vmul.f32 %v1638, %v1558
  %v1977 = vadd.f32 %v1975, %v1976
  %v1978 = vmul.f32 %v1645, %v1582
  %v1979 = vadd.f32 %v1977, %v1978
  %v1980 = vmul.f32 %v1652, %v1606
  %v1981 = vadd.f32 %v1979, %v1980
  %v1982 = vmul.f32 %v1631, %v1536
  %v1983 = vmul.f32 %v1638, %v1560
  %v1984 = vadd.f32 %v1982, %v1983
  %v1985 = vmul.f32 %v1645, %v1584
  %v1986 = vadd.f32 %v1984, %v1985
  %v1987 = vmul.f32 %v1652, %v1608
  %v1988 = vadd.f32 %v1986, %v1987
  %v1989 = vmul.f32 %v1631, %v1538
  %v1990 = vmul.f32 %v1638, %v1562
  %v1991 = vadd.f32 %v1989, %v1990
  %v1992 = vmul.f32 %v1645, %v1586
  %v1993 = vadd.f32 %v1991, %v1992
  %v1994 = vmul.f32 %v1652, %v1610
  %v1995 = vadd.f32 %v1993, %v1994
  %v1996 = vmul.f32 %v1631, %v1540
  %v1997 = vmul.f32 %v1638, %v1564
  %v1998 = vadd.f32 %v1996, %v1997
  %v1999 = vmul.f32 %v1645, %v1588
  %v2000 = vadd.f32 %v1998, %v1999
  %v2001 = vmul.f32 %v1652, %v1612
  %v2002 = vadd.f32 %v2000, %v2001
  %v2003 = vmul.f32 %v1631, %v1542
  %v2004 = vmul.f32 %v1638, %v1566
  %v2005 = vadd.f32 %v2003, %v2004
  %v2006 = vmul.f32 %v1645, %v1590
  %v2007 = vadd.f32 %v2005, %v2006
  %v2008 = vmul.f32 %v1652, %v1614
  %v2009 = vadd.f32 %v2007, %v2008
  %v2010 = vmul.f32 %v1631, %v1544
  %v2011 = vmul.f32 %v1638, %v1568
  %v2012 = vadd.f32 %v2010, %v2011
  %v2013 = vmul.f32 %v1645, %v1592
  %v2014 = vadd.f32 %v2012, %v2013
  %v2015 = vmul.f32 %v1652, %v1616
  %v2016 = vadd.f32 %v2014, %v2015
  %v2017 = vmul.f32 %v1631, %v1546
  %v2018 = vmul.f32 %v1638, %v1570
  %v2019 = vadd.f32 %v2017, %v2018
  %v2020 = vmul.f32 %v1645, %v1594
  %v2021 = vadd.f32 %v2019, %v2020
  %v2022 = vmul.f32 %v1652, %v1618
  %v2023 = vadd.f32 %v2021, %v2022
  %v2024 = vmul.f32 %v1631, %v1548
  %v2025 = vmul.f32 %v1638, %v1572
  %v2026 = vadd.f32 %v2024, %v2025
  %v2027 = vmul.f32 %v1645, %v1596
  %v2028 = vadd.f32 %v2026, %v2027
  %v2029 = vmul.f32 %v1652, %v1620
  %v2030 = vadd.f32 %v2028, %v2029
  %v2031 = vmul.f32 %v1631, %v1550
  %v2032 = vmul.f32 %v1638, %v1574
  %v2033 = vadd.f32 %v2031, %v2032
  %v2034 = vmul.f32 %v1645, %v1598
  %v2035 = vadd.f32 %v2033, %v2034
  %v2036 = vmul.f32 %v1652, %v1622
  %v2037 = vadd.f32 %v2035, %v2036
  %v2038 = vmul.f32 %v1631, %v1552
  %v2039 = vmul.f32 %v1638, %v1576
  %v2040 = vadd.f32 %v2038, %v2039
  %v2041 = vmul.f32 %v1645, %v1600
  %v2042 = vadd.f32 %v2040, %v2041
  %v2043 = vmul.f32 %v1652, %v1624
  %v2044 = vadd.f32 %v2042, %v2043
  %v2045 = vmul.f32 %v1659, %v1530
  %v2046 = vmul.f32 %v1666, %v1554
  %v2047 = vadd.f32 %v2045, %v2046
  %v2048 = vmul.f32 %v1673, %v1578
  %v2049 = vadd.f32 %v2047, %v2048
  %v2050 = vmul.f32 %v1680, %v1602
  %v2051 = vadd.f32 %v2049, %v2050
  %v2052 = vmul.f32 %v1659, %v1532
  %v2053 = vmul.f32 %v1666, %v1556
  %v2054 = vadd.f32 %v2052, %v2053
  %v2055 = vmul.f32 %v1673, %v1580
  %v2056 = vadd.f32 %v2054, %v2055
  %v2057 = vmul.f32 %v1680, %v1604
  %v2058 = vadd.f32 %v2056, %v2057
  %v2059 = vmul.f32 %v1659, %v1534
  %v2060 = vmul.f32 %v1666, %v1558
  %v2061 = vadd.f32 %v2059, %v2060
  %v2062 = vmul.f32 %v1673, %v1582
  %v2063 = vadd.f32 %v2061, %v2062
  %v2064 = vmul.f32 %v1680, %v1606
  %v2065 = vadd.f32 %v2063, %v2064
  %v2066 = vmul.f32 %v1659, %v1536
  %v2067 = vmul.f32 %v1666, %v1560
  %v2068 = vadd.f32 %v2066, %v2067
  %v2069 = vmul.f32 %v1673, %v1584
  %v2070 = vadd.f32 %v2068, %v2069
  %v2071 = vmul.f32 %v1680, %v1608
  %v2072 = vadd.f32 %v2070, %v2071
  %v2073 = vmul.f32 %v1659, %v1538
  %v2074 = vmul.f32 %v1666, %v1562
  %v2075 = vadd.f32 %v2073, %v2074
  %v2076 = vmul.f32 %v1673, %v1586
  %v2077 = vadd.f32 %v2075, %v2076
  %v2078 = vmul.f32 %v1680, %v1610
  %v2079 = vadd.f32 %v2077, %v2078
  %v2080 = vmul.f32 %v1659, %v1540
  %v2081 = vmul.f32 %v1666, %v1564
  %v2082 = vadd.f32 %v2080, %v2081
  %v2083 = vmul.f32 %v1673, %v1588
  %v2084 = vadd.f32 %v2082, %v2083
  %v2085 = vmul.f32 %v1680, %v1612
  %v2086 = vadd.f32 %v2084, %v2085
  %v2087 = vmul.f32 %v1659, %v1542
  %v2088 = vmul.f32 %v1666, %v1566
  %v2089 = vadd.f32 %v2087, %v2088
  %v2090 = vmul.f32 %v1673, %v1590
  %v2091 = vadd.f32 %v2089, %v2090
  %v2092 = vmul.f32 %v1680, %v1614
  %v2093 = vadd.f32 %v2091, %v2092
  %v2094 = vmul.f32 %v1659, %v1544
  %v2095 = vmul.f32 %v1666, %v1568
  %v2096 = vadd.f32 %v2094, %v2095
  %v2097 = vmul.f32 %v1673, %v1592
  %v2098 = vadd.f32 %v2096, %v2097
  %v2099 = vmul.f32 %v1680, %v1616
  %v2100 = vadd.f32 %v2098, %v2099
  %v2101 = vmul.f32 %v1659, %v1546
  %v2102 = vmul.f32 %v1666, %v1570
  %v2103 = vadd.f32 %v2101, %v2102
  %v2104 = vmul.f32 %v1673, %v1594
  %v2105 = vadd.f32 %v2103, %v2104
  %v2106 = vmul.f32 %v1680, %v1618
  %v2107 = vadd.f32 %v2105, %v2106
  %v2108 = vmul.f32 %v1659, %v1548
  %v2109 = vmul.f32 %v1666, %v1572
  %v2110 = vadd.f32 %v2108, %v2109
  %v2111 = vmul.f32 %v1673, %v1596
  %v2112 = vadd.f32 %v2110, %v2111
  %v2113 = vmul.f32 %v1680, %v1620
  %v2114 = vadd.f32 %v2112, %v2113
  %v2115 = vmul.f32 %v1659, %v1550
  %v2116 = vmul.f32 %v1666, %v1574
  %v2117 = vadd.f32 %v2115, %v2116
  %v2118 = vmul.f32 %v1673, %v1598
  %v2119 = vadd.f32 %v2117, %v2118
  %v2120 = vmul.f32 %v1680, %v1622
  %v2121 = vadd.f32 %v2119, %v2120
  %v2122 = vmul.f32 %v1659, %v1552
  %v2123 = vmul.f32 %v1666, %v1576
  %v2124 = vadd.f32 %v2122, %v2123
  %v2125 = vmul.f32 %v1673, %v1600
  %v2126 = vadd.f32 %v2124, %v2125
  %v2127 = vmul.f32 %v1680, %v1624
  %v2128 = vadd.f32 %v2126, %v2127
  %v2129 = vmul.f32 %v1687, %v1530
  %v2130 = vmul.f32 %v1694, %v1554
  %v2131 = vadd.f32 %v2129, %v2130
  %v2132 = vmul.f32 %v1701, %v1578
  %v2133 = vadd.f32 %v2131, %v2132
  %v2134 = vmul.f32 %v1708, %v1602
  %v2135 = vadd.f32 %v2133, %v2134
  %v2136 = vmul.f32 %v1687, %v1532
  %v2137 = vmul.f32 %v1694, %v1556
  %v2138 = vadd.f32 %v2136, %v2137
  %v2139 = vmul.f32 %v1701, %v1580
  %v2140 = vadd.f32 %v2138, %v2139
  %v2141 = vmul.f32 %v1708, %v1604
  %v2142 = vadd.f32 %v2140, %v2141
  %v2143 = vmul.f32 %v1687, %v1534
  %v2144 = vmul.f32 %v1694, %v1558
  %v2145 = vadd.f32 %v2143, %v2144
  %v2146 = vmul.f32 %v1701, %v1582
  %v2147 = vadd.f32 %v2145, %v2146
  %v2148 = vmul.f32 %v1708, %v1606
  %v2149 = vadd.f32 %v2147, %v2148
  %v2150 = vmul.f32 %v1687, %v1536
  %v2151 = vmul.f32 %v1694, %v1560
  %v2152 = vadd.f32 %v2150, %v2151
  %v2153 = vmul.f32 %v1701, %v1584
  %v2154 = vadd.f32 %v2152, %v2153
  %v2155 = vmul.f32 %v1708, %v1608
  %v2156 = vadd.f32 %v2154, %v2155
  %v2157 = vmul.f32 %v1687, %v1538
  %v2158 = vmul.f32 %v1694, %v1562
  %v2159 = vadd.f32 %v2157, %v2158
  %v2160 = vmul.f32 %v1701, %v1586
  %v2161 = vadd.f32 %v2159, %v2160
  %v2162 = vmul.f32 %v1708, %v1610
  %v2163 = vadd.f32 %v2161, %v2162
  %v2164 = vmul.f32 %v1687, %v1540
  %v2165 = vmul.f32 %v1694, %v1564
  %v2166 = vadd.f32 %v2164, %v2165
  %v2167 = vmul.f32 %v1701, %v1588
  %v2168 = vadd.f32 %v2166, %v2167
  %v2169 = vmul.f32 %v1708, %v1612
  %v2170 = vadd.f32 %v2168, %v2169
  %v2171 = vmul.f32 %v1687, %v1542
  %v2172 = vmul.f32 %v1694, %v1566
  %v2173 = vadd.f32 %v2171, %v2172
  %v2174 = vmul.f32 %v1701, %v1590
  %v2175 = vadd.f32 %v2173, %v2174
  %v2176 = vmul.f32 %v1708, %v1614
  %v2177 = vadd.f32 %v2175, %v2176
  %v2178 = vmul.f32 %v1687, %v1544
  %v2179 = vmul.f32 %v1694, %v1568
  %v2180 = vadd.f32 %v2178, %v2179
  %v2181 = vmul.f32 %v1701, %v1592
  %v2182 = vadd.f32 %v2180, %v2181
  %v2183 = vmul.f32 %v1708, %v1616
  %v2184 = vadd.f32 %v2182, %v2183
  %v2185 = vmul.f32 %v1687, %v1546
  %v2186 = vmul.f32 %v1694, %v1570
  %v2187 = vadd.f32 %v2185, %v2186
  %v2188 = vmul.f32 %v1701, %v1594
  %v2189 = vadd.f32 %v2187, %v2188
  %v2190 = vmul.f32 %v1708, %v1618
  %v2191 = vadd.f32 %v2189, %v2190
  %v2192 = vmul.f32 %v1687, %v1548
  %v2193 = vmul.f32 %v1694, %v1572
  %v2194 = vadd.f32 %v2192, %v2193
  %v2195 = vmul.f32 %v1701, %v1596
  %v2196 = vadd.f32 %v2194, %v2195
  %v2197 = vmul.f32 %v1708, %v1620
  %v2198 = vadd.f32 %v2196, %v2197
  %v2199 = vmul.f32 %v1687, %v1550
  %v2200 = vmul.f32 %v1694, %v1574
  %v2201 = vadd.f32 %v2199, %v2200
  %v2202 = vmul.f32 %v1701, %v1598
  %v2203 = vadd.f32 %v2201, %v2202
  %v2204 = vmul.f32 %v1708, %v1622
  %v2205 = vadd.f32 %v2203, %v2204
  %v2206 = vmul.f32 %v1687, %v1552
  %v2207 = vmul.f32 %v1694, %v1576
  %v2208 = vadd.f32 %v2206, %v2207
  %v2209 = vmul.f32 %v1701, %v1600
  %v2210 = vadd.f32 %v2208, %v2209
  %v2211 = vmul.f32 %v1708, %v1624
  %v2212 = vadd.f32 %v2210, %v2211
  %v2213 = vmul.f32 %v1715, %v1530
  %v2214 = vmul.f32 %v1722, %v1554
  %v2215 = vadd.f32 %v2213, %v2214
  %v2216 = vmul.f32 %v1729, %v1578
  %v2217 = vadd.f32 %v2215, %v2216
  %v2218 = vmul.f32 %v1736, %v1602
  %v2219 = vadd.f32 %v2217, %v2218
  %v2220 = vmul.f32 %v1715, %v1532
  %v2221 = vmul.f32 %v1722, %v1556
  %v2222 = vadd.f32 %v2220, %v2221
  %v2223 = vmul.f32 %v1729, %v1580
  %v2224 = vadd.f32 %v2222, %v2223
  %v2225 = vmul.f32 %v1736, %v1604
  %v2226 = vadd.f32 %v2224, %v2225
  %v2227 = vmul.f32 %v1715, %v1534
  %v2228 = vmul.f32 %v1722, %v1558
  %v2229 = vadd.f32 %v2227, %v2228
  %v2230 = vmul.f32 %v1729, %v1582
  %v2231 = vadd.f32 %v2229, %v2230
  %v2232 = vmul.f32 %v1736, %v1606
  %v2233 = vadd.f32 %v2231, %v2232
  %v2234 = vmul.f32 %v1715, %v1536
  %v2235 = vmul.f32 %v1722, %v1560
  %v2236 = vadd.f32 %v2234, %v2235
  %v2237 = vmul.f32 %v1729, %v1584
  %v2238 = vadd.f32 %v2236, %v2237
  %v2239 = vmul.f32 %v1736, %v1608
  %v2240 = vadd.f32 %v2238, %v2239
  %v2241 = vmul.f32 %v1715, %v1538
  %v2242 = vmul.f32 %v1722, %v1562
  %v2243 = vadd.f32 %v2241, %v2242
  %v2244 = vmul.f32 %v1729, %v1586
  %v2245 = vadd.f32 %v2243, %v2244
  %v2246 = vmul.f32 %v1736, %v1610
  %v2247 = vadd.f32 %v2245, %v2246
  %v2248 = vmul.f32 %v1715, %v1540
  %v2249 = vmul.f32 %v1722, %v1564
  %v2250 = vadd.f32 %v2248, %v2249
  %v2251 = vmul.f32 %v1729, %v1588
  %v2252 = vadd.f32 %v2250, %v2251
  %v2253 = vmul.f32 %v1736, %v1612
  %v2254 = vadd.f32 %v2252, %v2253
  %v2255 = vmul.f32 %v1715, %v1542
  %v2256 = vmul.f32 %v1722, %v1566
  %v2257 = vadd.f32 %v2255, %v2256
  %v2258 = vmul.f32 %v1729, %v1590
  %v2259 = vadd.f32 %v2257, %v2258
  %v2260 = vmul.f32 %v1736, %v1614
  %v2261 = vadd.f32 %v2259, %v2260
  %v2262 = vmul.f32 %v1715, %v1544
  %v2263 = vmul.f32 %v1722, %v1568
  %v2264 = vadd.f32 %v2262, %v2263
  %v2265 = vmul.f32 %v1729, %v1592
  %v2266 = vadd.f32 %v2264, %v2265
  %v2267 = vmul.f32 %v1736, %v1616
  %v2268 = vadd.f32 %v2266, %v2267
  %v2269 = vmul.f32 %v1715, %v1546
  %v2270 = vmul.f32 %v1722, %v1570
  %v2271 = vadd.f32 %v2269, %v2270
  %v2272 = vmul.f32 %v1729, %v1594
  %v2273 = vadd.f32 %v2271, %v2272
  %v2274 = vmul.f32 %v1736, %v1618
  %v2275 = vadd.f32 %v2273, %v2274
  %v2276 = vmul.f32 %v1715, %v1548
  %v2277 = vmul.f32 %v1722, %v1572
  %v2278 = vadd.f32 %v2276, %v2277
  %v2279 = vmul.f32 %v1729, %v1596
  %v2280 = vadd.f32 %v2278, %v2279
  %v2281 = vmul.f32 %v1736, %v1620
  %v2282 = vadd.f32 %v2280, %v2281
  %v2283 = vmul.f32 %v1715, %v1550
  %v2284 = vmul.f32 %v1722, %v1574
  %v2285 = vadd.f32 %v2283, %v2284
  %v2286 = vmul.f32 %v1729, %v1598
  %v2287 = vadd.f32 %v2285, %v2286
  %v2288 = vmul.f32 %v1736, %v1622
  %v2289 = vadd.f32 %v2287, %v2288
  %v2290 = vmul.f32 %v1715, %v1552
  %v2291 = vmul.f32 %v1722, %v1576
  %v2292 = vadd.f32 %v2290, %v2291
  %v2293 = vmul.f32 %v1729, %v1600
  %v2294 = vadd.f32 %v2292, %v2293
  %v2295 = vmul.f32 %v1736, %v1624
  %v2296 = vadd.f32 %v2294, %v2295
  %v2297 = vmul.f32 %v1743, %v1530
  %v2298 = vmul.f32 %v1750, %v1554
  %v2299 = vadd.f32 %v2297, %v2298
  %v2300 = vmul.f32 %v1757, %v1578
  %v2301 = vadd.f32 %v2299, %v2300
  %v2302 = vmul.f32 %v1764, %v1602
  %v2303 = vadd.f32 %v2301, %v2302
  %v2304 = vmul.f32 %v1743, %v1532
  %v2305 = vmul.f32 %v1750, %v1556
  %v2306 = vadd.f32 %v2304, %v2305
  %v2307 = vmul.f32 %v1757, %v1580
  %v2308 = vadd.f32 %v2306, %v2307
  %v2309 = vmul.f32 %v1764, %v1604
  %v2310 = vadd.f32 %v2308, %v2309
  %v2311 = vmul.f32 %v1743, %v1534
  %v2312 = vmul.f32 %v1750, %v1558
  %v2313 = vadd.f32 %v2311, %v2312
  %v2314 = vmul.f32 %v1757, %v1582
  %v2315 = vadd.f32 %v2313, %v2314
  %v2316 = vmul.f32 %v1764, %v1606
  %v2317 = vadd.f32 %v2315, %v2316
  %v2318 = vmul.f32 %v1743, %v1536
  %v2319 = vmul.f32 %v1750, %v1560
  %v2320 = vadd.f32 %v2318, %v2319
  %v2321 = vmul.f32 %v1757, %v1584
  %v2322 = vadd.f32 %v2320, %v2321
  %v2323 = vmul.f32 %v1764, %v1608
  %v2324 = vadd.f32 %v2322, %v2323
  %v2325 = vmul.f32 %v1743, %v1538
  %v2326 = vmul.f32 %v1750, %v1562
  %v2327 = vadd.f32 %v2325, %v2326
  %v2328 = vmul.f32 %v1757, %v1586
  %v2329 = vadd.f32 %v2327, %v2328
  %v2330 = vmul.f32 %v1764, %v1610
  %v2331 = vadd.f32 %v2329, %v2330
  %v2332 = vmul.f32 %v1743, %v1540
  %v2333 = vmul.f32 %v1750, %v1564
  %v2334 = vadd.f32 %v2332, %v2333
  %v2335 = vmul.f32 %v1757, %v1588
  %v2336 = vadd.f32 %v2334, %v2335
  %v2337 = vmul.f32 %v1764, %v1612
  %v2338 = vadd.f32 %v2336, %v2337
  %v2339 = vmul.f32 %v1743, %v1542
  %v2340 = vmul.f32 %v1750, %v1566
  %v2341 = vadd.f32 %v2339, %v2340
  %v2342 = vmul.f32 %v1757, %v1590
  %v2343 = vadd.f32 %v2341, %v2342
  %v2344 = vmul.f32 %v1764, %v1614
  %v2345 = vadd.f32 %v2343, %v2344
  %v2346 = vmul.f32 %v1743, %v1544
  %v2347 = vmul.f32 %v1750, %v1568
  %v2348 = vadd.f32 %v2346, %v2347
  %v2349 = vmul.f32 %v1757, %v1592
  %v2350 = vadd.f32 %v2348, %v2349
  %v2351 = vmul.f32 %v1764, %v1616
  %v2352 = vadd.f32 %v2350, %v2351
  %v2353 = vmul.f32 %v1743, %v1546
  %v2354 = vmul.f32 %v1750, %v1570
  %v2355 = vadd.f32 %v2353, %v2354
  %v2356 = vmul.f32 %v1757, %v1594
  %v2357 = vadd.f32 %v2355, %v2356
  %v2358 = vmul.f32 %v1764, %v1618
  %v2359 = vadd.f32 %v2357, %v2358
  %v2360 = vmul.f32 %v1743, %v1548
  %v2361 = vmul.f32 %v1750, %v1572
  %v2362 = vadd.f32 %v2360, %v2361
  %v2363 = vmul.f32 %v1757, %v1596
  %v2364 = vadd.f32 %v2362, %v2363
  %v2365 = vmul.f32 %v1764, %v1620
  %v2366 = vadd.f32 %v2364, %v2365
  %v2367 = vmul.f32 %v1743, %v1550
  %v2368 = vmul.f32 %v1750, %v1574
  %v2369 = vadd.f32 %v2367, %v2368
  %v2370 = vmul.f32 %v1757, %v1598
  %v2371 = vadd.f32 %v2369, %v2370
  %v2372 = vmul.f32 %v1764, %v1622
  %v2373 = vadd.f32 %v2371, %v2372
  %v2374 = vmul.f32 %v1743, %v1552
  %v2375 = vmul.f32 %v1750, %v1576
  %v2376 = vadd.f32 %v2374, %v2375
  %v2377 = vmul.f32 %v1757, %v1600
  %v2378 = vadd.f32 %v2376, %v2377
  %v2379 = vmul.f32 %v1764, %v1624
  %v2380 = vadd.f32 %v2378, %v2379
  %v2381 = vmul.f32 %v1771, %v1530
  %v2382 = vmul.f32 %v1778, %v1554
  %v2383 = vadd.f32 %v2381, %v2382
  %v2384 = vmul.f32 %v1785, %v1578
  %v2385 = vadd.f32 %v2383, %v2384
  %v2386 = vmul.f32 %v1792, %v1602
  %v2387 = vadd.f32 %v2385, %v2386
  %v2388 = vmul.f32 %v1771, %v1532
  %v2389 = vmul.f32 %v1778, %v1556
  %v2390 = vadd.f32 %v2388, %v2389
  %v2391 = vmul.f32 %v1785, %v1580
  %v2392 = vadd.f32 %v2390, %v2391
  %v2393 = vmul.f32 %v1792, %v1604
  %v2394 = vadd.f32 %v2392, %v2393
  %v2395 = vmul.f32 %v1771, %v1534
  %v2396 = vmul.f32 %v1778, %v1558
  %v2397 = vadd.f32 %v2395, %v2396
  %v2398 = vmul.f32 %v1785, %v1582
  %v2399 = vadd.f32 %v2397, %v2398
  %v2400 = vmul.f32 %v1792, %v1606
  %v2401 = vadd.f32 %v2399, %v2400
  %v2402 = vmul.f32 %v1771, %v1536
  %v2403 = vmul.f32 %v1778, %v1560
  %v2404 = vadd.f32 %v2402, %v2403
  %v2405 = vmul.f32 %v1785, %v1584
  %v2406 = vadd.f32 %v2404, %v2405
  %v2407 = vmul.f32 %v1792, %v1608
  %v2408 = vadd.f32 %v2406, %v2407
  %v2409 = vmul.f32 %v1771, %v1538
  %v2410 = vmul.f32 %v1778, %v1562
  %v2411 = vadd.f32 %v2409, %v2410
  %v2412 = vmul.f32 %v1785, %v1586
  %v2413 = vadd.f32 %v2411, %v2412
  %v2414 = vmul.f32 %v1792, %v1610
  %v2415 = vadd.f32 %v2413, %v2414
  %v2416 = vmul.f32 %v1771, %v1540
  %v2417 = vmul.f32 %v1778, %v1564
  %v2418 = vadd.f32 %v2416, %v2417
  %v2419 = vmul.f32 %v1785, %v1588
  %v2420 = vadd.f32 %v2418, %v2419
  %v2421 = vmul.f32 %v1792, %v1612
  %v2422 = vadd.f32 %v2420, %v2421
  %v2423 = vmul.f32 %v1771, %v1542
  %v2424 = vmul.f32 %v1778, %v1566
  %v2425 = vadd.f32 %v2423, %v2424
  %v2426 = vmul.f32 %v1785, %v1590
  %v2427 = vadd.f32 %v2425, %v2426
  %v2428 = vmul.f32 %v1792, %v1614
  %v2429 = vadd.f32 %v2427, %v2428
  %v2430 = vmul.f32 %v1771, %v1544
  %v2431 = vmul.f32 %v1778, %v1568
  %v2432 = vadd.f32 %v2430, %v2431
  %v2433 = vmul.f32 %v1785, %v1592
  %v2434 = vadd.f32 %v2432, %v2433
  %v2435 = vmul.f32 %v1792, %v1616
  %v2436 = vadd.f32 %v2434, %v2435
  %v2437 = vmul.f32 %v1771, %v1546
  %v2438 = vmul.f32 %v1778, %v1570
  %v2439 = vadd.f32 %v2437, %v2438
  %v2440 = vmul.f32 %v1785, %v1594
  %v2441 = vadd.f32 %v2439, %v2440
  %v2442 = vmul.f32 %v1792, %v1618
  %v2443 = vadd.f32 %v2441, %v2442
  %v2444 = vmul.f32 %v1771, %v1548
  %v2445 = vmul.f32 %v1778, %v1572
  %v2446 = vadd.f32 %v2444, %v2445
  %v2447 = vmul.f32 %v1785, %v1596
  %v2448 = vadd.f32 %v2446, %v2447
  %v2449 = vmul.f32 %v1792, %v1620
  %v2450 = vadd.f32 %v2448, %v2449
  %v2451 = vmul.f32 %v1771, %v1550
  %v2452 = vmul.f32 %v1778, %v1574
  %v2453 = vadd.f32 %v2451, %v2452
  %v2454 = vmul.f32 %v1785, %v1598
  %v2455 = vadd.f32 %v2453, %v2454
  %v2456 = vmul.f32 %v1792, %v1622
  %v2457 = vadd.f32 %v2455, %v2456
  %v2458 = vmul.f32 %v1771, %v1552
  %v2459 = vmul.f32 %v1778, %v1576
  %v2460 = vadd.f32 %v2458, %v2459
  %v2461 = vmul.f32 %v1785, %v1600
  %v2462 = vadd.f32 %v2460, %v2461
  %v2463 = vmul.f32 %v1792, %v1624
  %v2464 = vadd.f32 %v2462, %v2463
  %v2465 = vmul.f32 %v1799, %v1530
  %v2466 = vmul.f32 %v1806, %v1554
  %v2467 = vadd.f32 %v2465, %v2466
  %v2468 = vmul.f32 %v1813, %v1578
  %v2469 = vadd.f32 %v2467, %v2468
  %v2470 = vmul.f32 %v1820, %v1602
  %v2471 = vadd.f32 %v2469, %v2470
  %v2472 = vmul.f32 %v1799, %v1532
  %v2473 = vmul.f32 %v1806, %v1556
  %v2474 = vadd.f32 %v2472, %v2473
  %v2475 = vmul.f32 %v1813, %v1580
  %v2476 = vadd.f32 %v2474, %v2475
  %v2477 = vmul.f32 %v1820, %v1604
  %v2478 = vadd.f32 %v2476, %v2477
  %v2479 = vmul.f32 %v1799, %v1534
  %v2480 = vmul.f32 %v1806, %v1558
  %v2481 = vadd.f32 %v2479, %v2480
  %v2482 = vmul.f32 %v1813, %v1582
  %v2483 = vadd.f32 %v2481, %v2482
  %v2484 = vmul.f32 %v1820, %v1606
  %v2485 = vadd.f32 %v2483, %v2484
  %v2486 = vmul.f32 %v1799, %v1536
  %v2487 = vmul.f32 %v1806, %v1560
  %v2488 = vadd.f32 %v2486, %v2487
  %v2489 = vmul.f32 %v1813, %v1584
  %v2490 = vadd.f32 %v2488, %v2489
  %v2491 = vmul.f32 %v1820, %v1608
  %v2492 = vadd.f32 %v2490, %v2491
  %v2493 = vmul.f32 %v1799, %v1538
  %v2494 = vmul.f32 %v1806, %v1562
  %v2495 = vadd.f32 %v2493, %v2494
  %v2496 = vmul.f32 %v1813, %v1586
  %v2497 = vadd.f32 %v2495, %v2496
  %v2498 = vmul.f32 %v1820, %v1610
  %v2499 = vadd.f32 %v2497, %v2498
  %v2500 = vmul.f32 %v1799, %v1540
  %v2501 = vmul.f32 %v1806, %v1564
  %v2502 = vadd.f32 %v2500, %v2501
  %v2503 = vmul.f32 %v1813, %v1588
  %v2504 = vadd.f32 %v2502, %v2503
  %v2505 = vmul.f32 %v1820, %v1612
  %v2506 = vadd.f32 %v2504, %v2505
  %v2507 = vmul.f32 %v1799, %v1542
  %v2508 = vmul.f32 %v1806, %v1566
  %v2509 = vadd.f32 %v2507, %v2508
  %v2510 = vmul.f32 %v1813, %v1590
  %v2511 = vadd.f32 %v2509, %v2510
  %v2512 = vmul.f32 %v1820, %v1614
  %v2513 = vadd.f32 %v2511, %v2512
  %v2514 = vmul.f32 %v1799, %v1544
  %v2515 = vmul.f32 %v1806, %v1568
  %v2516 = vadd.f32 %v2514, %v2515
  %v2517 = vmul.f32 %v1813, %v1592
  %v2518 = vadd.f32 %v2516, %v2517
  %v2519 = vmul.f32 %v1820, %v1616
  %v2520 = vadd.f32 %v2518, %v2519
  %v2521 = vmul.f32 %v1799, %v1546
  %v2522 = vmul.f32 %v1806, %v1570
  %v2523 = vadd.f32 %v2521, %v2522
  %v2524 = vmul.f32 %v1813, %v1594
  %v2525 = vadd.f32 %v2523, %v2524
  %v2526 = vmul.f32 %v1820, %v1618
  %v2527 = vadd.f32 %v2525, %v2526
  %v2528 = vmul.f32 %v1799, %v1548
  %v2529 = vmul.f32 %v1806, %v1572
  %v2530 = vadd.f32 %v2528, %v2529
  %v2531 = vmul.f32 %v1813, %v1596
  %v2532 = vadd.f32 %v2530, %v2531
  %v2533 = vmul.f32 %v1820, %v1620
  %v2534 = vadd.f32 %v2532, %v2533
  %v2535 = vmul.f32 %v1799, %v1550
  %v2536 = vmul.f32 %v1806, %v1574
  %v2537 = vadd.f32 %v2535, %v2536
  %v2538 = vmul.f32 %v1813, %v1598
  %v2539 = vadd.f32 %v2537, %v2538
  %v2540 = vmul.f32 %v1820, %v1622
  %v2541 = vadd.f32 %v2539, %v2540
  %v2542 = vmul.f32 %v1799, %v1552
  %v2543 = vmul.f32 %v1806, %v1576
  %v2544 = vadd.f32 %v2542, %v2543
  %v2545 = vmul.f32 %v1813, %v1600
  %v2546 = vadd.f32 %v2544, %v2545
  %v2547 = vmul.f32 %v1820, %v1624
  %v2548 = vadd.f32 %v2546, %v2547
  %v2549 = vmul.f32 %v1827, %v1530
  %v2550 = vmul.f32 %v1834, %v1554
  %v2551 = vadd.f32 %v2549, %v2550
  %v2552 = vmul.f32 %v1841, %v1578
  %v2553 = vadd.f32 %v2551, %v2552
  %v2554 = vmul.f32 %v1848, %v1602
  %v2555 = vadd.f32 %v2553, %v2554
  %v2556 = vmul.f32 %v1827, %v1532
  %v2557 = vmul.f32 %v1834, %v1556
  %v2558 = vadd.f32 %v2556, %v2557
  %v2559 = vmul.f32 %v1841, %v1580
  %v2560 = vadd.f32 %v2558, %v2559
  %v2561 = vmul.f32 %v1848, %v1604
  %v2562 = vadd.f32 %v2560, %v2561
  %v2563 = vmul.f32 %v1827, %v1534
  %v2564 = vmul.f32 %v1834, %v1558
  %v2565 = vadd.f32 %v2563, %v2564
  %v2566 = vmul.f32 %v1841, %v1582
  %v2567 = vadd.f32 %v2565, %v2566
  %v2568 = vmul.f32 %v1848, %v1606
  %v2569 = vadd.f32 %v2567, %v2568
  %v2570 = vmul.f32 %v1827, %v1536
  %v2571 = vmul.f32 %v1834, %v1560
  %v2572 = vadd.f32 %v2570, %v2571
  %v2573 = vmul.f32 %v1841, %v1584
  %v2574 = vadd.f32 %v2572, %v2573
  %v2575 = vmul.f32 %v1848, %v1608
  %v2576 = vadd.f32 %v2574, %v2575
  %v2577 = vmul.f32 %v1827, %v1538
  %v2578 = vmul.f32 %v1834, %v1562
  %v2579 = vadd.f32 %v2577, %v2578
  %v2580 = vmul.f32 %v1841, %v1586
  %v2581 = vadd.f32 %v2579, %v2580
  %v2582 = vmul.f32 %v1848, %v1610
  %v2583 = vadd.f32 %v2581, %v2582
  %v2584 = vmul.f32 %v1827, %v1540
  %v2585 = vmul.f32 %v1834, %v1564
  %v2586 = vadd.f32 %v2584, %v2585
  %v2587 = vmul.f32 %v1841, %v1588
  %v2588 = vadd.f32 %v2586, %v2587
  %v2589 = vmul.f32 %v1848, %v1612
  %v2590 = vadd.f32 %v2588, %v2589
  %v2591 = vmul.f32 %v1827, %v1542
  %v2592 = vmul.f32 %v1834, %v1566
  %v2593 = vadd.f32 %v2591, %v2592
  %v2594 = vmul.f32 %v1841, %v1590
  %v2595 = vadd.f32 %v2593, %v2594
  %v2596 = vmul.f32 %v1848, %v1614
  %v2597 = vadd.f32 %v2595, %v2596
  %v2598 = vmul.f32 %v1827, %v1544
  %v2599 = vmul.f32 %v1834, %v1568
  %v2600 = vadd.f32 %v2598, %v2599
  %v2601 = vmul.f32 %v1841, %v1592
  %v2602 = vadd.f32 %v2600, %v2601
  %v2603 = vmul.f32 %v1848, %v1616
  %v2604 = vadd.f32 %v2602, %v2603
  %v2605 = vmul.f32 %v1827, %v1546
  %v2606 = vmul.f32 %v1834, %v1570
  %v2607 = vadd.f32 %v2605, %v2606
  %v2608 = vmul.f32 %v1841, %v1594
  %v2609 = vadd.f32 %v2607, %v2608
  %v2610 = vmul.f32 %v1848, %v1618
  %v2611 = vadd.f32 %v2609, %v2610
  %v2612 = vmul.f32 %v1827, %v1548
  %v2613 = vmul.f32 %v1834, %v1572
  %v2614 = vadd.f32 %v2612, %v2613
  %v2615 = vmul.f32 %v1841, %v1596
  %v2616 = vadd.f32 %v2614, %v2615
  %v2617 = vmul.f32 %v1848, %v1620
  %v2618 = vadd.f32 %v2616, %v2617
  %v2619 = vmul.f32 %v1827, %v1550
  %v2620 = vmul.f32 %v1834, %v1574
  %v2621 = vadd.f32 %v2619, %v2620
  %v2622 = vmul.f32 %v1841, %v1598
  %v2623 = vadd.f32 %v2621, %v2622
  %v2624 = vmul.f32 %v1848, %v1622
  %v2625 = vadd.f32 %v2623, %v2624
  %v2626 = vmul.f32 %v1827, %v1552
  %v2627 = vmul.f32 %v1834, %v1576
  %v2628 = vadd.f32 %v2626, %v2627
  %v2629 = vmul.f32 %v1841, %v1600
  %v2630 = vadd.f32 %v2628, %v2629
  %v2631 = vmul.f32 %v1848, %v1624
  %v2632 = vadd.f32 %v2630, %v2631
  %v2633 = vmul.f32 %v1855, %v1530
  %v2634 = vmul.f32 %v1862, %v1554
  %v2635 = vadd.f32 %v2633, %v2634
  %v2636 = vmul.f32 %v1869, %v1578
  %v2637 = vadd.f32 %v2635, %v2636
  %v2638 = vmul.f32 %v1876, %v1602
  %v2639 = vadd.f32 %v2637, %v2638
  %v2640 = vmul.f32 %v1855, %v1532
  %v2641 = vmul.f32 %v1862, %v1556
  %v2642 = vadd.f32 %v2640, %v2641
  %v2643 = vmul.f32 %v1869, %v1580
  %v2644 = vadd.f32 %v2642, %v2643
  %v2645 = vmul.f32 %v1876, %v1604
  %v2646 = vadd.f32 %v2644, %v2645
  %v2647 = vmul.f32 %v1855, %v1534
  %v2648 = vmul.f32 %v1862, %v1558
  %v2649 = vadd.f32 %v2647, %v2648
  %v2650 = vmul.f32 %v1869, %v1582
  %v2651 = vadd.f32 %v2649, %v2650
  %v2652 = vmul.f32 %v1876, %v1606
  %v2653 = vadd.f32 %v2651, %v2652
  %v2654 = vmul.f32 %v1855, %v1536
  %v2655 = vmul.f32 %v1862, %v1560
  %v2656 = vadd.f32 %v2654, %v2655
  %v2657 = vmul.f32 %v1869, %v1584
  %v2658 = vadd.f32 %v2656, %v2657
  %v2659 = vmul.f32 %v1876, %v1608
  %v2660 = vadd.f32 %v2658, %v2659
  %v2661 = vmul.f32 %v1855, %v1538
  %v2662 = vmul.f32 %v1862, %v1562
  %v2663 = vadd.f32 %v2661, %v2662
  %v2664 = vmul.f32 %v1869, %v1586
  %v2665 = vadd.f32 %v2663, %v2664
  %v2666 = vmul.f32 %v1876, %v1610
  %v2667 = vadd.f32 %v2665, %v2666
  %v2668 = vmul.f32 %v1855, %v1540
  %v2669 = vmul.f32 %v1862, %v1564
  %v2670 = vadd.f32 %v2668, %v2669
  %v2671 = vmul.f32 %v1869, %v1588
  %v2672 = vadd.f32 %v2670, %v2671
  %v2673 = vmul.f32 %v1876, %v1612
  %v2674 = vadd.f32 %v2672, %v2673
  %v2675 = vmul.f32 %v1855, %v1542
  %v2676 = vmul.f32 %v1862, %v1566
  %v2677 = vadd.f32 %v2675, %v2676
  %v2678 = vmul.f32 %v1869, %v1590
  %v2679 = vadd.f32 %v2677, %v2678
  %v2680 = vmul.f32 %v1876, %v1614
  %v2681 = vadd.f32 %v2679, %v2680
  %v2682 = vmul.f32 %v1855, %v1544
  %v2683 = vmul.f32 %v1862, %v1568
  %v2684 = vadd.f32 %v2682, %v2683
  %v2685 = vmul.f32 %v1869, %v1592
  %v2686 = vadd.f32 %v2684, %v2685
  %v2687 = vmul.f32 %v1876, %v1616
  %v2688 = vadd.f32 %v2686, %v2687
  %v2689 = vmul.f32 %v1855, %v1546
  %v2690 = vmul.f32 %v1862, %v1570
  %v2691 = vadd.f32 %v2689, %v2690
  %v2692 = vmul.f32 %v1869, %v1594
  %v2693 = vadd.f32 %v2691, %v2692
  %v2694 = vmul.f32 %v1876, %v1618
  %v2695 = vadd.f32 %v2693, %v2694
  %v2696 = vmul.f32 %v1855, %v1548
  %v2697 = vmul.f32 %v1862, %v1572
  %v2698 = vadd.f32 %v2696, %v2697
  %v2699 = vmul.f32 %v1869, %v1596
  %v2700 = vadd.f32 %v2698, %v2699
  %v2701 = vmul.f32 %v1876, %v1620
  %v2702 = vadd.f32 %v2700, %v2701
  %v2703 = vmul.f32 %v1855, %v1550
  %v2704 = vmul.f32 %v1862, %v1574
  %v2705 = vadd.f32 %v2703, %v2704
  %v2706 = vmul.f32 %v1869, %v1598
  %v2707 = vadd.f32 %v2705, %v2706
  %v2708 = vmul.f32 %v1876, %v1622
  %v2709 = vadd.f32 %v2707, %v2708
  %v2710 = vmul.f32 %v1855, %v1552
  %v2711 = vmul.f32 %v1862, %v1576
  %v2712 = vadd.f32 %v2710, %v2711
  %v2713 = vmul.f32 %v1869, %v1600
  %v2714 = vadd.f32 %v2712, %v2713
  %v2715 = vmul.f32 %v1876, %v1624
  %v2716 = vadd.f32 %v2714, %v2715
  %v2717 = vmul.f32 %v1883, %v1530
  %v2718 = vmul.f32 %v1890, %v1554
  %v2719 = vadd.f32 %v2717, %v2718
  %v2720 = vmul.f32 %v1897, %v1578
  %v2721 = vadd.f32 %v2719, %v2720
  %v2722 = vmul.f32 %v1904, %v1602
  %v2723 = vadd.f32 %v2721, %v2722
  %v2724 = vmul.f32 %v1883, %v1532
  %v2725 = vmul.f32 %v1890, %v1556
  %v2726 = vadd.f32 %v2724, %v2725
  %v2727 = vmul.f32 %v1897, %v1580
  %v2728 = vadd.f32 %v2726, %v2727
  %v2729 = vmul.f32 %v1904, %v1604
  %v2730 = vadd.f32 %v2728, %v2729
  %v2731 = vmul.f32 %v1883, %v1534
  %v2732 = vmul.f32 %v1890, %v1558
  %v2733 = vadd.f32 %v2731, %v2732
  %v2734 = vmul.f32 %v1897, %v1582
  %v2735 = vadd.f32 %v2733, %v2734
  %v2736 = vmul.f32 %v1904, %v1606
  %v2737 = vadd.f32 %v2735, %v2736
  %v2738 = vmul.f32 %v1883, %v1536
  %v2739 = vmul.f32 %v1890, %v1560
  %v2740 = vadd.f32 %v2738, %v2739
  %v2741 = vmul.f32 %v1897, %v1584
  %v2742 = vadd.f32 %v2740, %v2741
  %v2743 = vmul.f32 %v1904, %v1608
  %v2744 = vadd.f32 %v2742, %v2743
  %v2745 = vmul.f32 %v1883, %v1538
  %v2746 = vmul.f32 %v1890, %v1562
  %v2747 = vadd.f32 %v2745, %v2746
  %v2748 = vmul.f32 %v1897, %v1586
  %v2749 = vadd.f32 %v2747, %v2748
  %v2750 = vmul.f32 %v1904, %v1610
  %v2751 = vadd.f32 %v2749, %v2750
  %v2752 = vmul.f32 %v1883, %v1540
  %v2753 = vmul.f32 %v1890, %v1564
  %v2754 = vadd.f32 %v2752, %v2753
  %v2755 = vmul.f32 %v1897, %v1588
  %v2756 = vadd.f32 %v2754, %v2755
  %v2757 = vmul.f32 %v1904, %v1612
  %v2758 = vadd.f32 %v2756, %v2757
  %v2759 = vmul.f32 %v1883, %v1542
  %v2760 = vmul.f32 %v1890, %v1566
  %v2761 = vadd.f32 %v2759, %v2760
  %v2762 = vmul.f32 %v1897, %v1590
  %v2763 = vadd.f32 %v2761, %v2762
  %v2764 = vmul.f32 %v1904, %v1614
  %v2765 = vadd.f32 %v2763, %v2764
  %v2766 = vmul.f32 %v1883, %v1544
  %v2767 = vmul.f32 %v1890, %v1568
  %v2768 = vadd.f32 %v2766, %v2767
  %v2769 = vmul.f32 %v1897, %v1592
  %v2770 = vadd.f32 %v2768, %v2769
  %v2771 = vmul.f32 %v1904, %v1616
  %v2772 = vadd.f32 %v2770, %v2771
  %v2773 = vmul.f32 %v1883, %v1546
  %v2774 = vmul.f32 %v1890, %v1570
  %v2775 = vadd.f32 %v2773, %v2774
  %v2776 = vmul.f32 %v1897, %v1594
  %v2777 = vadd.f32 %v2775, %v2776
  %v2778 = vmul.f32 %v1904, %v1618
  %v2779 = vadd.f32 %v2777, %v2778
  %v2780 = vmul.f32 %v1883, %v1548
  %v2781 = vmul.f32 %v1890, %v1572
  %v2782 = vadd.f32 %v2780, %v2781
  %v2783 = vmul.f32 %v1897, %v1596
  %v2784 = vadd.f32 %v2782, %v2783
  %v2785 = vmul.f32 %v1904, %v1620
  %v2786 = vadd.f32 %v2784, %v2785
  %v2787 = vmul.f32 %v1883, %v1550
  %v2788 = vmul.f32 %v1890, %v1574
  %v2789 = vadd.f32 %v2787, %v2788
  %v2790 = vmul.f32 %v1897, %v1598
  %v2791 = vadd.f32 %v2789, %v2790
  %v2792 = vmul.f32 %v1904, %v1622
  %v2793 = vadd.f32 %v2791, %v2792
  %v2794 = vmul.f32 %v1883, %v1552
  %v2795 = vmul.f32 %v1890, %v1576
  %v2796 = vadd.f32 %v2794, %v2795
  %v2797 = vmul.f32 %v1897, %v1600
  %v2798 = vadd.f32 %v2796, %v2797
  %v2799 = vmul.f32 %v1904, %v1624
  %v2800 = vadd.f32 %v2798, %v2799
  %v2801 = vmul.f32 %v1911, %v1530
  %v2802 = vmul.f32 %v1918, %v1554
  %v2803 = vadd.f32 %v2801, %v2802
  %v2804 = vmul.f32 %v1925, %v1578
  %v2805 = vadd.f32 %v2803, %v2804
  %v2806 = vmul.f32 %v1932, %v1602
  %v2807 = vadd.f32 %v2805, %v2806
  %v2808 = vmul.f32 %v1911, %v1532
  %v2809 = vmul.f32 %v1918, %v1556
  %v2810 = vadd.f32 %v2808, %v2809
  %v2811 = vmul.f32 %v1925, %v1580
  %v2812 = vadd.f32 %v2810, %v2811
  %v2813 = vmul.f32 %v1932, %v1604
  %v2814 = vadd.f32 %v2812, %v2813
  %v2815 = vmul.f32 %v1911, %v1534
  %v2816 = vmul.f32 %v1918, %v1558
  %v2817 = vadd.f32 %v2815, %v2816
  %v2818 = vmul.f32 %v1925, %v1582
  %v2819 = vadd.f32 %v2817, %v2818
  %v2820 = vmul.f32 %v1932, %v1606
  %v2821 = vadd.f32 %v2819, %v2820
  %v2822 = vmul.f32 %v1911, %v1536
  %v2823 = vmul.f32 %v1918, %v1560
  %v2824 = vadd.f32 %v2822, %v2823
  %v2825 = vmul.f32 %v1925, %v1584
  %v2826 = vadd.f32 %v2824, %v2825
  %v2827 = vmul.f32 %v1932, %v1608
  %v2828 = vadd.f32 %v2826, %v2827
  %v2829 = vmul.f32 %v1911, %v1538
  %v2830 = vmul.f32 %v1918, %v1562
  %v2831 = vadd.f32 %v2829, %v2830
  %v2832 = vmul.f32 %v1925, %v1586
  %v2833 = vadd.f32 %v2831, %v2832
  %v2834 = vmul.f32 %v1932, %v1610
  %v2835 = vadd.f32 %v2833, %v2834
  %v2836 = vmul.f32 %v1911, %v1540
  %v2837 = vmul.f32 %v1918, %v1564
  %v2838 = vadd.f32 %v2836, %v2837
  %v2839 = vmul.f32 %v1925, %v1588
  %v2840 = vadd.f32 %v2838, %v2839
  %v2841 = vmul.f32 %v1932, %v1612
  %v2842 = vadd.f32 %v2840, %v2841
  %v2843 = vmul.f32 %v1911, %v1542
  %v2844 = vmul.f32 %v1918, %v1566
  %v2845 = vadd.f32 %v2843, %v2844
  %v2846 = vmul.f32 %v1925, %v1590
  %v2847 = vadd.f32 %v2845, %v2846
  %v2848 = vmul.f32 %v1932, %v1614
  %v2849 = vadd.f32 %v2847, %v2848
  %v2850 = vmul.f32 %v1911, %v1544
  %v2851 = vmul.f32 %v1918, %v1568
  %v2852 = vadd.f32 %v2850, %v2851
  %v2853 = vmul.f32 %v1925, %v1592
  %v2854 = vadd.f32 %v2852, %v2853
  %v2855 = vmul.f32 %v1932, %v1616
  %v2856 = vadd.f32 %v2854, %v2855
  %v2857 = vmul.f32 %v1911, %v1546
  %v2858 = vmul.f32 %v1918, %v1570
  %v2859 = vadd.f32 %v2857, %v2858
  %v2860 = vmul.f32 %v1925, %v1594
  %v2861 = vadd.f32 %v2859, %v2860
  %v2862 = vmul.f32 %v1932, %v1618
  %v2863 = vadd.f32 %v2861, %v2862
  %v2864 = vmul.f32 %v1911, %v1548
  %v2865 = vmul.f32 %v1918, %v1572
  %v2866 = vadd.f32 %v2864, %v2865
  %v2867 = vmul.f32 %v1925, %v1596
  %v2868 = vadd.f32 %v2866, %v2867
  %v2869 = vmul.f32 %v1932, %v1620
  %v2870 = vadd.f32 %v2868, %v2869
  %v2871 = vmul.f32 %v1911, %v1550
  %v2872 = vmul.f32 %v1918, %v1574
  %v2873 = vadd.f32 %v2871, %v2872
  %v2874 = vmul.f32 %v1925, %v1598
  %v2875 = vadd.f32 %v2873, %v2874
  %v2876 = vmul.f32 %v1932, %v1622
  %v2877 = vadd.f32 %v2875, %v2876
  %v2878 = vmul.f32 %v1911, %v1552
  %v2879 = vmul.f32 %v1918, %v1576
  %v2880 = vadd.f32 %v2878, %v2879
  %v2881 = vmul.f32 %v1925, %v1600
  %v2882 = vadd.f32 %v2880, %v2881
  %v2883 = vmul.f32 %v1932, %v1624
  %v2884 = vadd.f32 %v2882, %v2883
  %v2885 = vmul.f32 %v1939, %v1530
  %v2886 = vmul.f32 %v1946, %v1554
  %v2887 = vadd.f32 %v2885, %v2886
  %v2888 = vmul.f32 %v1953, %v1578
  %v2889 = vadd.f32 %v2887, %v2888
  %v2890 = vmul.f32 %v1960, %v1602
  %v2891 = vadd.f32 %v2889, %v2890
  %v2892 = vmul.f32 %v1939, %v1532
  %v2893 = vmul.f32 %v1946, %v1556
  %v2894 = vadd.f32 %v2892, %v2893
  %v2895 = vmul.f32 %v1953, %v1580
  %v2896 = vadd.f32 %v2894, %v2895
  %v2897 = vmul.f32 %v1960, %v1604
  %v2898 = vadd.f32 %v2896, %v2897
  %v2899 = vmul.f32 %v1939, %v1534
  %v2900 = vmul.f32 %v1946, %v1558
  %v2901 = vadd.f32 %v2899, %v2900
  %v2902 = vmul.f32 %v1953, %v1582
  %v2903 = vadd.f32 %v2901, %v2902
  %v2904 = vmul.f32 %v1960, %v1606
  %v2905 = vadd.f32 %v2903, %v2904
  %v2906 = vmul.f32 %v1939, %v1536
  %v2907 = vmul.f32 %v1946, %v1560
  %v2908 = vadd.f32 %v2906, %v2907
  %v2909 = vmul.f32 %v1953, %v1584
  %v2910 = vadd.f32 %v2908, %v2909
  %v2911 = vmul.f32 %v1960, %v1608
  %v2912 = vadd.f32 %v2910, %v2911
  %v2913 = vmul.f32 %v1939, %v1538
  %v2914 = vmul.f32 %v1946, %v1562
  %v2915 = vadd.f32 %v2913, %v2914
  %v2916 = vmul.f32 %v1953, %v1586
  %v2917 = vadd.f32 %v2915, %v2916
  %v2918 = vmul.f32 %v1960, %v1610
  %v2919 = vadd.f32 %v2917, %v2918
  %v2920 = vmul.f32 %v1939, %v1540
  %v2921 = vmul.f32 %v1946, %v1564
  %v2922 = vadd.f32 %v2920, %v2921
  %v2923 = vmul.f32 %v1953, %v1588
  %v2924 = vadd.f32 %v2922, %v2923
  %v2925 = vmul.f32 %v1960, %v1612
  %v2926 = vadd.f32 %v2924, %v2925
  %v2927 = vmul.f32 %v1939, %v1542
  %v2928 = vmul.f32 %v1946, %v1566
  %v2929 = vadd.f32 %v2927, %v2928
  %v2930 = vmul.f32 %v1953, %v1590
  %v2931 = vadd.f32 %v2929, %v2930
  %v2932 = vmul.f32 %v1960, %v1614
  %v2933 = vadd.f32 %v2931, %v2932
  %v2934 = vmul.f32 %v1939, %v1544
  %v2935 = vmul.f32 %v1946, %v1568
  %v2936 = vadd.f32 %v2934, %v2935
  %v2937 = vmul.f32 %v1953, %v1592
  %v2938 = vadd.f32 %v2936, %v2937
  %v2939 = vmul.f32 %v1960, %v1616
  %v2940 = vadd.f32 %v2938, %v2939
  %v2941 = vmul.f32 %v1939, %v1546
  %v2942 = vmul.f32 %v1946, %v1570
  %v2943 = vadd.f32 %v2941, %v2942
  %v2944 = vmul.f32 %v1953, %v1594
  %v2945 = vadd.f32 %v2943, %v2944
  %v2946 = vmul.f32 %v1960, %v1618
  %v2947 = vadd.f32 %v2945, %v2946
  %v2948 = vmul.f32 %v1939, %v1548
  %v2949 = vmul.f32 %v1946, %v1572
  %v2950 = vadd.f32 %v2948, %v2949
  %v2951 = vmul.f32 %v1953, %v1596
  %v2952 = vadd.f32 %v2950, %v2951
  %v2953 = vmul.f32 %v1960, %v1620
  %v2954 = vadd.f32 %v2952, %v2953
  %v2955 = vmul.f32 %v1939, %v1550
  %v2956 = vmul.f32 %v1946, %v1574
  %v2957 = vadd.f32 %v2955, %v2956
  %v2958 = vmul.f32 %v1953, %v1598
  %v2959 = vadd.f32 %v2957, %v2958
  %v2960 = vmul.f32 %v1960, %v1622
  %v2961 = vadd.f32 %v2959, %v2960
  %v2962 = vmul.f32 %v1939, %v1552
  %v2963 = vmul.f32 %v1946, %v1576
  %v2964 = vadd.f32 %v2962, %v2963
  %v2965 = vmul.f32 %v1953, %v1600
  %v2966 = vadd.f32 %v2964, %v2965
  %v2967 = vmul.f32 %v1960, %v1624
  %v2968 = vadd.f32 %v2966, %v2967
  %v2969 = vadd.f32 %v11, %v1967
  %2970 = vst [vmem:[%s2] sm:$0xff] %v2969
  %v2971 = vadd.f32 %v13, %v1974
  %s2972 = scalar_lea.vmem %s2, 8
  %2973 = vst [vmem:[%s2972] sm:$0xff] %v2971
  %v2974 = vadd.f32 %v15, %v1981
  %s2975 = scalar_lea.vmem %s2, 16
  %2976 = vst [vmem:[%s2975] sm:$0xff] %v2974
  %v2977 = vadd.f32 %v17, %v1988
  %s2978 = scalar_lea.vmem %s2, 24
  %2979 = vst [vmem:[%s2978] sm:$0xff] %v2977
  %v2980 = vadd.f32 %v19, %v1995
  %s2981 = scalar_lea.vmem %s2, 32
  %2982 = vst [vmem:[%s2981] sm:$0xff] %v2980
  %v2983 = vadd.f32 %v21, %v2002
  %s2984 = scalar_lea.vmem %s2, 40
  %2985 = vst [vmem:[%s2984] sm:$0xff] %v2983
  %v2986 = vadd.f32 %v23, %v2009
  %s2987 = scalar_lea.vmem %s2, 48
  %2988 = vst [vmem:[%s2987] sm:$0xff] %v2986
  %v2989 = vadd.f32 %v25, %v2016
  %s2990 = scalar_lea.vmem %s2, 56
  %2991 = vst [vmem:[%s2990] sm:$0xff] %v2989
  %v2992 = vadd.f32 %v27, %v2023
  %s2993 = scalar_lea.vmem %s2, 64
  %2994 = vst [vmem:[%s2993] sm:$0xff] %v2992
  %v2995 = vadd.f32 %v29, %v2030
  %s2996 = scalar_lea.vmem %s2, 72
  %2997 = vst [vmem:[%s2996] sm:$0xff] %v2995
  %v2998 = vadd.f32 %v31, %v2037
  %s2999 = scalar_lea.vmem %s2, 80
  %3000 = vst [vmem:[%s2999] sm:$0xff] %v2998
  %v3001 = vadd.f32 %v33, %v2044
  %s3002 = scalar_lea.vmem %s2, 88
  %3003 = vst [vmem:[%s3002] sm:$0xff] %v3001
  %v3004 = vadd.f32 %v35, %v2051
  %s3005 = scalar_lea.vmem %s2, 96
  %3006 = vst [vmem:[%s3005] sm:$0xff] %v3004
  %v3007 = vadd.f32 %v37, %v2058
  %s3008 = scalar_lea.vmem %s2, 104
  %3009 = vst [vmem:[%s3008] sm:$0xff] %v3007
  %v3010 = vadd.f32 %v39, %v2065
  %s3011 = scalar_lea.vmem %s2, 112
  %3012 = vst [vmem:[%s3011] sm:$0xff] %v3010
  %v3013 = vadd.f32 %v41, %v2072
  %s3014 = scalar_lea.vmem %s2, 120
  %3015 = vst [vmem:[%s3014] sm:$0xff] %v3013
  %v3016 = vadd.f32 %v43, %v2079
  %s3017 = scalar_lea.vmem %s2, 128
  %3018 = vst [vmem:[%s3017] sm:$0xff] %v3016
  %v3019 = vadd.f32 %v45, %v2086
  %s3020 = scalar_lea.vmem %s2, 136
  %3021 = vst [vmem:[%s3020] sm:$0xff] %v3019
  %v3022 = vadd.f32 %v47, %v2093
  %s3023 = scalar_lea.vmem %s2, 144
  %3024 = vst [vmem:[%s3023] sm:$0xff] %v3022
  %v3025 = vadd.f32 %v49, %v2100
  %s3026 = scalar_lea.vmem %s2, 152
  %3027 = vst [vmem:[%s3026] sm:$0xff] %v3025
  %v3028 = vadd.f32 %v51, %v2107
  %s3029 = scalar_lea.vmem %s2, 160
  %3030 = vst [vmem:[%s3029] sm:$0xff] %v3028
  %v3031 = vadd.f32 %v53, %v2114
  %s3032 = scalar_lea.vmem %s2, 168
  %3033 = vst [vmem:[%s3032] sm:$0xff] %v3031
  %v3034 = vadd.f32 %v55, %v2121
  %s3035 = scalar_lea.vmem %s2, 176
  %3036 = vst [vmem:[%s3035] sm:$0xff] %v3034
  %v3037 = vadd.f32 %v57, %v2128
  %s3038 = scalar_lea.vmem %s2, 184
  %3039 = vst [vmem:[%s3038] sm:$0xff] %v3037
  %v3040 = vadd.f32 %v59, %v2135
  %s3041 = scalar_lea.vmem %s2, 192
  %3042 = vst [vmem:[%s3041] sm:$0xff] %v3040
  %v3043 = vadd.f32 %v61, %v2142
  %s3044 = scalar_lea.vmem %s2, 200
  %3045 = vst [vmem:[%s3044] sm:$0xff] %v3043
  %v3046 = vadd.f32 %v63, %v2149
  %s3047 = scalar_lea.vmem %s2, 208
  %3048 = vst [vmem:[%s3047] sm:$0xff] %v3046
  %v3049 = vadd.f32 %v65, %v2156
  %s3050 = scalar_lea.vmem %s2, 216
  %3051 = vst [vmem:[%s3050] sm:$0xff] %v3049
  %v3052 = vadd.f32 %v67, %v2163
  %s3053 = scalar_lea.vmem %s2, 224
  %3054 = vst [vmem:[%s3053] sm:$0xff] %v3052
  %v3055 = vadd.f32 %v69, %v2170
  %s3056 = scalar_lea.vmem %s2, 232
  %3057 = vst [vmem:[%s3056] sm:$0xff] %v3055
  %v3058 = vadd.f32 %v71, %v2177
  %s3059 = scalar_lea.vmem %s2, 240
  %3060 = vst [vmem:[%s3059] sm:$0xff] %v3058
  %v3061 = vadd.f32 %v73, %v2184
  %s3062 = scalar_lea.vmem %s2, 248
  %3063 = vst [vmem:[%s3062] sm:$0xff] %v3061
  %v3064 = vadd.f32 %v75, %v2191
  %s3065 = scalar_lea.vmem %s2, 256
  %3066 = vst [vmem:[%s3065] sm:$0xff] %v3064
  %v3067 = vadd.f32 %v77, %v2198
  %s3068 = scalar_lea.vmem %s2, 264
  %3069 = vst [vmem:[%s3068] sm:$0xff] %v3067
  %v3070 = vadd.f32 %v79, %v2205
  %s3071 = scalar_lea.vmem %s2, 272
  %3072 = vst [vmem:[%s3071] sm:$0xff] %v3070
  %v3073 = vadd.f32 %v81, %v2212
  %s3074 = scalar_lea.vmem %s2, 280
  %3075 = vst [vmem:[%s3074] sm:$0xff] %v3073
  %v3076 = vadd.f32 %v83, %v2219
  %s3077 = scalar_lea.vmem %s2, 288
  %3078 = vst [vmem:[%s3077] sm:$0xff] %v3076
  %v3079 = vadd.f32 %v85, %v2226
  %s3080 = scalar_lea.vmem %s2, 296
  %3081 = vst [vmem:[%s3080] sm:$0xff] %v3079
  %v3082 = vadd.f32 %v87, %v2233
  %s3083 = scalar_lea.vmem %s2, 304
  %3084 = vst [vmem:[%s3083] sm:$0xff] %v3082
  %v3085 = vadd.f32 %v89, %v2240
  %s3086 = scalar_lea.vmem %s2, 312
  %3087 = vst [vmem:[%s3086] sm:$0xff] %v3085
  %v3088 = vadd.f32 %v91, %v2247
  %s3089 = scalar_lea.vmem %s2, 320
  %3090 = vst [vmem:[%s3089] sm:$0xff] %v3088
  %v3091 = vadd.f32 %v93, %v2254
  %s3092 = scalar_lea.vmem %s2, 328
  %3093 = vst [vmem:[%s3092] sm:$0xff] %v3091
  %v3094 = vadd.f32 %v95, %v2261
  %s3095 = scalar_lea.vmem %s2, 336
  %3096 = vst [vmem:[%s3095] sm:$0xff] %v3094
  %v3097 = vadd.f32 %v97, %v2268
  %s3098 = scalar_lea.vmem %s2, 344
  %3099 = vst [vmem:[%s3098] sm:$0xff] %v3097
  %v3100 = vadd.f32 %v99, %v2275
  %s3101 = scalar_lea.vmem %s2, 352
  %3102 = vst [vmem:[%s3101] sm:$0xff] %v3100
  %v3103 = vadd.f32 %v101, %v2282
  %s3104 = scalar_lea.vmem %s2, 360
  %3105 = vst [vmem:[%s3104] sm:$0xff] %v3103
  %v3106 = vadd.f32 %v103, %v2289
  %s3107 = scalar_lea.vmem %s2, 368
  %3108 = vst [vmem:[%s3107] sm:$0xff] %v3106
  %v3109 = vadd.f32 %v105, %v2296
  %s3110 = scalar_lea.vmem %s2, 376
  %3111 = vst [vmem:[%s3110] sm:$0xff] %v3109
  %v3112 = vadd.f32 %v107, %v2303
  %s3113 = scalar_lea.vmem %s2, 384
  %3114 = vst [vmem:[%s3113] sm:$0xff] %v3112
  %v3115 = vadd.f32 %v109, %v2310
  %s3116 = scalar_lea.vmem %s2, 392
  %3117 = vst [vmem:[%s3116] sm:$0xff] %v3115
  %v3118 = vadd.f32 %v111, %v2317
  %s3119 = scalar_lea.vmem %s2, 400
  %3120 = vst [vmem:[%s3119] sm:$0xff] %v3118
  %v3121 = vadd.f32 %v113, %v2324
  %s3122 = scalar_lea.vmem %s2, 408
  %3123 = vst [vmem:[%s3122] sm:$0xff] %v3121
  %v3124 = vadd.f32 %v115, %v2331
  %s3125 = scalar_lea.vmem %s2, 416
  %3126 = vst [vmem:[%s3125] sm:$0xff] %v3124
  %v3127 = vadd.f32 %v117, %v2338
  %s3128 = scalar_lea.vmem %s2, 424
  %3129 = vst [vmem:[%s3128] sm:$0xff] %v3127
  %v3130 = vadd.f32 %v119, %v2345
  %s3131 = scalar_lea.vmem %s2, 432
  %3132 = vst [vmem:[%s3131] sm:$0xff] %v3130
  %v3133 = vadd.f32 %v121, %v2352
  %s3134 = scalar_lea.vmem %s2, 440
  %3135 = vst [vmem:[%s3134] sm:$0xff] %v3133
  %v3136 = vadd.f32 %v123, %v2359
  %s3137 = scalar_lea.vmem %s2, 448
  %3138 = vst [vmem:[%s3137] sm:$0xff] %v3136
  %v3139 = vadd.f32 %v125, %v2366
  %s3140 = scalar_lea.vmem %s2, 456
  %3141 = vst [vmem:[%s3140] sm:$0xff] %v3139
  %v3142 = vadd.f32 %v127, %v2373
  %s3143 = scalar_lea.vmem %s2, 464
  %3144 = vst [vmem:[%s3143] sm:$0xff] %v3142
  %v3145 = vadd.f32 %v129, %v2380
  %s3146 = scalar_lea.vmem %s2, 472
  %3147 = vst [vmem:[%s3146] sm:$0xff] %v3145
  %v3148 = vadd.f32 %v131, %v2387
  %s3149 = scalar_lea.vmem %s2, 480
  %3150 = vst [vmem:[%s3149] sm:$0xff] %v3148
  %v3151 = vadd.f32 %v133, %v2394
  %s3152 = scalar_lea.vmem %s2, 488
  %3153 = vst [vmem:[%s3152] sm:$0xff] %v3151
  %v3154 = vadd.f32 %v135, %v2401
  %s3155 = scalar_lea.vmem %s2, 496
  %3156 = vst [vmem:[%s3155] sm:$0xff] %v3154
  %v3157 = vadd.f32 %v137, %v2408
  %s3158 = scalar_lea.vmem %s2, 504
  %3159 = vst [vmem:[%s3158] sm:$0xff] %v3157
  %v3160 = vadd.f32 %v139, %v2415
  %s3161 = scalar_lea.vmem %s2, 512
  %3162 = vst [vmem:[%s3161] sm:$0xff] %v3160
  %v3163 = vadd.f32 %v141, %v2422
  %s3164 = scalar_lea.vmem %s2, 520
  %3165 = vst [vmem:[%s3164] sm:$0xff] %v3163
  %v3166 = vadd.f32 %v143, %v2429
  %s3167 = scalar_lea.vmem %s2, 528
  %3168 = vst [vmem:[%s3167] sm:$0xff] %v3166
  %v3169 = vadd.f32 %v145, %v2436
  %s3170 = scalar_lea.vmem %s2, 536
  %3171 = vst [vmem:[%s3170] sm:$0xff] %v3169
  %v3172 = vadd.f32 %v147, %v2443
  %s3173 = scalar_lea.vmem %s2, 544
  %3174 = vst [vmem:[%s3173] sm:$0xff] %v3172
  %v3175 = vadd.f32 %v149, %v2450
  %s3176 = scalar_lea.vmem %s2, 552
  %3177 = vst [vmem:[%s3176] sm:$0xff] %v3175
  %v3178 = vadd.f32 %v151, %v2457
  %s3179 = scalar_lea.vmem %s2, 560
  %3180 = vst [vmem:[%s3179] sm:$0xff] %v3178
  %v3181 = vadd.f32 %v153, %v2464
  %s3182 = scalar_lea.vmem %s2, 568
  %3183 = vst [vmem:[%s3182] sm:$0xff] %v3181
  %v3184 = vadd.f32 %v155, %v2471
  %s3185 = scalar_lea.vmem %s2, 576
  %3186 = vst [vmem:[%s3185] sm:$0xff] %v3184
  %v3187 = vadd.f32 %v157, %v2478
  %s3188 = scalar_lea.vmem %s2, 584
  %3189 = vst [vmem:[%s3188] sm:$0xff] %v3187
  %v3190 = vadd.f32 %v159, %v2485
  %s3191 = scalar_lea.vmem %s2, 592
  %3192 = vst [vmem:[%s3191] sm:$0xff] %v3190
  %v3193 = vadd.f32 %v161, %v2492
  %s3194 = scalar_lea.vmem %s2, 600
  %3195 = vst [vmem:[%s3194] sm:$0xff] %v3193
  %v3196 = vadd.f32 %v163, %v2499
  %s3197 = scalar_lea.vmem %s2, 608
  %3198 = vst [vmem:[%s3197] sm:$0xff] %v3196
  %v3199 = vadd.f32 %v165, %v2506
  %s3200 = scalar_lea.vmem %s2, 616
  %3201 = vst [vmem:[%s3200] sm:$0xff] %v3199
  %v3202 = vadd.f32 %v167, %v2513
  %s3203 = scalar_lea.vmem %s2, 624
  %3204 = vst [vmem:[%s3203] sm:$0xff] %v3202
  %v3205 = vadd.f32 %v169, %v2520
  %s3206 = scalar_lea.vmem %s2, 632
  %3207 = vst [vmem:[%s3206] sm:$0xff] %v3205
  %v3208 = vadd.f32 %v171, %v2527
  %s3209 = scalar_lea.vmem %s2, 640
  %3210 = vst [vmem:[%s3209] sm:$0xff] %v3208
  %v3211 = vadd.f32 %v173, %v2534
  %s3212 = scalar_lea.vmem %s2, 648
  %3213 = vst [vmem:[%s3212] sm:$0xff] %v3211
  %v3214 = vadd.f32 %v175, %v2541
  %s3215 = scalar_lea.vmem %s2, 656
  %3216 = vst [vmem:[%s3215] sm:$0xff] %v3214
  %v3217 = vadd.f32 %v177, %v2548
  %s3218 = scalar_lea.vmem %s2, 664
  %3219 = vst [vmem:[%s3218] sm:$0xff] %v3217
  %v3220 = vadd.f32 %v179, %v2555
  %s3221 = scalar_lea.vmem %s2, 672
  %3222 = vst [vmem:[%s3221] sm:$0xff] %v3220
  %v3223 = vadd.f32 %v181, %v2562
  %s3224 = scalar_lea.vmem %s2, 680
  %3225 = vst [vmem:[%s3224] sm:$0xff] %v3223
  %v3226 = vadd.f32 %v183, %v2569
  %s3227 = scalar_lea.vmem %s2, 688
  %3228 = vst [vmem:[%s3227] sm:$0xff] %v3226
  %v3229 = vadd.f32 %v185, %v2576
  %s3230 = scalar_lea.vmem %s2, 696
  %3231 = vst [vmem:[%s3230] sm:$0xff] %v3229
  %v3232 = vadd.f32 %v187, %v2583
  %s3233 = scalar_lea.vmem %s2, 704
  %3234 = vst [vmem:[%s3233] sm:$0xff] %v3232
  %v3235 = vadd.f32 %v189, %v2590
  %s3236 = scalar_lea.vmem %s2, 712
  %3237 = vst [vmem:[%s3236] sm:$0xff] %v3235
  %v3238 = vadd.f32 %v191, %v2597
  %s3239 = scalar_lea.vmem %s2, 720
  %3240 = vst [vmem:[%s3239] sm:$0xff] %v3238
  %v3241 = vadd.f32 %v193, %v2604
  %s3242 = scalar_lea.vmem %s2, 728
  %3243 = vst [vmem:[%s3242] sm:$0xff] %v3241
  %v3244 = vadd.f32 %v195, %v2611
  %s3245 = scalar_lea.vmem %s2, 736
  %3246 = vst [vmem:[%s3245] sm:$0xff] %v3244
  %v3247 = vadd.f32 %v197, %v2618
  %s3248 = scalar_lea.vmem %s2, 744
  %3249 = vst [vmem:[%s3248] sm:$0xff] %v3247
  %v3250 = vadd.f32 %v199, %v2625
  %s3251 = scalar_lea.vmem %s2, 752
  %3252 = vst [vmem:[%s3251] sm:$0xff] %v3250
  %v3253 = vadd.f32 %v201, %v2632
  %s3254 = scalar_lea.vmem %s2, 760
  %3255 = vst [vmem:[%s3254] sm:$0xff] %v3253
  %v3256 = vadd.f32 %v203, %v2639
  %s3257 = scalar_lea.vmem %s2, 768
  %3258 = vst [vmem:[%s3257] sm:$0xff] %v3256
  %v3259 = vadd.f32 %v205, %v2646
  %s3260 = scalar_lea.vmem %s2, 776
  %3261 = vst [vmem:[%s3260] sm:$0xff] %v3259
  %v3262 = vadd.f32 %v207, %v2653
  %s3263 = scalar_lea.vmem %s2, 784
  %3264 = vst [vmem:[%s3263] sm:$0xff] %v3262
  %v3265 = vadd.f32 %v209, %v2660
  %s3266 = scalar_lea.vmem %s2, 792
  %3267 = vst [vmem:[%s3266] sm:$0xff] %v3265
  %v3268 = vadd.f32 %v211, %v2667
  %s3269 = scalar_lea.vmem %s2, 800
  %3270 = vst [vmem:[%s3269] sm:$0xff] %v3268
  %v3271 = vadd.f32 %v213, %v2674
  %s3272 = scalar_lea.vmem %s2, 808
  %3273 = vst [vmem:[%s3272] sm:$0xff] %v3271
  %v3274 = vadd.f32 %v215, %v2681
  %s3275 = scalar_lea.vmem %s2, 816
  %3276 = vst [vmem:[%s3275] sm:$0xff] %v3274
  %v3277 = vadd.f32 %v217, %v2688
  %s3278 = scalar_lea.vmem %s2, 824
  %3279 = vst [vmem:[%s3278] sm:$0xff] %v3277
  %v3280 = vadd.f32 %v219, %v2695
  %s3281 = scalar_lea.vmem %s2, 832
  %3282 = vst [vmem:[%s3281] sm:$0xff] %v3280
  %v3283 = vadd.f32 %v221, %v2702
  %s3284 = scalar_lea.vmem %s2, 840
  %3285 = vst [vmem:[%s3284] sm:$0xff] %v3283
  %v3286 = vadd.f32 %v223, %v2709
  %s3287 = scalar_lea.vmem %s2, 848
  %3288 = vst [vmem:[%s3287] sm:$0xff] %v3286
  %v3289 = vadd.f32 %v225, %v2716
  %s3290 = scalar_lea.vmem %s2, 856
  %3291 = vst [vmem:[%s3290] sm:$0xff] %v3289
  %v3292 = vadd.f32 %v227, %v2723
  %s3293 = scalar_lea.vmem %s2, 864
  %3294 = vst [vmem:[%s3293] sm:$0xff] %v3292
  %v3295 = vadd.f32 %v229, %v2730
  %s3296 = scalar_lea.vmem %s2, 872
  %3297 = vst [vmem:[%s3296] sm:$0xff] %v3295
  %v3298 = vadd.f32 %v231, %v2737
  %s3299 = scalar_lea.vmem %s2, 880
  %3300 = vst [vmem:[%s3299] sm:$0xff] %v3298
  %v3301 = vadd.f32 %v233, %v2744
  %s3302 = scalar_lea.vmem %s2, 888
  %3303 = vst [vmem:[%s3302] sm:$0xff] %v3301
  %v3304 = vadd.f32 %v235, %v2751
  %s3305 = scalar_lea.vmem %s2, 896
  %3306 = vst [vmem:[%s3305] sm:$0xff] %v3304
  %v3307 = vadd.f32 %v237, %v2758
  %s3308 = scalar_lea.vmem %s2, 904
  %3309 = vst [vmem:[%s3308] sm:$0xff] %v3307
  %v3310 = vadd.f32 %v239, %v2765
  %s3311 = scalar_lea.vmem %s2, 912
  %3312 = vst [vmem:[%s3311] sm:$0xff] %v3310
  %v3313 = vadd.f32 %v241, %v2772
  %s3314 = scalar_lea.vmem %s2, 920
  %3315 = vst [vmem:[%s3314] sm:$0xff] %v3313
  %v3316 = vadd.f32 %v243, %v2779
  %s3317 = scalar_lea.vmem %s2, 928
  %3318 = vst [vmem:[%s3317] sm:$0xff] %v3316
  %v3319 = vadd.f32 %v245, %v2786
  %s3320 = scalar_lea.vmem %s2, 936
  %3321 = vst [vmem:[%s3320] sm:$0xff] %v3319
  %v3322 = vadd.f32 %v247, %v2793
  %s3323 = scalar_lea.vmem %s2, 944
  %3324 = vst [vmem:[%s3323] sm:$0xff] %v3322
  %v3325 = vadd.f32 %v249, %v2800
  %s3326 = scalar_lea.vmem %s2, 952
  %3327 = vst [vmem:[%s3326] sm:$0xff] %v3325
  %v3328 = vadd.f32 %v251, %v2807
  %s3329 = scalar_lea.vmem %s2, 960
  %3330 = vst [vmem:[%s3329] sm:$0xff] %v3328
  %v3331 = vadd.f32 %v253, %v2814
  %s3332 = scalar_lea.vmem %s2, 968
  %3333 = vst [vmem:[%s3332] sm:$0xff] %v3331
  %v3334 = vadd.f32 %v255, %v2821
  %s3335 = scalar_lea.vmem %s2, 976
  %3336 = vst [vmem:[%s3335] sm:$0xff] %v3334
  %v3337 = vadd.f32 %v257, %v2828
  %s3338 = scalar_lea.vmem %s2, 984
  %3339 = vst [vmem:[%s3338] sm:$0xff] %v3337
  %v3340 = vadd.f32 %v259, %v2835
  %s3341 = scalar_lea.vmem %s2, 992
  %3342 = vst [vmem:[%s3341] sm:$0xff] %v3340
  %v3343 = vadd.f32 %v261, %v2842
  %s3344 = scalar_lea.vmem %s2, 1000
  %3345 = vst [vmem:[%s3344] sm:$0xff] %v3343
  %v3346 = vadd.f32 %v263, %v2849
  %s3347 = scalar_lea.vmem %s2, 1008
  %3348 = vst [vmem:[%s3347] sm:$0xff] %v3346
  %v3349 = vadd.f32 %v265, %v2856
  %s3350 = scalar_lea.vmem %s2, 1016
  %3351 = vst [vmem:[%s3350] sm:$0xff] %v3349
  %v3352 = vadd.f32 %v267, %v2863
  %s3353 = scalar_lea.vmem %s2, 1024
  %3354 = vst [vmem:[%s3353] sm:$0xff] %v3352
  %v3355 = vadd.f32 %v269, %v2870
  %s3356 = scalar_lea.vmem %s2, 1032
  %3357 = vst [vmem:[%s3356] sm:$0xff] %v3355
  %v3358 = vadd.f32 %v271, %v2877
  %s3359 = scalar_lea.vmem %s2, 1040
  %3360 = vst [vmem:[%s3359] sm:$0xff] %v3358
  %v3361 = vadd.f32 %v273, %v2884
  %s3362 = scalar_lea.vmem %s2, 1048
  %3363 = vst [vmem:[%s3362] sm:$0xff] %v3361
  %v3364 = vadd.f32 %v275, %v2891
  %s3365 = scalar_lea.vmem %s2, 1056
  %3366 = vst [vmem:[%s3365] sm:$0xff] %v3364
  %v3367 = vadd.f32 %v277, %v2898
  %s3368 = scalar_lea.vmem %s2, 1064
  %3369 = vst [vmem:[%s3368] sm:$0xff] %v3367
  %v3370 = vadd.f32 %v279, %v2905
  %s3371 = scalar_lea.vmem %s2, 1072
  %3372 = vst [vmem:[%s3371] sm:$0xff] %v3370
  %v3373 = vadd.f32 %v281, %v2912
  %s3374 = scalar_lea.vmem %s2, 1080
  %3375 = vst [vmem:[%s3374] sm:$0xff] %v3373
  %v3376 = vadd.f32 %v283, %v2919
  %s3377 = scalar_lea.vmem %s2, 1088
  %3378 = vst [vmem:[%s3377] sm:$0xff] %v3376
  %v3379 = vadd.f32 %v285, %v2926
  %s3380 = scalar_lea.vmem %s2, 1096
  %3381 = vst [vmem:[%s3380] sm:$0xff] %v3379
  %v3382 = vadd.f32 %v287, %v2933
  %s3383 = scalar_lea.vmem %s2, 1104
  %3384 = vst [vmem:[%s3383] sm:$0xff] %v3382
  %v3385 = vadd.f32 %v289, %v2940
  %s3386 = scalar_lea.vmem %s2, 1112
  %3387 = vst [vmem:[%s3386] sm:$0xff] %v3385
  %v3388 = vadd.f32 %v291, %v2947
  %s3389 = scalar_lea.vmem %s2, 1120
  %3390 = vst [vmem:[%s3389] sm:$0xff] %v3388
  %v3391 = vadd.f32 %v293, %v2954
  %s3392 = scalar_lea.vmem %s2, 1128
  %3393 = vst [vmem:[%s3392] sm:$0xff] %v3391
  %v3394 = vadd.f32 %v295, %v2961
  %s3395 = scalar_lea.vmem %s2, 1136
  %3396 = vst [vmem:[%s3395] sm:$0xff] %v3394
  %v3397 = vadd.f32 %v297, %v2968
  %s3398 = scalar_lea.vmem %s2, 1144
  %3399 = vst [vmem:[%s3398] sm:$0xff] %v3397
  // Predicated region
  $region10: #{_forward_batched_impl.1} parent=0 // pred_check
    _
  $region11: #{_forward_batched_impl.1} parent=0 // pred_check_branch
    %3401 = sbr.rel (0) target = $region13
  $region12: #{_forward_batched_impl.1} parent=0 // pred_region
    _
  $region13: #{_forward_batched_impl.1} parent=0 // pred_fallthru
    _
  // Predicated region
  $region14: #{_forward_batched_impl.1} parent=0 // pred_check
    _
  $region15: #{_forward_batched_impl.1} parent=0 // pred_check_branch
    %3403 = sbr.rel (0) target = $region17
  $region16: #{_forward_batched_impl.1} parent=0 // pred_region
    _
  $region17: #{_forward_batched_impl.1} parent=0 // pred_fallthru
    _

</llo_original>
